<compile_context>
chip_gen: v5e
topology: v5e:2x2
jax: 0.10.0
libtpu: 0.0.40
codegen_flags: <defaults>
</compile_context>

<pallas_src>
import functools

import jax
import jax.numpy as jnp
from jax import lax
from jax.experimental import pallas as pl
from jax.experimental.pallas import tpu as pltpu

_BN_EPS = 1e-5
_LANES = 128


def _ru(n, m):
    return (n + m - 1) // m * m


def _vmem_limit_bytes():
    """Per-generation VMEM budget: generous on v5e/v6e, headroom on v7x."""
    try:
        cap = int(pltpu.get_tpu_info().vmem_capacity_bytes)
    except Exception:
        cap = 64 * 1024 * 1024
    return int(min(100 * 1024 * 1024,
                   max(32 * 1024 * 1024, cap - 16 * 1024 * 1024)))


_VMEM_LIMIT = _vmem_limit_bytes()


def _cparams():
    return pltpu.CompilerParams(dimension_semantics=("parallel",),
                                vmem_limit_bytes=_VMEM_LIMIT)


# ---------------------------------------------------------------------------
# In-kernel helpers (values already resident in VMEM / vregs)
# ---------------------------------------------------------------------------
def _pad_hw1(x3d):
    """Zero-pad an (H, W, C) value by 1 on each spatial side (VMEM only)."""
    h, w, c = x3d.shape
    zr = jnp.zeros((1, w, c), x3d.dtype)
    x3d = jnp.concatenate([zr, x3d, zr], axis=0)            # (h+2, w, c)
    zc = jnp.zeros((h + 2, 1, c), x3d.dtype)
    return jnp.concatenate([zc, x3d, zc], axis=1)           # (h+2, w+2, c)


def _conv3x3(xpad, w_ref, ho, wo, stride):
    """3x3 conv on a padded (H+2, W+2, C) slab: nine shifted (M,C)x(C,Cout)
    MXU matmuls with f32 accumulation. w_ref is a resident (9, C, Cout) ref."""
    c = xpad.shape[-1]
    acc = None
    for dy in range(3):
        for dx in range(3):
            if stride == 1:
                sl = xpad[dy:dy + ho, dx:dx + wo, :]
            else:
                # TODO(synk): stride > 1 uses a strided value slice; it is not
                # exercised by the self-test below.
                sl = xpad[dy:dy + (ho - 1) * stride + 1:stride,
                          dx:dx + (wo - 1) * stride + 1:stride, :]
            part = jnp.dot(sl.reshape(ho * wo, c), w_ref[dy * 3 + dx],
                           preferred_element_type=jnp.float32)
            acc = part if acc is None else acc + part
    return acc                                               # (ho*wo, Cout) f32


def _emit_conv_out(y, y_ref, s_ref, q_ref, ho, wo):
    """Store the conv tile (bf16) plus per-channel sum / sum-of-squares."""
    y_ref[0] = y.reshape(ho, wo, -1).astype(y_ref.dtype)
    s_ref[0] = jnp.sum(y, axis=0, keepdims=True)
    q_ref[0] = jnp.sum(y * y, axis=0, keepdims=True)


# ---------------------------------------------------------------------------
# Pallas kernels (grid = (batch,); one image per step; all axes "parallel")
# ---------------------------------------------------------------------------
def conv1_kernel(x_ref, w1_ref, y1_ref, s1_ref, q1_ref, *, stride, ho, wo):
    y = _conv3x3(_pad_hw1(x_ref[0]), w1_ref, ho, wo, stride)
    _emit_conv_out(y, y1_ref, s1_ref, q1_ref, ho, wo)


def conv1_proj_kernel(x_ref, w1_ref, wsc_ref, y1_ref, ysc_ref,
                      s1_ref, q1_ref, ssc_ref, qsc_ref, *, stride, ho, wo):
    xv = x_ref[0]
    y = _conv3x3(_pad_hw1(xv), w1_ref, ho, wo, stride)
    _emit_conv_out(y, y1_ref, s1_ref, q1_ref, ho, wo)
    # Fused 1x1 projection shortcut: reuses the activation tile already in VMEM.
    if stride == 1:
        xc = xv
    else:
        xc = xv[::stride, ::stride, :]
    ysc = jnp.dot(xc.reshape(ho * wo, xv.shape[-1]), wsc_ref[...],
                  preferred_element_type=jnp.float32)
    _emit_conv_out(ysc, ysc_ref, ssc_ref, qsc_ref, ho, wo)


def conv2_kernel(y1_ref, w2_ref, sc1_ref, sh1_ref, y2_ref, s2_ref, q2_ref,
                 *, ho, wo):
    # Fused BN1-apply + ReLU prologue (scale/shift folded in the wrapper).
    h1 = jnp.maximum(
        y1_ref[0].astype(jnp.float32) * sc1_ref[...] + sh1_ref[...], 0.0)
    y = _conv3x3(_pad_hw1(h1.astype(jnp.bfloat16)), w2_ref, ho, wo, 1)
    _emit_conv_out(y, y2_ref, s2_ref, q2_ref, ho, wo)


def bn_add_relu_proj_kernel(y2_ref, ysc_ref, sc2_ref, sh2_ref, scs_ref, shs_ref,
                            o_ref):
    left = y2_ref[0].astype(jnp.float32) * sc2_ref[...] + sh2_ref[...]
    short = ysc_ref[0].astype(jnp.float32) * scs_ref[...] + shs_ref[...]
    o_ref[0] = jnp.maximum(left + short, 0.0).astype(o_ref.dtype)


def bn_add_relu_id_kernel(y2_ref, xsc_ref, sc2_ref, sh2_ref, o_ref):
    left = y2_ref[0].astype(jnp.float32) * sc2_ref[...] + sh2_ref[...]
    o_ref[0] = jnp.maximum(left + xsc_ref[0].astype(jnp.float32),
                           0.0).astype(o_ref.dtype)


# ---------------------------------------------------------------------------
# pallas_call wrappers
# ---------------------------------------------------------------------------
def _batch_spec(inner_shape):
    nd = len(inner_shape)
    return pl.BlockSpec((1,) + tuple(inner_shape), lambda b: (b,) + (0,) * nd)


def _const_spec(shape):
    nd = len(shape)
    return pl.BlockSpec(tuple(shape), lambda b: (0,) * nd)


def _conv1_call(x, w1, wsc, *, stride, ho, wo, cp_out):
    b, h, w, cp_in = x.shape
    img = jax.ShapeDtypeStruct((b, ho, wo, cp_out), jnp.bfloat16)
    stat = jax.ShapeDtypeStruct((b, 1, cp_out), jnp.float32)
    if wsc is None:
        kern = functools.partial(conv1_kernel, stride=stride, ho=ho, wo=wo)
        in_specs = [_batch_spec((h, w, cp_in)), _const_spec(w1.shape)]
        out_shape = (img, stat, stat)
        out_specs = (_batch_spec((ho, wo, cp_out)),
                     _batch_spec((1, cp_out)), _batch_spec((1, cp_out)))
        args = (x, w1)
    else:
        kern = functools.partial(conv1_proj_kernel, stride=stride, ho=ho, wo=wo)
        in_specs = [_batch_spec((h, w, cp_in)), _const_spec(w1.shape),
                    _const_spec(wsc.shape)]
        out_shape = (img, img, stat, stat, stat, stat)
        out_specs = (_batch_spec((ho, wo, cp_out)), _batch_spec((ho, wo, cp_out)),
                     _batch_spec((1, cp_out)), _batch_spec((1, cp_out)),
                     _batch_spec((1, cp_out)), _batch_spec((1, cp_out)))
        args = (x, w1, wsc)
    return pl.pallas_call(
        kern, out_shape=out_shape, grid=(b,),
        in_specs=in_specs, out_specs=out_specs,
        compiler_params=_cparams())(*args)


def _conv2_call(y1, w2, scale1, shift1):
    b, ho, wo, cp = y1.shape
    stat = jax.ShapeDtypeStruct((b, 1, cp), jnp.float32)
    return pl.pallas_call(
        functools.partial(conv2_kernel, ho=ho, wo=wo),
        out_shape=(jax.ShapeDtypeStruct((b, ho, wo, cp), jnp.bfloat16),
                   stat, stat),
        grid=(b,),
        in_specs=[_batch_spec((ho, wo, cp)), _const_spec(w2.shape),
                  _const_spec(scale1.shape), _const_spec(shift1.shape)],
        out_specs=(_batch_spec((ho, wo, cp)),
                   _batch_spec((1, cp)), _batch_spec((1, cp))),
        compiler_params=_cparams())(y1, w2, scale1, shift1)


def _finalize_call(y2, short, scale2, shift2, scale_sc=None, shift_sc=None):
    b, ho, wo, cp = y2.shape
    if scale_sc is None:
        kern = bn_add_relu_id_kernel
        in_specs = [_batch_spec((ho, wo, cp)), _batch_spec((ho, wo, cp)),
                    _const_spec(scale2.shape), _const_spec(shift2.shape)]
        args = (y2, short, scale2, shift2)
    else:
        kern = bn_add_relu_proj_kernel
        in_specs = [_batch_spec((ho, wo, cp)), _batch_spec((ho, wo, cp)),
                    _const_spec(scale2.shape), _const_spec(shift2.shape),
                    _const_spec(scale_sc.shape), _const_spec(shift_sc.shape)]
        args = (y2, short, scale2, shift2, scale_sc, shift_sc)
    return pl.pallas_call(
        kern,
        out_shape=jax.ShapeDtypeStruct((b, ho, wo, cp), jnp.float32),
        grid=(b,),
        in_specs=in_specs,
        out_specs=_batch_spec((ho, wo, cp)),
        compiler_params=_cparams())(*args)


# ---------------------------------------------------------------------------
# Wrapper-side glue: BN fold, weight layout, channel lane padding
# ---------------------------------------------------------------------------
def _fold_bn(ssum, ssq, gamma, beta, count, cp):
    """Per-image partial (sum, sum_sq) -> per-channel BN (scale, shift), f32."""
    mean = jnp.sum(ssum, axis=0) / count                         # (1, cp)
    ex2 = jnp.sum(ssq, axis=0) / count
    var = jnp.maximum(ex2 - mean * mean, 0.0)                    # cancellation guard
    g = jnp.pad(gamma, (0, cp - gamma.shape[0])).reshape(1, cp).astype(jnp.float32)
    bv = jnp.pad(beta, (0, cp - beta.shape[0])).reshape(1, cp).astype(jnp.float32)
    scale = g * lax.rsqrt(var + _BN_EPS)
    shift = bv - mean * scale
    return scale.reshape(1, 1, cp), shift.reshape(1, 1, cp)


def _w3x3(w_oihw, cp_in, cp_out):
    """(Cout, Cin, 3, 3) -> (9, cp_in, cp_out), tap-major, zero-padded, bf16."""
    cout, cin = w_oihw.shape[0], w_oihw.shape[1]
    w = jnp.transpose(w_oihw, (2, 3, 1, 0)).reshape(9, cin, cout)
    w = jnp.pad(w, ((0, 0), (0, cp_in - cin), (0, cp_out - cout)))
    return w.astype(jnp.bfloat16)


def _w1x1(w_oi11, cp_in, cp_out):
    cout, cin = w_oi11.shape[0], w_oi11.shape[1]
    w = jnp.transpose(w_oi11[:, :, 0, 0], (1, 0))
    w = jnp.pad(w, ((0, cp_in - cin), (0, cp_out - cout)))
    return w.astype(jnp.bfloat16)


# ---------------------------------------------------------------------------
# ResidualBlock forward
# ---------------------------------------------------------------------------
def residual_block_forward(x_nchw, params, stride=1):
    b, cin, h, w = x_nchw.shape
    cout = params["w1"].shape[0]
    ho = (h + 2 - 3) // stride + 1
    wo = (w + 2 - 3) // stride + 1
    use_proj = "wsc" in params
    count = float(b * ho * wo)                       # static BN reduction count

    cp_in = _ru(cin, _LANES)
    cp_out = _ru(cout, _LANES)

    # NHWC bf16 MXU inputs; channels zero-padded to a lane-dense 128 multiple.
    x = jnp.transpose(x_nchw, (0, 2, 3, 1)).astype(jnp.bfloat16)
    x = jnp.pad(x, ((0, 0), (0, 0), (0, 0), (0, cp_in - cin)))

    w1 = _w3x3(params["w1"], cp_in, cp_out)
    w2 = _w3x3(params["w2"], cp_out, cp_out)
    wsc = _w1x1(params["wsc"], cp_in, cp_out) if use_proj else None

    # ---- stage 1: Conv3x3(stride) (+ fused 1x1 projection) + stats ----
    outs = _conv1_call(x, w1, wsc, stride=stride, ho=ho, wo=wo, cp_out=cp_out)
    if use_proj:
        y1, ysc, s1, q1, ssc, qsc = outs
        scale_sc, shift_sc = _fold_bn(ssc, qsc, params["gsc"], params["bsc"],
                                      count, cp_out)
    else:
        y1, s1, q1 = outs
    scale1, shift1 = _fold_bn(s1, q1, params["g1"], params["b1"], count, cp_out)

    # ---- stage 2: fused BN1+ReLU prologue -> Conv3x3(1) + stats ----
    y2, s2, q2 = _conv2_call(y1, w2, scale1, shift1)
    scale2, shift2 = _fold_bn(s2, q2, params["g2"], params["b2"], count, cp_out)

    # ---- finalize: BN2 (+ BN_sc) + residual add + ReLU, fused ----
    if use_proj:
        out = _finalize_call(y2, ysc, scale2, shift2, scale_sc, shift_sc)
    else:
        out = _finalize_call(y2, x, scale2, shift2)  # identity: stride==1, cin==cout

    out = out[..., :cout]                            # drop lane padding
    return jnp.transpose(out, (0, 3, 1, 2))          # NHWC -> NCHW


# ---------------------------------------------------------------------------
# Deterministic parameter init (matches PyTorch module shapes / defaults)
# ---------------------------------------------------------------------------
def init_params(key, cin, cout, stride):
    k1, k2, k3 = jax.random.split(key, 3)
    p = {
        "w1": jax.random.normal(k1, (cout, cin, 3, 3), jnp.float32) * 0.1,
        "g1": jnp.ones((cout,), jnp.float32),
        "b1": jnp.zeros((cout,), jnp.float32),
        "w2": jax.random.normal(k2, (cout, cout, 3, 3), jnp.float32) * 0.1,
        "g2": jnp.ones((cout,), jnp.float32),
        "b2": jnp.zeros((cout,), jnp.float32),
    }
    if stride != 1 or cin != cout:
        p["wsc"] = jax.random.normal(k3, (cout, cin, 1, 1), jnp.float32) * 0.1
        p["gsc"] = jnp.ones((cout,), jnp.float32)
        p["bsc"] = jnp.zeros((cout,), jnp.float32)
    return p


# ---------------------------------------------------------------------------
# Pure-JAX reference (mirrors PyTorch forward with train-mode BatchNorm)
# ---------------------------------------------------------------------------
def reference_forward(x, p, stride):
    def conv(x, w, s, pad):
        return lax.conv_general_dilated(
            x, w, (s, s), ((pad, pad), (pad, pad)),
            dimension_numbers=("NCHW", "OIHW", "NCHW"),
            precision=lax.Precision.HIGHEST)

    def bn(x, g, b):
        mu = jnp.mean(x, axis=(0, 2, 3), keepdims=True)
        v = jnp.mean((x - mu) ** 2, axis=(0, 2, 3), keepdims=True)
        return ((x - mu) / jnp.sqrt(v + _BN_EPS)) * g.reshape(1, -1, 1, 1) \
            + b.reshape(1, -1, 1, 1)

    h = jax.nn.relu(bn(conv(x, p["w1"], stride, 1), p["g1"], p["b1"]))
    left = bn(conv(h, p["w2"], 1, 1), p["g2"], p["b2"])
    if "wsc" in p:
        sc = bn(conv(x, p["wsc"], stride, 0), p["gsc"], p["bsc"])
    else:
        sc = x
    return jax.nn.relu(left + sc)


if __name__ == "__main__":
    key = jax.random.PRNGKey(0)
    configs = [
        dict(B=2, CIN=4, COUT=8, H=16, W=16, STRIDE=1),   # projection shortcut
        dict(B=2, CIN=8, COUT=8, H=16, W=16, STRIDE=1),   # identity shortcut
    ]
    for cfg in configs:
        kx, kp, key = jax.random.split(key, 3)
        x = jax.random.normal(kx, (cfg["B"], cfg["CIN"], cfg["H"], cfg["W"]),
                              jnp.float32)
        params = init_params(kp, cfg["CIN"], cfg["COUT"], cfg["STRIDE"])
        fwd = jax.jit(functools.partial(residual_block_forward,
                                        stride=cfg["STRIDE"]))
        out = jax.block_until_ready(fwd(x, params))
        ref = reference_forward(x, params, cfg["STRIDE"])
        assert out.shape == ref.shape, (out.shape, ref.shape)
        max_err = float(jnp.max(jnp.abs(out - ref)))
        assert jnp.allclose(out, ref, atol=5e-2, rtol=5e-2), max_err
    print("KERNEL_OK")
</pallas_src>

<mosaic_0001>
module attributes {stable_mosaic.version = 11 : i64} {
  func.func @conv1_proj_kernel(%arg0: i32, %arg1: memref<1x16x16x128xbf16, #tpu.memory_space<vmem>>, %arg2: memref<9x128x128xbf16, #tpu.memory_space<vmem>>, %arg3: memref<128x128xbf16, #tpu.memory_space<vmem>>, %arg4: memref<1x16x16x128xbf16, #tpu.memory_space<vmem>>, %arg5: memref<1x16x16x128xbf16, #tpu.memory_space<vmem>>, %arg6: memref<1x1x128xf32, #tpu.memory_space<vmem>>, %arg7: memref<1x1x128xf32, #tpu.memory_space<vmem>>, %arg8: memref<1x1x128xf32, #tpu.memory_space<vmem>>, %arg9: memref<1x1x128xf32, #tpu.memory_space<vmem>>) attributes {dimension_semantics = [#tpu.dimension_semantics<parallel>], iteration_bounds = array<i64: 2>, scalar_prefetch = 0 : i64, scratch_operands = 0 : i64, tpu.core_type = #tpu.core_type<tc>, window_params = [{transform_indices = @transform_0, window_bounds = array<i64: 1, 16, 16, 128>}, {pipeline_mode = #tpu.pipeline_mode<synchronous>, transform_indices = @transform_1, window_bounds = array<i64: 9, 128, 128>}, {pipeline_mode = #tpu.pipeline_mode<synchronous>, transform_indices = @transform_2, window_bounds = array<i64: 128, 128>}, {transform_indices = @transform_3, window_bounds = array<i64: 1, 16, 16, 128>}, {transform_indices = @transform_4, window_bounds = array<i64: 1, 16, 16, 128>}, {transform_indices = @transform_5, window_bounds = array<i64: 1, 1, 128>}, {transform_indices = @transform_6, window_bounds = array<i64: 1, 1, 128>}, {transform_indices = @transform_7, window_bounds = array<i64: 1, 1, 128>}, {transform_indices = @transform_8, window_bounds = array<i64: 1, 1, 128>}]} {
    %c0 = arith.constant 0 : index
    %c0_0 = arith.constant 0 : index
    %c0_1 = arith.constant 0 : index
    %c0_2 = arith.constant 0 : index
    %0 = vector.load %arg1[%c0, %c0_0, %c0_1, %c0_2] : memref<1x16x16x128xbf16, #tpu.memory_space<vmem>>, vector<1x16x16x128xbf16>
    %1 = vector.shape_cast %0 : vector<1x16x16x128xbf16> to vector<16x16x128xbf16>
    %cst = arith.constant 0.000000e+00 : bf16
    %2 = vector.broadcast %cst : bf16 to vector<1x16x128xbf16>
    %3 = tpu.concatenate %2, %1, %2 in 0 : vector<1x16x128xbf16>, vector<16x16x128xbf16>, vector<1x16x128xbf16> -> vector<18x16x128xbf16>
    %cst_3 = arith.constant 0.000000e+00 : bf16
    %4 = vector.broadcast %cst_3 : bf16 to vector<18x1x128xbf16>
    %5 = tpu.concatenate %4, %3, %4 in 1 : vector<18x1x128xbf16>, vector<18x16x128xbf16>, vector<18x1x128xbf16> -> vector<18x18x128xbf16>
    %6 = vector.extract_strided_slice %5 {offsets = [0, 0, 0], sizes = [16, 16, 128], strides = [1, 1, 1]} : vector<18x18x128xbf16> to vector<16x16x128xbf16>
    %7 = vector.shape_cast %6 : vector<16x16x128xbf16> to vector<256x128xbf16>
    %c0_4 = arith.constant 0 : index
    %c0_5 = arith.constant 0 : index
    %c0_6 = arith.constant 0 : index
    %8 = vector.load %arg2[%c0_4, %c0_5, %c0_6] : memref<9x128x128xbf16, #tpu.memory_space<vmem>>, vector<1x128x128xbf16>
    %9 = vector.shape_cast %8 : vector<1x128x128xbf16> to vector<128x128xbf16>
    %cst_7 = arith.constant dense<0.000000e+00> : vector<256x128xf32>
    %10 = tpu.matmul %7, %9, %cst_7 {dimension_numbers = #tpu.dot_dimension_numbers<[1], [0], [0], [1], [0, 0, 1, 1], [], []>} : vector<256x128xbf16>, vector<128x128xbf16>, vector<256x128xf32> -> vector<256x128xf32>
    %11 = vector.extract_strided_slice %5 {offsets = [0, 1, 0], sizes = [16, 16, 128], strides = [1, 1, 1]} : vector<18x18x128xbf16> to vector<16x16x128xbf16>
    %12 = vector.shape_cast %11 : vector<16x16x128xbf16> to vector<256x128xbf16>
    %c1 = arith.constant 1 : index
    %c0_8 = arith.constant 0 : index
    %c0_9 = arith.constant 0 : index
    %13 = vector.load %arg2[%c1, %c0_8, %c0_9] : memref<9x128x128xbf16, #tpu.memory_space<vmem>>, vector<1x128x128xbf16>
    %14 = vector.shape_cast %13 : vector<1x128x128xbf16> to vector<128x128xbf16>
    %cst_10 = arith.constant dense<0.000000e+00> : vector<256x128xf32>
    %15 = tpu.matmul %12, %14, %cst_10 {dimension_numbers = #tpu.dot_dimension_numbers<[1], [0], [0], [1], [0, 0, 1, 1], [], []>} : vector<256x128xbf16>, vector<128x128xbf16>, vector<256x128xf32> -> vector<256x128xf32>
    %16 = arith.addf %10, %15 : vector<256x128xf32>
    %17 = vector.extract_strided_slice %5 {offsets = [0, 2, 0], sizes = [16, 16, 128], strides = [1, 1, 1]} : vector<18x18x128xbf16> to vector<16x16x128xbf16>
    %18 = vector.shape_cast %17 : vector<16x16x128xbf16> to vector<256x128xbf16>
    %c2 = arith.constant 2 : index
    %c0_11 = arith.constant 0 : index
    %c0_12 = arith.constant 0 : index
    %19 = vector.load %arg2[%c2, %c0_11, %c0_12] : memref<9x128x128xbf16, #tpu.memory_space<vmem>>, vector<1x128x128xbf16>
    %20 = vector.shape_cast %19 : vector<1x128x128xbf16> to vector<128x128xbf16>
    %cst_13 = arith.constant dense<0.000000e+00> : vector<256x128xf32>
    %21 = tpu.matmul %18, %20, %cst_13 {dimension_numbers = #tpu.dot_dimension_numbers<[1], [0], [0], [1], [0, 0, 1, 1], [], []>} : vector<256x128xbf16>, vector<128x128xbf16>, vector<256x128xf32> -> vector<256x128xf32>
    %22 = arith.addf %16, %21 : vector<256x128xf32>
    %23 = vector.extract_strided_slice %5 {offsets = [1, 0, 0], sizes = [16, 16, 128], strides = [1, 1, 1]} : vector<18x18x128xbf16> to vector<16x16x128xbf16>
    %24 = vector.shape_cast %23 : vector<16x16x128xbf16> to vector<256x128xbf16>
    %c3 = arith.constant 3 : index
    %c0_14 = arith.constant 0 : index
    %c0_15 = arith.constant 0 : index
    %25 = vector.load %arg2[%c3, %c0_14, %c0_15] : memref<9x128x128xbf16, #tpu.memory_space<vmem>>, vector<1x128x128xbf16>
    %26 = vector.shape_cast %25 : vector<1x128x128xbf16> to vector<128x128xbf16>
    %cst_16 = arith.constant dense<0.000000e+00> : vector<256x128xf32>
    %27 = tpu.matmul %24, %26, %cst_16 {dimension_numbers = #tpu.dot_dimension_numbers<[1], [0], [0], [1], [0, 0, 1, 1], [], []>} : vector<256x128xbf16>, vector<128x128xbf16>, vector<256x128xf32> -> vector<256x128xf32>
    %28 = arith.addf %22, %27 : vector<256x128xf32>
    %29 = vector.extract_strided_slice %5 {offsets = [1, 1, 0], sizes = [16, 16, 128], strides = [1, 1, 1]} : vector<18x18x128xbf16> to vector<16x16x128xbf16>
    %30 = vector.shape_cast %29 : vector<16x16x128xbf16> to vector<256x128xbf16>
    %c4 = arith.constant 4 : index
    %c0_17 = arith.constant 0 : index
    %c0_18 = arith.constant 0 : index
    %31 = vector.load %arg2[%c4, %c0_17, %c0_18] : memref<9x128x128xbf16, #tpu.memory_space<vmem>>, vector<1x128x128xbf16>
    %32 = vector.shape_cast %31 : vector<1x128x128xbf16> to vector<128x128xbf16>
    %cst_19 = arith.constant dense<0.000000e+00> : vector<256x128xf32>
    %33 = tpu.matmul %30, %32, %cst_19 {dimension_numbers = #tpu.dot_dimension_numbers<[1], [0], [0], [1], [0, 0, 1, 1], [], []>} : vector<256x128xbf16>, vector<128x128xbf16>, vector<256x128xf32> -> vector<256x128xf32>
    %34 = arith.addf %28, %33 : vector<256x128xf32>
    %35 = vector.extract_strided_slice %5 {offsets = [1, 2, 0], sizes = [16, 16, 128], strides = [1, 1, 1]} : vector<18x18x128xbf16> to vector<16x16x128xbf16>
    %36 = vector.shape_cast %35 : vector<16x16x128xbf16> to vector<256x128xbf16>
    %c5 = arith.constant 5 : index
    %c0_20 = arith.constant 0 : index
    %c0_21 = arith.constant 0 : index
    %37 = vector.load %arg2[%c5, %c0_20, %c0_21] : memref<9x128x128xbf16, #tpu.memory_space<vmem>>, vector<1x128x128xbf16>
    %38 = vector.shape_cast %37 : vector<1x128x128xbf16> to vector<128x128xbf16>
    %cst_22 = arith.constant dense<0.000000e+00> : vector<256x128xf32>
    %39 = tpu.matmul %36, %38, %cst_22 {dimension_numbers = #tpu.dot_dimension_numbers<[1], [0], [0], [1], [0, 0, 1, 1], [], []>} : vector<256x128xbf16>, vector<128x128xbf16>, vector<256x128xf32> -> vector<256x128xf32>
    %40 = arith.addf %34, %39 : vector<256x128xf32>
    %41 = vector.extract_strided_slice %5 {offsets = [2, 0, 0], sizes = [16, 16, 128], strides = [1, 1, 1]} : vector<18x18x128xbf16> to vector<16x16x128xbf16>
    %42 = vector.shape_cast %41 : vector<16x16x128xbf16> to vector<256x128xbf16>
    %c6 = arith.constant 6 : index
    %c0_23 = arith.constant 0 : index
    %c0_24 = arith.constant 0 : index
    %43 = vector.load %arg2[%c6, %c0_23, %c0_24] : memref<9x128x128xbf16, #tpu.memory_space<vmem>>, vector<1x128x128xbf16>
    %44 = vector.shape_cast %43 : vector<1x128x128xbf16> to vector<128x128xbf16>
    %cst_25 = arith.constant dense<0.000000e+00> : vector<256x128xf32>
    %45 = tpu.matmul %42, %44, %cst_25 {dimension_numbers = #tpu.dot_dimension_numbers<[1], [0], [0], [1], [0, 0, 1, 1], [], []>} : vector<256x128xbf16>, vector<128x128xbf16>, vector<256x128xf32> -> vector<256x128xf32>
    %46 = arith.addf %40, %45 : vector<256x128xf32>
    %47 = vector.extract_strided_slice %5 {offsets = [2, 1, 0], sizes = [16, 16, 128], strides = [1, 1, 1]} : vector<18x18x128xbf16> to vector<16x16x128xbf16>
    %48 = vector.shape_cast %47 : vector<16x16x128xbf16> to vector<256x128xbf16>
    %c7 = arith.constant 7 : index
    %c0_26 = arith.constant 0 : index
    %c0_27 = arith.constant 0 : index
    %49 = vector.load %arg2[%c7, %c0_26, %c0_27] : memref<9x128x128xbf16, #tpu.memory_space<vmem>>, vector<1x128x128xbf16>
    %50 = vector.shape_cast %49 : vector<1x128x128xbf16> to vector<128x128xbf16>
    %cst_28 = arith.constant dense<0.000000e+00> : vector<256x128xf32>
    %51 = tpu.matmul %48, %50, %cst_28 {dimension_numbers = #tpu.dot_dimension_numbers<[1], [0], [0], [1], [0, 0, 1, 1], [], []>} : vector<256x128xbf16>, vector<128x128xbf16>, vector<256x128xf32> -> vector<256x128xf32>
    %52 = arith.addf %46, %51 : vector<256x128xf32>
    %53 = vector.extract_strided_slice %5 {offsets = [2, 2, 0], sizes = [16, 16, 128], strides = [1, 1, 1]} : vector<18x18x128xbf16> to vector<16x16x128xbf16>
    %54 = vector.shape_cast %53 : vector<16x16x128xbf16> to vector<256x128xbf16>
    %c8 = arith.constant 8 : index
    %c0_29 = arith.constant 0 : index
    %c0_30 = arith.constant 0 : index
    %55 = vector.load %arg2[%c8, %c0_29, %c0_30] : memref<9x128x128xbf16, #tpu.memory_space<vmem>>, vector<1x128x128xbf16>
    %56 = vector.shape_cast %55 : vector<1x128x128xbf16> to vector<128x128xbf16>
    %cst_31 = arith.constant dense<0.000000e+00> : vector<256x128xf32>
    %57 = tpu.matmul %54, %56, %cst_31 {dimension_numbers = #tpu.dot_dimension_numbers<[1], [0], [0], [1], [0, 0, 1, 1], [], []>} : vector<256x128xbf16>, vector<128x128xbf16>, vector<256x128xf32> -> vector<256x128xf32>
    %58 = arith.addf %52, %57 : vector<256x128xf32>
    %59 = vector.shape_cast %58 : vector<256x128xf32> to vector<16x16x128xf32>
    %60 = arith.truncf %59 : vector<16x16x128xf32> to vector<16x16x128xbf16>
    %c0_32 = arith.constant 0 : index
    %c0_33 = arith.constant 0 : index
    %c0_34 = arith.constant 0 : index
    %c0_35 = arith.constant 0 : index
    %61 = vector.load %arg4[%c0_32, %c0_33, %c0_34, %c0_35] : memref<1x16x16x128xbf16, #tpu.memory_space<vmem>>, vector<1x16x16x128xbf16>
    %62 = vector.shape_cast %61 : vector<1x16x16x128xbf16> to vector<16x16x128xbf16>
    %63 = vector.shape_cast %60 : vector<16x16x128xbf16> to vector<1x16x16x128xbf16>
    tpu.vector_store %arg4[%c0_32, %c0_33, %c0_34, %c0_35], %63 {strides = array<i32>} : memref<1x16x16x128xbf16, #tpu.memory_space<vmem>>, vector<1x16x16x128xbf16>,
    %cst_36 = arith.constant dense<0.000000e+00> : vector<128xf32>
    %64 = vector.multi_reduction <add>, %58, %cst_36 [0] : vector<256x128xf32> to vector<128xf32>
    %65 = vector.shape_cast %64 : vector<128xf32> to vector<1x128xf32>
    %c0_37 = arith.constant 0 : index
    %c0_38 = arith.constant 0 : index
    %c0_39 = arith.constant 0 : index
    %66 = vector.load %arg6[%c0_37, %c0_38, %c0_39] : memref<1x1x128xf32, #tpu.memory_space<vmem>>, vector<1x1x128xf32>
    %67 = vector.shape_cast %66 : vector<1x1x128xf32> to vector<1x128xf32>
    %68 = vector.shape_cast %65 : vector<1x128xf32> to vector<1x1x128xf32>
    tpu.vector_store %arg6[%c0_37, %c0_38, %c0_39], %68 {strides = array<i32>} : memref<1x1x128xf32, #tpu.memory_space<vmem>>, vector<1x1x128xf32>,
    %69 = arith.mulf %58, %58 : vector<256x128xf32>
    %cst_40 = arith.constant dense<0.000000e+00> : vector<128xf32>
    %70 = vector.multi_reduction <add>, %69, %cst_40 [0] : vector<256x128xf32> to vector<128xf32>
    %71 = vector.shape_cast %70 : vector<128xf32> to vector<1x128xf32>
    %c0_41 = arith.constant 0 : index
    %c0_42 = arith.constant 0 : index
    %c0_43 = arith.constant 0 : index
    %72 = vector.load %arg7[%c0_41, %c0_42, %c0_43] : memref<1x1x128xf32, #tpu.memory_space<vmem>>, vector<1x1x128xf32>
    %73 = vector.shape_cast %72 : vector<1x1x128xf32> to vector<1x128xf32>
    %74 = vector.shape_cast %71 : vector<1x128xf32> to vector<1x1x128xf32>
    tpu.vector_store %arg7[%c0_41, %c0_42, %c0_43], %74 {strides = array<i32>} : memref<1x1x128xf32, #tpu.memory_space<vmem>>, vector<1x1x128xf32>,
    %75 = vector.shape_cast %1 : vector<16x16x128xbf16> to vector<256x128xbf16>
    %c0_44 = arith.constant 0 : index
    %c0_45 = arith.constant 0 : index
    %76 = vector.load %arg3[%c0_44, %c0_45] : memref<128x128xbf16, #tpu.memory_space<vmem>>, vector<128x128xbf16>
    %cst_46 = arith.constant dense<0.000000e+00> : vector<256x128xf32>
    %77 = tpu.matmul %75, %76, %cst_46 {dimension_numbers = #tpu.dot_dimension_numbers<[1], [0], [0], [1], [0, 0, 1, 1], [], []>} : vector<256x128xbf16>, vector<128x128xbf16>, vector<256x128xf32> -> vector<256x128xf32>
    %78 = vector.shape_cast %77 : vector<256x128xf32> to vector<16x16x128xf32>
    %79 = arith.truncf %78 : vector<16x16x128xf32> to vector<16x16x128xbf16>
    %c0_47 = arith.constant 0 : index
    %c0_48 = arith.constant 0 : index
    %c0_49 = arith.constant 0 : index
    %c0_50 = arith.constant 0 : index
    %80 = vector.load %arg5[%c0_47, %c0_48, %c0_49, %c0_50] : memref<1x16x16x128xbf16, #tpu.memory_space<vmem>>, vector<1x16x16x128xbf16>
    %81 = vector.shape_cast %80 : vector<1x16x16x128xbf16> to vector<16x16x128xbf16>
    %82 = vector.shape_cast %79 : vector<16x16x128xbf16> to vector<1x16x16x128xbf16>
    tpu.vector_store %arg5[%c0_47, %c0_48, %c0_49, %c0_50], %82 {strides = array<i32>} : memref<1x16x16x128xbf16, #tpu.memory_space<vmem>>, vector<1x16x16x128xbf16>,
    %cst_51 = arith.constant dense<0.000000e+00> : vector<128xf32>
    %83 = vector.multi_reduction <add>, %77, %cst_51 [0] : vector<256x128xf32> to vector<128xf32>
    %84 = vector.shape_cast %83 : vector<128xf32> to vector<1x128xf32>
    %c0_52 = arith.constant 0 : index
    %c0_53 = arith.constant 0 : index
    %c0_54 = arith.constant 0 : index
    %85 = vector.load %arg8[%c0_52, %c0_53, %c0_54] : memref<1x1x128xf32, #tpu.memory_space<vmem>>, vector<1x1x128xf32>
    %86 = vector.shape_cast %85 : vector<1x1x128xf32> to vector<1x128xf32>
    %87 = vector.shape_cast %84 : vector<1x128xf32> to vector<1x1x128xf32>
    tpu.vector_store %arg8[%c0_52, %c0_53, %c0_54], %87 {strides = array<i32>} : memref<1x1x128xf32, #tpu.memory_space<vmem>>, vector<1x1x128xf32>,
    %88 = arith.mulf %77, %77 : vector<256x128xf32>
    %cst_55 = arith.constant dense<0.000000e+00> : vector<128xf32>
    %89 = vector.multi_reduction <add>, %88, %cst_55 [0] : vector<256x128xf32> to vector<128xf32>
    %90 = vector.shape_cast %89 : vector<128xf32> to vector<1x128xf32>
    %c0_56 = arith.constant 0 : index
    %c0_57 = arith.constant 0 : index
    %c0_58 = arith.constant 0 : index
    %91 = vector.load %arg9[%c0_56, %c0_57, %c0_58] : memref<1x1x128xf32, #tpu.memory_space<vmem>>, vector<1x1x128xf32>
    %92 = vector.shape_cast %91 : vector<1x1x128xf32> to vector<1x128xf32>
    %93 = vector.shape_cast %90 : vector<1x128xf32> to vector<1x1x128xf32>
    tpu.vector_store %arg9[%c0_56, %c0_57, %c0_58], %93 {strides = array<i32>} : memref<1x1x128xf32, #tpu.memory_space<vmem>>, vector<1x1x128xf32>,
    return
  }
  func.func @transform_0(%arg0: i32) -> (i32, i32, i32, i32) {
    %c0_i32 = arith.constant 0 : i32
    %c0_i32_0 = arith.constant 0 : i32
    %c0_i32_1 = arith.constant 0 : i32
    %c0_i32_2 = arith.constant 0 : i32
    return %arg0, %c0_i32, %c0_i32_0, %c0_i32_1 : i32, i32, i32, i32
  }
  func.func @transform_1(%arg0: i32) -> (i32, i32, i32) {
    %c0_i32 = arith.constant 0 : i32
    %c0_i32_0 = arith.constant 0 : i32
    %c0_i32_1 = arith.constant 0 : i32
    %c0_i32_2 = arith.constant 0 : i32
    return %c0_i32, %c0_i32_0, %c0_i32_1 : i32, i32, i32
  }
  func.func @transform_2(%arg0: i32) -> (i32, i32) {
    %c0_i32 = arith.constant 0 : i32
    %c0_i32_0 = arith.constant 0 : i32
    %c0_i32_1 = arith.constant 0 : i32
    return %c0_i32, %c0_i32_0 : i32, i32
  }
  func.func @transform_3(%arg0: i32) -> (i32, i32, i32, i32) {
    %c0_i32 = arith.constant 0 : i32
    %c0_i32_0 = arith.constant 0 : i32
    %c0_i32_1 = arith.constant 0 : i32
    %c0_i32_2 = arith.constant 0 : i32
    return %arg0, %c0_i32, %c0_i32_0, %c0_i32_1 : i32, i32, i32, i32
  }
  func.func @transform_4(%arg0: i32) -> (i32, i32, i32, i32) {
    %c0_i32 = arith.constant 0 : i32
    %c0_i32_0 = arith.constant 0 : i32
    %c0_i32_1 = arith.constant 0 : i32
    %c0_i32_2 = arith.constant 0 : i32
    return %arg0, %c0_i32, %c0_i32_0, %c0_i32_1 : i32, i32, i32, i32
  }
  func.func @transform_5(%arg0: i32) -> (i32, i32, i32) {
    %c0_i32 = arith.constant 0 : i32
    %c0_i32_0 = arith.constant 0 : i32
    %c0_i32_1 = arith.constant 0 : i32
    return %arg0, %c0_i32, %c0_i32_0 : i32, i32, i32
  }
  func.func @transform_6(%arg0: i32) -> (i32, i32, i32) {
    %c0_i32 = arith.constant 0 : i32
    %c0_i32_0 = arith.constant 0 : i32
    %c0_i32_1 = arith.constant 0 : i32
    return %arg0, %c0_i32, %c0_i32_0 : i32, i32, i32
  }
  func.func @transform_7(%arg0: i32) -> (i32, i32, i32) {
    %c0_i32 = arith.constant 0 : i32
    %c0_i32_0 = arith.constant 0 : i32
    %c0_i32_1 = arith.constant 0 : i32
    return %arg0, %c0_i32, %c0_i32_0 : i32, i32, i32
  }
  func.func @transform_8(%arg0: i32) -> (i32, i32, i32) {
    %c0_i32 = arith.constant 0 : i32
    %c0_i32_0 = arith.constant 0 : i32
    %c0_i32_1 = arith.constant 0 : i32
    return %arg0, %c0_i32, %c0_i32_0 : i32, i32, i32
  }
}

module attributes {stable_mosaic.version = 11 : i64} {
  func.func @conv2_kernel(%arg0: i32, %arg1: memref<1x16x16x128xbf16, #tpu.memory_space<vmem>>, %arg2: memref<9x128x128xbf16, #tpu.memory_space<vmem>>, %arg3: memref<1x1x128xf32, #tpu.memory_space<vmem>>, %arg4: memref<1x1x128xf32, #tpu.memory_space<vmem>>, %arg5: memref<1x16x16x128xbf16, #tpu.memory_space<vmem>>, %arg6: memref<1x1x128xf32, #tpu.memory_space<vmem>>, %arg7: memref<1x1x128xf32, #tpu.memory_space<vmem>>) attributes {dimension_semantics = [#tpu.dimension_semantics<parallel>], iteration_bounds = array<i64: 2>, scalar_prefetch = 0 : i64, scratch_operands = 0 : i64, tpu.core_type = #tpu.core_type<tc>, window_params = [{transform_indices = @transform_0, window_bounds = array<i64: 1, 16, 16, 128>}, {pipeline_mode = #tpu.pipeline_mode<synchronous>, transform_indices = @transform_1, window_bounds = array<i64: 9, 128, 128>}, {pipeline_mode = #tpu.pipeline_mode<synchronous>, transform_indices = @transform_2, window_bounds = array<i64: 1, 1, 128>}, {pipeline_mode = #tpu.pipeline_mode<synchronous>, transform_indices = @transform_3, window_bounds = array<i64: 1, 1, 128>}, {transform_indices = @transform_4, window_bounds = array<i64: 1, 16, 16, 128>}, {transform_indices = @transform_5, window_bounds = array<i64: 1, 1, 128>}, {transform_indices = @transform_6, window_bounds = array<i64: 1, 1, 128>}]} {
    %c0 = arith.constant 0 : index
    %c0_0 = arith.constant 0 : index
    %c0_1 = arith.constant 0 : index
    %c0_2 = arith.constant 0 : index
    %0 = vector.load %arg1[%c0, %c0_0, %c0_1, %c0_2] : memref<1x16x16x128xbf16, #tpu.memory_space<vmem>>, vector<1x16x16x128xbf16>
    %1 = vector.shape_cast %0 : vector<1x16x16x128xbf16> to vector<16x16x128xbf16>
    %2 = arith.extf %1 : vector<16x16x128xbf16> to vector<16x16x128xf32>
    %c0_3 = arith.constant 0 : index
    %c0_4 = arith.constant 0 : index
    %c0_5 = arith.constant 0 : index
    %3 = vector.load %arg3[%c0_3, %c0_4, %c0_5] : memref<1x1x128xf32, #tpu.memory_space<vmem>>, vector<1x1x128xf32>
    %4 = vector.broadcast %3 : vector<1x1x128xf32> to vector<16x16x128xf32>
    %5 = arith.mulf %2, %4 : vector<16x16x128xf32>
    %c0_6 = arith.constant 0 : index
    %c0_7 = arith.constant 0 : index
    %c0_8 = arith.constant 0 : index
    %6 = vector.load %arg4[%c0_6, %c0_7, %c0_8] : memref<1x1x128xf32, #tpu.memory_space<vmem>>, vector<1x1x128xf32>
    %7 = vector.broadcast %6 : vector<1x1x128xf32> to vector<16x16x128xf32>
    %8 = arith.addf %5, %7 : vector<16x16x128xf32>
    %cst = arith.constant 0.000000e+00 : f32
    %9 = vector.broadcast %cst : f32 to vector<16x16x128xf32>
    %10 = arith.maximumf %8, %9 : vector<16x16x128xf32>
    %11 = arith.truncf %10 : vector<16x16x128xf32> to vector<16x16x128xbf16>
    %cst_9 = arith.constant 0.000000e+00 : bf16
    %12 = vector.broadcast %cst_9 : bf16 to vector<1x16x128xbf16>
    %13 = tpu.concatenate %12, %11, %12 in 0 : vector<1x16x128xbf16>, vector<16x16x128xbf16>, vector<1x16x128xbf16> -> vector<18x16x128xbf16>
    %cst_10 = arith.constant 0.000000e+00 : bf16
    %14 = vector.broadcast %cst_10 : bf16 to vector<18x1x128xbf16>
    %15 = tpu.concatenate %14, %13, %14 in 1 : vector<18x1x128xbf16>, vector<18x16x128xbf16>, vector<18x1x128xbf16> -> vector<18x18x128xbf16>
    %16 = vector.extract_strided_slice %15 {offsets = [0, 0, 0], sizes = [16, 16, 128], strides = [1, 1, 1]} : vector<18x18x128xbf16> to vector<16x16x128xbf16>
    %17 = vector.shape_cast %16 : vector<16x16x128xbf16> to vector<256x128xbf16>
    %c0_11 = arith.constant 0 : index
    %c0_12 = arith.constant 0 : index
    %c0_13 = arith.constant 0 : index
    %18 = vector.load %arg2[%c0_11, %c0_12, %c0_13] : memref<9x128x128xbf16, #tpu.memory_space<vmem>>, vector<1x128x128xbf16>
    %19 = vector.shape_cast %18 : vector<1x128x128xbf16> to vector<128x128xbf16>
    %cst_14 = arith.constant dense<0.000000e+00> : vector<256x128xf32>
    %20 = tpu.matmul %17, %19, %cst_14 {dimension_numbers = #tpu.dot_dimension_numbers<[1], [0], [0], [1], [0, 0, 1, 1], [], []>} : vector<256x128xbf16>, vector<128x128xbf16>, vector<256x128xf32> -> vector<256x128xf32>
    %21 = vector.extract_strided_slice %15 {offsets = [0, 1, 0], sizes = [16, 16, 128], strides = [1, 1, 1]} : vector<18x18x128xbf16> to vector<16x16x128xbf16>
    %22 = vector.shape_cast %21 : vector<16x16x128xbf16> to vector<256x128xbf16>
    %c1 = arith.constant 1 : index
    %c0_15 = arith.constant 0 : index
    %c0_16 = arith.constant 0 : index
    %23 = vector.load %arg2[%c1, %c0_15, %c0_16] : memref<9x128x128xbf16, #tpu.memory_space<vmem>>, vector<1x128x128xbf16>
    %24 = vector.shape_cast %23 : vector<1x128x128xbf16> to vector<128x128xbf16>
    %cst_17 = arith.constant dense<0.000000e+00> : vector<256x128xf32>
    %25 = tpu.matmul %22, %24, %cst_17 {dimension_numbers = #tpu.dot_dimension_numbers<[1], [0], [0], [1], [0, 0, 1, 1], [], []>} : vector<256x128xbf16>, vector<128x128xbf16>, vector<256x128xf32> -> vector<256x128xf32>
    %26 = arith.addf %20, %25 : vector<256x128xf32>
    %27 = vector.extract_strided_slice %15 {offsets = [0, 2, 0], sizes = [16, 16, 128], strides = [1, 1, 1]} : vector<18x18x128xbf16> to vector<16x16x128xbf16>
    %28 = vector.shape_cast %27 : vector<16x16x128xbf16> to vector<256x128xbf16>
    %c2 = arith.constant 2 : index
    %c0_18 = arith.constant 0 : index
    %c0_19 = arith.constant 0 : index
    %29 = vector.load %arg2[%c2, %c0_18, %c0_19] : memref<9x128x128xbf16, #tpu.memory_space<vmem>>, vector<1x128x128xbf16>
    %30 = vector.shape_cast %29 : vector<1x128x128xbf16> to vector<128x128xbf16>
    %cst_20 = arith.constant dense<0.000000e+00> : vector<256x128xf32>
    %31 = tpu.matmul %28, %30, %cst_20 {dimension_numbers = #tpu.dot_dimension_numbers<[1], [0], [0], [1], [0, 0, 1, 1], [], []>} : vector<256x128xbf16>, vector<128x128xbf16>, vector<256x128xf32> -> vector<256x128xf32>
    %32 = arith.addf %26, %31 : vector<256x128xf32>
    %33 = vector.extract_strided_slice %15 {offsets = [1, 0, 0], sizes = [16, 16, 128], strides = [1, 1, 1]} : vector<18x18x128xbf16> to vector<16x16x128xbf16>
    %34 = vector.shape_cast %33 : vector<16x16x128xbf16> to vector<256x128xbf16>
    %c3 = arith.constant 3 : index
    %c0_21 = arith.constant 0 : index
    %c0_22 = arith.constant 0 : index
    %35 = vector.load %arg2[%c3, %c0_21, %c0_22] : memref<9x128x128xbf16, #tpu.memory_space<vmem>>, vector<1x128x128xbf16>
    %36 = vector.shape_cast %35 : vector<1x128x128xbf16> to vector<128x128xbf16>
    %cst_23 = arith.constant dense<0.000000e+00> : vector<256x128xf32>
    %37 = tpu.matmul %34, %36, %cst_23 {dimension_numbers = #tpu.dot_dimension_numbers<[1], [0], [0], [1], [0, 0, 1, 1], [], []>} : vector<256x128xbf16>, vector<128x128xbf16>, vector<256x128xf32> -> vector<256x128xf32>
    %38 = arith.addf %32, %37 : vector<256x128xf32>
    %39 = vector.extract_strided_slice %15 {offsets = [1, 1, 0], sizes = [16, 16, 128], strides = [1, 1, 1]} : vector<18x18x128xbf16> to vector<16x16x128xbf16>
    %40 = vector.shape_cast %39 : vector<16x16x128xbf16> to vector<256x128xbf16>
    %c4 = arith.constant 4 : index
    %c0_24 = arith.constant 0 : index
    %c0_25 = arith.constant 0 : index
    %41 = vector.load %arg2[%c4, %c0_24, %c0_25] : memref<9x128x128xbf16, #tpu.memory_space<vmem>>, vector<1x128x128xbf16>
    %42 = vector.shape_cast %41 : vector<1x128x128xbf16> to vector<128x128xbf16>
    %cst_26 = arith.constant dense<0.000000e+00> : vector<256x128xf32>
    %43 = tpu.matmul %40, %42, %cst_26 {dimension_numbers = #tpu.dot_dimension_numbers<[1], [0], [0], [1], [0, 0, 1, 1], [], []>} : vector<256x128xbf16>, vector<128x128xbf16>, vector<256x128xf32> -> vector<256x128xf32>
    %44 = arith.addf %38, %43 : vector<256x128xf32>
    %45 = vector.extract_strided_slice %15 {offsets = [1, 2, 0], sizes = [16, 16, 128], strides = [1, 1, 1]} : vector<18x18x128xbf16> to vector<16x16x128xbf16>
    %46 = vector.shape_cast %45 : vector<16x16x128xbf16> to vector<256x128xbf16>
    %c5 = arith.constant 5 : index
    %c0_27 = arith.constant 0 : index
    %c0_28 = arith.constant 0 : index
    %47 = vector.load %arg2[%c5, %c0_27, %c0_28] : memref<9x128x128xbf16, #tpu.memory_space<vmem>>, vector<1x128x128xbf16>
    %48 = vector.shape_cast %47 : vector<1x128x128xbf16> to vector<128x128xbf16>
    %cst_29 = arith.constant dense<0.000000e+00> : vector<256x128xf32>
    %49 = tpu.matmul %46, %48, %cst_29 {dimension_numbers = #tpu.dot_dimension_numbers<[1], [0], [0], [1], [0, 0, 1, 1], [], []>} : vector<256x128xbf16>, vector<128x128xbf16>, vector<256x128xf32> -> vector<256x128xf32>
    %50 = arith.addf %44, %49 : vector<256x128xf32>
    %51 = vector.extract_strided_slice %15 {offsets = [2, 0, 0], sizes = [16, 16, 128], strides = [1, 1, 1]} : vector<18x18x128xbf16> to vector<16x16x128xbf16>
    %52 = vector.shape_cast %51 : vector<16x16x128xbf16> to vector<256x128xbf16>
    %c6 = arith.constant 6 : index
    %c0_30 = arith.constant 0 : index
    %c0_31 = arith.constant 0 : index
    %53 = vector.load %arg2[%c6, %c0_30, %c0_31] : memref<9x128x128xbf16, #tpu.memory_space<vmem>>, vector<1x128x128xbf16>
    %54 = vector.shape_cast %53 : vector<1x128x128xbf16> to vector<128x128xbf16>
    %cst_32 = arith.constant dense<0.000000e+00> : vector<256x128xf32>
    %55 = tpu.matmul %52, %54, %cst_32 {dimension_numbers = #tpu.dot_dimension_numbers<[1], [0], [0], [1], [0, 0, 1, 1], [], []>} : vector<256x128xbf16>, vector<128x128xbf16>, vector<256x128xf32> -> vector<256x128xf32>
    %56 = arith.addf %50, %55 : vector<256x128xf32>
    %57 = vector.extract_strided_slice %15 {offsets = [2, 1, 0], sizes = [16, 16, 128], strides = [1, 1, 1]} : vector<18x18x128xbf16> to vector<16x16x128xbf16>
    %58 = vector.shape_cast %57 : vector<16x16x128xbf16> to vector<256x128xbf16>
    %c7 = arith.constant 7 : index
    %c0_33 = arith.constant 0 : index
    %c0_34 = arith.constant 0 : index
    %59 = vector.load %arg2[%c7, %c0_33, %c0_34] : memref<9x128x128xbf16, #tpu.memory_space<vmem>>, vector<1x128x128xbf16>
    %60 = vector.shape_cast %59 : vector<1x128x128xbf16> to vector<128x128xbf16>
    %cst_35 = arith.constant dense<0.000000e+00> : vector<256x128xf32>
    %61 = tpu.matmul %58, %60, %cst_35 {dimension_numbers = #tpu.dot_dimension_numbers<[1], [0], [0], [1], [0, 0, 1, 1], [], []>} : vector<256x128xbf16>, vector<128x128xbf16>, vector<256x128xf32> -> vector<256x128xf32>
    %62 = arith.addf %56, %61 : vector<256x128xf32>
    %63 = vector.extract_strided_slice %15 {offsets = [2, 2, 0], sizes = [16, 16, 128], strides = [1, 1, 1]} : vector<18x18x128xbf16> to vector<16x16x128xbf16>
    %64 = vector.shape_cast %63 : vector<16x16x128xbf16> to vector<256x128xbf16>
    %c8 = arith.constant 8 : index
    %c0_36 = arith.constant 0 : index
    %c0_37 = arith.constant 0 : index
    %65 = vector.load %arg2[%c8, %c0_36, %c0_37] : memref<9x128x128xbf16, #tpu.memory_space<vmem>>, vector<1x128x128xbf16>
    %66 = vector.shape_cast %65 : vector<1x128x128xbf16> to vector<128x128xbf16>
    %cst_38 = arith.constant dense<0.000000e+00> : vector<256x128xf32>
    %67 = tpu.matmul %64, %66, %cst_38 {dimension_numbers = #tpu.dot_dimension_numbers<[1], [0], [0], [1], [0, 0, 1, 1], [], []>} : vector<256x128xbf16>, vector<128x128xbf16>, vector<256x128xf32> -> vector<256x128xf32>
    %68 = arith.addf %62, %67 : vector<256x128xf32>
    %69 = vector.shape_cast %68 : vector<256x128xf32> to vector<16x16x128xf32>
    %70 = arith.truncf %69 : vector<16x16x128xf32> to vector<16x16x128xbf16>
    %c0_39 = arith.constant 0 : index
    %c0_40 = arith.constant 0 : index
    %c0_41 = arith.constant 0 : index
    %c0_42 = arith.constant 0 : index
    %71 = vector.load %arg5[%c0_39, %c0_40, %c0_41, %c0_42] : memref<1x16x16x128xbf16, #tpu.memory_space<vmem>>, vector<1x16x16x128xbf16>
    %72 = vector.shape_cast %71 : vector<1x16x16x128xbf16> to vector<16x16x128xbf16>
    %73 = vector.shape_cast %70 : vector<16x16x128xbf16> to vector<1x16x16x128xbf16>
    tpu.vector_store %arg5[%c0_39, %c0_40, %c0_41, %c0_42], %73 {strides = array<i32>} : memref<1x16x16x128xbf16, #tpu.memory_space<vmem>>, vector<1x16x16x128xbf16>,
    %cst_43 = arith.constant dense<0.000000e+00> : vector<128xf32>
    %74 = vector.multi_reduction <add>, %68, %cst_43 [0] : vector<256x128xf32> to vector<128xf32>
    %75 = vector.shape_cast %74 : vector<128xf32> to vector<1x128xf32>
    %c0_44 = arith.constant 0 : index
    %c0_45 = arith.constant 0 : index
    %c0_46 = arith.constant 0 : index
    %76 = vector.load %arg6[%c0_44, %c0_45, %c0_46] : memref<1x1x128xf32, #tpu.memory_space<vmem>>, vector<1x1x128xf32>
    %77 = vector.shape_cast %76 : vector<1x1x128xf32> to vector<1x128xf32>
    %78 = vector.shape_cast %75 : vector<1x128xf32> to vector<1x1x128xf32>
    tpu.vector_store %arg6[%c0_44, %c0_45, %c0_46], %78 {strides = array<i32>} : memref<1x1x128xf32, #tpu.memory_space<vmem>>, vector<1x1x128xf32>,
    %79 = arith.mulf %68, %68 : vector<256x128xf32>
    %cst_47 = arith.constant dense<0.000000e+00> : vector<128xf32>
    %80 = vector.multi_reduction <add>, %79, %cst_47 [0] : vector<256x128xf32> to vector<128xf32>
    %81 = vector.shape_cast %80 : vector<128xf32> to vector<1x128xf32>
    %c0_48 = arith.constant 0 : index
    %c0_49 = arith.constant 0 : index
    %c0_50 = arith.constant 0 : index
    %82 = vector.load %arg7[%c0_48, %c0_49, %c0_50] : memref<1x1x128xf32, #tpu.memory_space<vmem>>, vector<1x1x128xf32>
    %83 = vector.shape_cast %82 : vector<1x1x128xf32> to vector<1x128xf32>
    %84 = vector.shape_cast %81 : vector<1x128xf32> to vector<1x1x128xf32>
    tpu.vector_store %arg7[%c0_48, %c0_49, %c0_50], %84 {strides = array<i32>} : memref<1x1x128xf32, #tpu.memory_space<vmem>>, vector<1x1x128xf32>,
    return
  }
  func.func @transform_0(%arg0: i32) -> (i32, i32, i32, i32) {
    %c0_i32 = arith.constant 0 : i32
    %c0_i32_0 = arith.constant 0 : i32
    %c0_i32_1 = arith.constant 0 : i32
    %c0_i32_2 = arith.constant 0 : i32
    return %arg0, %c0_i32, %c0_i32_0, %c0_i32_1 : i32, i32, i32, i32
  }
  func.func @transform_1(%arg0: i32) -> (i32, i32, i32) {
    %c0_i32 = arith.constant 0 : i32
    %c0_i32_0 = arith.constant 0 : i32
    %c0_i32_1 = arith.constant 0 : i32
    %c0_i32_2 = arith.constant 0 : i32
    return %c0_i32, %c0_i32_0, %c0_i32_1 : i32, i32, i32
  }
  func.func @transform_2(%arg0: i32) -> (i32, i32, i32) {
    %c0_i32 = arith.constant 0 : i32
    %c0_i32_0 = arith.constant 0 : i32
    %c0_i32_1 = arith.constant 0 : i32
    %c0_i32_2 = arith.constant 0 : i32
    return %c0_i32, %c0_i32_0, %c0_i32_1 : i32, i32, i32
  }
  func.func @transform_3(%arg0: i32) -> (i32, i32, i32) {
    %c0_i32 = arith.constant 0 : i32
    %c0_i32_0 = arith.constant 0 : i32
    %c0_i32_1 = arith.constant 0 : i32
    %c0_i32_2 = arith.constant 0 : i32
    return %c0_i32, %c0_i32_0, %c0_i32_1 : i32, i32, i32
  }
  func.func @transform_4(%arg0: i32) -> (i32, i32, i32, i32) {
    %c0_i32 = arith.constant 0 : i32
    %c0_i32_0 = arith.constant 0 : i32
    %c0_i32_1 = arith.constant 0 : i32
    %c0_i32_2 = arith.constant 0 : i32
    return %arg0, %c0_i32, %c0_i32_0, %c0_i32_1 : i32, i32, i32, i32
  }
  func.func @transform_5(%arg0: i32) -> (i32, i32, i32) {
    %c0_i32 = arith.constant 0 : i32
    %c0_i32_0 = arith.constant 0 : i32
    %c0_i32_1 = arith.constant 0 : i32
    return %arg0, %c0_i32, %c0_i32_0 : i32, i32, i32
  }
  func.func @transform_6(%arg0: i32) -> (i32, i32, i32) {
    %c0_i32 = arith.constant 0 : i32
    %c0_i32_0 = arith.constant 0 : i32
    %c0_i32_1 = arith.constant 0 : i32
    return %arg0, %c0_i32, %c0_i32_0 : i32, i32, i32
  }
}

module attributes {stable_mosaic.version = 11 : i64} {
  func.func @bn_add_relu_proj_kernel(%arg0: i32, %arg1: memref<1x16x16x128xbf16, #tpu.memory_space<vmem>>, %arg2: memref<1x16x16x128xbf16, #tpu.memory_space<vmem>>, %arg3: memref<1x1x128xf32, #tpu.memory_space<vmem>>, %arg4: memref<1x1x128xf32, #tpu.memory_space<vmem>>, %arg5: memref<1x1x128xf32, #tpu.memory_space<vmem>>, %arg6: memref<1x1x128xf32, #tpu.memory_space<vmem>>, %arg7: memref<1x16x16x128xf32, #tpu.memory_space<vmem>>) attributes {dimension_semantics = [#tpu.dimension_semantics<parallel>], iteration_bounds = array<i64: 2>, scalar_prefetch = 0 : i64, scratch_operands = 0 : i64, tpu.core_type = #tpu.core_type<tc>, window_params = [{transform_indices = @transform_0, window_bounds = array<i64: 1, 16, 16, 128>}, {transform_indices = @transform_1, window_bounds = array<i64: 1, 16, 16, 128>}, {pipeline_mode = #tpu.pipeline_mode<synchronous>, transform_indices = @transform_2, window_bounds = array<i64: 1, 1, 128>}, {pipeline_mode = #tpu.pipeline_mode<synchronous>, transform_indices = @transform_3, window_bounds = array<i64: 1, 1, 128>}, {pipeline_mode = #tpu.pipeline_mode<synchronous>, transform_indices = @transform_4, window_bounds = array<i64: 1, 1, 128>}, {pipeline_mode = #tpu.pipeline_mode<synchronous>, transform_indices = @transform_5, window_bounds = array<i64: 1, 1, 128>}, {transform_indices = @transform_6, window_bounds = array<i64: 1, 16, 16, 128>}]} {
    %c0 = arith.constant 0 : index
    %c0_0 = arith.constant 0 : index
    %c0_1 = arith.constant 0 : index
    %c0_2 = arith.constant 0 : index
    %0 = vector.load %arg1[%c0, %c0_0, %c0_1, %c0_2] : memref<1x16x16x128xbf16, #tpu.memory_space<vmem>>, vector<1x16x16x128xbf16>
    %1 = vector.shape_cast %0 : vector<1x16x16x128xbf16> to vector<16x16x128xbf16>
    %2 = arith.extf %1 : vector<16x16x128xbf16> to vector<16x16x128xf32>
    %c0_3 = arith.constant 0 : index
    %c0_4 = arith.constant 0 : index
    %c0_5 = arith.constant 0 : index
    %3 = vector.load %arg3[%c0_3, %c0_4, %c0_5] : memref<1x1x128xf32, #tpu.memory_space<vmem>>, vector<1x1x128xf32>
    %4 = vector.broadcast %3 : vector<1x1x128xf32> to vector<16x16x128xf32>
    %5 = arith.mulf %2, %4 : vector<16x16x128xf32>
    %c0_6 = arith.constant 0 : index
    %c0_7 = arith.constant 0 : index
    %c0_8 = arith.constant 0 : index
    %6 = vector.load %arg4[%c0_6, %c0_7, %c0_8] : memref<1x1x128xf32, #tpu.memory_space<vmem>>, vector<1x1x128xf32>
    %7 = vector.broadcast %6 : vector<1x1x128xf32> to vector<16x16x128xf32>
    %8 = arith.addf %5, %7 : vector<16x16x128xf32>
    %c0_9 = arith.constant 0 : index
    %c0_10 = arith.constant 0 : index
    %c0_11 = arith.constant 0 : index
    %c0_12 = arith.constant 0 : index
    %9 = vector.load %arg2[%c0_9, %c0_10, %c0_11, %c0_12] : memref<1x16x16x128xbf16, #tpu.memory_space<vmem>>, vector<1x16x16x128xbf16>
    %10 = vector.shape_cast %9 : vector<1x16x16x128xbf16> to vector<16x16x128xbf16>
    %11 = arith.extf %10 : vector<16x16x128xbf16> to vector<16x16x128xf32>
    %c0_13 = arith.constant 0 : index
    %c0_14 = arith.constant 0 : index
    %c0_15 = arith.constant 0 : index
    %12 = vector.load %arg5[%c0_13, %c0_14, %c0_15] : memref<1x1x128xf32, #tpu.memory_space<vmem>>, vector<1x1x128xf32>
    %13 = vector.broadcast %12 : vector<1x1x128xf32> to vector<16x16x128xf32>
    %14 = arith.mulf %11, %13 : vector<16x16x128xf32>
    %c0_16 = arith.constant 0 : index
    %c0_17 = arith.constant 0 : index
    %c0_18 = arith.constant 0 : index
    %15 = vector.load %arg6[%c0_16, %c0_17, %c0_18] : memref<1x1x128xf32, #tpu.memory_space<vmem>>, vector<1x1x128xf32>
    %16 = vector.broadcast %15 : vector<1x1x128xf32> to vector<16x16x128xf32>
    %17 = arith.addf %14, %16 : vector<16x16x128xf32>
    %18 = arith.addf %8, %17 : vector<16x16x128xf32>
    %cst = arith.constant 0.000000e+00 : f32
    %19 = vector.broadcast %cst : f32 to vector<16x16x128xf32>
    %20 = arith.maximumf %18, %19 : vector<16x16x128xf32>
    %c0_19 = arith.constant 0 : index
    %c0_20 = arith.constant 0 : index
    %c0_21 = arith.constant 0 : index
    %c0_22 = arith.constant 0 : index
    %21 = vector.load %arg7[%c0_19, %c0_20, %c0_21, %c0_22] : memref<1x16x16x128xf32, #tpu.memory_space<vmem>>, vector<1x16x16x128xf32>
    %22 = vector.shape_cast %21 : vector<1x16x16x128xf32> to vector<16x16x128xf32>
    %23 = vector.shape_cast %20 : vector<16x16x128xf32> to vector<1x16x16x128xf32>
    tpu.vector_store %arg7[%c0_19, %c0_20, %c0_21, %c0_22], %23 {strides = array<i32>} : memref<1x16x16x128xf32, #tpu.memory_space<vmem>>, vector<1x16x16x128xf32>,
    return
  }
  func.func @transform_0(%arg0: i32) -> (i32, i32, i32, i32) {
    %c0_i32 = arith.constant 0 : i32
    %c0_i32_0 = arith.constant 0 : i32
    %c0_i32_1 = arith.constant 0 : i32
    %c0_i32_2 = arith.constant 0 : i32
    return %arg0, %c0_i32, %c0_i32_0, %c0_i32_1 : i32, i32, i32, i32
  }
  func.func @transform_1(%arg0: i32) -> (i32, i32, i32, i32) {
    %c0_i32 = arith.constant 0 : i32
    %c0_i32_0 = arith.constant 0 : i32
    %c0_i32_1 = arith.constant 0 : i32
    %c0_i32_2 = arith.constant 0 : i32
    return %arg0, %c0_i32, %c0_i32_0, %c0_i32_1 : i32, i32, i32, i32
  }
  func.func @transform_2(%arg0: i32) -> (i32, i32, i32) {
    %c0_i32 = arith.constant 0 : i32
    %c0_i32_0 = arith.constant 0 : i32
    %c0_i32_1 = arith.constant 0 : i32
    %c0_i32_2 = arith.constant 0 : i32
    return %c0_i32, %c0_i32_0, %c0_i32_1 : i32, i32, i32
  }
  func.func @transform_3(%arg0: i32) -> (i32, i32, i32) {
    %c0_i32 = arith.constant 0 : i32
    %c0_i32_0 = arith.constant 0 : i32
    %c0_i32_1 = arith.constant 0 : i32
    %c0_i32_2 = arith.constant 0 : i32
    return %c0_i32, %c0_i32_0, %c0_i32_1 : i32, i32, i32
  }
  func.func @transform_4(%arg0: i32) -> (i32, i32, i32) {
    %c0_i32 = arith.constant 0 : i32
    %c0_i32_0 = arith.constant 0 : i32
    %c0_i32_1 = arith.constant 0 : i32
    %c0_i32_2 = arith.constant 0 : i32
    return %c0_i32, %c0_i32_0, %c0_i32_1 : i32, i32, i32
  }
  func.func @transform_5(%arg0: i32) -> (i32, i32, i32) {
    %c0_i32 = arith.constant 0 : i32
    %c0_i32_0 = arith.constant 0 : i32
    %c0_i32_1 = arith.constant 0 : i32
    %c0_i32_2 = arith.constant 0 : i32
    return %c0_i32, %c0_i32_0, %c0_i32_1 : i32, i32, i32
  }
  func.func @transform_6(%arg0: i32) -> (i32, i32, i32, i32) {
    %c0_i32 = arith.constant 0 : i32
    %c0_i32_0 = arith.constant 0 : i32
    %c0_i32_1 = arith.constant 0 : i32
    %c0_i32_2 = arith.constant 0 : i32
    return %arg0, %c0_i32, %c0_i32_0, %c0_i32_1 : i32, i32, i32, i32
  }
}

</mosaic_0001>

<llo_original>
// kernel: residual_block_forward.5
$region0: #{residual_block_forward.5}
  #allocation0 [shape = 'u32[]', space=smem, size = 0x4, offset = 0x4, fixed_abs, tag = 'smem constant byte address 0x4 - core index']
  #allocation1 [shape = 'u32[72,128]{1,0:T(1,128)}', space=vmem, size = 0x9000, scoped, tag = 'internal scratch']
  %s0 = inlined_call_operand.vmem [shape: bf16[2,16,16,128], index: 0, kind: input, shape index: {}]
  %s1 = inlined_call_operand.vmem [shape: bf16[2,16,16,128], index: 1, kind: input, shape index: {}]
  %s2 = inlined_call_operand.vmem [shape: f32[1,1,128], index: 2, kind: input, shape index: {}]
  %s3 = inlined_call_operand.vmem [shape: f32[1,1,128], index: 3, kind: input, shape index: {}]
  %s4 = inlined_call_operand.vmem [shape: f32[1,1,128], index: 4, kind: input, shape index: {}]
  %s5 = inlined_call_operand.vmem [shape: f32[1,1,128], index: 5, kind: input, shape index: {}]
  %s6 = inlined_call_operand.vmem [shape: f32[2,16,16,128], index: 6, kind: output, shape index: {}]
  %s7 = sld [smem:[#allocation0]]
  $region57: #{residual_block_forward.5} parent=0
    _
  %s9 = ssub.s32 1, %s7
  %s10 = scalar_select 0, %s9, %s7
  loop: start=0, step=1, limit=4
  $region2: #{residual_block_forward.5} parent=0 // loop_pre_header
    _
  $region3: #{residual_block_forward.5} parent=0 // loop_header
    %s12 = sphi 0, %s16
    %p13 = scmp.ge.s32.totalorder %s12, 4
    %s22 = sphi 0, %s24
    %s25 = sphi 0, %s22
    %s26 = sphi 0, %s25
    %s42 = sphi 0, %s26
    %s48 = sphi 0, %s50
    %s51 = sphi 0, %s48
    %s52 = sphi 0, %s51
    %s68 = sphi 0, %s52
    %s72 = sphi 0, %s72
    %s74 = sphi 0, %s72
    %s75 = sphi 0, %s74
    %s89 = sphi 0, %s75
    %s93 = sphi 0, %s93
    %s95 = sphi 0, %s93
    %s96 = sphi 0, %s95
    %s110 = sphi 0, %s96
    %s114 = sphi 0, %s114
    %s116 = sphi 0, %s114
    %s117 = sphi 0, %s116
    %s131 = sphi 0, %s117
    %s135 = sphi 0, %s135
    %s137 = sphi 0, %s135
    %s138 = sphi 0, %s137
    %s152 = sphi 0, %s138
    %s158 = sphi 0, %s160
    %s161 = sphi 0, %s158
    %s162 = sphi 0, %s161
    %s178 = sphi 0, %s162
  $region4: #{residual_block_forward.5} parent=0 // loop_header_branch
    %15 = sbr.rel (%p13) target = $region8
  $region5: #{residual_block_forward.5} parent=0 // loop_body
    %s17 = ssub.s32 %s12, 1
    %s18 = ssub.s32 %s12, 2
    %s19 = sadd.s32 %s12, 1
    %s20 = ssub.s32 %s12, %s19
    %p21 = scmp.eq.s32.totalorder %s20, 0
    %s23 = sadd.s32 %s22, 1
    %s24 = scalar_select %p21, %s22, %s23
    %p27 = pneg %p21
    %p28 = scmp.eq.s32.totalorder %s12, 1
    %p29 = por %p27, %p28
    %p30 = scmp.ne.s32.totalorder %s22, %s25
    %p31 = scmp.eq.s32.totalorder %s12, 0
    %p32 = por %p30, %p31
    %p33 = scmp.ne.s32.totalorder %s22, %s25
    %p34 = scmp.eq.s32.totalorder %s17, 1
    %p35 = por %p33, %p34
    %p36 = scmp.ne.s32.totalorder %s25, %s26
    %p37 = scmp.eq.s32.totalorder %s17, 0
    %p38 = por %p36, %p37
    %p39 = scmp.ne.s32.totalorder %s25, %s26
    %p40 = scmp.eq.s32.totalorder %s18, 1
    %p41 = por %p39, %p40
    %p43 = scmp.ne.s32.totalorder %s26, %s42
    %p44 = scmp.eq.s32.totalorder %s18, 0
    %p45 = por %p43, %p44
    %s46 = ssub.s32 %s12, %s19
    %p47 = scmp.eq.s32.totalorder %s46, 0
    %s49 = sadd.s32 %s48, 1
    %s50 = scalar_select %p47, %s48, %s49
    %p53 = pneg %p47
    %p54 = scmp.eq.s32.totalorder %s12, 1
    %p55 = por %p53, %p54
    %p56 = scmp.ne.s32.totalorder %s48, %s51
    %p57 = scmp.eq.s32.totalorder %s12, 0
    %p58 = por %p56, %p57
    %p59 = scmp.ne.s32.totalorder %s48, %s51
    %p60 = scmp.eq.s32.totalorder %s17, 1
    %p61 = por %p59, %p60
    %p62 = scmp.ne.s32.totalorder %s51, %s52
    %p63 = scmp.eq.s32.totalorder %s17, 0
    %p64 = por %p62, %p63
    %p65 = scmp.ne.s32.totalorder %s51, %s52
    %p66 = scmp.eq.s32.totalorder %s18, 1
    %p67 = por %p65, %p66
    %p69 = scmp.ne.s32.totalorder %s52, %s68
    %p70 = scmp.eq.s32.totalorder %s18, 0
    %p71 = por %p69, %p70
    %s73 = sadd.s32 %s72, 1
    %p76 = scmp.eq.s32.totalorder %s12, 1
    %p77 = scmp.ne.s32.totalorder %s72, %s74
    %p78 = scmp.eq.s32.totalorder %s12, 0
    %p79 = por %p77, %p78
    %p80 = scmp.ne.s32.totalorder %s72, %s74
    %p81 = scmp.eq.s32.totalorder %s17, 1
    %p82 = por %p80, %p81
    %p83 = scmp.ne.s32.totalorder %s74, %s75
    %p84 = scmp.eq.s32.totalorder %s17, 0
    %p85 = por %p83, %p84
    %p86 = scmp.ne.s32.totalorder %s74, %s75
    %p87 = scmp.eq.s32.totalorder %s18, 1
    %p88 = por %p86, %p87
    %p90 = scmp.ne.s32.totalorder %s75, %s89
    %p91 = scmp.eq.s32.totalorder %s18, 0
    %p92 = por %p90, %p91
    %s94 = sadd.s32 %s93, 1
    %p97 = scmp.eq.s32.totalorder %s12, 1
    %p98 = scmp.ne.s32.totalorder %s93, %s95
    %p99 = scmp.eq.s32.totalorder %s12, 0
    %p100 = por %p98, %p99
    %p101 = scmp.ne.s32.totalorder %s93, %s95
    %p102 = scmp.eq.s32.totalorder %s17, 1
    %p103 = por %p101, %p102
    %p104 = scmp.ne.s32.totalorder %s95, %s96
    %p105 = scmp.eq.s32.totalorder %s17, 0
    %p106 = por %p104, %p105
    %p107 = scmp.ne.s32.totalorder %s95, %s96
    %p108 = scmp.eq.s32.totalorder %s18, 1
    %p109 = por %p107, %p108
    %p111 = scmp.ne.s32.totalorder %s96, %s110
    %p112 = scmp.eq.s32.totalorder %s18, 0
    %p113 = por %p111, %p112
    %s115 = sadd.s32 %s114, 1
    %p118 = scmp.eq.s32.totalorder %s12, 1
    %p119 = scmp.ne.s32.totalorder %s114, %s116
    %p120 = scmp.eq.s32.totalorder %s12, 0
    %p121 = por %p119, %p120
    %p122 = scmp.ne.s32.totalorder %s114, %s116
    %p123 = scmp.eq.s32.totalorder %s17, 1
    %p124 = por %p122, %p123
    %p125 = scmp.ne.s32.totalorder %s116, %s117
    %p126 = scmp.eq.s32.totalorder %s17, 0
    %p127 = por %p125, %p126
    %p128 = scmp.ne.s32.totalorder %s116, %s117
    %p129 = scmp.eq.s32.totalorder %s18, 1
    %p130 = por %p128, %p129
    %p132 = scmp.ne.s32.totalorder %s117, %s131
    %p133 = scmp.eq.s32.totalorder %s18, 0
    %p134 = por %p132, %p133
    %s136 = sadd.s32 %s135, 1
    %p139 = scmp.eq.s32.totalorder %s12, 1
    %p140 = scmp.ne.s32.totalorder %s135, %s137
    %p141 = scmp.eq.s32.totalorder %s12, 0
    %p142 = por %p140, %p141
    %p143 = scmp.ne.s32.totalorder %s135, %s137
    %p144 = scmp.eq.s32.totalorder %s17, 1
    %p145 = por %p143, %p144
    %p146 = scmp.ne.s32.totalorder %s137, %s138
    %p147 = scmp.eq.s32.totalorder %s17, 0
    %p148 = por %p146, %p147
    %p149 = scmp.ne.s32.totalorder %s137, %s138
    %p150 = scmp.eq.s32.totalorder %s18, 1
    %p151 = por %p149, %p150
    %p153 = scmp.ne.s32.totalorder %s138, %s152
    %p154 = scmp.eq.s32.totalorder %s18, 0
    %p155 = por %p153, %p154
    %s156 = ssub.s32 %s12, %s19
    %p157 = scmp.eq.s32.totalorder %s156, 0
    %s159 = sadd.s32 %s158, 1
    %s160 = scalar_select %p157, %s158, %s159
    %p163 = pneg %p157
    %p164 = scmp.eq.s32.totalorder %s12, 1
    %p165 = por %p163, %p164
    %p166 = scmp.ne.s32.totalorder %s158, %s161
    %p167 = scmp.eq.s32.totalorder %s12, 0
    %p168 = por %p166, %p167
    %p169 = scmp.ne.s32.totalorder %s158, %s161
    %p170 = scmp.eq.s32.totalorder %s17, 1
    %p171 = por %p169, %p170
    %p172 = scmp.ne.s32.totalorder %s161, %s162
    %p173 = scmp.eq.s32.totalorder %s17, 0
    %p174 = por %p172, %p173
    %p175 = scmp.ne.s32.totalorder %s161, %s162
    %p176 = scmp.eq.s32.totalorder %s18, 1
    %p177 = por %p175, %p176
    %p179 = scmp.ne.s32.totalorder %s162, %s178
    %p180 = scmp.eq.s32.totalorder %s18, 0
    %p181 = por %p179, %p180
    %p182 = scmp.le.s32.totalorder 1, %s12
    %p183 = scmp.lt.s32.totalorder %s12, 3
    %p184 = pnand %p182, %p183
    %p185 = pneg %p184
    // Predicated region
    $region9: #{residual_block_forward.5} parent=5 // pred_check
      _
    $region10: #{residual_block_forward.5} parent=5 // pred_check_branch
      %187 = sbr.rel (%p184) target = $region12
    $region11: #{residual_block_forward.5} parent=5 // pred_region
      %s188 = ssub.s32 %s12, 1
      // Predicated region
      $region13: #{residual_block_forward.5} parent=11 // pred_check
        %p189 = pneg %p85
      $region14: #{residual_block_forward.5} parent=11 // pred_check_branch
        %191 = sbr.rel (%p189) target = $region16
      $region15: #{residual_block_forward.5} parent=11 // pred_region
        _
      $region16: #{residual_block_forward.5} parent=11 // pred_fallthru
        _
      // Predicated region
      $region17: #{residual_block_forward.5} parent=11 // pred_check
        %p192 = pneg %p106
      $region18: #{residual_block_forward.5} parent=11 // pred_check_branch
        %194 = sbr.rel (%p192) target = $region20
      $region19: #{residual_block_forward.5} parent=11 // pred_region
        _
      $region20: #{residual_block_forward.5} parent=11 // pred_fallthru
        _
      // Predicated region
      $region21: #{residual_block_forward.5} parent=11 // pred_check
        %p195 = pneg %p127
      $region22: #{residual_block_forward.5} parent=11 // pred_check_branch
        %197 = sbr.rel (%p195) target = $region24
      $region23: #{residual_block_forward.5} parent=11 // pred_region
        _
      $region24: #{residual_block_forward.5} parent=11 // pred_fallthru
        _
      // Predicated region
      $region25: #{residual_block_forward.5} parent=11 // pred_check
        %p198 = pneg %p148
      $region26: #{residual_block_forward.5} parent=11 // pred_check_branch
        %200 = sbr.rel (%p198) target = $region28
      $region27: #{residual_block_forward.5} parent=11 // pred_region
        _
      $region28: #{residual_block_forward.5} parent=11 // pred_fallthru
        _
    $region12: #{residual_block_forward.5} parent=5 // pred_fallthru
      _
    %p201 = scmp.lt.s32.totalorder %s12, 2
    // Predicated region
    $region29: #{residual_block_forward.5} parent=5 // pred_check
      %p202 = pneg %p201
    $region30: #{residual_block_forward.5} parent=5 // pred_check_branch
      %204 = sbr.rel (%p202) target = $region32
    $region31: #{residual_block_forward.5} parent=5 // pred_region
      // Predicated region
      $region33: #{residual_block_forward.5} parent=31 // pred_check
        %p205 = pneg %p32
      $region34: #{residual_block_forward.5} parent=31 // pred_check_branch
        %207 = sbr.rel (%p205) target = $region36
      $region35: #{residual_block_forward.5} parent=31 // pred_region
        %p208 = scmp.lt.s32.totalorder %s12, 1
        %s209 = scalar_select %p208, %s12, 1
        %s210 = smul.addr %s209, 32
        %s211 = smul.addr %s210, 4
        %s212 = scalar_lea.vmem %s0, %s211
      $region36: #{residual_block_forward.5} parent=31 // pred_fallthru
        _
      // Predicated region
      $region37: #{residual_block_forward.5} parent=31 // pred_check
        %p213 = pneg %p58
      $region38: #{residual_block_forward.5} parent=31 // pred_check_branch
        %215 = sbr.rel (%p213) target = $region40
      $region39: #{residual_block_forward.5} parent=31 // pred_region
        %p216 = scmp.lt.s32.totalorder %s12, 1
        %s217 = scalar_select %p216, %s12, 1
        %s218 = smul.addr %s217, 32
        %s219 = smul.addr %s218, 4
        %s220 = scalar_lea.vmem %s1, %s219
      $region40: #{residual_block_forward.5} parent=31 // pred_fallthru
        _
    $region32: #{residual_block_forward.5} parent=5 // pred_fallthru
      _
    %p221 = scmp.le.s32.totalorder 1, %s12
    %p222 = scmp.lt.s32.totalorder %s12, 3
    %p223 = pnand %p221, %p222
    %p224 = pneg %p223
    // Predicated region
    $region41: #{residual_block_forward.5} parent=5 // pred_check
      _
    $region42: #{residual_block_forward.5} parent=5 // pred_check_branch
      %226 = sbr.rel (%p223) target = $region44
    $region43: #{residual_block_forward.5} parent=5 // pred_region
      %s227 = ssub.s32 %s12, 1
      %p228 = scmp.lt.s32.totalorder %s17, 1
      %s229 = scalar_select %p228, %s17, 1
      %s230 = smul.addr %s229, 32
      %s231 = smul.addr %s230, 4
      %s232 = scalar_lea.vmem %s0, %s231
      %p233 = pneg %p38
      %p234 = pneg %p35
      %p235 = scmp.lt.s32.totalorder %s17, 1
      %s236 = scalar_select %p235, %s17, 1
      %s237 = smul.addr %s236, 32
      %s238 = smul.addr %s237, 4
      %s239 = scalar_lea.vmem %s1, %s238
      %p240 = pneg %p64
      %p241 = pneg %p61
      %p242 = pneg %p85
      %p243 = pneg %p82
      %p244 = pneg %p106
      %p245 = pneg %p103
      %p246 = pneg %p127
      %p247 = pneg %p124
      %p248 = pneg %p148
      %p249 = pneg %p145
      %p250 = pneg %p174
      %p251 = pneg %p171
      %p252 = scmp.lt.s32.totalorder %s17, 1
      %s253 = scalar_select %p252, %s17, 1
      %s254 = smul.addr %s253, 32
      %s255 = smul.addr %s254, 8
      %s256 = scalar_lea.vmem %s6, %s255
      %p257 = scmp.lt.s32.totalorder %s17, 1
      %s258 = scalar_select %p257, %s17, 1
      %s259 = smul.addr %s258, 32
      %s260 = smul.addr %s259, 4
      %s261 = scalar_lea.vmem %s0, %s260
      %p262 = scmp.lt.s32.totalorder %s17, 1
      %s263 = scalar_select %p262, %s17, 1
      %s264 = smul.addr %s263, 32
      %s265 = smul.addr %s264, 4
      %s266 = scalar_lea.vmem %s1, %s265
      %p267 = scmp.lt.s32.totalorder %s17, 1
      %s268 = scalar_select %p267, %s17, 1
      %s269 = smul.addr %s268, 32
      %s270 = smul.addr %s269, 8
      %s271 = scalar_lea.vmem %s6, %s270
      %v272 = vld [vmem:[%s261] sm:$0xf]
      %v273 = vld [vmem:[%s261 + $0x4] sm:$0xf]
      %v274 = vld [vmem:[%s261 + $0x8] sm:$0xf]
      %v275 = vld [vmem:[%s261 + $0xc] sm:$0xf]
      %v276 = vld [vmem:[%s261 + $0x10] sm:$0xf]
      %v277 = vld [vmem:[%s261 + $0x14] sm:$0xf]
      %v278 = vld [vmem:[%s261 + $0x18] sm:$0xf]
      %v279 = vld [vmem:[%s261 + $0x1c] sm:$0xf]
      %v280 = vld [vmem:[%s261 + $0x20] sm:$0xf]
      %v281 = vld [vmem:[%s261 + $0x24] sm:$0xf]
      %v282 = vld [vmem:[%s261 + $0x28] sm:$0xf]
      %v283 = vld [vmem:[%s261 + $0x2c] sm:$0xf]
      %v284 = vld [vmem:[%s261 + $0x30] sm:$0xf]
      %v285 = vld [vmem:[%s261 + $0x34] sm:$0xf]
      %v286 = vld [vmem:[%s261 + $0x38] sm:$0xf]
      %v287 = vld [vmem:[%s261 + $0x3c] sm:$0xf]
      %v288 = vld [vmem:[%s261 + $0x40] sm:$0xf]
      %v289 = vld [vmem:[%s261 + $0x44] sm:$0xf]
      %v290 = vld [vmem:[%s261 + $0x48] sm:$0xf]
      %v291 = vld [vmem:[%s261 + $0x4c] sm:$0xf]
      %v292 = vld [vmem:[%s261 + $0x50] sm:$0xf]
      %v293 = vld [vmem:[%s261 + $0x54] sm:$0xf]
      %v294 = vld [vmem:[%s261 + $0x58] sm:$0xf]
      %v295 = vld [vmem:[%s261 + $0x5c] sm:$0xf]
      %v296 = vld [vmem:[%s261 + $0x60] sm:$0xf]
      %v297 = vld [vmem:[%s261 + $0x64] sm:$0xf]
      %v298 = vld [vmem:[%s261 + $0x68] sm:$0xf]
      %v299 = vld [vmem:[%s261 + $0x6c] sm:$0xf]
      %v300 = vld [vmem:[%s261 + $0x70] sm:$0xf]
      %v301 = vld [vmem:[%s261 + $0x74] sm:$0xf]
      %v302 = vld [vmem:[%s261 + $0x78] sm:$0xf]
      %v303 = vld [vmem:[%s261 + $0x7c] sm:$0xf]
      %v304 = vunpack.c.l.bf16 %v272
      %v305 = vunpack.c.l.bf16 %v273
      %v306 = vunpack.c.l.bf16 %v274
      %v307 = vunpack.c.l.bf16 %v275
      %v308 = vunpack.c.l.bf16 %v276
      %v309 = vunpack.c.l.bf16 %v277
      %v310 = vunpack.c.l.bf16 %v278
      %v311 = vunpack.c.l.bf16 %v279
      %v312 = vunpack.c.l.bf16 %v280
      %v313 = vunpack.c.l.bf16 %v281
      %v314 = vunpack.c.l.bf16 %v282
      %v315 = vunpack.c.l.bf16 %v283
      %v316 = vunpack.c.l.bf16 %v284
      %v317 = vunpack.c.l.bf16 %v285
      %v318 = vunpack.c.l.bf16 %v286
      %v319 = vunpack.c.l.bf16 %v287
      %v320 = vunpack.c.l.bf16 %v288
      %v321 = vunpack.c.l.bf16 %v289
      %v322 = vunpack.c.l.bf16 %v290
      %v323 = vunpack.c.l.bf16 %v291
      %v324 = vunpack.c.l.bf16 %v292
      %v325 = vunpack.c.l.bf16 %v293
      %v326 = vunpack.c.l.bf16 %v294
      %v327 = vunpack.c.l.bf16 %v295
      %v328 = vunpack.c.l.bf16 %v296
      %v329 = vunpack.c.l.bf16 %v297
      %v330 = vunpack.c.l.bf16 %v298
      %v331 = vunpack.c.l.bf16 %v299
      %v332 = vunpack.c.l.bf16 %v300
      %v333 = vunpack.c.l.bf16 %v301
      %v334 = vunpack.c.l.bf16 %v302
      %v335 = vunpack.c.l.bf16 %v303
      %v336 = vld [vmem:[%s2] sm:$0x1]
      %v338 = vperm.slane %v336, 0
      %v340 = vmul.f32 %v304, %v338
      %v341 = vmul.f32 %v305, %v338
      %v342 = vmul.f32 %v306, %v338
      %v343 = vmul.f32 %v307, %v338
      %v344 = vmul.f32 %v308, %v338
      %v345 = vmul.f32 %v309, %v338
      %v346 = vmul.f32 %v310, %v338
      %v347 = vmul.f32 %v311, %v338
      %v348 = vmul.f32 %v312, %v338
      %v349 = vmul.f32 %v313, %v338
      %v350 = vmul.f32 %v314, %v338
      %v351 = vmul.f32 %v315, %v338
      %v352 = vmul.f32 %v316, %v338
      %v353 = vmul.f32 %v317, %v338
      %v354 = vmul.f32 %v318, %v338
      %v355 = vmul.f32 %v319, %v338
      %v356 = vmul.f32 %v320, %v338
      %v357 = vmul.f32 %v321, %v338
      %v358 = vmul.f32 %v322, %v338
      %v359 = vmul.f32 %v323, %v338
      %v360 = vmul.f32 %v324, %v338
      %v361 = vmul.f32 %v325, %v338
      %v362 = vmul.f32 %v326, %v338
      %v363 = vmul.f32 %v327, %v338
      %v364 = vmul.f32 %v328, %v338
      %v365 = vmul.f32 %v329, %v338
      %v366 = vmul.f32 %v330, %v338
      %v367 = vmul.f32 %v331, %v338
      %v368 = vmul.f32 %v332, %v338
      %v369 = vmul.f32 %v333, %v338
      %v370 = vmul.f32 %v334, %v338
      %v371 = vmul.f32 %v335, %v338
      %v372 = vld [vmem:[%s3] sm:$0x1]
      %v374 = vperm.slane %v372, 0
      %v376 = vadd.f32 %v340, %v374
      %v377 = vadd.f32 %v341, %v374
      %v378 = vadd.f32 %v342, %v374
      %v379 = vadd.f32 %v343, %v374
      %v380 = vadd.f32 %v344, %v374
      %v381 = vadd.f32 %v345, %v374
      %v382 = vadd.f32 %v346, %v374
      %v383 = vadd.f32 %v347, %v374
      %v384 = vadd.f32 %v348, %v374
      %v385 = vadd.f32 %v349, %v374
      %v386 = vadd.f32 %v350, %v374
      %v387 = vadd.f32 %v351, %v374
      %v388 = vadd.f32 %v352, %v374
      %v389 = vadd.f32 %v353, %v374
      %v390 = vadd.f32 %v354, %v374
      %v391 = vadd.f32 %v355, %v374
      %v392 = vadd.f32 %v356, %v374
      %v393 = vadd.f32 %v357, %v374
      %v394 = vadd.f32 %v358, %v374
      %v395 = vadd.f32 %v359, %v374
      %v396 = vadd.f32 %v360, %v374
      %v397 = vadd.f32 %v361, %v374
      %v398 = vadd.f32 %v362, %v374
      %v399 = vadd.f32 %v363, %v374
      %v400 = vadd.f32 %v364, %v374
      %v401 = vadd.f32 %v365, %v374
      %v402 = vadd.f32 %v366, %v374
      %v403 = vadd.f32 %v367, %v374
      %v404 = vadd.f32 %v368, %v374
      %v405 = vadd.f32 %v369, %v374
      %v406 = vadd.f32 %v370, %v374
      %v407 = vadd.f32 %v371, %v374
      %v408 = vld [vmem:[%s266] sm:$0xf]
      %v409 = vld [vmem:[%s266 + $0x4] sm:$0xf]
      %v410 = vld [vmem:[%s266 + $0x8] sm:$0xf]
      %v411 = vld [vmem:[%s266 + $0xc] sm:$0xf]
      %v412 = vld [vmem:[%s266 + $0x10] sm:$0xf]
      %v413 = vld [vmem:[%s266 + $0x14] sm:$0xf]
      %v414 = vld [vmem:[%s266 + $0x18] sm:$0xf]
      %v415 = vld [vmem:[%s266 + $0x1c] sm:$0xf]
      %v416 = vld [vmem:[%s266 + $0x20] sm:$0xf]
      %v417 = vld [vmem:[%s266 + $0x24] sm:$0xf]
      %v418 = vld [vmem:[%s266 + $0x28] sm:$0xf]
      %v419 = vld [vmem:[%s266 + $0x2c] sm:$0xf]
      %v420 = vld [vmem:[%s266 + $0x30] sm:$0xf]
      %v421 = vld [vmem:[%s266 + $0x34] sm:$0xf]
      %v422 = vld [vmem:[%s266 + $0x38] sm:$0xf]
      %v423 = vld [vmem:[%s266 + $0x3c] sm:$0xf]
      %v424 = vld [vmem:[%s266 + $0x40] sm:$0xf]
      %v425 = vld [vmem:[%s266 + $0x44] sm:$0xf]
      %v426 = vld [vmem:[%s266 + $0x48] sm:$0xf]
      %v427 = vld [vmem:[%s266 + $0x4c] sm:$0xf]
      %v428 = vld [vmem:[%s266 + $0x50] sm:$0xf]
      %v429 = vld [vmem:[%s266 + $0x54] sm:$0xf]
      %v430 = vld [vmem:[%s266 + $0x58] sm:$0xf]
      %v431 = vld [vmem:[%s266 + $0x5c] sm:$0xf]
      %v432 = vld [vmem:[%s266 + $0x60] sm:$0xf]
      %v433 = vld [vmem:[%s266 + $0x64] sm:$0xf]
      %v434 = vld [vmem:[%s266 + $0x68] sm:$0xf]
      %v435 = vld [vmem:[%s266 + $0x6c] sm:$0xf]
      %v436 = vld [vmem:[%s266 + $0x70] sm:$0xf]
      %v437 = vld [vmem:[%s266 + $0x74] sm:$0xf]
      %v438 = vld [vmem:[%s266 + $0x78] sm:$0xf]
      %v439 = vld [vmem:[%s266 + $0x7c] sm:$0xf]
      %v440 = vunpack.c.l.bf16 %v408
      %v441 = vunpack.c.l.bf16 %v409
      %v442 = vunpack.c.l.bf16 %v410
      %v443 = vunpack.c.l.bf16 %v411
      %v444 = vunpack.c.l.bf16 %v412
      %v445 = vunpack.c.l.bf16 %v413
      %v446 = vunpack.c.l.bf16 %v414
      %v447 = vunpack.c.l.bf16 %v415
      %v448 = vunpack.c.l.bf16 %v416
      %v449 = vunpack.c.l.bf16 %v417
      %v450 = vunpack.c.l.bf16 %v418
      %v451 = vunpack.c.l.bf16 %v419
      %v452 = vunpack.c.l.bf16 %v420
      %v453 = vunpack.c.l.bf16 %v421
      %v454 = vunpack.c.l.bf16 %v422
      %v455 = vunpack.c.l.bf16 %v423
      %v456 = vunpack.c.l.bf16 %v424
      %v457 = vunpack.c.l.bf16 %v425
      %v458 = vunpack.c.l.bf16 %v426
      %v459 = vunpack.c.l.bf16 %v427
      %v460 = vunpack.c.l.bf16 %v428
      %v461 = vunpack.c.l.bf16 %v429
      %v462 = vunpack.c.l.bf16 %v430
      %v463 = vunpack.c.l.bf16 %v431
      %v464 = vunpack.c.l.bf16 %v432
      %v465 = vunpack.c.l.bf16 %v433
      %v466 = vunpack.c.l.bf16 %v434
      %v467 = vunpack.c.l.bf16 %v435
      %v468 = vunpack.c.l.bf16 %v436
      %v469 = vunpack.c.l.bf16 %v437
      %v470 = vunpack.c.l.bf16 %v438
      %v471 = vunpack.c.l.bf16 %v439
      %v472 = vld [vmem:[%s4] sm:$0x1]
      %v474 = vperm.slane %v472, 0
      %v476 = vmul.f32 %v440, %v474
      %v477 = vmul.f32 %v441, %v474
      %v478 = vmul.f32 %v442, %v474
      %v479 = vmul.f32 %v443, %v474
      %v480 = vmul.f32 %v444, %v474
      %v481 = vmul.f32 %v445, %v474
      %v482 = vmul.f32 %v446, %v474
      %v483 = vmul.f32 %v447, %v474
      %v484 = vmul.f32 %v448, %v474
      %v485 = vmul.f32 %v449, %v474
      %v486 = vmul.f32 %v450, %v474
      %v487 = vmul.f32 %v451, %v474
      %v488 = vmul.f32 %v452, %v474
      %v489 = vmul.f32 %v453, %v474
      %v490 = vmul.f32 %v454, %v474
      %v491 = vmul.f32 %v455, %v474
      %v492 = vmul.f32 %v456, %v474
      %v493 = vmul.f32 %v457, %v474
      %v494 = vmul.f32 %v458, %v474
      %v495 = vmul.f32 %v459, %v474
      %v496 = vmul.f32 %v460, %v474
      %v497 = vmul.f32 %v461, %v474
      %v498 = vmul.f32 %v462, %v474
      %v499 = vmul.f32 %v463, %v474
      %v500 = vmul.f32 %v464, %v474
      %v501 = vmul.f32 %v465, %v474
      %v502 = vmul.f32 %v466, %v474
      %v503 = vmul.f32 %v467, %v474
      %v504 = vmul.f32 %v468, %v474
      %v505 = vmul.f32 %v469, %v474
      %v506 = vmul.f32 %v470, %v474
      %v507 = vmul.f32 %v471, %v474
      %v508 = vld [vmem:[%s5] sm:$0x1]
      %v510 = vperm.slane %v508, 0
      %v512 = vadd.f32 %v476, %v510
      %v513 = vadd.f32 %v477, %v510
      %v514 = vadd.f32 %v478, %v510
      %v515 = vadd.f32 %v479, %v510
      %v516 = vadd.f32 %v480, %v510
      %v517 = vadd.f32 %v481, %v510
      %v518 = vadd.f32 %v482, %v510
      %v519 = vadd.f32 %v483, %v510
      %v520 = vadd.f32 %v484, %v510
      %v521 = vadd.f32 %v485, %v510
      %v522 = vadd.f32 %v486, %v510
      %v523 = vadd.f32 %v487, %v510
      %v524 = vadd.f32 %v488, %v510
      %v525 = vadd.f32 %v489, %v510
      %v526 = vadd.f32 %v490, %v510
      %v527 = vadd.f32 %v491, %v510
      %v528 = vadd.f32 %v492, %v510
      %v529 = vadd.f32 %v493, %v510
      %v530 = vadd.f32 %v494, %v510
      %v531 = vadd.f32 %v495, %v510
      %v532 = vadd.f32 %v496, %v510
      %v533 = vadd.f32 %v497, %v510
      %v534 = vadd.f32 %v498, %v510
      %v535 = vadd.f32 %v499, %v510
      %v536 = vadd.f32 %v500, %v510
      %v537 = vadd.f32 %v501, %v510
      %v538 = vadd.f32 %v502, %v510
      %v539 = vadd.f32 %v503, %v510
      %v540 = vadd.f32 %v504, %v510
      %v541 = vadd.f32 %v505, %v510
      %v542 = vadd.f32 %v506, %v510
      %v543 = vadd.f32 %v507, %v510
      %v544 = vadd.f32 %v376, %v512
      %v545 = vadd.f32 %v377, %v513
      %v546 = vadd.f32 %v378, %v514
      %v547 = vadd.f32 %v379, %v515
      %v548 = vadd.f32 %v380, %v516
      %v549 = vadd.f32 %v381, %v517
      %v550 = vadd.f32 %v382, %v518
      %v551 = vadd.f32 %v383, %v519
      %v552 = vadd.f32 %v384, %v520
      %v553 = vadd.f32 %v385, %v521
      %v554 = vadd.f32 %v386, %v522
      %v555 = vadd.f32 %v387, %v523
      %v556 = vadd.f32 %v388, %v524
      %v557 = vadd.f32 %v389, %v525
      %v558 = vadd.f32 %v390, %v526
      %v559 = vadd.f32 %v391, %v527
      %v560 = vadd.f32 %v392, %v528
      %v561 = vadd.f32 %v393, %v529
      %v562 = vadd.f32 %v394, %v530
      %v563 = vadd.f32 %v395, %v531
      %v564 = vadd.f32 %v396, %v532
      %v565 = vadd.f32 %v397, %v533
      %v566 = vadd.f32 %v398, %v534
      %v567 = vadd.f32 %v399, %v535
      %v568 = vadd.f32 %v400, %v536
      %v569 = vadd.f32 %v401, %v537
      %v570 = vadd.f32 %v402, %v538
      %v571 = vadd.f32 %v403, %v539
      %v572 = vadd.f32 %v404, %v540
      %v573 = vadd.f32 %v405, %v541
      %v574 = vadd.f32 %v406, %v542
      %v575 = vadd.f32 %v407, %v543
      %v576 = vmax.f32 %v544, 0.0
      %v577 = vmax.f32 %v545, 0.0
      %v578 = vmax.f32 %v546, 0.0
      %v579 = vmax.f32 %v547, 0.0
      %v580 = vmax.f32 %v548, 0.0
      %v581 = vmax.f32 %v549, 0.0
      %v582 = vmax.f32 %v550, 0.0
      %v583 = vmax.f32 %v551, 0.0
      %v584 = vmax.f32 %v552, 0.0
      %v585 = vmax.f32 %v553, 0.0
      %v586 = vmax.f32 %v554, 0.0
      %v587 = vmax.f32 %v555, 0.0
      %v588 = vmax.f32 %v556, 0.0
      %v589 = vmax.f32 %v557, 0.0
      %v590 = vmax.f32 %v558, 0.0
      %v591 = vmax.f32 %v559, 0.0
      %v592 = vmax.f32 %v560, 0.0
      %v593 = vmax.f32 %v561, 0.0
      %v594 = vmax.f32 %v562, 0.0
      %v595 = vmax.f32 %v563, 0.0
      %v596 = vmax.f32 %v564, 0.0
      %v597 = vmax.f32 %v565, 0.0
      %v598 = vmax.f32 %v566, 0.0
      %v599 = vmax.f32 %v567, 0.0
      %v600 = vmax.f32 %v568, 0.0
      %v601 = vmax.f32 %v569, 0.0
      %v602 = vmax.f32 %v570, 0.0
      %v603 = vmax.f32 %v571, 0.0
      %v604 = vmax.f32 %v572, 0.0
      %v605 = vmax.f32 %v573, 0.0
      %v606 = vmax.f32 %v574, 0.0
      %v607 = vmax.f32 %v575, 0.0
      %608 = vst [vmem:[%s271] sm:$0xff] %v576
      %609 = vst [vmem:[%s271 + $0x8] sm:$0xff] %v577
      %610 = vst [vmem:[%s271 + $0x10] sm:$0xff] %v578
      %611 = vst [vmem:[%s271 + $0x18] sm:$0xff] %v579
      %612 = vst [vmem:[%s271 + $0x20] sm:$0xff] %v580
      %613 = vst [vmem:[%s271 + $0x28] sm:$0xff] %v581
      %614 = vst [vmem:[%s271 + $0x30] sm:$0xff] %v582
      %615 = vst [vmem:[%s271 + $0x38] sm:$0xff] %v583
      %616 = vst [vmem:[%s271 + $0x40] sm:$0xff] %v584
      %617 = vst [vmem:[%s271 + $0x48] sm:$0xff] %v585
      %618 = vst [vmem:[%s271 + $0x50] sm:$0xff] %v586
      %619 = vst [vmem:[%s271 + $0x58] sm:$0xff] %v587
      %620 = vst [vmem:[%s271 + $0x60] sm:$0xff] %v588
      %621 = vst [vmem:[%s271 + $0x68] sm:$0xff] %v589
      %622 = vst [vmem:[%s271 + $0x70] sm:$0xff] %v590
      %623 = vst [vmem:[%s271 + $0x78] sm:$0xff] %v591
      %624 = vst [vmem:[%s271 + $0x80] sm:$0xff] %v592
      %625 = vst [vmem:[%s271 + $0x88] sm:$0xff] %v593
      %626 = vst [vmem:[%s271 + $0x90] sm:$0xff] %v594
      %627 = vst [vmem:[%s271 + $0x98] sm:$0xff] %v595
      %628 = vst [vmem:[%s271 + $0xa0] sm:$0xff] %v596
      %629 = vst [vmem:[%s271 + $0xa8] sm:$0xff] %v597
      %630 = vst [vmem:[%s271 + $0xb0] sm:$0xff] %v598
      %631 = vst [vmem:[%s271 + $0xb8] sm:$0xff] %v599
      %632 = vst [vmem:[%s271 + $0xc0] sm:$0xff] %v600
      %633 = vst [vmem:[%s271 + $0xc8] sm:$0xff] %v601
      %634 = vst [vmem:[%s271 + $0xd0] sm:$0xff] %v602
      %635 = vst [vmem:[%s271 + $0xd8] sm:$0xff] %v603
      %636 = vst [vmem:[%s271 + $0xe0] sm:$0xff] %v604
      %637 = vst [vmem:[%s271 + $0xe8] sm:$0xff] %v605
      %638 = vst [vmem:[%s271 + $0xf0] sm:$0xff] %v606
      %639 = vst [vmem:[%s271 + $0xf8] sm:$0xff] %v607
      %p640 = scmp.lt.s32.totalorder %s17, 1
      %s641 = scalar_select %p640, %s17, 1
      %s642 = smul.addr %s641, 32
      %s643 = smul.addr %s642, 8
      %s644 = scalar_lea.vmem %s6, %s643
      // Predicated region
      $region45: #{residual_block_forward.5} parent=43 // pred_check
        %p645 = pneg %p171
      $region46: #{residual_block_forward.5} parent=43 // pred_check_branch
        %647 = sbr.rel (%p645) target = $region48
      $region47: #{residual_block_forward.5} parent=43 // pred_region
        _
      $region48: #{residual_block_forward.5} parent=43 // pred_fallthru
        _
    $region44: #{residual_block_forward.5} parent=5 // pred_fallthru
      _
    %p648 = scmp.le.s32.totalorder 2, %s12
    // Predicated region
    $region49: #{residual_block_forward.5} parent=5 // pred_check
      %p649 = pneg %p648
    $region50: #{residual_block_forward.5} parent=5 // pred_check_branch
      %651 = sbr.rel (%p649) target = $region52
    $region51: #{residual_block_forward.5} parent=5 // pred_region
      %s652 = ssub.s32 %s12, 2
      // Predicated region
      $region53: #{residual_block_forward.5} parent=51 // pred_check
        %p653 = pneg %p177
      $region54: #{residual_block_forward.5} parent=51 // pred_check_branch
        %655 = sbr.rel (%p653) target = $region56
      $region55: #{residual_block_forward.5} parent=51 // pred_region
        %p656 = scmp.lt.s32.totalorder %s18, 1
        %s657 = scalar_select %p656, %s18, 1
        %s658 = smul.addr %s657, 32
        %s659 = smul.addr %s658, 8
        %s660 = scalar_lea.vmem %s6, %s659
      $region56: #{residual_block_forward.5} parent=51 // pred_fallthru
        _
    $region52: #{residual_block_forward.5} parent=5 // pred_fallthru
      _
  $region6: #{residual_block_forward.5} parent=0 // loop_footer
    %s16 = sadd.s32 1, %s12
  $region7: #{residual_block_forward.5} parent=0 // loop_footer_branch
    %11 = sbr.rel target = $region3
  $region8: #{residual_block_forward.5} parent=0 // loop_exit
    _

// kernel: residual_block_forward.4
$region0: #{residual_block_forward.4}
  #allocation0 [shape = 'u32[]', space=smem, size = 0x4, offset = 0x4, fixed_abs, tag = 'smem constant byte address 0x4 - core index']
  #allocation1 [shape = 'u32[72,128]{1,0:T(1,128)}', space=vmem, size = 0x9000, scoped, tag = 'internal scratch']
  %s0 = inlined_call_operand.vmem [shape: bf16[2,16,16,128], index: 0, kind: input, shape index: {}]
  %s1 = inlined_call_operand.vmem [shape: bf16[9,128,128], index: 1, kind: input, shape index: {}]
  %s2 = inlined_call_operand.vmem [shape: f32[1,1,128], index: 2, kind: input, shape index: {}]
  %s3 = inlined_call_operand.vmem [shape: f32[1,1,128], index: 3, kind: input, shape index: {}]
  %s4 = inlined_call_operand.vmem [shape: bf16[2,16,16,128], index: 4, kind: output, shape index: {0}]
  %s5 = inlined_call_operand.vmem [shape: f32[2,1,128], index: 5, kind: output, shape index: {1}]
  %s6 = inlined_call_operand.vmem [shape: f32[2,1,128], index: 6, kind: output, shape index: {2}]
  %7 = xla_tuple %s4, %s5, %s6
  %s8 = sld [smem:[#allocation0]]
  $region65: #{residual_block_forward.4} parent=0
    _
  %s10 = ssub.s32 1, %s8
  %s11 = scalar_select 0, %s10, %s8
  loop: start=0, step=1, limit=4
  $region2: #{residual_block_forward.4} parent=0 // loop_pre_header
    _
  $region3: #{residual_block_forward.4} parent=0 // loop_header
    %s13 = sphi 0, %s17
    %p14 = scmp.ge.s32.totalorder %s13, 4
    %s23 = sphi 0, %s25
    %s26 = sphi 0, %s23
    %s27 = sphi 0, %s26
    %s43 = sphi 0, %s27
    %s47 = sphi 0, %s47
    %s49 = sphi 0, %s47
    %s50 = sphi 0, %s49
    %s64 = sphi 0, %s50
    %s68 = sphi 0, %s68
    %s70 = sphi 0, %s68
    %s71 = sphi 0, %s70
    %s85 = sphi 0, %s71
    %s89 = sphi 0, %s89
    %s91 = sphi 0, %s89
    %s92 = sphi 0, %s91
    %s106 = sphi 0, %s92
    %s112 = sphi 0, %s114
    %s115 = sphi 0, %s112
    %s116 = sphi 0, %s115
    %s132 = sphi 0, %s116
    %s138 = sphi 0, %s140
    %s141 = sphi 0, %s138
    %s142 = sphi 0, %s141
    %s158 = sphi 0, %s142
    %s164 = sphi 0, %s166
    %s167 = sphi 0, %s164
    %s168 = sphi 0, %s167
    %s184 = sphi 0, %s168
  $region4: #{residual_block_forward.4} parent=0 // loop_header_branch
    %16 = sbr.rel (%p14) target = $region8
  $region5: #{residual_block_forward.4} parent=0 // loop_body
    %s18 = ssub.s32 %s13, 1
    %s19 = ssub.s32 %s13, 2
    %s20 = sadd.s32 %s13, 1
    %s21 = ssub.s32 %s13, %s20
    %p22 = scmp.eq.s32.totalorder %s21, 0
    %s24 = sadd.s32 %s23, 1
    %s25 = scalar_select %p22, %s23, %s24
    %p28 = pneg %p22
    %p29 = scmp.eq.s32.totalorder %s13, 1
    %p30 = por %p28, %p29
    %p31 = scmp.ne.s32.totalorder %s23, %s26
    %p32 = scmp.eq.s32.totalorder %s13, 0
    %p33 = por %p31, %p32
    %p34 = scmp.ne.s32.totalorder %s23, %s26
    %p35 = scmp.eq.s32.totalorder %s18, 1
    %p36 = por %p34, %p35
    %p37 = scmp.ne.s32.totalorder %s26, %s27
    %p38 = scmp.eq.s32.totalorder %s18, 0
    %p39 = por %p37, %p38
    %p40 = scmp.ne.s32.totalorder %s26, %s27
    %p41 = scmp.eq.s32.totalorder %s19, 1
    %p42 = por %p40, %p41
    %p44 = scmp.ne.s32.totalorder %s27, %s43
    %p45 = scmp.eq.s32.totalorder %s19, 0
    %p46 = por %p44, %p45
    %s48 = sadd.s32 %s47, 1
    %p51 = scmp.eq.s32.totalorder %s13, 1
    %p52 = scmp.ne.s32.totalorder %s47, %s49
    %p53 = scmp.eq.s32.totalorder %s13, 0
    %p54 = por %p52, %p53
    %p55 = scmp.ne.s32.totalorder %s47, %s49
    %p56 = scmp.eq.s32.totalorder %s18, 1
    %p57 = por %p55, %p56
    %p58 = scmp.ne.s32.totalorder %s49, %s50
    %p59 = scmp.eq.s32.totalorder %s18, 0
    %p60 = por %p58, %p59
    %p61 = scmp.ne.s32.totalorder %s49, %s50
    %p62 = scmp.eq.s32.totalorder %s19, 1
    %p63 = por %p61, %p62
    %p65 = scmp.ne.s32.totalorder %s50, %s64
    %p66 = scmp.eq.s32.totalorder %s19, 0
    %p67 = por %p65, %p66
    %s69 = sadd.s32 %s68, 1
    %p72 = scmp.eq.s32.totalorder %s13, 1
    %p73 = scmp.ne.s32.totalorder %s68, %s70
    %p74 = scmp.eq.s32.totalorder %s13, 0
    %p75 = por %p73, %p74
    %p76 = scmp.ne.s32.totalorder %s68, %s70
    %p77 = scmp.eq.s32.totalorder %s18, 1
    %p78 = por %p76, %p77
    %p79 = scmp.ne.s32.totalorder %s70, %s71
    %p80 = scmp.eq.s32.totalorder %s18, 0
    %p81 = por %p79, %p80
    %p82 = scmp.ne.s32.totalorder %s70, %s71
    %p83 = scmp.eq.s32.totalorder %s19, 1
    %p84 = por %p82, %p83
    %p86 = scmp.ne.s32.totalorder %s71, %s85
    %p87 = scmp.eq.s32.totalorder %s19, 0
    %p88 = por %p86, %p87
    %s90 = sadd.s32 %s89, 1
    %p93 = scmp.eq.s32.totalorder %s13, 1
    %p94 = scmp.ne.s32.totalorder %s89, %s91
    %p95 = scmp.eq.s32.totalorder %s13, 0
    %p96 = por %p94, %p95
    %p97 = scmp.ne.s32.totalorder %s89, %s91
    %p98 = scmp.eq.s32.totalorder %s18, 1
    %p99 = por %p97, %p98
    %p100 = scmp.ne.s32.totalorder %s91, %s92
    %p101 = scmp.eq.s32.totalorder %s18, 0
    %p102 = por %p100, %p101
    %p103 = scmp.ne.s32.totalorder %s91, %s92
    %p104 = scmp.eq.s32.totalorder %s19, 1
    %p105 = por %p103, %p104
    %p107 = scmp.ne.s32.totalorder %s92, %s106
    %p108 = scmp.eq.s32.totalorder %s19, 0
    %p109 = por %p107, %p108
    %s110 = ssub.s32 %s13, %s20
    %p111 = scmp.eq.s32.totalorder %s110, 0
    %s113 = sadd.s32 %s112, 1
    %s114 = scalar_select %p111, %s112, %s113
    %p117 = pneg %p111
    %p118 = scmp.eq.s32.totalorder %s13, 1
    %p119 = por %p117, %p118
    %p120 = scmp.ne.s32.totalorder %s112, %s115
    %p121 = scmp.eq.s32.totalorder %s13, 0
    %p122 = por %p120, %p121
    %p123 = scmp.ne.s32.totalorder %s112, %s115
    %p124 = scmp.eq.s32.totalorder %s18, 1
    %p125 = por %p123, %p124
    %p126 = scmp.ne.s32.totalorder %s115, %s116
    %p127 = scmp.eq.s32.totalorder %s18, 0
    %p128 = por %p126, %p127
    %p129 = scmp.ne.s32.totalorder %s115, %s116
    %p130 = scmp.eq.s32.totalorder %s19, 1
    %p131 = por %p129, %p130
    %p133 = scmp.ne.s32.totalorder %s116, %s132
    %p134 = scmp.eq.s32.totalorder %s19, 0
    %p135 = por %p133, %p134
    %s136 = ssub.s32 %s13, %s20
    %p137 = scmp.eq.s32.totalorder %s136, 0
    %s139 = sadd.s32 %s138, 1
    %s140 = scalar_select %p137, %s138, %s139
    %p143 = pneg %p137
    %p144 = scmp.eq.s32.totalorder %s13, 1
    %p145 = por %p143, %p144
    %p146 = scmp.ne.s32.totalorder %s138, %s141
    %p147 = scmp.eq.s32.totalorder %s13, 0
    %p148 = por %p146, %p147
    %p149 = scmp.ne.s32.totalorder %s138, %s141
    %p150 = scmp.eq.s32.totalorder %s18, 1
    %p151 = por %p149, %p150
    %p152 = scmp.ne.s32.totalorder %s141, %s142
    %p153 = scmp.eq.s32.totalorder %s18, 0
    %p154 = por %p152, %p153
    %p155 = scmp.ne.s32.totalorder %s141, %s142
    %p156 = scmp.eq.s32.totalorder %s19, 1
    %p157 = por %p155, %p156
    %p159 = scmp.ne.s32.totalorder %s142, %s158
    %p160 = scmp.eq.s32.totalorder %s19, 0
    %p161 = por %p159, %p160
    %s162 = ssub.s32 %s13, %s20
    %p163 = scmp.eq.s32.totalorder %s162, 0
    %s165 = sadd.s32 %s164, 1
    %s166 = scalar_select %p163, %s164, %s165
    %p169 = pneg %p163
    %p170 = scmp.eq.s32.totalorder %s13, 1
    %p171 = por %p169, %p170
    %p172 = scmp.ne.s32.totalorder %s164, %s167
    %p173 = scmp.eq.s32.totalorder %s13, 0
    %p174 = por %p172, %p173
    %p175 = scmp.ne.s32.totalorder %s164, %s167
    %p176 = scmp.eq.s32.totalorder %s18, 1
    %p177 = por %p175, %p176
    %p178 = scmp.ne.s32.totalorder %s167, %s168
    %p179 = scmp.eq.s32.totalorder %s18, 0
    %p180 = por %p178, %p179
    %p181 = scmp.ne.s32.totalorder %s167, %s168
    %p182 = scmp.eq.s32.totalorder %s19, 1
    %p183 = por %p181, %p182
    %p185 = scmp.ne.s32.totalorder %s168, %s184
    %p186 = scmp.eq.s32.totalorder %s19, 0
    %p187 = por %p185, %p186
    %p188 = scmp.le.s32.totalorder 1, %s13
    %p189 = scmp.lt.s32.totalorder %s13, 3
    %p190 = pnand %p188, %p189
    %p191 = pneg %p190
    // Predicated region
    $region9: #{residual_block_forward.4} parent=5 // pred_check
      _
    $region10: #{residual_block_forward.4} parent=5 // pred_check_branch
      %193 = sbr.rel (%p190) target = $region12
    $region11: #{residual_block_forward.4} parent=5 // pred_region
      %s194 = ssub.s32 %s13, 1
      // Predicated region
      $region13: #{residual_block_forward.4} parent=11 // pred_check
        %p195 = pneg %p60
      $region14: #{residual_block_forward.4} parent=11 // pred_check_branch
        %197 = sbr.rel (%p195) target = $region16
      $region15: #{residual_block_forward.4} parent=11 // pred_region
        _
      $region16: #{residual_block_forward.4} parent=11 // pred_fallthru
        _
      // Predicated region
      $region17: #{residual_block_forward.4} parent=11 // pred_check
        %p198 = pneg %p81
      $region18: #{residual_block_forward.4} parent=11 // pred_check_branch
        %200 = sbr.rel (%p198) target = $region20
      $region19: #{residual_block_forward.4} parent=11 // pred_region
        _
      $region20: #{residual_block_forward.4} parent=11 // pred_fallthru
        _
      // Predicated region
      $region21: #{residual_block_forward.4} parent=11 // pred_check
        %p201 = pneg %p102
      $region22: #{residual_block_forward.4} parent=11 // pred_check_branch
        %203 = sbr.rel (%p201) target = $region24
      $region23: #{residual_block_forward.4} parent=11 // pred_region
        _
      $region24: #{residual_block_forward.4} parent=11 // pred_fallthru
        _
    $region12: #{residual_block_forward.4} parent=5 // pred_fallthru
      _
    %p204 = scmp.lt.s32.totalorder %s13, 2
    // Predicated region
    $region25: #{residual_block_forward.4} parent=5 // pred_check
      %p205 = pneg %p204
    $region26: #{residual_block_forward.4} parent=5 // pred_check_branch
      %207 = sbr.rel (%p205) target = $region28
    $region27: #{residual_block_forward.4} parent=5 // pred_region
      // Predicated region
      $region29: #{residual_block_forward.4} parent=27 // pred_check
        %p208 = pneg %p33
      $region30: #{residual_block_forward.4} parent=27 // pred_check_branch
        %210 = sbr.rel (%p208) target = $region32
      $region31: #{residual_block_forward.4} parent=27 // pred_region
        %p211 = scmp.lt.s32.totalorder %s13, 1
        %s212 = scalar_select %p211, %s13, 1
        %s213 = smul.addr %s212, 32
        %s214 = smul.addr %s213, 4
        %s215 = scalar_lea.vmem %s0, %s214
      $region32: #{residual_block_forward.4} parent=27 // pred_fallthru
        _
    $region28: #{residual_block_forward.4} parent=5 // pred_fallthru
      _
    %p216 = scmp.le.s32.totalorder 1, %s13
    %p217 = scmp.lt.s32.totalorder %s13, 3
    %p218 = pnand %p216, %p217
    %p219 = pneg %p218
    // Predicated region
    $region33: #{residual_block_forward.4} parent=5 // pred_check
      _
    $region34: #{residual_block_forward.4} parent=5 // pred_check_branch
      %221 = sbr.rel (%p218) target = $region36
    $region35: #{residual_block_forward.4} parent=5 // pred_region
      %s222 = ssub.s32 %s13, 1
      %p223 = scmp.lt.s32.totalorder %s18, 1
      %s224 = scalar_select %p223, %s18, 1
      %s225 = smul.addr %s224, 32
      %s226 = smul.addr %s225, 4
      %s227 = scalar_lea.vmem %s0, %s226
      %p228 = pneg %p39
      %p229 = pneg %p36
      %p230 = pneg %p60
      %p231 = pneg %p57
      %p232 = pneg %p81
      %p233 = pneg %p78
      %p234 = pneg %p102
      %p235 = pneg %p99
      %p236 = pneg %p128
      %p237 = pneg %p125
      %p238 = scmp.lt.s32.totalorder %s18, 1
      %s239 = scalar_select %p238, %s18, 1
      %s240 = smul.addr %s239, 32
      %s241 = smul.addr %s240, 4
      %s242 = scalar_lea.vmem %s4, %s241
      %p243 = pneg %p154
      %p244 = pneg %p151
      %p245 = scmp.lt.s32.totalorder %s18, 1
      %s246 = scalar_select %p245, %s18, 1
      %s247 = scalar_lea.vmem %s5, %s246
      %p248 = pneg %p180
      %p249 = pneg %p177
      %p250 = scmp.lt.s32.totalorder %s18, 1
      %s251 = scalar_select %p250, %s18, 1
      %s252 = scalar_lea.vmem %s6, %s251
      %p253 = scmp.lt.s32.totalorder %s18, 1
      %s254 = scalar_select %p253, %s18, 1
      %s255 = smul.addr %s254, 32
      %s256 = smul.addr %s255, 4
      %s257 = scalar_lea.vmem %s0, %s256
      %p258 = scmp.lt.s32.totalorder %s18, 1
      %s259 = scalar_select %p258, %s18, 1
      %s260 = smul.addr %s259, 32
      %s261 = smul.addr %s260, 4
      %s262 = scalar_lea.vmem %s4, %s261
      %p263 = scmp.lt.s32.totalorder %s18, 1
      %s264 = scalar_select %p263, %s18, 1
      %s265 = scalar_lea.vmem %s5, %s264
      %p266 = scmp.lt.s32.totalorder %s18, 1
      %s267 = scalar_select %p266, %s18, 1
      %s268 = scalar_lea.vmem %s6, %s267
      %v270 = vld [vmem:[%s257] sm:$0xf]
      %v271 = vld [vmem:[%s257 + $0x4] sm:$0xf]
      %v272 = vld [vmem:[%s257 + $0x8] sm:$0xf]
      %v273 = vld [vmem:[%s257 + $0xc] sm:$0xf]
      %v274 = vld [vmem:[%s257 + $0x10] sm:$0xf]
      %v275 = vld [vmem:[%s257 + $0x14] sm:$0xf]
      %v276 = vld [vmem:[%s257 + $0x18] sm:$0xf]
      %v277 = vld [vmem:[%s257 + $0x1c] sm:$0xf]
      %v278 = vld [vmem:[%s257 + $0x20] sm:$0xf]
      %v279 = vld [vmem:[%s257 + $0x24] sm:$0xf]
      %v280 = vld [vmem:[%s257 + $0x28] sm:$0xf]
      %v281 = vld [vmem:[%s257 + $0x2c] sm:$0xf]
      %v282 = vld [vmem:[%s257 + $0x30] sm:$0xf]
      %v283 = vld [vmem:[%s257 + $0x34] sm:$0xf]
      %v284 = vld [vmem:[%s257 + $0x38] sm:$0xf]
      %v285 = vld [vmem:[%s257 + $0x3c] sm:$0xf]
      %v286 = vld [vmem:[%s257 + $0x40] sm:$0xf]
      %v287 = vld [vmem:[%s257 + $0x44] sm:$0xf]
      %v288 = vld [vmem:[%s257 + $0x48] sm:$0xf]
      %v289 = vld [vmem:[%s257 + $0x4c] sm:$0xf]
      %v290 = vld [vmem:[%s257 + $0x50] sm:$0xf]
      %v291 = vld [vmem:[%s257 + $0x54] sm:$0xf]
      %v292 = vld [vmem:[%s257 + $0x58] sm:$0xf]
      %v293 = vld [vmem:[%s257 + $0x5c] sm:$0xf]
      %v294 = vld [vmem:[%s257 + $0x60] sm:$0xf]
      %v295 = vld [vmem:[%s257 + $0x64] sm:$0xf]
      %v296 = vld [vmem:[%s257 + $0x68] sm:$0xf]
      %v297 = vld [vmem:[%s257 + $0x6c] sm:$0xf]
      %v298 = vld [vmem:[%s257 + $0x70] sm:$0xf]
      %v299 = vld [vmem:[%s257 + $0x74] sm:$0xf]
      %v300 = vld [vmem:[%s257 + $0x78] sm:$0xf]
      %v301 = vld [vmem:[%s257 + $0x7c] sm:$0xf]
      %v302 = vunpack.c.l.bf16 %v270
      %v303 = vunpack.c.l.bf16 %v271
      %v304 = vunpack.c.l.bf16 %v272
      %v305 = vunpack.c.l.bf16 %v273
      %v306 = vunpack.c.l.bf16 %v274
      %v307 = vunpack.c.l.bf16 %v275
      %v308 = vunpack.c.l.bf16 %v276
      %v309 = vunpack.c.l.bf16 %v277
      %v310 = vunpack.c.l.bf16 %v278
      %v311 = vunpack.c.l.bf16 %v279
      %v312 = vunpack.c.l.bf16 %v280
      %v313 = vunpack.c.l.bf16 %v281
      %v314 = vunpack.c.l.bf16 %v282
      %v315 = vunpack.c.l.bf16 %v283
      %v316 = vunpack.c.l.bf16 %v284
      %v317 = vunpack.c.l.bf16 %v285
      %v318 = vunpack.c.l.bf16 %v286
      %v319 = vunpack.c.l.bf16 %v287
      %v320 = vunpack.c.l.bf16 %v288
      %v321 = vunpack.c.l.bf16 %v289
      %v322 = vunpack.c.l.bf16 %v290
      %v323 = vunpack.c.l.bf16 %v291
      %v324 = vunpack.c.l.bf16 %v292
      %v325 = vunpack.c.l.bf16 %v293
      %v326 = vunpack.c.l.bf16 %v294
      %v327 = vunpack.c.l.bf16 %v295
      %v328 = vunpack.c.l.bf16 %v296
      %v329 = vunpack.c.l.bf16 %v297
      %v330 = vunpack.c.l.bf16 %v298
      %v331 = vunpack.c.l.bf16 %v299
      %v332 = vunpack.c.l.bf16 %v300
      %v333 = vunpack.c.l.bf16 %v301
      %v334 = vld [vmem:[%s2] sm:$0x1]
      %v336 = vperm.slane %v334, 0
      %v338 = vmul.f32 %v302, %v336
      %v339 = vmul.f32 %v303, %v336
      %v340 = vmul.f32 %v304, %v336
      %v341 = vmul.f32 %v305, %v336
      %v342 = vmul.f32 %v306, %v336
      %v343 = vmul.f32 %v307, %v336
      %v344 = vmul.f32 %v308, %v336
      %v345 = vmul.f32 %v309, %v336
      %v346 = vmul.f32 %v310, %v336
      %v347 = vmul.f32 %v311, %v336
      %v348 = vmul.f32 %v312, %v336
      %v349 = vmul.f32 %v313, %v336
      %v350 = vmul.f32 %v314, %v336
      %v351 = vmul.f32 %v315, %v336
      %v352 = vmul.f32 %v316, %v336
      %v353 = vmul.f32 %v317, %v336
      %v354 = vmul.f32 %v318, %v336
      %v355 = vmul.f32 %v319, %v336
      %v356 = vmul.f32 %v320, %v336
      %v357 = vmul.f32 %v321, %v336
      %v358 = vmul.f32 %v322, %v336
      %v359 = vmul.f32 %v323, %v336
      %v360 = vmul.f32 %v324, %v336
      %v361 = vmul.f32 %v325, %v336
      %v362 = vmul.f32 %v326, %v336
      %v363 = vmul.f32 %v327, %v336
      %v364 = vmul.f32 %v328, %v336
      %v365 = vmul.f32 %v329, %v336
      %v366 = vmul.f32 %v330, %v336
      %v367 = vmul.f32 %v331, %v336
      %v368 = vmul.f32 %v332, %v336
      %v369 = vmul.f32 %v333, %v336
      %v370 = vld [vmem:[%s3] sm:$0x1]
      %v372 = vperm.slane %v370, 0
      %v374 = vadd.f32 %v338, %v372
      %v375 = vadd.f32 %v339, %v372
      %v376 = vadd.f32 %v340, %v372
      %v377 = vadd.f32 %v341, %v372
      %v378 = vadd.f32 %v342, %v372
      %v379 = vadd.f32 %v343, %v372
      %v380 = vadd.f32 %v344, %v372
      %v381 = vadd.f32 %v345, %v372
      %v382 = vadd.f32 %v346, %v372
      %v383 = vadd.f32 %v347, %v372
      %v384 = vadd.f32 %v348, %v372
      %v385 = vadd.f32 %v349, %v372
      %v386 = vadd.f32 %v350, %v372
      %v387 = vadd.f32 %v351, %v372
      %v388 = vadd.f32 %v352, %v372
      %v389 = vadd.f32 %v353, %v372
      %v390 = vadd.f32 %v354, %v372
      %v391 = vadd.f32 %v355, %v372
      %v392 = vadd.f32 %v356, %v372
      %v393 = vadd.f32 %v357, %v372
      %v394 = vadd.f32 %v358, %v372
      %v395 = vadd.f32 %v359, %v372
      %v396 = vadd.f32 %v360, %v372
      %v397 = vadd.f32 %v361, %v372
      %v398 = vadd.f32 %v362, %v372
      %v399 = vadd.f32 %v363, %v372
      %v400 = vadd.f32 %v364, %v372
      %v401 = vadd.f32 %v365, %v372
      %v402 = vadd.f32 %v366, %v372
      %v403 = vadd.f32 %v367, %v372
      %v404 = vadd.f32 %v368, %v372
      %v405 = vadd.f32 %v369, %v372
      %v406 = vmax.f32 %v374, 0.0
      %v407 = vmax.f32 %v375, 0.0
      %v408 = vmax.f32 %v376, 0.0
      %v409 = vmax.f32 %v377, 0.0
      %v410 = vmax.f32 %v378, 0.0
      %v411 = vmax.f32 %v379, 0.0
      %v412 = vmax.f32 %v380, 0.0
      %v413 = vmax.f32 %v381, 0.0
      %v414 = vmax.f32 %v382, 0.0
      %v415 = vmax.f32 %v383, 0.0
      %v416 = vmax.f32 %v384, 0.0
      %v417 = vmax.f32 %v385, 0.0
      %v418 = vmax.f32 %v386, 0.0
      %v419 = vmax.f32 %v387, 0.0
      %v420 = vmax.f32 %v388, 0.0
      %v421 = vmax.f32 %v389, 0.0
      %v422 = vmax.f32 %v390, 0.0
      %v423 = vmax.f32 %v391, 0.0
      %v424 = vmax.f32 %v392, 0.0
      %v425 = vmax.f32 %v393, 0.0
      %v426 = vmax.f32 %v394, 0.0
      %v427 = vmax.f32 %v395, 0.0
      %v428 = vmax.f32 %v396, 0.0
      %v429 = vmax.f32 %v397, 0.0
      %v430 = vmax.f32 %v398, 0.0
      %v431 = vmax.f32 %v399, 0.0
      %v432 = vmax.f32 %v400, 0.0
      %v433 = vmax.f32 %v401, 0.0
      %v434 = vmax.f32 %v402, 0.0
      %v435 = vmax.f32 %v403, 0.0
      %v436 = vmax.f32 %v404, 0.0
      %v437 = vmax.f32 %v405, 0.0
      %v438 = vpack.c.bf16 %v406, %v406
      %v439 = vpack.c.bf16 %v407, %v407
      %v440 = vpack.c.bf16 %v408, %v408
      %v441 = vpack.c.bf16 %v409, %v409
      %v442 = vpack.c.bf16 %v410, %v410
      %v443 = vpack.c.bf16 %v411, %v411
      %v444 = vpack.c.bf16 %v412, %v412
      %v445 = vpack.c.bf16 %v413, %v413
      %v446 = vpack.c.bf16 %v414, %v414
      %v447 = vpack.c.bf16 %v415, %v415
      %v448 = vpack.c.bf16 %v416, %v416
      %v449 = vpack.c.bf16 %v417, %v417
      %v450 = vpack.c.bf16 %v418, %v418
      %v451 = vpack.c.bf16 %v419, %v419
      %v452 = vpack.c.bf16 %v420, %v420
      %v453 = vpack.c.bf16 %v421, %v421
      %v454 = vpack.c.bf16 %v422, %v422
      %v455 = vpack.c.bf16 %v423, %v423
      %v456 = vpack.c.bf16 %v424, %v424
      %v457 = vpack.c.bf16 %v425, %v425
      %v458 = vpack.c.bf16 %v426, %v426
      %v459 = vpack.c.bf16 %v427, %v427
      %v460 = vpack.c.bf16 %v428, %v428
      %v461 = vpack.c.bf16 %v429, %v429
      %v462 = vpack.c.bf16 %v430, %v430
      %v463 = vpack.c.bf16 %v431, %v431
      %v464 = vpack.c.bf16 %v432, %v432
      %v465 = vpack.c.bf16 %v433, %v433
      %v466 = vpack.c.bf16 %v434, %v434
      %v467 = vpack.c.bf16 %v435, %v435
      %v468 = vpack.c.bf16 %v436, %v436
      %v469 = vpack.c.bf16 %v437, %v437
      %v502 = vunpack.c.l.b16 %v438
      %v503 = vunpack.c.l.b16 %v439
      %v504 = vunpack.c.l.b16 %v440
      %v505 = vunpack.c.l.b16 %v441
      %v506 = vunpack.c.l.b16 %v442
      %v507 = vunpack.c.l.b16 %v443
      %v508 = vunpack.c.l.b16 %v444
      %v509 = vunpack.c.l.b16 %v445
      %v510 = vunpack.c.l.b16 %v446
      %v511 = vunpack.c.l.b16 %v447
      %v512 = vunpack.c.l.b16 %v448
      %v513 = vunpack.c.l.b16 %v449
      %v514 = vunpack.c.l.b16 %v450
      %v515 = vunpack.c.l.b16 %v451
      %v516 = vunpack.c.l.b16 %v452
      %v517 = vunpack.c.l.b16 %v453
      %v518 = vunpack.c.l.b16 %v454
      %v519 = vunpack.c.l.b16 %v455
      %v520 = vunpack.c.l.b16 %v456
      %v521 = vunpack.c.l.b16 %v457
      %v522 = vunpack.c.l.b16 %v458
      %v523 = vunpack.c.l.b16 %v459
      %v524 = vunpack.c.l.b16 %v460
      %v525 = vunpack.c.l.b16 %v461
      %v526 = vunpack.c.l.b16 %v462
      %v527 = vunpack.c.l.b16 %v463
      %v528 = vunpack.c.l.b16 %v464
      %v529 = vunpack.c.l.b16 %v465
      %v530 = vunpack.c.l.b16 %v466
      %v531 = vunpack.c.l.b16 %v467
      %v532 = vunpack.c.l.b16 %v468
      %v533 = vunpack.c.l.b16 %v469
      %v534 = vpack.c.b16 %v503, %v502
      %v535 = vpack.c.b16 %v505, %v504
      %v536 = vpack.c.b16 %v507, %v506
      %v537 = vpack.c.b16 %v509, %v508
      %v538 = vpack.c.b16 %v511, %v510
      %v539 = vpack.c.b16 %v513, %v512
      %v540 = vpack.c.b16 %v515, %v514
      %v541 = vpack.c.b16 %v517, %v516
      %v542 = vpack.c.b16 %v519, %v518
      %v543 = vpack.c.b16 %v521, %v520
      %v544 = vpack.c.b16 %v523, %v522
      %v545 = vpack.c.b16 %v525, %v524
      %v546 = vpack.c.b16 %v527, %v526
      %v547 = vpack.c.b16 %v529, %v528
      %v548 = vpack.c.b16 %v531, %v530
      %v549 = vpack.c.b16 %v533, %v532
      %v551 = vshrl.u32 0, 16
      %v553 = vrot.slane %v551, 7
      %v554 = vshll.u32 0, 16
      %v556 = vor.u32 %v553, %v554
      %v558 = vshrl.u32 %v534, 16
      %v560 = vrot.slane %v558, 7
      %v561 = vshll.u32 %v534, 16
      %v563 = vor.u32 %v560, %v561
      %v565 = vshrl.u32 %v535, 16
      %v567 = vrot.slane %v565, 7
      %v568 = vshll.u32 %v535, 16
      %v570 = vor.u32 %v567, %v568
      %v572 = vshrl.u32 %v536, 16
      %v574 = vrot.slane %v572, 7
      %v575 = vshll.u32 %v536, 16
      %v577 = vor.u32 %v574, %v575
      %v579 = vshrl.u32 %v537, 16
      %v581 = vrot.slane %v579, 7
      %v582 = vshll.u32 %v537, 16
      %v584 = vor.u32 %v581, %v582
      %v586 = vshrl.u32 %v538, 16
      %v588 = vrot.slane %v586, 7
      %v589 = vshll.u32 %v538, 16
      %v591 = vor.u32 %v588, %v589
      %v593 = vshrl.u32 %v539, 16
      %v595 = vrot.slane %v593, 7
      %v596 = vshll.u32 %v539, 16
      %v598 = vor.u32 %v595, %v596
      %v600 = vshrl.u32 %v540, 16
      %v602 = vrot.slane %v600, 7
      %v603 = vshll.u32 %v540, 16
      %v605 = vor.u32 %v602, %v603
      %v607 = vshrl.u32 %v541, 16
      %v609 = vrot.slane %v607, 7
      %v610 = vshll.u32 %v541, 16
      %v612 = vor.u32 %v609, %v610
      %v614 = vshrl.u32 %v542, 16
      %v616 = vrot.slane %v614, 7
      %v617 = vshll.u32 %v542, 16
      %v619 = vor.u32 %v616, %v617
      %v621 = vshrl.u32 %v543, 16
      %v623 = vrot.slane %v621, 7
      %v624 = vshll.u32 %v543, 16
      %v626 = vor.u32 %v623, %v624
      %v628 = vshrl.u32 %v544, 16
      %v630 = vrot.slane %v628, 7
      %v631 = vshll.u32 %v544, 16
      %v633 = vor.u32 %v630, %v631
      %v635 = vshrl.u32 %v545, 16
      %v637 = vrot.slane %v635, 7
      %v638 = vshll.u32 %v545, 16
      %v640 = vor.u32 %v637, %v638
      %v642 = vshrl.u32 %v546, 16
      %v644 = vrot.slane %v642, 7
      %v645 = vshll.u32 %v546, 16
      %v647 = vor.u32 %v644, %v645
      %v649 = vshrl.u32 %v547, 16
      %v651 = vrot.slane %v649, 7
      %v652 = vshll.u32 %v547, 16
      %v654 = vor.u32 %v651, %v652
      %v656 = vshrl.u32 %v548, 16
      %v658 = vrot.slane %v656, 7
      %v659 = vshll.u32 %v548, 16
      %v661 = vor.u32 %v658, %v659
      %v663 = vshrl.u32 %v549, 16
      %v665 = vrot.slane %v663, 7
      %v666 = vshll.u32 %v549, 16
      %v668 = vor.u32 %v665, %v666
      %vm703 = vcmask 1040384
      %vm704 = vsmask.f32 256
      %vm705 = vmand %vm703, %vm704
      %v706 = vsel %vm705, 0, %v556
      %v707 = vsel %vm705, 0, %v563
      %v708 = vsel %vm705, 0, %v570
      %v709 = vsel %vm705, 0, %v577
      %v710 = vsel %vm705, 0, %v584
      %v711 = vsel %vm705, 0, %v591
      %v712 = vsel %vm705, 0, %v598
      %v713 = vsel %vm705, 0, %v605
      %v714 = vsel %vm705, 0, %v612
      %v715 = vsel %vm705, 0, %v619
      %v716 = vsel %vm705, 0, %v626
      %v717 = vsel %vm705, 0, %v633
      %v718 = vsel %vm705, 0, %v640
      %v719 = vsel %vm705, 0, %v647
      %v720 = vsel %vm705, 0, %v654
      %v721 = vsel %vm705, 0, %v661
      %v722 = vsel %vm705, 0, %v668
      %v723 = vsel %vm705, %v553, 0
      %v724 = vsel %vm705, %v560, 0
      %v725 = vsel %vm705, %v567, 0
      %v726 = vsel %vm705, %v574, 0
      %v727 = vsel %vm705, %v581, 0
      %v728 = vsel %vm705, %v588, 0
      %v729 = vsel %vm705, %v595, 0
      %v730 = vsel %vm705, %v602, 0
      %v731 = vsel %vm705, %v609, 0
      %v732 = vsel %vm705, %v616, 0
      %v733 = vsel %vm705, %v623, 0
      %v734 = vsel %vm705, %v630, 0
      %v735 = vsel %vm705, %v637, 0
      %v736 = vsel %vm705, %v644, 0
      %v737 = vsel %vm705, %v651, 0
      %v738 = vsel %vm705, %v658, 0
      %v739 = vsel %vm705, %v665, 0
      %v740 = vld [vmem:[%s1] sm:$0xf]
      %v741 = vld [vmem:[%s1 + $0x4] sm:$0xf]
      %v742 = vld [vmem:[%s1 + $0x8] sm:$0xf]
      %v743 = vld [vmem:[%s1 + $0xc] sm:$0xf]
      %v744 = vld [vmem:[%s1 + $0x10] sm:$0xf]
      %v745 = vld [vmem:[%s1 + $0x14] sm:$0xf]
      %v746 = vld [vmem:[%s1 + $0x18] sm:$0xf]
      %v747 = vld [vmem:[%s1 + $0x1c] sm:$0xf]
      %v748 = vld [vmem:[%s1 + $0x20] sm:$0xf]
      %v749 = vld [vmem:[%s1 + $0x24] sm:$0xf]
      %v750 = vld [vmem:[%s1 + $0x28] sm:$0xf]
      %v751 = vld [vmem:[%s1 + $0x2c] sm:$0xf]
      %v752 = vld [vmem:[%s1 + $0x30] sm:$0xf]
      %v753 = vld [vmem:[%s1 + $0x34] sm:$0xf]
      %v754 = vld [vmem:[%s1 + $0x38] sm:$0xf]
      %v755 = vld [vmem:[%s1 + $0x3c] sm:$0xf]
      %vm756 = vsmask.f32 7424
      %v758 = vshrl.u32 %v706, 16
      %v760 = vshll.u32 %v706, 16
      %v762 = vrot.slane %v760, 1
      %v763 = vor.u32 %v758, %v762
      %v765 = vshll.u32 %v723, 16
      %v767 = vrot.slane %v765, 1
      %v768 = vsel %vm756, %v763, %v767
      %v770 = vshrl.u32 %v707, 16
      %v772 = vshll.u32 %v707, 16
      %v774 = vrot.slane %v772, 1
      %v775 = vor.u32 %v770, %v774
      %v777 = vshll.u32 %v724, 16
      %v779 = vrot.slane %v777, 1
      %v780 = vsel %vm756, %v775, %v779
      %v782 = vshrl.u32 %v708, 16
      %v784 = vshll.u32 %v708, 16
      %v786 = vrot.slane %v784, 1
      %v787 = vor.u32 %v782, %v786
      %v789 = vshll.u32 %v725, 16
      %v791 = vrot.slane %v789, 1
      %v792 = vsel %vm756, %v787, %v791
      %v794 = vshrl.u32 %v709, 16
      %v796 = vshll.u32 %v709, 16
      %v798 = vrot.slane %v796, 1
      %v799 = vor.u32 %v794, %v798
      %v801 = vshll.u32 %v726, 16
      %v803 = vrot.slane %v801, 1
      %v804 = vsel %vm756, %v799, %v803
      %v806 = vshrl.u32 %v710, 16
      %v808 = vshll.u32 %v710, 16
      %v810 = vrot.slane %v808, 1
      %v811 = vor.u32 %v806, %v810
      %v813 = vshll.u32 %v727, 16
      %v815 = vrot.slane %v813, 1
      %v816 = vsel %vm756, %v811, %v815
      %v818 = vshrl.u32 %v711, 16
      %v820 = vshll.u32 %v711, 16
      %v822 = vrot.slane %v820, 1
      %v823 = vor.u32 %v818, %v822
      %v825 = vshll.u32 %v728, 16
      %v827 = vrot.slane %v825, 1
      %v828 = vsel %vm756, %v823, %v827
      %v830 = vshrl.u32 %v712, 16
      %v832 = vshll.u32 %v712, 16
      %v834 = vrot.slane %v832, 1
      %v835 = vor.u32 %v830, %v834
      %v837 = vshll.u32 %v729, 16
      %v839 = vrot.slane %v837, 1
      %v840 = vsel %vm756, %v835, %v839
      %v842 = vshrl.u32 %v713, 16
      %v844 = vshll.u32 %v713, 16
      %v846 = vrot.slane %v844, 1
      %v847 = vor.u32 %v842, %v846
      %v849 = vshll.u32 %v730, 16
      %v851 = vrot.slane %v849, 1
      %v852 = vsel %vm756, %v847, %v851
      %v854 = vshrl.u32 %v714, 16
      %v856 = vshll.u32 %v714, 16
      %v858 = vrot.slane %v856, 1
      %v859 = vor.u32 %v854, %v858
      %v861 = vshll.u32 %v731, 16
      %v863 = vrot.slane %v861, 1
      %v864 = vsel %vm756, %v859, %v863
      %v866 = vshrl.u32 %v715, 16
      %v868 = vshll.u32 %v715, 16
      %v870 = vrot.slane %v868, 1
      %v871 = vor.u32 %v866, %v870
      %v873 = vshll.u32 %v732, 16
      %v875 = vrot.slane %v873, 1
      %v876 = vsel %vm756, %v871, %v875
      %v878 = vshrl.u32 %v716, 16
      %v880 = vshll.u32 %v716, 16
      %v882 = vrot.slane %v880, 1
      %v883 = vor.u32 %v878, %v882
      %v885 = vshll.u32 %v733, 16
      %v887 = vrot.slane %v885, 1
      %v888 = vsel %vm756, %v883, %v887
      %v890 = vshrl.u32 %v717, 16
      %v892 = vshll.u32 %v717, 16
      %v894 = vrot.slane %v892, 1
      %v895 = vor.u32 %v890, %v894
      %v897 = vshll.u32 %v734, 16
      %v899 = vrot.slane %v897, 1
      %v900 = vsel %vm756, %v895, %v899
      %v902 = vshrl.u32 %v718, 16
      %v904 = vshll.u32 %v718, 16
      %v906 = vrot.slane %v904, 1
      %v907 = vor.u32 %v902, %v906
      %v909 = vshll.u32 %v735, 16
      %v911 = vrot.slane %v909, 1
      %v912 = vsel %vm756, %v907, %v911
      %v914 = vshrl.u32 %v719, 16
      %v916 = vshll.u32 %v719, 16
      %v918 = vrot.slane %v916, 1
      %v919 = vor.u32 %v914, %v918
      %v921 = vshll.u32 %v736, 16
      %v923 = vrot.slane %v921, 1
      %v924 = vsel %vm756, %v919, %v923
      %v926 = vshrl.u32 %v720, 16
      %v928 = vshll.u32 %v720, 16
      %v930 = vrot.slane %v928, 1
      %v931 = vor.u32 %v926, %v930
      %v933 = vshll.u32 %v737, 16
      %v935 = vrot.slane %v933, 1
      %v936 = vsel %vm756, %v931, %v935
      %v938 = vshrl.u32 %v721, 16
      %v940 = vshll.u32 %v721, 16
      %v942 = vrot.slane %v940, 1
      %v943 = vor.u32 %v938, %v942
      %v945 = vshll.u32 %v738, 16
      %v947 = vrot.slane %v945, 1
      %v948 = vsel %vm756, %v943, %v947
      %s965 = scalar_lea.vmem %s1, 64
      %v966 = vld [vmem:[%s965] sm:$0xf]
      %v967 = vld [vmem:[%s965 + $0x4] sm:$0xf]
      %v968 = vld [vmem:[%s965 + $0x8] sm:$0xf]
      %v969 = vld [vmem:[%s965 + $0xc] sm:$0xf]
      %v970 = vld [vmem:[%s965 + $0x10] sm:$0xf]
      %v971 = vld [vmem:[%s965 + $0x14] sm:$0xf]
      %v972 = vld [vmem:[%s965 + $0x18] sm:$0xf]
      %v973 = vld [vmem:[%s965 + $0x1c] sm:$0xf]
      %v974 = vld [vmem:[%s965 + $0x20] sm:$0xf]
      %v975 = vld [vmem:[%s965 + $0x24] sm:$0xf]
      %v976 = vld [vmem:[%s965 + $0x28] sm:$0xf]
      %v977 = vld [vmem:[%s965 + $0x2c] sm:$0xf]
      %v978 = vld [vmem:[%s965 + $0x30] sm:$0xf]
      %v979 = vld [vmem:[%s965 + $0x34] sm:$0xf]
      %v980 = vld [vmem:[%s965 + $0x38] sm:$0xf]
      %v981 = vld [vmem:[%s965 + $0x3c] sm:$0xf]
      %v998 = vunpack.c.l.b16 %v966
      %v999 = vunpack.c.l.b16 %v967
      %v1000 = vunpack.c.l.b16 %v968
      %v1001 = vunpack.c.l.b16 %v969
      %v1002 = vunpack.c.l.b16 %v970
      %v1003 = vunpack.c.l.b16 %v971
      %v1004 = vunpack.c.l.b16 %v972
      %v1005 = vunpack.c.l.b16 %v973
      %v1006 = vunpack.c.l.b16 %v974
      %v1007 = vunpack.c.l.b16 %v975
      %v1008 = vunpack.c.l.b16 %v976
      %v1009 = vunpack.c.l.b16 %v977
      %v1010 = vunpack.c.l.b16 %v978
      %v1011 = vunpack.c.l.b16 %v979
      %v1012 = vunpack.c.l.b16 %v980
      %v1013 = vunpack.c.l.b16 %v981
      %v1014 = vpack.c.b16 %v999, %v998
      %v1015 = vpack.c.b16 %v1001, %v1000
      %v1016 = vpack.c.b16 %v1003, %v1002
      %v1017 = vpack.c.b16 %v1005, %v1004
      %v1018 = vpack.c.b16 %v1007, %v1006
      %v1019 = vpack.c.b16 %v1009, %v1008
      %v1020 = vpack.c.b16 %v1011, %v1010
      %v1021 = vpack.c.b16 %v1013, %v1012
      %1030 = vmatpush.bf16.msra.mxu0 %v1021
      %1031 = vmatpush.bf16.msra.mxu0 %v1020
      %1032 = vmatpush.bf16.msra.mxu0 %v1019
      %1033 = vmatpush.bf16.msra.mxu0 %v1018
      %1034 = vmatpush.bf16.msra.mxu0 %v1017
      %1035 = vmatpush.bf16.msra.mxu0 %v1016
      %1036 = vmatpush.bf16.msra.mxu0 %v1015
      %1037 = vmatpush.bf16.msra.mxu0 %v1014
      %1038 = vmatmul.bf16.gmra.mxu0 %v768
      %v1039 = vpop.f32.mrf.mxu0
      %v1040 = vadd.f32 0.0, %v1039
      %v1041 = vpop.f32.mrf.mxu0
      %v1042 = vadd.f32 0.0, %v1041
      %1043 = vmatmul.bf16.gmra.mxu0 %v780
      %v1044 = vpop.f32.mrf.mxu0
      %v1045 = vadd.f32 0.0, %v1044
      %v1046 = vpop.f32.mrf.mxu0
      %v1047 = vadd.f32 0.0, %v1046
      %1048 = vmatmul.bf16.gmra.mxu0 %v792
      %v1049 = vpop.f32.mrf.mxu0
      %v1050 = vadd.f32 0.0, %v1049
      %v1051 = vpop.f32.mrf.mxu0
      %v1052 = vadd.f32 0.0, %v1051
      %1053 = vmatmul.bf16.gmra.mxu0 %v804
      %v1054 = vpop.f32.mrf.mxu0
      %v1055 = vadd.f32 0.0, %v1054
      %v1056 = vpop.f32.mrf.mxu0
      %v1057 = vadd.f32 0.0, %v1056
      %1058 = vmatmul.bf16.gmra.mxu0 %v816
      %v1059 = vpop.f32.mrf.mxu0
      %v1060 = vadd.f32 0.0, %v1059
      %v1061 = vpop.f32.mrf.mxu0
      %v1062 = vadd.f32 0.0, %v1061
      %1063 = vmatmul.bf16.gmra.mxu0 %v828
      %v1064 = vpop.f32.mrf.mxu0
      %v1065 = vadd.f32 0.0, %v1064
      %v1066 = vpop.f32.mrf.mxu0
      %v1067 = vadd.f32 0.0, %v1066
      %1068 = vmatmul.bf16.gmra.mxu0 %v840
      %v1069 = vpop.f32.mrf.mxu0
      %v1070 = vadd.f32 0.0, %v1069
      %v1071 = vpop.f32.mrf.mxu0
      %v1072 = vadd.f32 0.0, %v1071
      %1073 = vmatmul.bf16.gmra.mxu0 %v852
      %v1074 = vpop.f32.mrf.mxu0
      %v1075 = vadd.f32 0.0, %v1074
      %v1076 = vpop.f32.mrf.mxu0
      %v1077 = vadd.f32 0.0, %v1076
      %1078 = vmatmul.bf16.gmra.mxu0 %v864
      %v1079 = vpop.f32.mrf.mxu0
      %v1080 = vadd.f32 0.0, %v1079
      %v1081 = vpop.f32.mrf.mxu0
      %v1082 = vadd.f32 0.0, %v1081
      %1083 = vmatmul.bf16.gmra.mxu0 %v876
      %v1084 = vpop.f32.mrf.mxu0
      %v1085 = vadd.f32 0.0, %v1084
      %v1086 = vpop.f32.mrf.mxu0
      %v1087 = vadd.f32 0.0, %v1086
      %1088 = vmatmul.bf16.gmra.mxu0 %v888
      %v1089 = vpop.f32.mrf.mxu0
      %v1090 = vadd.f32 0.0, %v1089
      %v1091 = vpop.f32.mrf.mxu0
      %v1092 = vadd.f32 0.0, %v1091
      %1093 = vmatmul.bf16.gmra.mxu0 %v900
      %v1094 = vpop.f32.mrf.mxu0
      %v1095 = vadd.f32 0.0, %v1094
      %v1096 = vpop.f32.mrf.mxu0
      %v1097 = vadd.f32 0.0, %v1096
      %1098 = vmatmul.bf16.gmra.mxu0 %v912
      %v1099 = vpop.f32.mrf.mxu0
      %v1100 = vadd.f32 0.0, %v1099
      %v1101 = vpop.f32.mrf.mxu0
      %v1102 = vadd.f32 0.0, %v1101
      %1103 = vmatmul.bf16.gmra.mxu0 %v924
      %v1104 = vpop.f32.mrf.mxu0
      %v1105 = vadd.f32 0.0, %v1104
      %v1106 = vpop.f32.mrf.mxu0
      %v1107 = vadd.f32 0.0, %v1106
      %1108 = vmatmul.bf16.gmra.mxu0 %v936
      %v1109 = vpop.f32.mrf.mxu0
      %v1110 = vadd.f32 0.0, %v1109
      %v1111 = vpop.f32.mrf.mxu0
      %v1112 = vadd.f32 0.0, %v1111
      %1113 = vmatmul.bf16.gmra.mxu0 %v948
      %v1114 = vpop.f32.mrf.mxu0
      %v1115 = vadd.f32 0.0, %v1114
      %v1116 = vpop.f32.mrf.mxu0
      %v1117 = vadd.f32 0.0, %v1116
      %1118 = vdwg.mxu0
      %v1135 = vunpack.c.l.b16 %v740
      %v1136 = vunpack.c.l.b16 %v741
      %v1137 = vunpack.c.l.b16 %v742
      %v1138 = vunpack.c.l.b16 %v743
      %v1139 = vunpack.c.l.b16 %v744
      %v1140 = vunpack.c.l.b16 %v745
      %v1141 = vunpack.c.l.b16 %v746
      %v1142 = vunpack.c.l.b16 %v747
      %v1143 = vunpack.c.l.b16 %v748
      %v1144 = vunpack.c.l.b16 %v749
      %v1145 = vunpack.c.l.b16 %v750
      %v1146 = vunpack.c.l.b16 %v751
      %v1147 = vunpack.c.l.b16 %v752
      %v1148 = vunpack.c.l.b16 %v753
      %v1149 = vunpack.c.l.b16 %v754
      %v1150 = vunpack.c.l.b16 %v755
      %v1151 = vpack.c.b16 %v1136, %v1135
      %v1152 = vpack.c.b16 %v1138, %v1137
      %v1153 = vpack.c.b16 %v1140, %v1139
      %v1154 = vpack.c.b16 %v1142, %v1141
      %v1155 = vpack.c.b16 %v1144, %v1143
      %v1156 = vpack.c.b16 %v1146, %v1145
      %v1157 = vpack.c.b16 %v1148, %v1147
      %v1158 = vpack.c.b16 %v1150, %v1149
      %1167 = vmatpush.bf16.msra.mxu0 %v1158
      %1168 = vmatpush.bf16.msra.mxu0 %v1157
      %1169 = vmatpush.bf16.msra.mxu0 %v1156
      %1170 = vmatpush.bf16.msra.mxu0 %v1155
      %1171 = vmatpush.bf16.msra.mxu0 %v1154
      %1172 = vmatpush.bf16.msra.mxu0 %v1153
      %1173 = vmatpush.bf16.msra.mxu0 %v1152
      %1174 = vmatpush.bf16.msra.mxu0 %v1151
      %1175 = vmatmul.bf16.gmra.mxu0 %v706
      %v1176 = vpop.f32.mrf.mxu0
      %v1177 = vadd.f32 %v1040, %v1176
      %v1178 = vpop.f32.mrf.mxu0
      %v1179 = vadd.f32 %v1042, %v1178
      %1180 = vmatmul.bf16.gmra.mxu0 %v707
      %v1181 = vpop.f32.mrf.mxu0
      %v1182 = vadd.f32 %v1045, %v1181
      %v1183 = vpop.f32.mrf.mxu0
      %v1184 = vadd.f32 %v1047, %v1183
      %1185 = vmatmul.bf16.gmra.mxu0 %v708
      %v1186 = vpop.f32.mrf.mxu0
      %v1187 = vadd.f32 %v1050, %v1186
      %v1188 = vpop.f32.mrf.mxu0
      %v1189 = vadd.f32 %v1052, %v1188
      %1190 = vmatmul.bf16.gmra.mxu0 %v709
      %v1191 = vpop.f32.mrf.mxu0
      %v1192 = vadd.f32 %v1055, %v1191
      %v1193 = vpop.f32.mrf.mxu0
      %v1194 = vadd.f32 %v1057, %v1193
      %1195 = vmatmul.bf16.gmra.mxu0 %v710
      %v1196 = vpop.f32.mrf.mxu0
      %v1197 = vadd.f32 %v1060, %v1196
      %v1198 = vpop.f32.mrf.mxu0
      %v1199 = vadd.f32 %v1062, %v1198
      %1200 = vmatmul.bf16.gmra.mxu0 %v711
      %v1201 = vpop.f32.mrf.mxu0
      %v1202 = vadd.f32 %v1065, %v1201
      %v1203 = vpop.f32.mrf.mxu0
      %v1204 = vadd.f32 %v1067, %v1203
      %1205 = vmatmul.bf16.gmra.mxu0 %v712
      %v1206 = vpop.f32.mrf.mxu0
      %v1207 = vadd.f32 %v1070, %v1206
      %v1208 = vpop.f32.mrf.mxu0
      %v1209 = vadd.f32 %v1072, %v1208
      %1210 = vmatmul.bf16.gmra.mxu0 %v713
      %v1211 = vpop.f32.mrf.mxu0
      %v1212 = vadd.f32 %v1075, %v1211
      %v1213 = vpop.f32.mrf.mxu0
      %v1214 = vadd.f32 %v1077, %v1213
      %1215 = vmatmul.bf16.gmra.mxu0 %v714
      %v1216 = vpop.f32.mrf.mxu0
      %v1217 = vadd.f32 %v1080, %v1216
      %v1218 = vpop.f32.mrf.mxu0
      %v1219 = vadd.f32 %v1082, %v1218
      %1220 = vmatmul.bf16.gmra.mxu0 %v715
      %v1221 = vpop.f32.mrf.mxu0
      %v1222 = vadd.f32 %v1085, %v1221
      %v1223 = vpop.f32.mrf.mxu0
      %v1224 = vadd.f32 %v1087, %v1223
      %1225 = vmatmul.bf16.gmra.mxu0 %v716
      %v1226 = vpop.f32.mrf.mxu0
      %v1227 = vadd.f32 %v1090, %v1226
      %v1228 = vpop.f32.mrf.mxu0
      %v1229 = vadd.f32 %v1092, %v1228
      %1230 = vmatmul.bf16.gmra.mxu0 %v717
      %v1231 = vpop.f32.mrf.mxu0
      %v1232 = vadd.f32 %v1095, %v1231
      %v1233 = vpop.f32.mrf.mxu0
      %v1234 = vadd.f32 %v1097, %v1233
      %1235 = vmatmul.bf16.gmra.mxu0 %v718
      %v1236 = vpop.f32.mrf.mxu0
      %v1237 = vadd.f32 %v1100, %v1236
      %v1238 = vpop.f32.mrf.mxu0
      %v1239 = vadd.f32 %v1102, %v1238
      %1240 = vmatmul.bf16.gmra.mxu0 %v719
      %v1241 = vpop.f32.mrf.mxu0
      %v1242 = vadd.f32 %v1105, %v1241
      %v1243 = vpop.f32.mrf.mxu0
      %v1244 = vadd.f32 %v1107, %v1243
      %1245 = vmatmul.bf16.gmra.mxu0 %v720
      %v1246 = vpop.f32.mrf.mxu0
      %v1247 = vadd.f32 %v1110, %v1246
      %v1248 = vpop.f32.mrf.mxu0
      %v1249 = vadd.f32 %v1112, %v1248
      %1250 = vmatmul.bf16.gmra.mxu0 %v721
      %v1251 = vpop.f32.mrf.mxu0
      %v1252 = vadd.f32 %v1115, %v1251
      %v1253 = vpop.f32.mrf.mxu0
      %v1254 = vadd.f32 %v1117, %v1253
      %1255 = vdwg.mxu0
      %vm1288 = vcmask 1046528
      %v1289 = vrot.slane %v706, 1
      %v1290 = vrot.slane %v723, 1
      %v1291 = vsel %vm1288, %v1289, %v1290
      %v1292 = vrot.slane %v707, 1
      %v1293 = vrot.slane %v724, 1
      %v1294 = vsel %vm1288, %v1292, %v1293
      %v1295 = vrot.slane %v708, 1
      %v1296 = vrot.slane %v725, 1
      %v1297 = vsel %vm1288, %v1295, %v1296
      %v1298 = vrot.slane %v709, 1
      %v1299 = vrot.slane %v726, 1
      %v1300 = vsel %vm1288, %v1298, %v1299
      %v1301 = vrot.slane %v710, 1
      %v1302 = vrot.slane %v727, 1
      %v1303 = vsel %vm1288, %v1301, %v1302
      %v1304 = vrot.slane %v711, 1
      %v1305 = vrot.slane %v728, 1
      %v1306 = vsel %vm1288, %v1304, %v1305
      %v1307 = vrot.slane %v712, 1
      %v1308 = vrot.slane %v729, 1
      %v1309 = vsel %vm1288, %v1307, %v1308
      %v1310 = vrot.slane %v713, 1
      %v1311 = vrot.slane %v730, 1
      %v1312 = vsel %vm1288, %v1310, %v1311
      %v1313 = vrot.slane %v714, 1
      %v1314 = vrot.slane %v731, 1
      %v1315 = vsel %vm1288, %v1313, %v1314
      %v1316 = vrot.slane %v715, 1
      %v1317 = vrot.slane %v732, 1
      %v1318 = vsel %vm1288, %v1316, %v1317
      %v1319 = vrot.slane %v716, 1
      %v1320 = vrot.slane %v733, 1
      %v1321 = vsel %vm1288, %v1319, %v1320
      %v1322 = vrot.slane %v717, 1
      %v1323 = vrot.slane %v734, 1
      %v1324 = vsel %vm1288, %v1322, %v1323
      %v1325 = vrot.slane %v718, 1
      %v1326 = vrot.slane %v735, 1
      %v1327 = vsel %vm1288, %v1325, %v1326
      %v1328 = vrot.slane %v719, 1
      %v1329 = vrot.slane %v736, 1
      %v1330 = vsel %vm1288, %v1328, %v1329
      %v1331 = vrot.slane %v720, 1
      %v1332 = vrot.slane %v737, 1
      %v1333 = vsel %vm1288, %v1331, %v1332
      %v1334 = vrot.slane %v721, 1
      %v1335 = vrot.slane %v738, 1
      %v1336 = vsel %vm1288, %v1334, %v1335
      %s1353 = scalar_lea.vmem %s1, 128
      %v1354 = vld [vmem:[%s1353] sm:$0xf]
      %v1355 = vld [vmem:[%s1353 + $0x4] sm:$0xf]
      %v1356 = vld [vmem:[%s1353 + $0x8] sm:$0xf]
      %v1357 = vld [vmem:[%s1353 + $0xc] sm:$0xf]
      %v1358 = vld [vmem:[%s1353 + $0x10] sm:$0xf]
      %v1359 = vld [vmem:[%s1353 + $0x14] sm:$0xf]
      %v1360 = vld [vmem:[%s1353 + $0x18] sm:$0xf]
      %v1361 = vld [vmem:[%s1353 + $0x1c] sm:$0xf]
      %v1362 = vld [vmem:[%s1353 + $0x20] sm:$0xf]
      %v1363 = vld [vmem:[%s1353 + $0x24] sm:$0xf]
      %v1364 = vld [vmem:[%s1353 + $0x28] sm:$0xf]
      %v1365 = vld [vmem:[%s1353 + $0x2c] sm:$0xf]
      %v1366 = vld [vmem:[%s1353 + $0x30] sm:$0xf]
      %v1367 = vld [vmem:[%s1353 + $0x34] sm:$0xf]
      %v1368 = vld [vmem:[%s1353 + $0x38] sm:$0xf]
      %v1369 = vld [vmem:[%s1353 + $0x3c] sm:$0xf]
      %v1386 = vunpack.c.l.b16 %v1354
      %v1387 = vunpack.c.l.b16 %v1355
      %v1388 = vunpack.c.l.b16 %v1356
      %v1389 = vunpack.c.l.b16 %v1357
      %v1390 = vunpack.c.l.b16 %v1358
      %v1391 = vunpack.c.l.b16 %v1359
      %v1392 = vunpack.c.l.b16 %v1360
      %v1393 = vunpack.c.l.b16 %v1361
      %v1394 = vunpack.c.l.b16 %v1362
      %v1395 = vunpack.c.l.b16 %v1363
      %v1396 = vunpack.c.l.b16 %v1364
      %v1397 = vunpack.c.l.b16 %v1365
      %v1398 = vunpack.c.l.b16 %v1366
      %v1399 = vunpack.c.l.b16 %v1367
      %v1400 = vunpack.c.l.b16 %v1368
      %v1401 = vunpack.c.l.b16 %v1369
      %v1402 = vpack.c.b16 %v1387, %v1386
      %v1403 = vpack.c.b16 %v1389, %v1388
      %v1404 = vpack.c.b16 %v1391, %v1390
      %v1405 = vpack.c.b16 %v1393, %v1392
      %v1406 = vpack.c.b16 %v1395, %v1394
      %v1407 = vpack.c.b16 %v1397, %v1396
      %v1408 = vpack.c.b16 %v1399, %v1398
      %v1409 = vpack.c.b16 %v1401, %v1400
      %1418 = vmatpush.bf16.msra.mxu0 %v1409
      %1419 = vmatpush.bf16.msra.mxu0 %v1408
      %1420 = vmatpush.bf16.msra.mxu0 %v1407
      %1421 = vmatpush.bf16.msra.mxu0 %v1406
      %1422 = vmatpush.bf16.msra.mxu0 %v1405
      %1423 = vmatpush.bf16.msra.mxu0 %v1404
      %1424 = vmatpush.bf16.msra.mxu0 %v1403
      %1425 = vmatpush.bf16.msra.mxu0 %v1402
      %1426 = vmatmul.bf16.gmra.mxu0 %v1291
      %v1427 = vpop.f32.mrf.mxu0
      %v1428 = vadd.f32 0.0, %v1427
      %v1429 = vpop.f32.mrf.mxu0
      %v1430 = vadd.f32 0.0, %v1429
      %1431 = vmatmul.bf16.gmra.mxu0 %v1294
      %v1432 = vpop.f32.mrf.mxu0
      %v1433 = vadd.f32 0.0, %v1432
      %v1434 = vpop.f32.mrf.mxu0
      %v1435 = vadd.f32 0.0, %v1434
      %1436 = vmatmul.bf16.gmra.mxu0 %v1297
      %v1437 = vpop.f32.mrf.mxu0
      %v1438 = vadd.f32 0.0, %v1437
      %v1439 = vpop.f32.mrf.mxu0
      %v1440 = vadd.f32 0.0, %v1439
      %1441 = vmatmul.bf16.gmra.mxu0 %v1300
      %v1442 = vpop.f32.mrf.mxu0
      %v1443 = vadd.f32 0.0, %v1442
      %v1444 = vpop.f32.mrf.mxu0
      %v1445 = vadd.f32 0.0, %v1444
      %1446 = vmatmul.bf16.gmra.mxu0 %v1303
      %v1447 = vpop.f32.mrf.mxu0
      %v1448 = vadd.f32 0.0, %v1447
      %v1449 = vpop.f32.mrf.mxu0
      %v1450 = vadd.f32 0.0, %v1449
      %1451 = vmatmul.bf16.gmra.mxu0 %v1306
      %v1452 = vpop.f32.mrf.mxu0
      %v1453 = vadd.f32 0.0, %v1452
      %v1454 = vpop.f32.mrf.mxu0
      %v1455 = vadd.f32 0.0, %v1454
      %1456 = vmatmul.bf16.gmra.mxu0 %v1309
      %v1457 = vpop.f32.mrf.mxu0
      %v1458 = vadd.f32 0.0, %v1457
      %v1459 = vpop.f32.mrf.mxu0
      %v1460 = vadd.f32 0.0, %v1459
      %1461 = vmatmul.bf16.gmra.mxu0 %v1312
      %v1462 = vpop.f32.mrf.mxu0
      %v1463 = vadd.f32 0.0, %v1462
      %v1464 = vpop.f32.mrf.mxu0
      %v1465 = vadd.f32 0.0, %v1464
      %1466 = vmatmul.bf16.gmra.mxu0 %v1315
      %v1467 = vpop.f32.mrf.mxu0
      %v1468 = vadd.f32 0.0, %v1467
      %v1469 = vpop.f32.mrf.mxu0
      %v1470 = vadd.f32 0.0, %v1469
      %1471 = vmatmul.bf16.gmra.mxu0 %v1318
      %v1472 = vpop.f32.mrf.mxu0
      %v1473 = vadd.f32 0.0, %v1472
      %v1474 = vpop.f32.mrf.mxu0
      %v1475 = vadd.f32 0.0, %v1474
      %1476 = vmatmul.bf16.gmra.mxu0 %v1321
      %v1477 = vpop.f32.mrf.mxu0
      %v1478 = vadd.f32 0.0, %v1477
      %v1479 = vpop.f32.mrf.mxu0
      %v1480 = vadd.f32 0.0, %v1479
      %1481 = vmatmul.bf16.gmra.mxu0 %v1324
      %v1482 = vpop.f32.mrf.mxu0
      %v1483 = vadd.f32 0.0, %v1482
      %v1484 = vpop.f32.mrf.mxu0
      %v1485 = vadd.f32 0.0, %v1484
      %1486 = vmatmul.bf16.gmra.mxu0 %v1327
      %v1487 = vpop.f32.mrf.mxu0
      %v1488 = vadd.f32 0.0, %v1487
      %v1489 = vpop.f32.mrf.mxu0
      %v1490 = vadd.f32 0.0, %v1489
      %1491 = vmatmul.bf16.gmra.mxu0 %v1330
      %v1492 = vpop.f32.mrf.mxu0
      %v1493 = vadd.f32 0.0, %v1492
      %v1494 = vpop.f32.mrf.mxu0
      %v1495 = vadd.f32 0.0, %v1494
      %1496 = vmatmul.bf16.gmra.mxu0 %v1333
      %v1497 = vpop.f32.mrf.mxu0
      %v1498 = vadd.f32 0.0, %v1497
      %v1499 = vpop.f32.mrf.mxu0
      %v1500 = vadd.f32 0.0, %v1499
      %1501 = vmatmul.bf16.gmra.mxu0 %v1336
      %v1502 = vpop.f32.mrf.mxu0
      %v1503 = vadd.f32 0.0, %v1502
      %v1504 = vpop.f32.mrf.mxu0
      %v1505 = vadd.f32 0.0, %v1504
      %1506 = vdwg.mxu0
      %v1507 = vadd.f32 %v1177, %v1428
      %v1508 = vadd.f32 %v1179, %v1430
      %v1509 = vadd.f32 %v1182, %v1433
      %v1510 = vadd.f32 %v1184, %v1435
      %v1511 = vadd.f32 %v1187, %v1438
      %v1512 = vadd.f32 %v1189, %v1440
      %v1513 = vadd.f32 %v1192, %v1443
      %v1514 = vadd.f32 %v1194, %v1445
      %v1515 = vadd.f32 %v1197, %v1448
      %v1516 = vadd.f32 %v1199, %v1450
      %v1517 = vadd.f32 %v1202, %v1453
      %v1518 = vadd.f32 %v1204, %v1455
      %v1519 = vadd.f32 %v1207, %v1458
      %v1520 = vadd.f32 %v1209, %v1460
      %v1521 = vadd.f32 %v1212, %v1463
      %v1522 = vadd.f32 %v1214, %v1465
      %v1523 = vadd.f32 %v1217, %v1468
      %v1524 = vadd.f32 %v1219, %v1470
      %v1525 = vadd.f32 %v1222, %v1473
      %v1526 = vadd.f32 %v1224, %v1475
      %v1527 = vadd.f32 %v1227, %v1478
      %v1528 = vadd.f32 %v1229, %v1480
      %v1529 = vadd.f32 %v1232, %v1483
      %v1530 = vadd.f32 %v1234, %v1485
      %v1531 = vadd.f32 %v1237, %v1488
      %v1532 = vadd.f32 %v1239, %v1490
      %v1533 = vadd.f32 %v1242, %v1493
      %v1534 = vadd.f32 %v1244, %v1495
      %v1535 = vadd.f32 %v1247, %v1498
      %v1536 = vadd.f32 %v1249, %v1500
      %v1537 = vadd.f32 %v1252, %v1503
      %v1538 = vadd.f32 %v1254, %v1505
      %s1539 = scalar_lea.vmem %s1, 192
      %v1540 = vld [vmem:[%s1539] sm:$0xf]
      %v1541 = vld [vmem:[%s1539 + $0x4] sm:$0xf]
      %v1542 = vld [vmem:[%s1539 + $0x8] sm:$0xf]
      %v1543 = vld [vmem:[%s1539 + $0xc] sm:$0xf]
      %v1544 = vld [vmem:[%s1539 + $0x10] sm:$0xf]
      %v1545 = vld [vmem:[%s1539 + $0x14] sm:$0xf]
      %v1546 = vld [vmem:[%s1539 + $0x18] sm:$0xf]
      %v1547 = vld [vmem:[%s1539 + $0x1c] sm:$0xf]
      %v1548 = vld [vmem:[%s1539 + $0x20] sm:$0xf]
      %v1549 = vld [vmem:[%s1539 + $0x24] sm:$0xf]
      %v1550 = vld [vmem:[%s1539 + $0x28] sm:$0xf]
      %v1551 = vld [vmem:[%s1539 + $0x2c] sm:$0xf]
      %v1552 = vld [vmem:[%s1539 + $0x30] sm:$0xf]
      %v1553 = vld [vmem:[%s1539 + $0x34] sm:$0xf]
      %v1554 = vld [vmem:[%s1539 + $0x38] sm:$0xf]
      %v1555 = vld [vmem:[%s1539 + $0x3c] sm:$0xf]
      %v1572 = vunpack.c.l.b16 %v1540
      %v1573 = vunpack.c.l.b16 %v1541
      %v1574 = vunpack.c.l.b16 %v1542
      %v1575 = vunpack.c.l.b16 %v1543
      %v1576 = vunpack.c.l.b16 %v1544
      %v1577 = vunpack.c.l.b16 %v1545
      %v1578 = vunpack.c.l.b16 %v1546
      %v1579 = vunpack.c.l.b16 %v1547
      %v1580 = vunpack.c.l.b16 %v1548
      %v1581 = vunpack.c.l.b16 %v1549
      %v1582 = vunpack.c.l.b16 %v1550
      %v1583 = vunpack.c.l.b16 %v1551
      %v1584 = vunpack.c.l.b16 %v1552
      %v1585 = vunpack.c.l.b16 %v1553
      %v1586 = vunpack.c.l.b16 %v1554
      %v1587 = vunpack.c.l.b16 %v1555
      %v1588 = vpack.c.b16 %v1573, %v1572
      %v1589 = vpack.c.b16 %v1575, %v1574
      %v1590 = vpack.c.b16 %v1577, %v1576
      %v1591 = vpack.c.b16 %v1579, %v1578
      %v1592 = vpack.c.b16 %v1581, %v1580
      %v1593 = vpack.c.b16 %v1583, %v1582
      %v1594 = vpack.c.b16 %v1585, %v1584
      %v1595 = vpack.c.b16 %v1587, %v1586
      %1604 = vmatpush.bf16.msra.mxu0 %v1595
      %1605 = vmatpush.bf16.msra.mxu0 %v1594
      %1606 = vmatpush.bf16.msra.mxu0 %v1593
      %1607 = vmatpush.bf16.msra.mxu0 %v1592
      %1608 = vmatpush.bf16.msra.mxu0 %v1591
      %1609 = vmatpush.bf16.msra.mxu0 %v1590
      %1610 = vmatpush.bf16.msra.mxu0 %v1589
      %1611 = vmatpush.bf16.msra.mxu0 %v1588
      %1612 = vmatmul.bf16.gmra.mxu0 %v707
      %v1613 = vpop.f32.mrf.mxu0
      %v1614 = vadd.f32 0.0, %v1613
      %v1615 = vpop.f32.mrf.mxu0
      %v1616 = vadd.f32 0.0, %v1615
      %1617 = vmatmul.bf16.gmra.mxu0 %v708
      %v1618 = vpop.f32.mrf.mxu0
      %v1619 = vadd.f32 0.0, %v1618
      %v1620 = vpop.f32.mrf.mxu0
      %v1621 = vadd.f32 0.0, %v1620
      %1622 = vmatmul.bf16.gmra.mxu0 %v709
      %v1623 = vpop.f32.mrf.mxu0
      %v1624 = vadd.f32 0.0, %v1623
      %v1625 = vpop.f32.mrf.mxu0
      %v1626 = vadd.f32 0.0, %v1625
      %1627 = vmatmul.bf16.gmra.mxu0 %v710
      %v1628 = vpop.f32.mrf.mxu0
      %v1629 = vadd.f32 0.0, %v1628
      %v1630 = vpop.f32.mrf.mxu0
      %v1631 = vadd.f32 0.0, %v1630
      %1632 = vmatmul.bf16.gmra.mxu0 %v711
      %v1633 = vpop.f32.mrf.mxu0
      %v1634 = vadd.f32 0.0, %v1633
      %v1635 = vpop.f32.mrf.mxu0
      %v1636 = vadd.f32 0.0, %v1635
      %1637 = vmatmul.bf16.gmra.mxu0 %v712
      %v1638 = vpop.f32.mrf.mxu0
      %v1639 = vadd.f32 0.0, %v1638
      %v1640 = vpop.f32.mrf.mxu0
      %v1641 = vadd.f32 0.0, %v1640
      %1642 = vmatmul.bf16.gmra.mxu0 %v713
      %v1643 = vpop.f32.mrf.mxu0
      %v1644 = vadd.f32 0.0, %v1643
      %v1645 = vpop.f32.mrf.mxu0
      %v1646 = vadd.f32 0.0, %v1645
      %1647 = vmatmul.bf16.gmra.mxu0 %v714
      %v1648 = vpop.f32.mrf.mxu0
      %v1649 = vadd.f32 0.0, %v1648
      %v1650 = vpop.f32.mrf.mxu0
      %v1651 = vadd.f32 0.0, %v1650
      %1652 = vmatmul.bf16.gmra.mxu0 %v715
      %v1653 = vpop.f32.mrf.mxu0
      %v1654 = vadd.f32 0.0, %v1653
      %v1655 = vpop.f32.mrf.mxu0
      %v1656 = vadd.f32 0.0, %v1655
      %1657 = vmatmul.bf16.gmra.mxu0 %v716
      %v1658 = vpop.f32.mrf.mxu0
      %v1659 = vadd.f32 0.0, %v1658
      %v1660 = vpop.f32.mrf.mxu0
      %v1661 = vadd.f32 0.0, %v1660
      %1662 = vmatmul.bf16.gmra.mxu0 %v717
      %v1663 = vpop.f32.mrf.mxu0
      %v1664 = vadd.f32 0.0, %v1663
      %v1665 = vpop.f32.mrf.mxu0
      %v1666 = vadd.f32 0.0, %v1665
      %1667 = vmatmul.bf16.gmra.mxu0 %v718
      %v1668 = vpop.f32.mrf.mxu0
      %v1669 = vadd.f32 0.0, %v1668
      %v1670 = vpop.f32.mrf.mxu0
      %v1671 = vadd.f32 0.0, %v1670
      %1672 = vmatmul.bf16.gmra.mxu0 %v719
      %v1673 = vpop.f32.mrf.mxu0
      %v1674 = vadd.f32 0.0, %v1673
      %v1675 = vpop.f32.mrf.mxu0
      %v1676 = vadd.f32 0.0, %v1675
      %1677 = vmatmul.bf16.gmra.mxu0 %v720
      %v1678 = vpop.f32.mrf.mxu0
      %v1679 = vadd.f32 0.0, %v1678
      %v1680 = vpop.f32.mrf.mxu0
      %v1681 = vadd.f32 0.0, %v1680
      %1682 = vmatmul.bf16.gmra.mxu0 %v721
      %v1683 = vpop.f32.mrf.mxu0
      %v1684 = vadd.f32 0.0, %v1683
      %v1685 = vpop.f32.mrf.mxu0
      %v1686 = vadd.f32 0.0, %v1685
      %1687 = vmatmul.bf16.gmra.mxu0 %v722
      %v1688 = vpop.f32.mrf.mxu0
      %v1689 = vadd.f32 0.0, %v1688
      %v1690 = vpop.f32.mrf.mxu0
      %v1691 = vadd.f32 0.0, %v1690
      %1692 = vdwg.mxu0
      %v1693 = vadd.f32 %v1507, %v1614
      %v1694 = vadd.f32 %v1508, %v1616
      %v1695 = vadd.f32 %v1509, %v1619
      %v1696 = vadd.f32 %v1510, %v1621
      %v1697 = vadd.f32 %v1511, %v1624
      %v1698 = vadd.f32 %v1512, %v1626
      %v1699 = vadd.f32 %v1513, %v1629
      %v1700 = vadd.f32 %v1514, %v1631
      %v1701 = vadd.f32 %v1515, %v1634
      %v1702 = vadd.f32 %v1516, %v1636
      %v1703 = vadd.f32 %v1517, %v1639
      %v1704 = vadd.f32 %v1518, %v1641
      %v1705 = vadd.f32 %v1519, %v1644
      %v1706 = vadd.f32 %v1520, %v1646
      %v1707 = vadd.f32 %v1521, %v1649
      %v1708 = vadd.f32 %v1522, %v1651
      %v1709 = vadd.f32 %v1523, %v1654
      %v1710 = vadd.f32 %v1524, %v1656
      %v1711 = vadd.f32 %v1525, %v1659
      %v1712 = vadd.f32 %v1526, %v1661
      %v1713 = vadd.f32 %v1527, %v1664
      %v1714 = vadd.f32 %v1528, %v1666
      %v1715 = vadd.f32 %v1529, %v1669
      %v1716 = vadd.f32 %v1530, %v1671
      %v1717 = vadd.f32 %v1531, %v1674
      %v1718 = vadd.f32 %v1532, %v1676
      %v1719 = vadd.f32 %v1533, %v1679
      %v1720 = vadd.f32 %v1534, %v1681
      %v1721 = vadd.f32 %v1535, %v1684
      %v1722 = vadd.f32 %v1536, %v1686
      %v1723 = vadd.f32 %v1537, %v1689
      %v1724 = vadd.f32 %v1538, %v1691
      %v1726 = vshrl.u32 %v722, 16
      %v1728 = vshll.u32 %v722, 16
      %v1730 = vrot.slane %v1728, 1
      %v1731 = vor.u32 %v1726, %v1730
      %v1733 = vshll.u32 %v739, 16
      %v1735 = vrot.slane %v1733, 1
      %v1736 = vsel %vm756, %v1731, %v1735
      %s1738 = scalar_lea.vmem %s1, 256
      %v1739 = vld [vmem:[%s1738] sm:$0xf]
      %v1740 = vld [vmem:[%s1738 + $0x4] sm:$0xf]
      %v1741 = vld [vmem:[%s1738 + $0x8] sm:$0xf]
      %v1742 = vld [vmem:[%s1738 + $0xc] sm:$0xf]
      %v1743 = vld [vmem:[%s1738 + $0x10] sm:$0xf]
      %v1744 = vld [vmem:[%s1738 + $0x14] sm:$0xf]
      %v1745 = vld [vmem:[%s1738 + $0x18] sm:$0xf]
      %v1746 = vld [vmem:[%s1738 + $0x1c] sm:$0xf]
      %v1747 = vld [vmem:[%s1738 + $0x20] sm:$0xf]
      %v1748 = vld [vmem:[%s1738 + $0x24] sm:$0xf]
      %v1749 = vld [vmem:[%s1738 + $0x28] sm:$0xf]
      %v1750 = vld [vmem:[%s1738 + $0x2c] sm:$0xf]
      %v1751 = vld [vmem:[%s1738 + $0x30] sm:$0xf]
      %v1752 = vld [vmem:[%s1738 + $0x34] sm:$0xf]
      %v1753 = vld [vmem:[%s1738 + $0x38] sm:$0xf]
      %v1754 = vld [vmem:[%s1738 + $0x3c] sm:$0xf]
      %v1771 = vunpack.c.l.b16 %v1739
      %v1772 = vunpack.c.l.b16 %v1740
      %v1773 = vunpack.c.l.b16 %v1741
      %v1774 = vunpack.c.l.b16 %v1742
      %v1775 = vunpack.c.l.b16 %v1743
      %v1776 = vunpack.c.l.b16 %v1744
      %v1777 = vunpack.c.l.b16 %v1745
      %v1778 = vunpack.c.l.b16 %v1746
      %v1779 = vunpack.c.l.b16 %v1747
      %v1780 = vunpack.c.l.b16 %v1748
      %v1781 = vunpack.c.l.b16 %v1749
      %v1782 = vunpack.c.l.b16 %v1750
      %v1783 = vunpack.c.l.b16 %v1751
      %v1784 = vunpack.c.l.b16 %v1752
      %v1785 = vunpack.c.l.b16 %v1753
      %v1786 = vunpack.c.l.b16 %v1754
      %v1787 = vpack.c.b16 %v1772, %v1771
      %v1788 = vpack.c.b16 %v1774, %v1773
      %v1789 = vpack.c.b16 %v1776, %v1775
      %v1790 = vpack.c.b16 %v1778, %v1777
      %v1791 = vpack.c.b16 %v1780, %v1779
      %v1792 = vpack.c.b16 %v1782, %v1781
      %v1793 = vpack.c.b16 %v1784, %v1783
      %v1794 = vpack.c.b16 %v1786, %v1785
      %1803 = vmatpush.bf16.msra.mxu0 %v1794
      %1804 = vmatpush.bf16.msra.mxu0 %v1793
      %1805 = vmatpush.bf16.msra.mxu0 %v1792
      %1806 = vmatpush.bf16.msra.mxu0 %v1791
      %1807 = vmatpush.bf16.msra.mxu0 %v1790
      %1808 = vmatpush.bf16.msra.mxu0 %v1789
      %1809 = vmatpush.bf16.msra.mxu0 %v1788
      %1810 = vmatpush.bf16.msra.mxu0 %v1787
      %1811 = vmatmul.bf16.gmra.mxu0 %v780
      %v1812 = vpop.f32.mrf.mxu0
      %v1813 = vadd.f32 0.0, %v1812
      %v1814 = vpop.f32.mrf.mxu0
      %v1815 = vadd.f32 0.0, %v1814
      %1816 = vmatmul.bf16.gmra.mxu0 %v792
      %v1817 = vpop.f32.mrf.mxu0
      %v1818 = vadd.f32 0.0, %v1817
      %v1819 = vpop.f32.mrf.mxu0
      %v1820 = vadd.f32 0.0, %v1819
      %1821 = vmatmul.bf16.gmra.mxu0 %v804
      %v1822 = vpop.f32.mrf.mxu0
      %v1823 = vadd.f32 0.0, %v1822
      %v1824 = vpop.f32.mrf.mxu0
      %v1825 = vadd.f32 0.0, %v1824
      %1826 = vmatmul.bf16.gmra.mxu0 %v816
      %v1827 = vpop.f32.mrf.mxu0
      %v1828 = vadd.f32 0.0, %v1827
      %v1829 = vpop.f32.mrf.mxu0
      %v1830 = vadd.f32 0.0, %v1829
      %1831 = vmatmul.bf16.gmra.mxu0 %v828
      %v1832 = vpop.f32.mrf.mxu0
      %v1833 = vadd.f32 0.0, %v1832
      %v1834 = vpop.f32.mrf.mxu0
      %v1835 = vadd.f32 0.0, %v1834
      %1836 = vmatmul.bf16.gmra.mxu0 %v840
      %v1837 = vpop.f32.mrf.mxu0
      %v1838 = vadd.f32 0.0, %v1837
      %v1839 = vpop.f32.mrf.mxu0
      %v1840 = vadd.f32 0.0, %v1839
      %1841 = vmatmul.bf16.gmra.mxu0 %v852
      %v1842 = vpop.f32.mrf.mxu0
      %v1843 = vadd.f32 0.0, %v1842
      %v1844 = vpop.f32.mrf.mxu0
      %v1845 = vadd.f32 0.0, %v1844
      %1846 = vmatmul.bf16.gmra.mxu0 %v864
      %v1847 = vpop.f32.mrf.mxu0
      %v1848 = vadd.f32 0.0, %v1847
      %v1849 = vpop.f32.mrf.mxu0
      %v1850 = vadd.f32 0.0, %v1849
      %1851 = vmatmul.bf16.gmra.mxu0 %v876
      %v1852 = vpop.f32.mrf.mxu0
      %v1853 = vadd.f32 0.0, %v1852
      %v1854 = vpop.f32.mrf.mxu0
      %v1855 = vadd.f32 0.0, %v1854
      %1856 = vmatmul.bf16.gmra.mxu0 %v888
      %v1857 = vpop.f32.mrf.mxu0
      %v1858 = vadd.f32 0.0, %v1857
      %v1859 = vpop.f32.mrf.mxu0
      %v1860 = vadd.f32 0.0, %v1859
      %1861 = vmatmul.bf16.gmra.mxu0 %v900
      %v1862 = vpop.f32.mrf.mxu0
      %v1863 = vadd.f32 0.0, %v1862
      %v1864 = vpop.f32.mrf.mxu0
      %v1865 = vadd.f32 0.0, %v1864
      %1866 = vmatmul.bf16.gmra.mxu0 %v912
      %v1867 = vpop.f32.mrf.mxu0
      %v1868 = vadd.f32 0.0, %v1867
      %v1869 = vpop.f32.mrf.mxu0
      %v1870 = vadd.f32 0.0, %v1869
      %1871 = vmatmul.bf16.gmra.mxu0 %v924
      %v1872 = vpop.f32.mrf.mxu0
      %v1873 = vadd.f32 0.0, %v1872
      %v1874 = vpop.f32.mrf.mxu0
      %v1875 = vadd.f32 0.0, %v1874
      %1876 = vmatmul.bf16.gmra.mxu0 %v936
      %v1877 = vpop.f32.mrf.mxu0
      %v1878 = vadd.f32 0.0, %v1877
      %v1879 = vpop.f32.mrf.mxu0
      %v1880 = vadd.f32 0.0, %v1879
      %1881 = vmatmul.bf16.gmra.mxu0 %v948
      %v1882 = vpop.f32.mrf.mxu0
      %v1883 = vadd.f32 0.0, %v1882
      %v1884 = vpop.f32.mrf.mxu0
      %v1885 = vadd.f32 0.0, %v1884
      %1886 = vmatmul.bf16.gmra.mxu0 %v1736
      %v1887 = vpop.f32.mrf.mxu0
      %v1888 = vadd.f32 0.0, %v1887
      %v1889 = vpop.f32.mrf.mxu0
      %v1890 = vadd.f32 0.0, %v1889
      %1891 = vdwg.mxu0
      %v1892 = vadd.f32 %v1693, %v1813
      %v1893 = vadd.f32 %v1694, %v1815
      %v1894 = vadd.f32 %v1695, %v1818
      %v1895 = vadd.f32 %v1696, %v1820
      %v1896 = vadd.f32 %v1697, %v1823
      %v1897 = vadd.f32 %v1698, %v1825
      %v1898 = vadd.f32 %v1699, %v1828
      %v1899 = vadd.f32 %v1700, %v1830
      %v1900 = vadd.f32 %v1701, %v1833
      %v1901 = vadd.f32 %v1702, %v1835
      %v1902 = vadd.f32 %v1703, %v1838
      %v1903 = vadd.f32 %v1704, %v1840
      %v1904 = vadd.f32 %v1705, %v1843
      %v1905 = vadd.f32 %v1706, %v1845
      %v1906 = vadd.f32 %v1707, %v1848
      %v1907 = vadd.f32 %v1708, %v1850
      %v1908 = vadd.f32 %v1709, %v1853
      %v1909 = vadd.f32 %v1710, %v1855
      %v1910 = vadd.f32 %v1711, %v1858
      %v1911 = vadd.f32 %v1712, %v1860
      %v1912 = vadd.f32 %v1713, %v1863
      %v1913 = vadd.f32 %v1714, %v1865
      %v1914 = vadd.f32 %v1715, %v1868
      %v1915 = vadd.f32 %v1716, %v1870
      %v1916 = vadd.f32 %v1717, %v1873
      %v1917 = vadd.f32 %v1718, %v1875
      %v1918 = vadd.f32 %v1719, %v1878
      %v1919 = vadd.f32 %v1720, %v1880
      %v1920 = vadd.f32 %v1721, %v1883
      %v1921 = vadd.f32 %v1722, %v1885
      %v1922 = vadd.f32 %v1723, %v1888
      %v1923 = vadd.f32 %v1724, %v1890
      %v1926 = vrot.slane %v722, 1
      %v1927 = vrot.slane %v739, 1
      %v1928 = vsel %vm1288, %v1926, %v1927
      %s1930 = scalar_lea.vmem %s1, 320
      %v1931 = vld [vmem:[%s1930] sm:$0xf]
      %v1932 = vld [vmem:[%s1930 + $0x4] sm:$0xf]
      %v1933 = vld [vmem:[%s1930 + $0x8] sm:$0xf]
      %v1934 = vld [vmem:[%s1930 + $0xc] sm:$0xf]
      %v1935 = vld [vmem:[%s1930 + $0x10] sm:$0xf]
      %v1936 = vld [vmem:[%s1930 + $0x14] sm:$0xf]
      %v1937 = vld [vmem:[%s1930 + $0x18] sm:$0xf]
      %v1938 = vld [vmem:[%s1930 + $0x1c] sm:$0xf]
      %v1939 = vld [vmem:[%s1930 + $0x20] sm:$0xf]
      %v1940 = vld [vmem:[%s1930 + $0x24] sm:$0xf]
      %v1941 = vld [vmem:[%s1930 + $0x28] sm:$0xf]
      %v1942 = vld [vmem:[%s1930 + $0x2c] sm:$0xf]
      %v1943 = vld [vmem:[%s1930 + $0x30] sm:$0xf]
      %v1944 = vld [vmem:[%s1930 + $0x34] sm:$0xf]
      %v1945 = vld [vmem:[%s1930 + $0x38] sm:$0xf]
      %v1946 = vld [vmem:[%s1930 + $0x3c] sm:$0xf]
      %v1963 = vunpack.c.l.b16 %v1931
      %v1964 = vunpack.c.l.b16 %v1932
      %v1965 = vunpack.c.l.b16 %v1933
      %v1966 = vunpack.c.l.b16 %v1934
      %v1967 = vunpack.c.l.b16 %v1935
      %v1968 = vunpack.c.l.b16 %v1936
      %v1969 = vunpack.c.l.b16 %v1937
      %v1970 = vunpack.c.l.b16 %v1938
      %v1971 = vunpack.c.l.b16 %v1939
      %v1972 = vunpack.c.l.b16 %v1940
      %v1973 = vunpack.c.l.b16 %v1941
      %v1974 = vunpack.c.l.b16 %v1942
      %v1975 = vunpack.c.l.b16 %v1943
      %v1976 = vunpack.c.l.b16 %v1944
      %v1977 = vunpack.c.l.b16 %v1945
      %v1978 = vunpack.c.l.b16 %v1946
      %v1979 = vpack.c.b16 %v1964, %v1963
      %v1980 = vpack.c.b16 %v1966, %v1965
      %v1981 = vpack.c.b16 %v1968, %v1967
      %v1982 = vpack.c.b16 %v1970, %v1969
      %v1983 = vpack.c.b16 %v1972, %v1971
      %v1984 = vpack.c.b16 %v1974, %v1973
      %v1985 = vpack.c.b16 %v1976, %v1975
      %v1986 = vpack.c.b16 %v1978, %v1977
      %1995 = vmatpush.bf16.msra.mxu0 %v1986
      %1996 = vmatpush.bf16.msra.mxu0 %v1985
      %1997 = vmatpush.bf16.msra.mxu0 %v1984
      %1998 = vmatpush.bf16.msra.mxu0 %v1983
      %1999 = vmatpush.bf16.msra.mxu0 %v1982
      %2000 = vmatpush.bf16.msra.mxu0 %v1981
      %2001 = vmatpush.bf16.msra.mxu0 %v1980
      %2002 = vmatpush.bf16.msra.mxu0 %v1979
      %2003 = vmatmul.bf16.gmra.mxu0 %v1294
      %v2004 = vpop.f32.mrf.mxu0
      %v2005 = vadd.f32 0.0, %v2004
      %v2006 = vpop.f32.mrf.mxu0
      %v2007 = vadd.f32 0.0, %v2006
      %2008 = vmatmul.bf16.gmra.mxu0 %v1297
      %v2009 = vpop.f32.mrf.mxu0
      %v2010 = vadd.f32 0.0, %v2009
      %v2011 = vpop.f32.mrf.mxu0
      %v2012 = vadd.f32 0.0, %v2011
      %2013 = vmatmul.bf16.gmra.mxu0 %v1300
      %v2014 = vpop.f32.mrf.mxu0
      %v2015 = vadd.f32 0.0, %v2014
      %v2016 = vpop.f32.mrf.mxu0
      %v2017 = vadd.f32 0.0, %v2016
      %2018 = vmatmul.bf16.gmra.mxu0 %v1303
      %v2019 = vpop.f32.mrf.mxu0
      %v2020 = vadd.f32 0.0, %v2019
      %v2021 = vpop.f32.mrf.mxu0
      %v2022 = vadd.f32 0.0, %v2021
      %2023 = vmatmul.bf16.gmra.mxu0 %v1306
      %v2024 = vpop.f32.mrf.mxu0
      %v2025 = vadd.f32 0.0, %v2024
      %v2026 = vpop.f32.mrf.mxu0
      %v2027 = vadd.f32 0.0, %v2026
      %2028 = vmatmul.bf16.gmra.mxu0 %v1309
      %v2029 = vpop.f32.mrf.mxu0
      %v2030 = vadd.f32 0.0, %v2029
      %v2031 = vpop.f32.mrf.mxu0
      %v2032 = vadd.f32 0.0, %v2031
      %2033 = vmatmul.bf16.gmra.mxu0 %v1312
      %v2034 = vpop.f32.mrf.mxu0
      %v2035 = vadd.f32 0.0, %v2034
      %v2036 = vpop.f32.mrf.mxu0
      %v2037 = vadd.f32 0.0, %v2036
      %2038 = vmatmul.bf16.gmra.mxu0 %v1315
      %v2039 = vpop.f32.mrf.mxu0
      %v2040 = vadd.f32 0.0, %v2039
      %v2041 = vpop.f32.mrf.mxu0
      %v2042 = vadd.f32 0.0, %v2041
      %2043 = vmatmul.bf16.gmra.mxu0 %v1318
      %v2044 = vpop.f32.mrf.mxu0
      %v2045 = vadd.f32 0.0, %v2044
      %v2046 = vpop.f32.mrf.mxu0
      %v2047 = vadd.f32 0.0, %v2046
      %2048 = vmatmul.bf16.gmra.mxu0 %v1321
      %v2049 = vpop.f32.mrf.mxu0
      %v2050 = vadd.f32 0.0, %v2049
      %v2051 = vpop.f32.mrf.mxu0
      %v2052 = vadd.f32 0.0, %v2051
      %2053 = vmatmul.bf16.gmra.mxu0 %v1324
      %v2054 = vpop.f32.mrf.mxu0
      %v2055 = vadd.f32 0.0, %v2054
      %v2056 = vpop.f32.mrf.mxu0
      %v2057 = vadd.f32 0.0, %v2056
      %2058 = vmatmul.bf16.gmra.mxu0 %v1327
      %v2059 = vpop.f32.mrf.mxu0
      %v2060 = vadd.f32 0.0, %v2059
      %v2061 = vpop.f32.mrf.mxu0
      %v2062 = vadd.f32 0.0, %v2061
      %2063 = vmatmul.bf16.gmra.mxu0 %v1330
      %v2064 = vpop.f32.mrf.mxu0
      %v2065 = vadd.f32 0.0, %v2064
      %v2066 = vpop.f32.mrf.mxu0
      %v2067 = vadd.f32 0.0, %v2066
      %2068 = vmatmul.bf16.gmra.mxu0 %v1333
      %v2069 = vpop.f32.mrf.mxu0
      %v2070 = vadd.f32 0.0, %v2069
      %v2071 = vpop.f32.mrf.mxu0
      %v2072 = vadd.f32 0.0, %v2071
      %2073 = vmatmul.bf16.gmra.mxu0 %v1336
      %v2074 = vpop.f32.mrf.mxu0
      %v2075 = vadd.f32 0.0, %v2074
      %v2076 = vpop.f32.mrf.mxu0
      %v2077 = vadd.f32 0.0, %v2076
      %2078 = vmatmul.bf16.gmra.mxu0 %v1928
      %v2079 = vpop.f32.mrf.mxu0
      %v2080 = vadd.f32 0.0, %v2079
      %v2081 = vpop.f32.mrf.mxu0
      %v2082 = vadd.f32 0.0, %v2081
      %2083 = vdwg.mxu0
      %v2084 = vadd.f32 %v1892, %v2005
      %v2085 = vadd.f32 %v1893, %v2007
      %v2086 = vadd.f32 %v1894, %v2010
      %v2087 = vadd.f32 %v1895, %v2012
      %v2088 = vadd.f32 %v1896, %v2015
      %v2089 = vadd.f32 %v1897, %v2017
      %v2090 = vadd.f32 %v1898, %v2020
      %v2091 = vadd.f32 %v1899, %v2022
      %v2092 = vadd.f32 %v1900, %v2025
      %v2093 = vadd.f32 %v1901, %v2027
      %v2094 = vadd.f32 %v1902, %v2030
      %v2095 = vadd.f32 %v1903, %v2032
      %v2096 = vadd.f32 %v1904, %v2035
      %v2097 = vadd.f32 %v1905, %v2037
      %v2098 = vadd.f32 %v1906, %v2040
      %v2099 = vadd.f32 %v1907, %v2042
      %v2100 = vadd.f32 %v1908, %v2045
      %v2101 = vadd.f32 %v1909, %v2047
      %v2102 = vadd.f32 %v1910, %v2050
      %v2103 = vadd.f32 %v1911, %v2052
      %v2104 = vadd.f32 %v1912, %v2055
      %v2105 = vadd.f32 %v1913, %v2057
      %v2106 = vadd.f32 %v1914, %v2060
      %v2107 = vadd.f32 %v1915, %v2062
      %v2108 = vadd.f32 %v1916, %v2065
      %v2109 = vadd.f32 %v1917, %v2067
      %v2110 = vadd.f32 %v1918, %v2070
      %v2111 = vadd.f32 %v1919, %v2072
      %v2112 = vadd.f32 %v1920, %v2075
      %v2113 = vadd.f32 %v1921, %v2077
      %v2114 = vadd.f32 %v1922, %v2080
      %v2115 = vadd.f32 %v1923, %v2082
      %s2116 = scalar_lea.vmem %s1, 384
      %v2117 = vld [vmem:[%s2116] sm:$0xf]
      %v2118 = vld [vmem:[%s2116 + $0x4] sm:$0xf]
      %v2119 = vld [vmem:[%s2116 + $0x8] sm:$0xf]
      %v2120 = vld [vmem:[%s2116 + $0xc] sm:$0xf]
      %v2121 = vld [vmem:[%s2116 + $0x10] sm:$0xf]
      %v2122 = vld [vmem:[%s2116 + $0x14] sm:$0xf]
      %v2123 = vld [vmem:[%s2116 + $0x18] sm:$0xf]
      %v2124 = vld [vmem:[%s2116 + $0x1c] sm:$0xf]
      %v2125 = vld [vmem:[%s2116 + $0x20] sm:$0xf]
      %v2126 = vld [vmem:[%s2116 + $0x24] sm:$0xf]
      %v2127 = vld [vmem:[%s2116 + $0x28] sm:$0xf]
      %v2128 = vld [vmem:[%s2116 + $0x2c] sm:$0xf]
      %v2129 = vld [vmem:[%s2116 + $0x30] sm:$0xf]
      %v2130 = vld [vmem:[%s2116 + $0x34] sm:$0xf]
      %v2131 = vld [vmem:[%s2116 + $0x38] sm:$0xf]
      %v2132 = vld [vmem:[%s2116 + $0x3c] sm:$0xf]
      %v2149 = vunpack.c.l.b16 %v2117
      %v2150 = vunpack.c.l.b16 %v2118
      %v2151 = vunpack.c.l.b16 %v2119
      %v2152 = vunpack.c.l.b16 %v2120
      %v2153 = vunpack.c.l.b16 %v2121
      %v2154 = vunpack.c.l.b16 %v2122
      %v2155 = vunpack.c.l.b16 %v2123
      %v2156 = vunpack.c.l.b16 %v2124
      %v2157 = vunpack.c.l.b16 %v2125
      %v2158 = vunpack.c.l.b16 %v2126
      %v2159 = vunpack.c.l.b16 %v2127
      %v2160 = vunpack.c.l.b16 %v2128
      %v2161 = vunpack.c.l.b16 %v2129
      %v2162 = vunpack.c.l.b16 %v2130
      %v2163 = vunpack.c.l.b16 %v2131
      %v2164 = vunpack.c.l.b16 %v2132
      %v2165 = vpack.c.b16 %v2150, %v2149
      %v2166 = vpack.c.b16 %v2152, %v2151
      %v2167 = vpack.c.b16 %v2154, %v2153
      %v2168 = vpack.c.b16 %v2156, %v2155
      %v2169 = vpack.c.b16 %v2158, %v2157
      %v2170 = vpack.c.b16 %v2160, %v2159
      %v2171 = vpack.c.b16 %v2162, %v2161
      %v2172 = vpack.c.b16 %v2164, %v2163
      %2181 = vmatpush.bf16.msra.mxu0 %v2172
      %2182 = vmatpush.bf16.msra.mxu0 %v2171
      %2183 = vmatpush.bf16.msra.mxu0 %v2170
      %2184 = vmatpush.bf16.msra.mxu0 %v2169
      %2185 = vmatpush.bf16.msra.mxu0 %v2168
      %2186 = vmatpush.bf16.msra.mxu0 %v2167
      %2187 = vmatpush.bf16.msra.mxu0 %v2166
      %2188 = vmatpush.bf16.msra.mxu0 %v2165
      %2189 = vmatmul.bf16.gmra.mxu0 %v708
      %v2190 = vpop.f32.mrf.mxu0
      %v2191 = vadd.f32 0.0, %v2190
      %v2192 = vpop.f32.mrf.mxu0
      %v2193 = vadd.f32 0.0, %v2192
      %2194 = vmatmul.bf16.gmra.mxu0 %v709
      %v2195 = vpop.f32.mrf.mxu0
      %v2196 = vadd.f32 0.0, %v2195
      %v2197 = vpop.f32.mrf.mxu0
      %v2198 = vadd.f32 0.0, %v2197
      %2199 = vmatmul.bf16.gmra.mxu0 %v710
      %v2200 = vpop.f32.mrf.mxu0
      %v2201 = vadd.f32 0.0, %v2200
      %v2202 = vpop.f32.mrf.mxu0
      %v2203 = vadd.f32 0.0, %v2202
      %2204 = vmatmul.bf16.gmra.mxu0 %v711
      %v2205 = vpop.f32.mrf.mxu0
      %v2206 = vadd.f32 0.0, %v2205
      %v2207 = vpop.f32.mrf.mxu0
      %v2208 = vadd.f32 0.0, %v2207
      %2209 = vmatmul.bf16.gmra.mxu0 %v712
      %v2210 = vpop.f32.mrf.mxu0
      %v2211 = vadd.f32 0.0, %v2210
      %v2212 = vpop.f32.mrf.mxu0
      %v2213 = vadd.f32 0.0, %v2212
      %2214 = vmatmul.bf16.gmra.mxu0 %v713
      %v2215 = vpop.f32.mrf.mxu0
      %v2216 = vadd.f32 0.0, %v2215
      %v2217 = vpop.f32.mrf.mxu0
      %v2218 = vadd.f32 0.0, %v2217
      %2219 = vmatmul.bf16.gmra.mxu0 %v714
      %v2220 = vpop.f32.mrf.mxu0
      %v2221 = vadd.f32 0.0, %v2220
      %v2222 = vpop.f32.mrf.mxu0
      %v2223 = vadd.f32 0.0, %v2222
      %2224 = vmatmul.bf16.gmra.mxu0 %v715
      %v2225 = vpop.f32.mrf.mxu0
      %v2226 = vadd.f32 0.0, %v2225
      %v2227 = vpop.f32.mrf.mxu0
      %v2228 = vadd.f32 0.0, %v2227
      %2229 = vmatmul.bf16.gmra.mxu0 %v716
      %v2230 = vpop.f32.mrf.mxu0
      %v2231 = vadd.f32 0.0, %v2230
      %v2232 = vpop.f32.mrf.mxu0
      %v2233 = vadd.f32 0.0, %v2232
      %2234 = vmatmul.bf16.gmra.mxu0 %v717
      %v2235 = vpop.f32.mrf.mxu0
      %v2236 = vadd.f32 0.0, %v2235
      %v2237 = vpop.f32.mrf.mxu0
      %v2238 = vadd.f32 0.0, %v2237
      %2239 = vmatmul.bf16.gmra.mxu0 %v718
      %v2240 = vpop.f32.mrf.mxu0
      %v2241 = vadd.f32 0.0, %v2240
      %v2242 = vpop.f32.mrf.mxu0
      %v2243 = vadd.f32 0.0, %v2242
      %2244 = vmatmul.bf16.gmra.mxu0 %v719
      %v2245 = vpop.f32.mrf.mxu0
      %v2246 = vadd.f32 0.0, %v2245
      %v2247 = vpop.f32.mrf.mxu0
      %v2248 = vadd.f32 0.0, %v2247
      %2249 = vmatmul.bf16.gmra.mxu0 %v720
      %v2250 = vpop.f32.mrf.mxu0
      %v2251 = vadd.f32 0.0, %v2250
      %v2252 = vpop.f32.mrf.mxu0
      %v2253 = vadd.f32 0.0, %v2252
      %2254 = vmatmul.bf16.gmra.mxu0 %v721
      %v2255 = vpop.f32.mrf.mxu0
      %v2256 = vadd.f32 0.0, %v2255
      %v2257 = vpop.f32.mrf.mxu0
      %v2258 = vadd.f32 0.0, %v2257
      %2259 = vmatmul.bf16.gmra.mxu0 %v722
      %v2260 = vpop.f32.mrf.mxu0
      %v2261 = vadd.f32 0.0, %v2260
      %v2262 = vpop.f32.mrf.mxu0
      %v2263 = vadd.f32 0.0, %v2262
      %2264 = vmatmul.bf16.gmra.mxu0 %v706
      %v2265 = vpop.f32.mrf.mxu0
      %v2266 = vadd.f32 0.0, %v2265
      %v2267 = vpop.f32.mrf.mxu0
      %v2268 = vadd.f32 0.0, %v2267
      %2269 = vdwg.mxu0
      %v2270 = vadd.f32 %v2084, %v2191
      %v2271 = vadd.f32 %v2085, %v2193
      %v2272 = vadd.f32 %v2086, %v2196
      %v2273 = vadd.f32 %v2087, %v2198
      %v2274 = vadd.f32 %v2088, %v2201
      %v2275 = vadd.f32 %v2089, %v2203
      %v2276 = vadd.f32 %v2090, %v2206
      %v2277 = vadd.f32 %v2091, %v2208
      %v2278 = vadd.f32 %v2092, %v2211
      %v2279 = vadd.f32 %v2093, %v2213
      %v2280 = vadd.f32 %v2094, %v2216
      %v2281 = vadd.f32 %v2095, %v2218
      %v2282 = vadd.f32 %v2096, %v2221
      %v2283 = vadd.f32 %v2097, %v2223
      %v2284 = vadd.f32 %v2098, %v2226
      %v2285 = vadd.f32 %v2099, %v2228
      %v2286 = vadd.f32 %v2100, %v2231
      %v2287 = vadd.f32 %v2101, %v2233
      %v2288 = vadd.f32 %v2102, %v2236
      %v2289 = vadd.f32 %v2103, %v2238
      %v2290 = vadd.f32 %v2104, %v2241
      %v2291 = vadd.f32 %v2105, %v2243
      %v2292 = vadd.f32 %v2106, %v2246
      %v2293 = vadd.f32 %v2107, %v2248
      %v2294 = vadd.f32 %v2108, %v2251
      %v2295 = vadd.f32 %v2109, %v2253
      %v2296 = vadd.f32 %v2110, %v2256
      %v2297 = vadd.f32 %v2111, %v2258
      %v2298 = vadd.f32 %v2112, %v2261
      %v2299 = vadd.f32 %v2113, %v2263
      %v2300 = vadd.f32 %v2114, %v2266
      %v2301 = vadd.f32 %v2115, %v2268
      %s2302 = scalar_lea.vmem %s1, 448
      %v2303 = vld [vmem:[%s2302] sm:$0xf]
      %v2304 = vld [vmem:[%s2302 + $0x4] sm:$0xf]
      %v2305 = vld [vmem:[%s2302 + $0x8] sm:$0xf]
      %v2306 = vld [vmem:[%s2302 + $0xc] sm:$0xf]
      %v2307 = vld [vmem:[%s2302 + $0x10] sm:$0xf]
      %v2308 = vld [vmem:[%s2302 + $0x14] sm:$0xf]
      %v2309 = vld [vmem:[%s2302 + $0x18] sm:$0xf]
      %v2310 = vld [vmem:[%s2302 + $0x1c] sm:$0xf]
      %v2311 = vld [vmem:[%s2302 + $0x20] sm:$0xf]
      %v2312 = vld [vmem:[%s2302 + $0x24] sm:$0xf]
      %v2313 = vld [vmem:[%s2302 + $0x28] sm:$0xf]
      %v2314 = vld [vmem:[%s2302 + $0x2c] sm:$0xf]
      %v2315 = vld [vmem:[%s2302 + $0x30] sm:$0xf]
      %v2316 = vld [vmem:[%s2302 + $0x34] sm:$0xf]
      %v2317 = vld [vmem:[%s2302 + $0x38] sm:$0xf]
      %v2318 = vld [vmem:[%s2302 + $0x3c] sm:$0xf]
      %v2335 = vunpack.c.l.b16 %v2303
      %v2336 = vunpack.c.l.b16 %v2304
      %v2337 = vunpack.c.l.b16 %v2305
      %v2338 = vunpack.c.l.b16 %v2306
      %v2339 = vunpack.c.l.b16 %v2307
      %v2340 = vunpack.c.l.b16 %v2308
      %v2341 = vunpack.c.l.b16 %v2309
      %v2342 = vunpack.c.l.b16 %v2310
      %v2343 = vunpack.c.l.b16 %v2311
      %v2344 = vunpack.c.l.b16 %v2312
      %v2345 = vunpack.c.l.b16 %v2313
      %v2346 = vunpack.c.l.b16 %v2314
      %v2347 = vunpack.c.l.b16 %v2315
      %v2348 = vunpack.c.l.b16 %v2316
      %v2349 = vunpack.c.l.b16 %v2317
      %v2350 = vunpack.c.l.b16 %v2318
      %v2351 = vpack.c.b16 %v2336, %v2335
      %v2352 = vpack.c.b16 %v2338, %v2337
      %v2353 = vpack.c.b16 %v2340, %v2339
      %v2354 = vpack.c.b16 %v2342, %v2341
      %v2355 = vpack.c.b16 %v2344, %v2343
      %v2356 = vpack.c.b16 %v2346, %v2345
      %v2357 = vpack.c.b16 %v2348, %v2347
      %v2358 = vpack.c.b16 %v2350, %v2349
      %2367 = vmatpush.bf16.msra.mxu0 %v2358
      %2368 = vmatpush.bf16.msra.mxu0 %v2357
      %2369 = vmatpush.bf16.msra.mxu0 %v2356
      %2370 = vmatpush.bf16.msra.mxu0 %v2355
      %2371 = vmatpush.bf16.msra.mxu0 %v2354
      %2372 = vmatpush.bf16.msra.mxu0 %v2353
      %2373 = vmatpush.bf16.msra.mxu0 %v2352
      %2374 = vmatpush.bf16.msra.mxu0 %v2351
      %2375 = vmatmul.bf16.gmra.mxu0 %v792
      %v2376 = vpop.f32.mrf.mxu0
      %v2377 = vadd.f32 0.0, %v2376
      %v2378 = vpop.f32.mrf.mxu0
      %v2379 = vadd.f32 0.0, %v2378
      %2380 = vmatmul.bf16.gmra.mxu0 %v804
      %v2381 = vpop.f32.mrf.mxu0
      %v2382 = vadd.f32 0.0, %v2381
      %v2383 = vpop.f32.mrf.mxu0
      %v2384 = vadd.f32 0.0, %v2383
      %2385 = vmatmul.bf16.gmra.mxu0 %v816
      %v2386 = vpop.f32.mrf.mxu0
      %v2387 = vadd.f32 0.0, %v2386
      %v2388 = vpop.f32.mrf.mxu0
      %v2389 = vadd.f32 0.0, %v2388
      %2390 = vmatmul.bf16.gmra.mxu0 %v828
      %v2391 = vpop.f32.mrf.mxu0
      %v2392 = vadd.f32 0.0, %v2391
      %v2393 = vpop.f32.mrf.mxu0
      %v2394 = vadd.f32 0.0, %v2393
      %2395 = vmatmul.bf16.gmra.mxu0 %v840
      %v2396 = vpop.f32.mrf.mxu0
      %v2397 = vadd.f32 0.0, %v2396
      %v2398 = vpop.f32.mrf.mxu0
      %v2399 = vadd.f32 0.0, %v2398
      %2400 = vmatmul.bf16.gmra.mxu0 %v852
      %v2401 = vpop.f32.mrf.mxu0
      %v2402 = vadd.f32 0.0, %v2401
      %v2403 = vpop.f32.mrf.mxu0
      %v2404 = vadd.f32 0.0, %v2403
      %2405 = vmatmul.bf16.gmra.mxu0 %v864
      %v2406 = vpop.f32.mrf.mxu0
      %v2407 = vadd.f32 0.0, %v2406
      %v2408 = vpop.f32.mrf.mxu0
      %v2409 = vadd.f32 0.0, %v2408
      %2410 = vmatmul.bf16.gmra.mxu0 %v876
      %v2411 = vpop.f32.mrf.mxu0
      %v2412 = vadd.f32 0.0, %v2411
      %v2413 = vpop.f32.mrf.mxu0
      %v2414 = vadd.f32 0.0, %v2413
      %2415 = vmatmul.bf16.gmra.mxu0 %v888
      %v2416 = vpop.f32.mrf.mxu0
      %v2417 = vadd.f32 0.0, %v2416
      %v2418 = vpop.f32.mrf.mxu0
      %v2419 = vadd.f32 0.0, %v2418
      %2420 = vmatmul.bf16.gmra.mxu0 %v900
      %v2421 = vpop.f32.mrf.mxu0
      %v2422 = vadd.f32 0.0, %v2421
      %v2423 = vpop.f32.mrf.mxu0
      %v2424 = vadd.f32 0.0, %v2423
      %2425 = vmatmul.bf16.gmra.mxu0 %v912
      %v2426 = vpop.f32.mrf.mxu0
      %v2427 = vadd.f32 0.0, %v2426
      %v2428 = vpop.f32.mrf.mxu0
      %v2429 = vadd.f32 0.0, %v2428
      %2430 = vmatmul.bf16.gmra.mxu0 %v924
      %v2431 = vpop.f32.mrf.mxu0
      %v2432 = vadd.f32 0.0, %v2431
      %v2433 = vpop.f32.mrf.mxu0
      %v2434 = vadd.f32 0.0, %v2433
      %2435 = vmatmul.bf16.gmra.mxu0 %v936
      %v2436 = vpop.f32.mrf.mxu0
      %v2437 = vadd.f32 0.0, %v2436
      %v2438 = vpop.f32.mrf.mxu0
      %v2439 = vadd.f32 0.0, %v2438
      %2440 = vmatmul.bf16.gmra.mxu0 %v948
      %v2441 = vpop.f32.mrf.mxu0
      %v2442 = vadd.f32 0.0, %v2441
      %v2443 = vpop.f32.mrf.mxu0
      %v2444 = vadd.f32 0.0, %v2443
      %2445 = vmatmul.bf16.gmra.mxu0 %v1736
      %v2446 = vpop.f32.mrf.mxu0
      %v2447 = vadd.f32 0.0, %v2446
      %v2448 = vpop.f32.mrf.mxu0
      %v2449 = vadd.f32 0.0, %v2448
      %2450 = vmatmul.bf16.gmra.mxu0 %v768
      %v2451 = vpop.f32.mrf.mxu0
      %v2452 = vadd.f32 0.0, %v2451
      %v2453 = vpop.f32.mrf.mxu0
      %v2454 = vadd.f32 0.0, %v2453
      %2455 = vdwg.mxu0
      %v2456 = vadd.f32 %v2270, %v2377
      %v2457 = vadd.f32 %v2271, %v2379
      %v2458 = vadd.f32 %v2272, %v2382
      %v2459 = vadd.f32 %v2273, %v2384
      %v2460 = vadd.f32 %v2274, %v2387
      %v2461 = vadd.f32 %v2275, %v2389
      %v2462 = vadd.f32 %v2276, %v2392
      %v2463 = vadd.f32 %v2277, %v2394
      %v2464 = vadd.f32 %v2278, %v2397
      %v2465 = vadd.f32 %v2279, %v2399
      %v2466 = vadd.f32 %v2280, %v2402
      %v2467 = vadd.f32 %v2281, %v2404
      %v2468 = vadd.f32 %v2282, %v2407
      %v2469 = vadd.f32 %v2283, %v2409
      %v2470 = vadd.f32 %v2284, %v2412
      %v2471 = vadd.f32 %v2285, %v2414
      %v2472 = vadd.f32 %v2286, %v2417
      %v2473 = vadd.f32 %v2287, %v2419
      %v2474 = vadd.f32 %v2288, %v2422
      %v2475 = vadd.f32 %v2289, %v2424
      %v2476 = vadd.f32 %v2290, %v2427
      %v2477 = vadd.f32 %v2291, %v2429
      %v2478 = vadd.f32 %v2292, %v2432
      %v2479 = vadd.f32 %v2293, %v2434
      %v2480 = vadd.f32 %v2294, %v2437
      %v2481 = vadd.f32 %v2295, %v2439
      %v2482 = vadd.f32 %v2296, %v2442
      %v2483 = vadd.f32 %v2297, %v2444
      %v2484 = vadd.f32 %v2298, %v2447
      %v2485 = vadd.f32 %v2299, %v2449
      %v2486 = vadd.f32 %v2300, %v2452
      %v2487 = vadd.f32 %v2301, %v2454
      %s2488 = scalar_lea.vmem %s1, 512
      %v2489 = vld [vmem:[%s2488] sm:$0xf]
      %v2490 = vld [vmem:[%s2488 + $0x4] sm:$0xf]
      %v2491 = vld [vmem:[%s2488 + $0x8] sm:$0xf]
      %v2492 = vld [vmem:[%s2488 + $0xc] sm:$0xf]
      %v2493 = vld [vmem:[%s2488 + $0x10] sm:$0xf]
      %v2494 = vld [vmem:[%s2488 + $0x14] sm:$0xf]
      %v2495 = vld [vmem:[%s2488 + $0x18] sm:$0xf]
      %v2496 = vld [vmem:[%s2488 + $0x1c] sm:$0xf]
      %v2497 = vld [vmem:[%s2488 + $0x20] sm:$0xf]
      %v2498 = vld [vmem:[%s2488 + $0x24] sm:$0xf]
      %v2499 = vld [vmem:[%s2488 + $0x28] sm:$0xf]
      %v2500 = vld [vmem:[%s2488 + $0x2c] sm:$0xf]
      %v2501 = vld [vmem:[%s2488 + $0x30] sm:$0xf]
      %v2502 = vld [vmem:[%s2488 + $0x34] sm:$0xf]
      %v2503 = vld [vmem:[%s2488 + $0x38] sm:$0xf]
      %v2504 = vld [vmem:[%s2488 + $0x3c] sm:$0xf]
      %v2521 = vunpack.c.l.b16 %v2489
      %v2522 = vunpack.c.l.b16 %v2490
      %v2523 = vunpack.c.l.b16 %v2491
      %v2524 = vunpack.c.l.b16 %v2492
      %v2525 = vunpack.c.l.b16 %v2493
      %v2526 = vunpack.c.l.b16 %v2494
      %v2527 = vunpack.c.l.b16 %v2495
      %v2528 = vunpack.c.l.b16 %v2496
      %v2529 = vunpack.c.l.b16 %v2497
      %v2530 = vunpack.c.l.b16 %v2498
      %v2531 = vunpack.c.l.b16 %v2499
      %v2532 = vunpack.c.l.b16 %v2500
      %v2533 = vunpack.c.l.b16 %v2501
      %v2534 = vunpack.c.l.b16 %v2502
      %v2535 = vunpack.c.l.b16 %v2503
      %v2536 = vunpack.c.l.b16 %v2504
      %v2537 = vpack.c.b16 %v2522, %v2521
      %v2538 = vpack.c.b16 %v2524, %v2523
      %v2539 = vpack.c.b16 %v2526, %v2525
      %v2540 = vpack.c.b16 %v2528, %v2527
      %v2541 = vpack.c.b16 %v2530, %v2529
      %v2542 = vpack.c.b16 %v2532, %v2531
      %v2543 = vpack.c.b16 %v2534, %v2533
      %v2544 = vpack.c.b16 %v2536, %v2535
      %2553 = vmatpush.bf16.msra.mxu0 %v2544
      %2554 = vmatpush.bf16.msra.mxu0 %v2543
      %2555 = vmatpush.bf16.msra.mxu0 %v2542
      %2556 = vmatpush.bf16.msra.mxu0 %v2541
      %2557 = vmatpush.bf16.msra.mxu0 %v2540
      %2558 = vmatpush.bf16.msra.mxu0 %v2539
      %2559 = vmatpush.bf16.msra.mxu0 %v2538
      %2560 = vmatpush.bf16.msra.mxu0 %v2537
      %2561 = vmatmul.bf16.gmra.mxu0 %v1297
      %v2562 = vpop.f32.mrf.mxu0
      %v2563 = vadd.f32 0.0, %v2562
      %v2564 = vpop.f32.mrf.mxu0
      %v2565 = vadd.f32 0.0, %v2564
      %2566 = vmatmul.bf16.gmra.mxu0 %v1300
      %v2567 = vpop.f32.mrf.mxu0
      %v2568 = vadd.f32 0.0, %v2567
      %v2569 = vpop.f32.mrf.mxu0
      %v2570 = vadd.f32 0.0, %v2569
      %2571 = vmatmul.bf16.gmra.mxu0 %v1303
      %v2572 = vpop.f32.mrf.mxu0
      %v2573 = vadd.f32 0.0, %v2572
      %v2574 = vpop.f32.mrf.mxu0
      %v2575 = vadd.f32 0.0, %v2574
      %2576 = vmatmul.bf16.gmra.mxu0 %v1306
      %v2577 = vpop.f32.mrf.mxu0
      %v2578 = vadd.f32 0.0, %v2577
      %v2579 = vpop.f32.mrf.mxu0
      %v2580 = vadd.f32 0.0, %v2579
      %2581 = vmatmul.bf16.gmra.mxu0 %v1309
      %v2582 = vpop.f32.mrf.mxu0
      %v2583 = vadd.f32 0.0, %v2582
      %v2584 = vpop.f32.mrf.mxu0
      %v2585 = vadd.f32 0.0, %v2584
      %2586 = vmatmul.bf16.gmra.mxu0 %v1312
      %v2587 = vpop.f32.mrf.mxu0
      %v2588 = vadd.f32 0.0, %v2587
      %v2589 = vpop.f32.mrf.mxu0
      %v2590 = vadd.f32 0.0, %v2589
      %2591 = vmatmul.bf16.gmra.mxu0 %v1315
      %v2592 = vpop.f32.mrf.mxu0
      %v2593 = vadd.f32 0.0, %v2592
      %v2594 = vpop.f32.mrf.mxu0
      %v2595 = vadd.f32 0.0, %v2594
      %2596 = vmatmul.bf16.gmra.mxu0 %v1318
      %v2597 = vpop.f32.mrf.mxu0
      %v2598 = vadd.f32 0.0, %v2597
      %v2599 = vpop.f32.mrf.mxu0
      %v2600 = vadd.f32 0.0, %v2599
      %2601 = vmatmul.bf16.gmra.mxu0 %v1321
      %v2602 = vpop.f32.mrf.mxu0
      %v2603 = vadd.f32 0.0, %v2602
      %v2604 = vpop.f32.mrf.mxu0
      %v2605 = vadd.f32 0.0, %v2604
      %2606 = vmatmul.bf16.gmra.mxu0 %v1324
      %v2607 = vpop.f32.mrf.mxu0
      %v2608 = vadd.f32 0.0, %v2607
      %v2609 = vpop.f32.mrf.mxu0
      %v2610 = vadd.f32 0.0, %v2609
      %2611 = vmatmul.bf16.gmra.mxu0 %v1327
      %v2612 = vpop.f32.mrf.mxu0
      %v2613 = vadd.f32 0.0, %v2612
      %v2614 = vpop.f32.mrf.mxu0
      %v2615 = vadd.f32 0.0, %v2614
      %2616 = vmatmul.bf16.gmra.mxu0 %v1330
      %v2617 = vpop.f32.mrf.mxu0
      %v2618 = vadd.f32 0.0, %v2617
      %v2619 = vpop.f32.mrf.mxu0
      %v2620 = vadd.f32 0.0, %v2619
      %2621 = vmatmul.bf16.gmra.mxu0 %v1333
      %v2622 = vpop.f32.mrf.mxu0
      %v2623 = vadd.f32 0.0, %v2622
      %v2624 = vpop.f32.mrf.mxu0
      %v2625 = vadd.f32 0.0, %v2624
      %2626 = vmatmul.bf16.gmra.mxu0 %v1336
      %v2627 = vpop.f32.mrf.mxu0
      %v2628 = vadd.f32 0.0, %v2627
      %v2629 = vpop.f32.mrf.mxu0
      %v2630 = vadd.f32 0.0, %v2629
      %2631 = vmatmul.bf16.gmra.mxu0 %v1928
      %v2632 = vpop.f32.mrf.mxu0
      %v2633 = vadd.f32 0.0, %v2632
      %v2634 = vpop.f32.mrf.mxu0
      %v2635 = vadd.f32 0.0, %v2634
      %2636 = vmatmul.bf16.gmra.mxu0 %v1291
      %v2637 = vpop.f32.mrf.mxu0
      %v2638 = vadd.f32 0.0, %v2637
      %v2639 = vpop.f32.mrf.mxu0
      %v2640 = vadd.f32 0.0, %v2639
      %2641 = vdwg.mxu0
      %v2642 = vadd.f32 %v2456, %v2563
      %v2643 = vadd.f32 %v2457, %v2565
      %v2644 = vadd.f32 %v2458, %v2568
      %v2645 = vadd.f32 %v2459, %v2570
      %v2646 = vadd.f32 %v2460, %v2573
      %v2647 = vadd.f32 %v2461, %v2575
      %v2648 = vadd.f32 %v2462, %v2578
      %v2649 = vadd.f32 %v2463, %v2580
      %v2650 = vadd.f32 %v2464, %v2583
      %v2651 = vadd.f32 %v2465, %v2585
      %v2652 = vadd.f32 %v2466, %v2588
      %v2653 = vadd.f32 %v2467, %v2590
      %v2654 = vadd.f32 %v2468, %v2593
      %v2655 = vadd.f32 %v2469, %v2595
      %v2656 = vadd.f32 %v2470, %v2598
      %v2657 = vadd.f32 %v2471, %v2600
      %v2658 = vadd.f32 %v2472, %v2603
      %v2659 = vadd.f32 %v2473, %v2605
      %v2660 = vadd.f32 %v2474, %v2608
      %v2661 = vadd.f32 %v2475, %v2610
      %v2662 = vadd.f32 %v2476, %v2613
      %v2663 = vadd.f32 %v2477, %v2615
      %v2664 = vadd.f32 %v2478, %v2618
      %v2665 = vadd.f32 %v2479, %v2620
      %v2666 = vadd.f32 %v2480, %v2623
      %v2667 = vadd.f32 %v2481, %v2625
      %v2668 = vadd.f32 %v2482, %v2628
      %v2669 = vadd.f32 %v2483, %v2630
      %v2670 = vadd.f32 %v2484, %v2633
      %v2671 = vadd.f32 %v2485, %v2635
      %v2672 = vadd.f32 %v2486, %v2638
      %v2673 = vadd.f32 %v2487, %v2640
      %v2674 = vpack.c.bf16 %v2642, %v2642
      %v2675 = vpack.c.bf16 %v2643, %v2643
      %v2676 = vpack.c.bf16 %v2644, %v2644
      %v2677 = vpack.c.bf16 %v2645, %v2645
      %v2678 = vpack.c.bf16 %v2646, %v2646
      %v2679 = vpack.c.bf16 %v2647, %v2647
      %v2680 = vpack.c.bf16 %v2648, %v2648
      %v2681 = vpack.c.bf16 %v2649, %v2649
      %v2682 = vpack.c.bf16 %v2650, %v2650
      %v2683 = vpack.c.bf16 %v2651, %v2651
      %v2684 = vpack.c.bf16 %v2652, %v2652
      %v2685 = vpack.c.bf16 %v2653, %v2653
      %v2686 = vpack.c.bf16 %v2654, %v2654
      %v2687 = vpack.c.bf16 %v2655, %v2655
      %v2688 = vpack.c.bf16 %v2656, %v2656
      %v2689 = vpack.c.bf16 %v2657, %v2657
      %v2690 = vpack.c.bf16 %v2658, %v2658
      %v2691 = vpack.c.bf16 %v2659, %v2659
      %v2692 = vpack.c.bf16 %v2660, %v2660
      %v2693 = vpack.c.bf16 %v2661, %v2661
      %v2694 = vpack.c.bf16 %v2662, %v2662
      %v2695 = vpack.c.bf16 %v2663, %v2663
      %v2696 = vpack.c.bf16 %v2664, %v2664
      %v2697 = vpack.c.bf16 %v2665, %v2665
      %v2698 = vpack.c.bf16 %v2666, %v2666
      %v2699 = vpack.c.bf16 %v2667, %v2667
      %v2700 = vpack.c.bf16 %v2668, %v2668
      %v2701 = vpack.c.bf16 %v2669, %v2669
      %v2702 = vpack.c.bf16 %v2670, %v2670
      %v2703 = vpack.c.bf16 %v2671, %v2671
      %v2704 = vpack.c.bf16 %v2672, %v2672
      %v2705 = vpack.c.bf16 %v2673, %v2673
      %2706 = vst [vmem:[%s262] sm:$0xf] %v2674
      %2707 = vst [vmem:[%s262 + $0x4] sm:$0xf] %v2675
      %2708 = vst [vmem:[%s262 + $0x8] sm:$0xf] %v2676
      %2709 = vst [vmem:[%s262 + $0xc] sm:$0xf] %v2677
      %2710 = vst [vmem:[%s262 + $0x10] sm:$0xf] %v2678
      %2711 = vst [vmem:[%s262 + $0x14] sm:$0xf] %v2679
      %2712 = vst [vmem:[%s262 + $0x18] sm:$0xf] %v2680
      %2713 = vst [vmem:[%s262 + $0x1c] sm:$0xf] %v2681
      %2714 = vst [vmem:[%s262 + $0x20] sm:$0xf] %v2682
      %2715 = vst [vmem:[%s262 + $0x24] sm:$0xf] %v2683
      %2716 = vst [vmem:[%s262 + $0x28] sm:$0xf] %v2684
      %2717 = vst [vmem:[%s262 + $0x2c] sm:$0xf] %v2685
      %2718 = vst [vmem:[%s262 + $0x30] sm:$0xf] %v2686
      %2719 = vst [vmem:[%s262 + $0x34] sm:$0xf] %v2687
      %2720 = vst [vmem:[%s262 + $0x38] sm:$0xf] %v2688
      %2721 = vst [vmem:[%s262 + $0x3c] sm:$0xf] %v2689
      %2722 = vst [vmem:[%s262 + $0x40] sm:$0xf] %v2690
      %2723 = vst [vmem:[%s262 + $0x44] sm:$0xf] %v2691
      %2724 = vst [vmem:[%s262 + $0x48] sm:$0xf] %v2692
      %2725 = vst [vmem:[%s262 + $0x4c] sm:$0xf] %v2693
      %2726 = vst [vmem:[%s262 + $0x50] sm:$0xf] %v2694
      %2727 = vst [vmem:[%s262 + $0x54] sm:$0xf] %v2695
      %2728 = vst [vmem:[%s262 + $0x58] sm:$0xf] %v2696
      %2729 = vst [vmem:[%s262 + $0x5c] sm:$0xf] %v2697
      %2730 = vst [vmem:[%s262 + $0x60] sm:$0xf] %v2698
      %2731 = vst [vmem:[%s262 + $0x64] sm:$0xf] %v2699
      %2732 = vst [vmem:[%s262 + $0x68] sm:$0xf] %v2700
      %2733 = vst [vmem:[%s262 + $0x6c] sm:$0xf] %v2701
      %2734 = vst [vmem:[%s262 + $0x70] sm:$0xf] %v2702
      %2735 = vst [vmem:[%s262 + $0x74] sm:$0xf] %v2703
      %2736 = vst [vmem:[%s262 + $0x78] sm:$0xf] %v2704
      %2737 = vst [vmem:[%s262 + $0x7c] sm:$0xf] %v2705
      %v2738 = vadd.f32 %v2642, %v2643
      %v2739 = vadd.f32 %v2738, %v2644
      %v2740 = vadd.f32 %v2739, %v2645
      %v2741 = vadd.f32 %v2740, %v2646
      %v2742 = vadd.f32 %v2741, %v2647
      %v2743 = vadd.f32 %v2742, %v2648
      %v2744 = vadd.f32 %v2743, %v2649
      %v2745 = vadd.f32 %v2744, %v2650
      %v2746 = vadd.f32 %v2745, %v2651
      %v2747 = vadd.f32 %v2746, %v2652
      %v2748 = vadd.f32 %v2747, %v2653
      %v2749 = vadd.f32 %v2748, %v2654
      %v2750 = vadd.f32 %v2749, %v2655
      %v2751 = vadd.f32 %v2750, %v2656
      %v2752 = vadd.f32 %v2751, %v2657
      %v2753 = vadd.f32 %v2752, %v2658
      %v2754 = vadd.f32 %v2753, %v2659
      %v2755 = vadd.f32 %v2754, %v2660
      %v2756 = vadd.f32 %v2755, %v2661
      %v2757 = vadd.f32 %v2756, %v2662
      %v2758 = vadd.f32 %v2757, %v2663
      %v2759 = vadd.f32 %v2758, %v2664
      %v2760 = vadd.f32 %v2759, %v2665
      %v2761 = vadd.f32 %v2760, %v2666
      %v2762 = vadd.f32 %v2761, %v2667
      %v2763 = vadd.f32 %v2762, %v2668
      %v2764 = vadd.f32 %v2763, %v2669
      %v2765 = vadd.f32 %v2764, %v2670
      %v2766 = vadd.f32 %v2765, %v2671
      %v2767 = vadd.f32 %v2766, %v2672
      %v2768 = vadd.f32 %v2767, %v2673
      %v2769 = vrot.slane %v2768, 4
      %v2770 = vadd.f32 %v2768, %v2769
      %v2771 = vrot.slane %v2770, 2
      %v2772 = vadd.f32 %v2770, %v2771
      %v2773 = vrot.slane %v2772, 1
      %v2774 = vadd.f32 %v2772, %v2773
      %2775 = vst [vmem:[%s265] sm:$0x1] %v2774
      %v2776 = vmul.f32 %v2642, %v2642
      %v2777 = vmul.f32 %v2643, %v2643
      %v2778 = vmul.f32 %v2644, %v2644
      %v2779 = vmul.f32 %v2645, %v2645
      %v2780 = vmul.f32 %v2646, %v2646
      %v2781 = vmul.f32 %v2647, %v2647
      %v2782 = vmul.f32 %v2648, %v2648
      %v2783 = vmul.f32 %v2649, %v2649
      %v2784 = vmul.f32 %v2650, %v2650
      %v2785 = vmul.f32 %v2651, %v2651
      %v2786 = vmul.f32 %v2652, %v2652
      %v2787 = vmul.f32 %v2653, %v2653
      %v2788 = vmul.f32 %v2654, %v2654
      %v2789 = vmul.f32 %v2655, %v2655
      %v2790 = vmul.f32 %v2656, %v2656
      %v2791 = vmul.f32 %v2657, %v2657
      %v2792 = vmul.f32 %v2658, %v2658
      %v2793 = vmul.f32 %v2659, %v2659
      %v2794 = vmul.f32 %v2660, %v2660
      %v2795 = vmul.f32 %v2661, %v2661
      %v2796 = vmul.f32 %v2662, %v2662
      %v2797 = vmul.f32 %v2663, %v2663
      %v2798 = vmul.f32 %v2664, %v2664
      %v2799 = vmul.f32 %v2665, %v2665
      %v2800 = vmul.f32 %v2666, %v2666
      %v2801 = vmul.f32 %v2667, %v2667
      %v2802 = vmul.f32 %v2668, %v2668
      %v2803 = vmul.f32 %v2669, %v2669
      %v2804 = vmul.f32 %v2670, %v2670
      %v2805 = vmul.f32 %v2671, %v2671
      %v2806 = vmul.f32 %v2672, %v2672
      %v2807 = vmul.f32 %v2673, %v2673
      %v2808 = vadd.f32 %v2776, %v2777
      %v2809 = vadd.f32 %v2808, %v2778
      %v2810 = vadd.f32 %v2809, %v2779
      %v2811 = vadd.f32 %v2810, %v2780
      %v2812 = vadd.f32 %v2811, %v2781
      %v2813 = vadd.f32 %v2812, %v2782
      %v2814 = vadd.f32 %v2813, %v2783
      %v2815 = vadd.f32 %v2814, %v2784
      %v2816 = vadd.f32 %v2815, %v2785
      %v2817 = vadd.f32 %v2816, %v2786
      %v2818 = vadd.f32 %v2817, %v2787
      %v2819 = vadd.f32 %v2818, %v2788
      %v2820 = vadd.f32 %v2819, %v2789
      %v2821 = vadd.f32 %v2820, %v2790
      %v2822 = vadd.f32 %v2821, %v2791
      %v2823 = vadd.f32 %v2822, %v2792
      %v2824 = vadd.f32 %v2823, %v2793
      %v2825 = vadd.f32 %v2824, %v2794
      %v2826 = vadd.f32 %v2825, %v2795
      %v2827 = vadd.f32 %v2826, %v2796
      %v2828 = vadd.f32 %v2827, %v2797
      %v2829 = vadd.f32 %v2828, %v2798
      %v2830 = vadd.f32 %v2829, %v2799
      %v2831 = vadd.f32 %v2830, %v2800
      %v2832 = vadd.f32 %v2831, %v2801
      %v2833 = vadd.f32 %v2832, %v2802
      %v2834 = vadd.f32 %v2833, %v2803
      %v2835 = vadd.f32 %v2834, %v2804
      %v2836 = vadd.f32 %v2835, %v2805
      %v2837 = vadd.f32 %v2836, %v2806
      %v2838 = vadd.f32 %v2837, %v2807
      %v2839 = vrot.slane %v2838, 4
      %v2840 = vadd.f32 %v2838, %v2839
      %v2841 = vrot.slane %v2840, 2
      %v2842 = vadd.f32 %v2840, %v2841
      %v2843 = vrot.slane %v2842, 1
      %v2844 = vadd.f32 %v2842, %v2843
      %2845 = vst [vmem:[%s268] sm:$0x1] %v2844
      %p2846 = scmp.lt.s32.totalorder %s18, 1
      %s2847 = scalar_select %p2846, %s18, 1
      %s2848 = smul.addr %s2847, 32
      %s2849 = smul.addr %s2848, 4
      %s2850 = scalar_lea.vmem %s4, %s2849
      %p2851 = scmp.lt.s32.totalorder %s18, 1
      %s2852 = scalar_select %p2851, %s18, 1
      %s2853 = scalar_lea.vmem %s5, %s2852
      %p2854 = scmp.lt.s32.totalorder %s18, 1
      %s2855 = scalar_select %p2854, %s18, 1
      %s2856 = scalar_lea.vmem %s6, %s2855
      // Predicated region
      $region37: #{residual_block_forward.4} parent=35 // pred_check
        %p2857 = pneg %p125
      $region38: #{residual_block_forward.4} parent=35 // pred_check_branch
        %2859 = sbr.rel (%p2857) target = $region40
      $region39: #{residual_block_forward.4} parent=35 // pred_region
        _
      $region40: #{residual_block_forward.4} parent=35 // pred_fallthru
        _
      // Predicated region
      $region41: #{residual_block_forward.4} parent=35 // pred_check
        %p2860 = pneg %p151
      $region42: #{residual_block_forward.4} parent=35 // pred_check_branch
        %2862 = sbr.rel (%p2860) target = $region44
      $region43: #{residual_block_forward.4} parent=35 // pred_region
        _
      $region44: #{residual_block_forward.4} parent=35 // pred_fallthru
        _
      // Predicated region
      $region45: #{residual_block_forward.4} parent=35 // pred_check
        %p2863 = pneg %p177
      $region46: #{residual_block_forward.4} parent=35 // pred_check_branch
        %2865 = sbr.rel (%p2863) target = $region48
      $region47: #{residual_block_forward.4} parent=35 // pred_region
        _
      $region48: #{residual_block_forward.4} parent=35 // pred_fallthru
        _
    $region36: #{residual_block_forward.4} parent=5 // pred_fallthru
      _
    %p2866 = scmp.le.s32.totalorder 2, %s13
    // Predicated region
    $region49: #{residual_block_forward.4} parent=5 // pred_check
      %p2867 = pneg %p2866
    $region50: #{residual_block_forward.4} parent=5 // pred_check_branch
      %2869 = sbr.rel (%p2867) target = $region52
    $region51: #{residual_block_forward.4} parent=5 // pred_region
      %s2870 = ssub.s32 %s13, 2
      // Predicated region
      $region53: #{residual_block_forward.4} parent=51 // pred_check
        %p2871 = pneg %p131
      $region54: #{residual_block_forward.4} parent=51 // pred_check_branch
        %2873 = sbr.rel (%p2871) target = $region56
      $region55: #{residual_block_forward.4} parent=51 // pred_region
        %p2874 = scmp.lt.s32.totalorder %s19, 1
        %s2875 = scalar_select %p2874, %s19, 1
        %s2876 = smul.addr %s2875, 32
        %s2877 = smul.addr %s2876, 4
        %s2878 = scalar_lea.vmem %s4, %s2877
      $region56: #{residual_block_forward.4} parent=51 // pred_fallthru
        _
      // Predicated region
      $region57: #{residual_block_forward.4} parent=51 // pred_check
        %p2879 = pneg %p157
      $region58: #{residual_block_forward.4} parent=51 // pred_check_branch
        %2881 = sbr.rel (%p2879) target = $region60
      $region59: #{residual_block_forward.4} parent=51 // pred_region
        %p2882 = scmp.lt.s32.totalorder %s19, 1
        %s2883 = scalar_select %p2882, %s19, 1
        %s2884 = scalar_lea.vmem %s5, %s2883
      $region60: #{residual_block_forward.4} parent=51 // pred_fallthru
        _
      // Predicated region
      $region61: #{residual_block_forward.4} parent=51 // pred_check
        %p2885 = pneg %p183
      $region62: #{residual_block_forward.4} parent=51 // pred_check_branch
        %2887 = sbr.rel (%p2885) target = $region64
      $region63: #{residual_block_forward.4} parent=51 // pred_region
        %p2888 = scmp.lt.s32.totalorder %s19, 1
        %s2889 = scalar_select %p2888, %s19, 1
        %s2890 = scalar_lea.vmem %s6, %s2889
      $region64: #{residual_block_forward.4} parent=51 // pred_fallthru
        _
    $region52: #{residual_block_forward.4} parent=5 // pred_fallthru
      _
  $region6: #{residual_block_forward.4} parent=0 // loop_footer
    %s17 = sadd.s32 1, %s13
  $region7: #{residual_block_forward.4} parent=0 // loop_footer_branch
    %12 = sbr.rel target = $region3
  $region8: #{residual_block_forward.4} parent=0 // loop_exit
    _

// kernel: residual_block_forward.3
$region0: #{residual_block_forward.3}
  #allocation0 [shape = 'u32[]', space=smem, size = 0x4, offset = 0x4, fixed_abs, tag = 'smem constant byte address 0x4 - core index']
  #allocation1 [shape = 'u32[72,128]{1,0:T(1,128)}', space=vmem, size = 0x9000, scoped, tag = 'internal scratch']
  %s0 = inlined_call_operand.vmem [shape: bf16[2,16,16,128], index: 0, kind: input, shape index: {}]
  %s1 = inlined_call_operand.vmem [shape: bf16[9,128,128], index: 1, kind: input, shape index: {}]
  %s2 = inlined_call_operand.vmem [shape: bf16[128,128], index: 2, kind: input, shape index: {}]
  %s3 = inlined_call_operand.vmem [shape: bf16[2,16,16,128], index: 3, kind: output, shape index: {0}]
  %s4 = inlined_call_operand.vmem [shape: bf16[2,16,16,128], index: 4, kind: output, shape index: {1}]
  %s5 = inlined_call_operand.vmem [shape: f32[2,1,128], index: 5, kind: output, shape index: {2}]
  %s6 = inlined_call_operand.vmem [shape: f32[2,1,128], index: 6, kind: output, shape index: {3}]
  %s7 = inlined_call_operand.vmem [shape: f32[2,1,128], index: 7, kind: output, shape index: {4}]
  %s8 = inlined_call_operand.vmem [shape: f32[2,1,128], index: 8, kind: output, shape index: {5}]
  %9 = xla_tuple %s3, %s4, %s5, %s6, %s7, %s8
  %s10 = sld [smem:[#allocation0]]
  $region85: #{residual_block_forward.3} parent=0
    _
  %s12 = ssub.s32 1, %s10
  %s13 = scalar_select 0, %s12, %s10
  loop: start=0, step=1, limit=4
  $region2: #{residual_block_forward.3} parent=0 // loop_pre_header
    _
  $region3: #{residual_block_forward.3} parent=0 // loop_header
    %s15 = sphi 0, %s19
    %p16 = scmp.ge.s32.totalorder %s15, 4
    %s25 = sphi 0, %s27
    %s28 = sphi 0, %s25
    %s29 = sphi 0, %s28
    %s45 = sphi 0, %s29
    %s49 = sphi 0, %s49
    %s51 = sphi 0, %s49
    %s52 = sphi 0, %s51
    %s66 = sphi 0, %s52
    %s70 = sphi 0, %s70
    %s72 = sphi 0, %s70
    %s73 = sphi 0, %s72
    %s87 = sphi 0, %s73
    %s93 = sphi 0, %s95
    %s96 = sphi 0, %s93
    %s97 = sphi 0, %s96
    %s113 = sphi 0, %s97
    %s119 = sphi 0, %s121
    %s122 = sphi 0, %s119
    %s123 = sphi 0, %s122
    %s139 = sphi 0, %s123
    %s145 = sphi 0, %s147
    %s148 = sphi 0, %s145
    %s149 = sphi 0, %s148
    %s165 = sphi 0, %s149
    %s171 = sphi 0, %s173
    %s174 = sphi 0, %s171
    %s175 = sphi 0, %s174
    %s191 = sphi 0, %s175
    %s197 = sphi 0, %s199
    %s200 = sphi 0, %s197
    %s201 = sphi 0, %s200
    %s217 = sphi 0, %s201
    %s223 = sphi 0, %s225
    %s226 = sphi 0, %s223
    %s227 = sphi 0, %s226
    %s243 = sphi 0, %s227
  $region4: #{residual_block_forward.3} parent=0 // loop_header_branch
    %18 = sbr.rel (%p16) target = $region8
  $region5: #{residual_block_forward.3} parent=0 // loop_body
    %s20 = ssub.s32 %s15, 1
    %s21 = ssub.s32 %s15, 2
    %s22 = sadd.s32 %s15, 1
    %s23 = ssub.s32 %s15, %s22
    %p24 = scmp.eq.s32.totalorder %s23, 0
    %s26 = sadd.s32 %s25, 1
    %s27 = scalar_select %p24, %s25, %s26
    %p30 = pneg %p24
    %p31 = scmp.eq.s32.totalorder %s15, 1
    %p32 = por %p30, %p31
    %p33 = scmp.ne.s32.totalorder %s25, %s28
    %p34 = scmp.eq.s32.totalorder %s15, 0
    %p35 = por %p33, %p34
    %p36 = scmp.ne.s32.totalorder %s25, %s28
    %p37 = scmp.eq.s32.totalorder %s20, 1
    %p38 = por %p36, %p37
    %p39 = scmp.ne.s32.totalorder %s28, %s29
    %p40 = scmp.eq.s32.totalorder %s20, 0
    %p41 = por %p39, %p40
    %p42 = scmp.ne.s32.totalorder %s28, %s29
    %p43 = scmp.eq.s32.totalorder %s21, 1
    %p44 = por %p42, %p43
    %p46 = scmp.ne.s32.totalorder %s29, %s45
    %p47 = scmp.eq.s32.totalorder %s21, 0
    %p48 = por %p46, %p47
    %s50 = sadd.s32 %s49, 1
    %p53 = scmp.eq.s32.totalorder %s15, 1
    %p54 = scmp.ne.s32.totalorder %s49, %s51
    %p55 = scmp.eq.s32.totalorder %s15, 0
    %p56 = por %p54, %p55
    %p57 = scmp.ne.s32.totalorder %s49, %s51
    %p58 = scmp.eq.s32.totalorder %s20, 1
    %p59 = por %p57, %p58
    %p60 = scmp.ne.s32.totalorder %s51, %s52
    %p61 = scmp.eq.s32.totalorder %s20, 0
    %p62 = por %p60, %p61
    %p63 = scmp.ne.s32.totalorder %s51, %s52
    %p64 = scmp.eq.s32.totalorder %s21, 1
    %p65 = por %p63, %p64
    %p67 = scmp.ne.s32.totalorder %s52, %s66
    %p68 = scmp.eq.s32.totalorder %s21, 0
    %p69 = por %p67, %p68
    %s71 = sadd.s32 %s70, 1
    %p74 = scmp.eq.s32.totalorder %s15, 1
    %p75 = scmp.ne.s32.totalorder %s70, %s72
    %p76 = scmp.eq.s32.totalorder %s15, 0
    %p77 = por %p75, %p76
    %p78 = scmp.ne.s32.totalorder %s70, %s72
    %p79 = scmp.eq.s32.totalorder %s20, 1
    %p80 = por %p78, %p79
    %p81 = scmp.ne.s32.totalorder %s72, %s73
    %p82 = scmp.eq.s32.totalorder %s20, 0
    %p83 = por %p81, %p82
    %p84 = scmp.ne.s32.totalorder %s72, %s73
    %p85 = scmp.eq.s32.totalorder %s21, 1
    %p86 = por %p84, %p85
    %p88 = scmp.ne.s32.totalorder %s73, %s87
    %p89 = scmp.eq.s32.totalorder %s21, 0
    %p90 = por %p88, %p89
    %s91 = ssub.s32 %s15, %s22
    %p92 = scmp.eq.s32.totalorder %s91, 0
    %s94 = sadd.s32 %s93, 1
    %s95 = scalar_select %p92, %s93, %s94
    %p98 = pneg %p92
    %p99 = scmp.eq.s32.totalorder %s15, 1
    %p100 = por %p98, %p99
    %p101 = scmp.ne.s32.totalorder %s93, %s96
    %p102 = scmp.eq.s32.totalorder %s15, 0
    %p103 = por %p101, %p102
    %p104 = scmp.ne.s32.totalorder %s93, %s96
    %p105 = scmp.eq.s32.totalorder %s20, 1
    %p106 = por %p104, %p105
    %p107 = scmp.ne.s32.totalorder %s96, %s97
    %p108 = scmp.eq.s32.totalorder %s20, 0
    %p109 = por %p107, %p108
    %p110 = scmp.ne.s32.totalorder %s96, %s97
    %p111 = scmp.eq.s32.totalorder %s21, 1
    %p112 = por %p110, %p111
    %p114 = scmp.ne.s32.totalorder %s97, %s113
    %p115 = scmp.eq.s32.totalorder %s21, 0
    %p116 = por %p114, %p115
    %s117 = ssub.s32 %s15, %s22
    %p118 = scmp.eq.s32.totalorder %s117, 0
    %s120 = sadd.s32 %s119, 1
    %s121 = scalar_select %p118, %s119, %s120
    %p124 = pneg %p118
    %p125 = scmp.eq.s32.totalorder %s15, 1
    %p126 = por %p124, %p125
    %p127 = scmp.ne.s32.totalorder %s119, %s122
    %p128 = scmp.eq.s32.totalorder %s15, 0
    %p129 = por %p127, %p128
    %p130 = scmp.ne.s32.totalorder %s119, %s122
    %p131 = scmp.eq.s32.totalorder %s20, 1
    %p132 = por %p130, %p131
    %p133 = scmp.ne.s32.totalorder %s122, %s123
    %p134 = scmp.eq.s32.totalorder %s20, 0
    %p135 = por %p133, %p134
    %p136 = scmp.ne.s32.totalorder %s122, %s123
    %p137 = scmp.eq.s32.totalorder %s21, 1
    %p138 = por %p136, %p137
    %p140 = scmp.ne.s32.totalorder %s123, %s139
    %p141 = scmp.eq.s32.totalorder %s21, 0
    %p142 = por %p140, %p141
    %s143 = ssub.s32 %s15, %s22
    %p144 = scmp.eq.s32.totalorder %s143, 0
    %s146 = sadd.s32 %s145, 1
    %s147 = scalar_select %p144, %s145, %s146
    %p150 = pneg %p144
    %p151 = scmp.eq.s32.totalorder %s15, 1
    %p152 = por %p150, %p151
    %p153 = scmp.ne.s32.totalorder %s145, %s148
    %p154 = scmp.eq.s32.totalorder %s15, 0
    %p155 = por %p153, %p154
    %p156 = scmp.ne.s32.totalorder %s145, %s148
    %p157 = scmp.eq.s32.totalorder %s20, 1
    %p158 = por %p156, %p157
    %p159 = scmp.ne.s32.totalorder %s148, %s149
    %p160 = scmp.eq.s32.totalorder %s20, 0
    %p161 = por %p159, %p160
    %p162 = scmp.ne.s32.totalorder %s148, %s149
    %p163 = scmp.eq.s32.totalorder %s21, 1
    %p164 = por %p162, %p163
    %p166 = scmp.ne.s32.totalorder %s149, %s165
    %p167 = scmp.eq.s32.totalorder %s21, 0
    %p168 = por %p166, %p167
    %s169 = ssub.s32 %s15, %s22
    %p170 = scmp.eq.s32.totalorder %s169, 0
    %s172 = sadd.s32 %s171, 1
    %s173 = scalar_select %p170, %s171, %s172
    %p176 = pneg %p170
    %p177 = scmp.eq.s32.totalorder %s15, 1
    %p178 = por %p176, %p177
    %p179 = scmp.ne.s32.totalorder %s171, %s174
    %p180 = scmp.eq.s32.totalorder %s15, 0
    %p181 = por %p179, %p180
    %p182 = scmp.ne.s32.totalorder %s171, %s174
    %p183 = scmp.eq.s32.totalorder %s20, 1
    %p184 = por %p182, %p183
    %p185 = scmp.ne.s32.totalorder %s174, %s175
    %p186 = scmp.eq.s32.totalorder %s20, 0
    %p187 = por %p185, %p186
    %p188 = scmp.ne.s32.totalorder %s174, %s175
    %p189 = scmp.eq.s32.totalorder %s21, 1
    %p190 = por %p188, %p189
    %p192 = scmp.ne.s32.totalorder %s175, %s191
    %p193 = scmp.eq.s32.totalorder %s21, 0
    %p194 = por %p192, %p193
    %s195 = ssub.s32 %s15, %s22
    %p196 = scmp.eq.s32.totalorder %s195, 0
    %s198 = sadd.s32 %s197, 1
    %s199 = scalar_select %p196, %s197, %s198
    %p202 = pneg %p196
    %p203 = scmp.eq.s32.totalorder %s15, 1
    %p204 = por %p202, %p203
    %p205 = scmp.ne.s32.totalorder %s197, %s200
    %p206 = scmp.eq.s32.totalorder %s15, 0
    %p207 = por %p205, %p206
    %p208 = scmp.ne.s32.totalorder %s197, %s200
    %p209 = scmp.eq.s32.totalorder %s20, 1
    %p210 = por %p208, %p209
    %p211 = scmp.ne.s32.totalorder %s200, %s201
    %p212 = scmp.eq.s32.totalorder %s20, 0
    %p213 = por %p211, %p212
    %p214 = scmp.ne.s32.totalorder %s200, %s201
    %p215 = scmp.eq.s32.totalorder %s21, 1
    %p216 = por %p214, %p215
    %p218 = scmp.ne.s32.totalorder %s201, %s217
    %p219 = scmp.eq.s32.totalorder %s21, 0
    %p220 = por %p218, %p219
    %s221 = ssub.s32 %s15, %s22
    %p222 = scmp.eq.s32.totalorder %s221, 0
    %s224 = sadd.s32 %s223, 1
    %s225 = scalar_select %p222, %s223, %s224
    %p228 = pneg %p222
    %p229 = scmp.eq.s32.totalorder %s15, 1
    %p230 = por %p228, %p229
    %p231 = scmp.ne.s32.totalorder %s223, %s226
    %p232 = scmp.eq.s32.totalorder %s15, 0
    %p233 = por %p231, %p232
    %p234 = scmp.ne.s32.totalorder %s223, %s226
    %p235 = scmp.eq.s32.totalorder %s20, 1
    %p236 = por %p234, %p235
    %p237 = scmp.ne.s32.totalorder %s226, %s227
    %p238 = scmp.eq.s32.totalorder %s20, 0
    %p239 = por %p237, %p238
    %p240 = scmp.ne.s32.totalorder %s226, %s227
    %p241 = scmp.eq.s32.totalorder %s21, 1
    %p242 = por %p240, %p241
    %p244 = scmp.ne.s32.totalorder %s227, %s243
    %p245 = scmp.eq.s32.totalorder %s21, 0
    %p246 = por %p244, %p245
    %p247 = scmp.le.s32.totalorder 1, %s15
    %p248 = scmp.lt.s32.totalorder %s15, 3
    %p249 = pnand %p247, %p248
    %p250 = pneg %p249
    // Predicated region
    $region9: #{residual_block_forward.3} parent=5 // pred_check
      _
    $region10: #{residual_block_forward.3} parent=5 // pred_check_branch
      %252 = sbr.rel (%p249) target = $region12
    $region11: #{residual_block_forward.3} parent=5 // pred_region
      %s253 = ssub.s32 %s15, 1
      // Predicated region
      $region13: #{residual_block_forward.3} parent=11 // pred_check
        %p254 = pneg %p62
      $region14: #{residual_block_forward.3} parent=11 // pred_check_branch
        %256 = sbr.rel (%p254) target = $region16
      $region15: #{residual_block_forward.3} parent=11 // pred_region
        _
      $region16: #{residual_block_forward.3} parent=11 // pred_fallthru
        _
      // Predicated region
      $region17: #{residual_block_forward.3} parent=11 // pred_check
        %p257 = pneg %p83
      $region18: #{residual_block_forward.3} parent=11 // pred_check_branch
        %259 = sbr.rel (%p257) target = $region20
      $region19: #{residual_block_forward.3} parent=11 // pred_region
        _
      $region20: #{residual_block_forward.3} parent=11 // pred_fallthru
        _
    $region12: #{residual_block_forward.3} parent=5 // pred_fallthru
      _
    %p260 = scmp.lt.s32.totalorder %s15, 2
    // Predicated region
    $region21: #{residual_block_forward.3} parent=5 // pred_check
      %p261 = pneg %p260
    $region22: #{residual_block_forward.3} parent=5 // pred_check_branch
      %263 = sbr.rel (%p261) target = $region24
    $region23: #{residual_block_forward.3} parent=5 // pred_region
      // Predicated region
      $region25: #{residual_block_forward.3} parent=23 // pred_check
        %p264 = pneg %p35
      $region26: #{residual_block_forward.3} parent=23 // pred_check_branch
        %266 = sbr.rel (%p264) target = $region28
      $region27: #{residual_block_forward.3} parent=23 // pred_region
        %p267 = scmp.lt.s32.totalorder %s15, 1
        %s268 = scalar_select %p267, %s15, 1
        %s269 = smul.addr %s268, 32
        %s270 = smul.addr %s269, 4
        %s271 = scalar_lea.vmem %s0, %s270
      $region28: #{residual_block_forward.3} parent=23 // pred_fallthru
        _
    $region24: #{residual_block_forward.3} parent=5 // pred_fallthru
      _
    %p272 = scmp.le.s32.totalorder 1, %s15
    %p273 = scmp.lt.s32.totalorder %s15, 3
    %p274 = pnand %p272, %p273
    %p275 = pneg %p274
    // Predicated region
    $region29: #{residual_block_forward.3} parent=5 // pred_check
      _
    $region30: #{residual_block_forward.3} parent=5 // pred_check_branch
      %277 = sbr.rel (%p274) target = $region32
    $region31: #{residual_block_forward.3} parent=5 // pred_region
      %s278 = ssub.s32 %s15, 1
      %p279 = scmp.lt.s32.totalorder %s20, 1
      %s280 = scalar_select %p279, %s20, 1
      %s281 = smul.addr %s280, 32
      %s282 = smul.addr %s281, 4
      %s283 = scalar_lea.vmem %s0, %s282
      %p284 = pneg %p41
      %p285 = pneg %p38
      %p286 = pneg %p62
      %p287 = pneg %p59
      %p288 = pneg %p83
      %p289 = pneg %p80
      %p290 = pneg %p109
      %p291 = pneg %p106
      %p292 = scmp.lt.s32.totalorder %s20, 1
      %s293 = scalar_select %p292, %s20, 1
      %s294 = smul.addr %s293, 32
      %s295 = smul.addr %s294, 4
      %s296 = scalar_lea.vmem %s3, %s295
      %p297 = pneg %p135
      %p298 = pneg %p132
      %p299 = scmp.lt.s32.totalorder %s20, 1
      %s300 = scalar_select %p299, %s20, 1
      %s301 = smul.addr %s300, 32
      %s302 = smul.addr %s301, 4
      %s303 = scalar_lea.vmem %s4, %s302
      %p304 = pneg %p161
      %p305 = pneg %p158
      %p306 = scmp.lt.s32.totalorder %s20, 1
      %s307 = scalar_select %p306, %s20, 1
      %s308 = scalar_lea.vmem %s5, %s307
      %p309 = pneg %p187
      %p310 = pneg %p184
      %p311 = scmp.lt.s32.totalorder %s20, 1
      %s312 = scalar_select %p311, %s20, 1
      %s313 = scalar_lea.vmem %s6, %s312
      %p314 = pneg %p213
      %p315 = pneg %p210
      %p316 = scmp.lt.s32.totalorder %s20, 1
      %s317 = scalar_select %p316, %s20, 1
      %s318 = scalar_lea.vmem %s7, %s317
      %p319 = pneg %p239
      %p320 = pneg %p236
      %p321 = scmp.lt.s32.totalorder %s20, 1
      %s322 = scalar_select %p321, %s20, 1
      %s323 = scalar_lea.vmem %s8, %s322
      %p324 = scmp.lt.s32.totalorder %s20, 1
      %s325 = scalar_select %p324, %s20, 1
      %s326 = smul.addr %s325, 32
      %s327 = smul.addr %s326, 4
      %s328 = scalar_lea.vmem %s0, %s327
      %p329 = scmp.lt.s32.totalorder %s20, 1
      %s330 = scalar_select %p329, %s20, 1
      %s331 = smul.addr %s330, 32
      %s332 = smul.addr %s331, 4
      %s333 = scalar_lea.vmem %s3, %s332
      %p334 = scmp.lt.s32.totalorder %s20, 1
      %s335 = scalar_select %p334, %s20, 1
      %s336 = smul.addr %s335, 32
      %s337 = smul.addr %s336, 4
      %s338 = scalar_lea.vmem %s4, %s337
      %p339 = scmp.lt.s32.totalorder %s20, 1
      %s340 = scalar_select %p339, %s20, 1
      %s341 = scalar_lea.vmem %s5, %s340
      %p342 = scmp.lt.s32.totalorder %s20, 1
      %s343 = scalar_select %p342, %s20, 1
      %s344 = scalar_lea.vmem %s6, %s343
      %p345 = scmp.lt.s32.totalorder %s20, 1
      %s346 = scalar_select %p345, %s20, 1
      %s347 = scalar_lea.vmem %s7, %s346
      %p348 = scmp.lt.s32.totalorder %s20, 1
      %s349 = scalar_select %p348, %s20, 1
      %s350 = scalar_lea.vmem %s8, %s349
      %v352 = vld [vmem:[%s328] sm:$0xf]
      %v353 = vld [vmem:[%s328 + $0x4] sm:$0xf]
      %v354 = vld [vmem:[%s328 + $0x8] sm:$0xf]
      %v355 = vld [vmem:[%s328 + $0xc] sm:$0xf]
      %v356 = vld [vmem:[%s328 + $0x10] sm:$0xf]
      %v357 = vld [vmem:[%s328 + $0x14] sm:$0xf]
      %v358 = vld [vmem:[%s328 + $0x18] sm:$0xf]
      %v359 = vld [vmem:[%s328 + $0x1c] sm:$0xf]
      %v360 = vld [vmem:[%s328 + $0x20] sm:$0xf]
      %v361 = vld [vmem:[%s328 + $0x24] sm:$0xf]
      %v362 = vld [vmem:[%s328 + $0x28] sm:$0xf]
      %v363 = vld [vmem:[%s328 + $0x2c] sm:$0xf]
      %v364 = vld [vmem:[%s328 + $0x30] sm:$0xf]
      %v365 = vld [vmem:[%s328 + $0x34] sm:$0xf]
      %v366 = vld [vmem:[%s328 + $0x38] sm:$0xf]
      %v367 = vld [vmem:[%s328 + $0x3c] sm:$0xf]
      %v368 = vld [vmem:[%s328 + $0x40] sm:$0xf]
      %v369 = vld [vmem:[%s328 + $0x44] sm:$0xf]
      %v370 = vld [vmem:[%s328 + $0x48] sm:$0xf]
      %v371 = vld [vmem:[%s328 + $0x4c] sm:$0xf]
      %v372 = vld [vmem:[%s328 + $0x50] sm:$0xf]
      %v373 = vld [vmem:[%s328 + $0x54] sm:$0xf]
      %v374 = vld [vmem:[%s328 + $0x58] sm:$0xf]
      %v375 = vld [vmem:[%s328 + $0x5c] sm:$0xf]
      %v376 = vld [vmem:[%s328 + $0x60] sm:$0xf]
      %v377 = vld [vmem:[%s328 + $0x64] sm:$0xf]
      %v378 = vld [vmem:[%s328 + $0x68] sm:$0xf]
      %v379 = vld [vmem:[%s328 + $0x6c] sm:$0xf]
      %v380 = vld [vmem:[%s328 + $0x70] sm:$0xf]
      %v381 = vld [vmem:[%s328 + $0x74] sm:$0xf]
      %v382 = vld [vmem:[%s328 + $0x78] sm:$0xf]
      %v383 = vld [vmem:[%s328 + $0x7c] sm:$0xf]
      %v416 = vunpack.c.l.b16 %v352
      %v417 = vunpack.c.l.b16 %v353
      %v418 = vunpack.c.l.b16 %v354
      %v419 = vunpack.c.l.b16 %v355
      %v420 = vunpack.c.l.b16 %v356
      %v421 = vunpack.c.l.b16 %v357
      %v422 = vunpack.c.l.b16 %v358
      %v423 = vunpack.c.l.b16 %v359
      %v424 = vunpack.c.l.b16 %v360
      %v425 = vunpack.c.l.b16 %v361
      %v426 = vunpack.c.l.b16 %v362
      %v427 = vunpack.c.l.b16 %v363
      %v428 = vunpack.c.l.b16 %v364
      %v429 = vunpack.c.l.b16 %v365
      %v430 = vunpack.c.l.b16 %v366
      %v431 = vunpack.c.l.b16 %v367
      %v432 = vunpack.c.l.b16 %v368
      %v433 = vunpack.c.l.b16 %v369
      %v434 = vunpack.c.l.b16 %v370
      %v435 = vunpack.c.l.b16 %v371
      %v436 = vunpack.c.l.b16 %v372
      %v437 = vunpack.c.l.b16 %v373
      %v438 = vunpack.c.l.b16 %v374
      %v439 = vunpack.c.l.b16 %v375
      %v440 = vunpack.c.l.b16 %v376
      %v441 = vunpack.c.l.b16 %v377
      %v442 = vunpack.c.l.b16 %v378
      %v443 = vunpack.c.l.b16 %v379
      %v444 = vunpack.c.l.b16 %v380
      %v445 = vunpack.c.l.b16 %v381
      %v446 = vunpack.c.l.b16 %v382
      %v447 = vunpack.c.l.b16 %v383
      %v448 = vpack.c.b16 %v417, %v416
      %v449 = vpack.c.b16 %v419, %v418
      %v450 = vpack.c.b16 %v421, %v420
      %v451 = vpack.c.b16 %v423, %v422
      %v452 = vpack.c.b16 %v425, %v424
      %v453 = vpack.c.b16 %v427, %v426
      %v454 = vpack.c.b16 %v429, %v428
      %v455 = vpack.c.b16 %v431, %v430
      %v456 = vpack.c.b16 %v433, %v432
      %v457 = vpack.c.b16 %v435, %v434
      %v458 = vpack.c.b16 %v437, %v436
      %v459 = vpack.c.b16 %v439, %v438
      %v460 = vpack.c.b16 %v441, %v440
      %v461 = vpack.c.b16 %v443, %v442
      %v462 = vpack.c.b16 %v445, %v444
      %v463 = vpack.c.b16 %v447, %v446
      %v465 = vshrl.u32 0, 16
      %v467 = vrot.slane %v465, 7
      %v468 = vshll.u32 0, 16
      %v470 = vor.u32 %v467, %v468
      %v472 = vshrl.u32 %v448, 16
      %v474 = vrot.slane %v472, 7
      %v475 = vshll.u32 %v448, 16
      %v477 = vor.u32 %v474, %v475
      %v479 = vshrl.u32 %v449, 16
      %v481 = vrot.slane %v479, 7
      %v482 = vshll.u32 %v449, 16
      %v484 = vor.u32 %v481, %v482
      %v486 = vshrl.u32 %v450, 16
      %v488 = vrot.slane %v486, 7
      %v489 = vshll.u32 %v450, 16
      %v491 = vor.u32 %v488, %v489
      %v493 = vshrl.u32 %v451, 16
      %v495 = vrot.slane %v493, 7
      %v496 = vshll.u32 %v451, 16
      %v498 = vor.u32 %v495, %v496
      %v500 = vshrl.u32 %v452, 16
      %v502 = vrot.slane %v500, 7
      %v503 = vshll.u32 %v452, 16
      %v505 = vor.u32 %v502, %v503
      %v507 = vshrl.u32 %v453, 16
      %v509 = vrot.slane %v507, 7
      %v510 = vshll.u32 %v453, 16
      %v512 = vor.u32 %v509, %v510
      %v514 = vshrl.u32 %v454, 16
      %v516 = vrot.slane %v514, 7
      %v517 = vshll.u32 %v454, 16
      %v519 = vor.u32 %v516, %v517
      %v521 = vshrl.u32 %v455, 16
      %v523 = vrot.slane %v521, 7
      %v524 = vshll.u32 %v455, 16
      %v526 = vor.u32 %v523, %v524
      %v528 = vshrl.u32 %v456, 16
      %v530 = vrot.slane %v528, 7
      %v531 = vshll.u32 %v456, 16
      %v533 = vor.u32 %v530, %v531
      %v535 = vshrl.u32 %v457, 16
      %v537 = vrot.slane %v535, 7
      %v538 = vshll.u32 %v457, 16
      %v540 = vor.u32 %v537, %v538
      %v542 = vshrl.u32 %v458, 16
      %v544 = vrot.slane %v542, 7
      %v545 = vshll.u32 %v458, 16
      %v547 = vor.u32 %v544, %v545
      %v549 = vshrl.u32 %v459, 16
      %v551 = vrot.slane %v549, 7
      %v552 = vshll.u32 %v459, 16
      %v554 = vor.u32 %v551, %v552
      %v556 = vshrl.u32 %v460, 16
      %v558 = vrot.slane %v556, 7
      %v559 = vshll.u32 %v460, 16
      %v561 = vor.u32 %v558, %v559
      %v563 = vshrl.u32 %v461, 16
      %v565 = vrot.slane %v563, 7
      %v566 = vshll.u32 %v461, 16
      %v568 = vor.u32 %v565, %v566
      %v570 = vshrl.u32 %v462, 16
      %v572 = vrot.slane %v570, 7
      %v573 = vshll.u32 %v462, 16
      %v575 = vor.u32 %v572, %v573
      %v577 = vshrl.u32 %v463, 16
      %v579 = vrot.slane %v577, 7
      %v580 = vshll.u32 %v463, 16
      %v582 = vor.u32 %v579, %v580
      %vm617 = vcmask 1040384
      %vm618 = vsmask.f32 256
      %vm619 = vmand %vm617, %vm618
      %v620 = vsel %vm619, 0, %v470
      %v621 = vsel %vm619, 0, %v477
      %v622 = vsel %vm619, 0, %v484
      %v623 = vsel %vm619, 0, %v491
      %v624 = vsel %vm619, 0, %v498
      %v625 = vsel %vm619, 0, %v505
      %v626 = vsel %vm619, 0, %v512
      %v627 = vsel %vm619, 0, %v519
      %v628 = vsel %vm619, 0, %v526
      %v629 = vsel %vm619, 0, %v533
      %v630 = vsel %vm619, 0, %v540
      %v631 = vsel %vm619, 0, %v547
      %v632 = vsel %vm619, 0, %v554
      %v633 = vsel %vm619, 0, %v561
      %v634 = vsel %vm619, 0, %v568
      %v635 = vsel %vm619, 0, %v575
      %v636 = vsel %vm619, 0, %v582
      %v637 = vsel %vm619, %v467, 0
      %v638 = vsel %vm619, %v474, 0
      %v639 = vsel %vm619, %v481, 0
      %v640 = vsel %vm619, %v488, 0
      %v641 = vsel %vm619, %v495, 0
      %v642 = vsel %vm619, %v502, 0
      %v643 = vsel %vm619, %v509, 0
      %v644 = vsel %vm619, %v516, 0
      %v645 = vsel %vm619, %v523, 0
      %v646 = vsel %vm619, %v530, 0
      %v647 = vsel %vm619, %v537, 0
      %v648 = vsel %vm619, %v544, 0
      %v649 = vsel %vm619, %v551, 0
      %v650 = vsel %vm619, %v558, 0
      %v651 = vsel %vm619, %v565, 0
      %v652 = vsel %vm619, %v572, 0
      %v653 = vsel %vm619, %v579, 0
      %v654 = vld [vmem:[%s1] sm:$0xf]
      %v655 = vld [vmem:[%s1 + $0x4] sm:$0xf]
      %v656 = vld [vmem:[%s1 + $0x8] sm:$0xf]
      %v657 = vld [vmem:[%s1 + $0xc] sm:$0xf]
      %v658 = vld [vmem:[%s1 + $0x10] sm:$0xf]
      %v659 = vld [vmem:[%s1 + $0x14] sm:$0xf]
      %v660 = vld [vmem:[%s1 + $0x18] sm:$0xf]
      %v661 = vld [vmem:[%s1 + $0x1c] sm:$0xf]
      %v662 = vld [vmem:[%s1 + $0x20] sm:$0xf]
      %v663 = vld [vmem:[%s1 + $0x24] sm:$0xf]
      %v664 = vld [vmem:[%s1 + $0x28] sm:$0xf]
      %v665 = vld [vmem:[%s1 + $0x2c] sm:$0xf]
      %v666 = vld [vmem:[%s1 + $0x30] sm:$0xf]
      %v667 = vld [vmem:[%s1 + $0x34] sm:$0xf]
      %v668 = vld [vmem:[%s1 + $0x38] sm:$0xf]
      %v669 = vld [vmem:[%s1 + $0x3c] sm:$0xf]
      %vm670 = vsmask.f32 7424
      %v672 = vshrl.u32 %v620, 16
      %v674 = vshll.u32 %v620, 16
      %v676 = vrot.slane %v674, 1
      %v677 = vor.u32 %v672, %v676
      %v679 = vshll.u32 %v637, 16
      %v681 = vrot.slane %v679, 1
      %v682 = vsel %vm670, %v677, %v681
      %v684 = vshrl.u32 %v621, 16
      %v686 = vshll.u32 %v621, 16
      %v688 = vrot.slane %v686, 1
      %v689 = vor.u32 %v684, %v688
      %v691 = vshll.u32 %v638, 16
      %v693 = vrot.slane %v691, 1
      %v694 = vsel %vm670, %v689, %v693
      %v696 = vshrl.u32 %v622, 16
      %v698 = vshll.u32 %v622, 16
      %v700 = vrot.slane %v698, 1
      %v701 = vor.u32 %v696, %v700
      %v703 = vshll.u32 %v639, 16
      %v705 = vrot.slane %v703, 1
      %v706 = vsel %vm670, %v701, %v705
      %v708 = vshrl.u32 %v623, 16
      %v710 = vshll.u32 %v623, 16
      %v712 = vrot.slane %v710, 1
      %v713 = vor.u32 %v708, %v712
      %v715 = vshll.u32 %v640, 16
      %v717 = vrot.slane %v715, 1
      %v718 = vsel %vm670, %v713, %v717
      %v720 = vshrl.u32 %v624, 16
      %v722 = vshll.u32 %v624, 16
      %v724 = vrot.slane %v722, 1
      %v725 = vor.u32 %v720, %v724
      %v727 = vshll.u32 %v641, 16
      %v729 = vrot.slane %v727, 1
      %v730 = vsel %vm670, %v725, %v729
      %v732 = vshrl.u32 %v625, 16
      %v734 = vshll.u32 %v625, 16
      %v736 = vrot.slane %v734, 1
      %v737 = vor.u32 %v732, %v736
      %v739 = vshll.u32 %v642, 16
      %v741 = vrot.slane %v739, 1
      %v742 = vsel %vm670, %v737, %v741
      %v744 = vshrl.u32 %v626, 16
      %v746 = vshll.u32 %v626, 16
      %v748 = vrot.slane %v746, 1
      %v749 = vor.u32 %v744, %v748
      %v751 = vshll.u32 %v643, 16
      %v753 = vrot.slane %v751, 1
      %v754 = vsel %vm670, %v749, %v753
      %v756 = vshrl.u32 %v627, 16
      %v758 = vshll.u32 %v627, 16
      %v760 = vrot.slane %v758, 1
      %v761 = vor.u32 %v756, %v760
      %v763 = vshll.u32 %v644, 16
      %v765 = vrot.slane %v763, 1
      %v766 = vsel %vm670, %v761, %v765
      %v768 = vshrl.u32 %v628, 16
      %v770 = vshll.u32 %v628, 16
      %v772 = vrot.slane %v770, 1
      %v773 = vor.u32 %v768, %v772
      %v775 = vshll.u32 %v645, 16
      %v777 = vrot.slane %v775, 1
      %v778 = vsel %vm670, %v773, %v777
      %v780 = vshrl.u32 %v629, 16
      %v782 = vshll.u32 %v629, 16
      %v784 = vrot.slane %v782, 1
      %v785 = vor.u32 %v780, %v784
      %v787 = vshll.u32 %v646, 16
      %v789 = vrot.slane %v787, 1
      %v790 = vsel %vm670, %v785, %v789
      %v792 = vshrl.u32 %v630, 16
      %v794 = vshll.u32 %v630, 16
      %v796 = vrot.slane %v794, 1
      %v797 = vor.u32 %v792, %v796
      %v799 = vshll.u32 %v647, 16
      %v801 = vrot.slane %v799, 1
      %v802 = vsel %vm670, %v797, %v801
      %v804 = vshrl.u32 %v631, 16
      %v806 = vshll.u32 %v631, 16
      %v808 = vrot.slane %v806, 1
      %v809 = vor.u32 %v804, %v808
      %v811 = vshll.u32 %v648, 16
      %v813 = vrot.slane %v811, 1
      %v814 = vsel %vm670, %v809, %v813
      %v816 = vshrl.u32 %v632, 16
      %v818 = vshll.u32 %v632, 16
      %v820 = vrot.slane %v818, 1
      %v821 = vor.u32 %v816, %v820
      %v823 = vshll.u32 %v649, 16
      %v825 = vrot.slane %v823, 1
      %v826 = vsel %vm670, %v821, %v825
      %v828 = vshrl.u32 %v633, 16
      %v830 = vshll.u32 %v633, 16
      %v832 = vrot.slane %v830, 1
      %v833 = vor.u32 %v828, %v832
      %v835 = vshll.u32 %v650, 16
      %v837 = vrot.slane %v835, 1
      %v838 = vsel %vm670, %v833, %v837
      %v840 = vshrl.u32 %v634, 16
      %v842 = vshll.u32 %v634, 16
      %v844 = vrot.slane %v842, 1
      %v845 = vor.u32 %v840, %v844
      %v847 = vshll.u32 %v651, 16
      %v849 = vrot.slane %v847, 1
      %v850 = vsel %vm670, %v845, %v849
      %v852 = vshrl.u32 %v635, 16
      %v854 = vshll.u32 %v635, 16
      %v856 = vrot.slane %v854, 1
      %v857 = vor.u32 %v852, %v856
      %v859 = vshll.u32 %v652, 16
      %v861 = vrot.slane %v859, 1
      %v862 = vsel %vm670, %v857, %v861
      %s879 = scalar_lea.vmem %s1, 64
      %v880 = vld [vmem:[%s879] sm:$0xf]
      %v881 = vld [vmem:[%s879 + $0x4] sm:$0xf]
      %v882 = vld [vmem:[%s879 + $0x8] sm:$0xf]
      %v883 = vld [vmem:[%s879 + $0xc] sm:$0xf]
      %v884 = vld [vmem:[%s879 + $0x10] sm:$0xf]
      %v885 = vld [vmem:[%s879 + $0x14] sm:$0xf]
      %v886 = vld [vmem:[%s879 + $0x18] sm:$0xf]
      %v887 = vld [vmem:[%s879 + $0x1c] sm:$0xf]
      %v888 = vld [vmem:[%s879 + $0x20] sm:$0xf]
      %v889 = vld [vmem:[%s879 + $0x24] sm:$0xf]
      %v890 = vld [vmem:[%s879 + $0x28] sm:$0xf]
      %v891 = vld [vmem:[%s879 + $0x2c] sm:$0xf]
      %v892 = vld [vmem:[%s879 + $0x30] sm:$0xf]
      %v893 = vld [vmem:[%s879 + $0x34] sm:$0xf]
      %v894 = vld [vmem:[%s879 + $0x38] sm:$0xf]
      %v895 = vld [vmem:[%s879 + $0x3c] sm:$0xf]
      %v912 = vunpack.c.l.b16 %v880
      %v913 = vunpack.c.l.b16 %v881
      %v914 = vunpack.c.l.b16 %v882
      %v915 = vunpack.c.l.b16 %v883
      %v916 = vunpack.c.l.b16 %v884
      %v917 = vunpack.c.l.b16 %v885
      %v918 = vunpack.c.l.b16 %v886
      %v919 = vunpack.c.l.b16 %v887
      %v920 = vunpack.c.l.b16 %v888
      %v921 = vunpack.c.l.b16 %v889
      %v922 = vunpack.c.l.b16 %v890
      %v923 = vunpack.c.l.b16 %v891
      %v924 = vunpack.c.l.b16 %v892
      %v925 = vunpack.c.l.b16 %v893
      %v926 = vunpack.c.l.b16 %v894
      %v927 = vunpack.c.l.b16 %v895
      %v928 = vpack.c.b16 %v913, %v912
      %v929 = vpack.c.b16 %v915, %v914
      %v930 = vpack.c.b16 %v917, %v916
      %v931 = vpack.c.b16 %v919, %v918
      %v932 = vpack.c.b16 %v921, %v920
      %v933 = vpack.c.b16 %v923, %v922
      %v934 = vpack.c.b16 %v925, %v924
      %v935 = vpack.c.b16 %v927, %v926
      %944 = vmatpush.bf16.msra.mxu0 %v935
      %945 = vmatpush.bf16.msra.mxu0 %v934
      %946 = vmatpush.bf16.msra.mxu0 %v933
      %947 = vmatpush.bf16.msra.mxu0 %v932
      %948 = vmatpush.bf16.msra.mxu0 %v931
      %949 = vmatpush.bf16.msra.mxu0 %v930
      %950 = vmatpush.bf16.msra.mxu0 %v929
      %951 = vmatpush.bf16.msra.mxu0 %v928
      %952 = vmatmul.bf16.gmra.mxu0 %v682
      %v953 = vpop.f32.mrf.mxu0
      %v954 = vadd.f32 0.0, %v953
      %v955 = vpop.f32.mrf.mxu0
      %v956 = vadd.f32 0.0, %v955
      %957 = vmatmul.bf16.gmra.mxu0 %v694
      %v958 = vpop.f32.mrf.mxu0
      %v959 = vadd.f32 0.0, %v958
      %v960 = vpop.f32.mrf.mxu0
      %v961 = vadd.f32 0.0, %v960
      %962 = vmatmul.bf16.gmra.mxu0 %v706
      %v963 = vpop.f32.mrf.mxu0
      %v964 = vadd.f32 0.0, %v963
      %v965 = vpop.f32.mrf.mxu0
      %v966 = vadd.f32 0.0, %v965
      %967 = vmatmul.bf16.gmra.mxu0 %v718
      %v968 = vpop.f32.mrf.mxu0
      %v969 = vadd.f32 0.0, %v968
      %v970 = vpop.f32.mrf.mxu0
      %v971 = vadd.f32 0.0, %v970
      %972 = vmatmul.bf16.gmra.mxu0 %v730
      %v973 = vpop.f32.mrf.mxu0
      %v974 = vadd.f32 0.0, %v973
      %v975 = vpop.f32.mrf.mxu0
      %v976 = vadd.f32 0.0, %v975
      %977 = vmatmul.bf16.gmra.mxu0 %v742
      %v978 = vpop.f32.mrf.mxu0
      %v979 = vadd.f32 0.0, %v978
      %v980 = vpop.f32.mrf.mxu0
      %v981 = vadd.f32 0.0, %v980
      %982 = vmatmul.bf16.gmra.mxu0 %v754
      %v983 = vpop.f32.mrf.mxu0
      %v984 = vadd.f32 0.0, %v983
      %v985 = vpop.f32.mrf.mxu0
      %v986 = vadd.f32 0.0, %v985
      %987 = vmatmul.bf16.gmra.mxu0 %v766
      %v988 = vpop.f32.mrf.mxu0
      %v989 = vadd.f32 0.0, %v988
      %v990 = vpop.f32.mrf.mxu0
      %v991 = vadd.f32 0.0, %v990
      %992 = vmatmul.bf16.gmra.mxu0 %v778
      %v993 = vpop.f32.mrf.mxu0
      %v994 = vadd.f32 0.0, %v993
      %v995 = vpop.f32.mrf.mxu0
      %v996 = vadd.f32 0.0, %v995
      %997 = vmatmul.bf16.gmra.mxu0 %v790
      %v998 = vpop.f32.mrf.mxu0
      %v999 = vadd.f32 0.0, %v998
      %v1000 = vpop.f32.mrf.mxu0
      %v1001 = vadd.f32 0.0, %v1000
      %1002 = vmatmul.bf16.gmra.mxu0 %v802
      %v1003 = vpop.f32.mrf.mxu0
      %v1004 = vadd.f32 0.0, %v1003
      %v1005 = vpop.f32.mrf.mxu0
      %v1006 = vadd.f32 0.0, %v1005
      %1007 = vmatmul.bf16.gmra.mxu0 %v814
      %v1008 = vpop.f32.mrf.mxu0
      %v1009 = vadd.f32 0.0, %v1008
      %v1010 = vpop.f32.mrf.mxu0
      %v1011 = vadd.f32 0.0, %v1010
      %1012 = vmatmul.bf16.gmra.mxu0 %v826
      %v1013 = vpop.f32.mrf.mxu0
      %v1014 = vadd.f32 0.0, %v1013
      %v1015 = vpop.f32.mrf.mxu0
      %v1016 = vadd.f32 0.0, %v1015
      %1017 = vmatmul.bf16.gmra.mxu0 %v838
      %v1018 = vpop.f32.mrf.mxu0
      %v1019 = vadd.f32 0.0, %v1018
      %v1020 = vpop.f32.mrf.mxu0
      %v1021 = vadd.f32 0.0, %v1020
      %1022 = vmatmul.bf16.gmra.mxu0 %v850
      %v1023 = vpop.f32.mrf.mxu0
      %v1024 = vadd.f32 0.0, %v1023
      %v1025 = vpop.f32.mrf.mxu0
      %v1026 = vadd.f32 0.0, %v1025
      %1027 = vmatmul.bf16.gmra.mxu0 %v862
      %v1028 = vpop.f32.mrf.mxu0
      %v1029 = vadd.f32 0.0, %v1028
      %v1030 = vpop.f32.mrf.mxu0
      %v1031 = vadd.f32 0.0, %v1030
      %1032 = vdwg.mxu0
      %v1049 = vunpack.c.l.b16 %v654
      %v1050 = vunpack.c.l.b16 %v655
      %v1051 = vunpack.c.l.b16 %v656
      %v1052 = vunpack.c.l.b16 %v657
      %v1053 = vunpack.c.l.b16 %v658
      %v1054 = vunpack.c.l.b16 %v659
      %v1055 = vunpack.c.l.b16 %v660
      %v1056 = vunpack.c.l.b16 %v661
      %v1057 = vunpack.c.l.b16 %v662
      %v1058 = vunpack.c.l.b16 %v663
      %v1059 = vunpack.c.l.b16 %v664
      %v1060 = vunpack.c.l.b16 %v665
      %v1061 = vunpack.c.l.b16 %v666
      %v1062 = vunpack.c.l.b16 %v667
      %v1063 = vunpack.c.l.b16 %v668
      %v1064 = vunpack.c.l.b16 %v669
      %v1065 = vpack.c.b16 %v1050, %v1049
      %v1066 = vpack.c.b16 %v1052, %v1051
      %v1067 = vpack.c.b16 %v1054, %v1053
      %v1068 = vpack.c.b16 %v1056, %v1055
      %v1069 = vpack.c.b16 %v1058, %v1057
      %v1070 = vpack.c.b16 %v1060, %v1059
      %v1071 = vpack.c.b16 %v1062, %v1061
      %v1072 = vpack.c.b16 %v1064, %v1063
      %1081 = vmatpush.bf16.msra.mxu0 %v1072
      %1082 = vmatpush.bf16.msra.mxu0 %v1071
      %1083 = vmatpush.bf16.msra.mxu0 %v1070
      %1084 = vmatpush.bf16.msra.mxu0 %v1069
      %1085 = vmatpush.bf16.msra.mxu0 %v1068
      %1086 = vmatpush.bf16.msra.mxu0 %v1067
      %1087 = vmatpush.bf16.msra.mxu0 %v1066
      %1088 = vmatpush.bf16.msra.mxu0 %v1065
      %1089 = vmatmul.bf16.gmra.mxu0 %v620
      %v1090 = vpop.f32.mrf.mxu0
      %v1091 = vadd.f32 %v954, %v1090
      %v1092 = vpop.f32.mrf.mxu0
      %v1093 = vadd.f32 %v956, %v1092
      %1094 = vmatmul.bf16.gmra.mxu0 %v621
      %v1095 = vpop.f32.mrf.mxu0
      %v1096 = vadd.f32 %v959, %v1095
      %v1097 = vpop.f32.mrf.mxu0
      %v1098 = vadd.f32 %v961, %v1097
      %1099 = vmatmul.bf16.gmra.mxu0 %v622
      %v1100 = vpop.f32.mrf.mxu0
      %v1101 = vadd.f32 %v964, %v1100
      %v1102 = vpop.f32.mrf.mxu0
      %v1103 = vadd.f32 %v966, %v1102
      %1104 = vmatmul.bf16.gmra.mxu0 %v623
      %v1105 = vpop.f32.mrf.mxu0
      %v1106 = vadd.f32 %v969, %v1105
      %v1107 = vpop.f32.mrf.mxu0
      %v1108 = vadd.f32 %v971, %v1107
      %1109 = vmatmul.bf16.gmra.mxu0 %v624
      %v1110 = vpop.f32.mrf.mxu0
      %v1111 = vadd.f32 %v974, %v1110
      %v1112 = vpop.f32.mrf.mxu0
      %v1113 = vadd.f32 %v976, %v1112
      %1114 = vmatmul.bf16.gmra.mxu0 %v625
      %v1115 = vpop.f32.mrf.mxu0
      %v1116 = vadd.f32 %v979, %v1115
      %v1117 = vpop.f32.mrf.mxu0
      %v1118 = vadd.f32 %v981, %v1117
      %1119 = vmatmul.bf16.gmra.mxu0 %v626
      %v1120 = vpop.f32.mrf.mxu0
      %v1121 = vadd.f32 %v984, %v1120
      %v1122 = vpop.f32.mrf.mxu0
      %v1123 = vadd.f32 %v986, %v1122
      %1124 = vmatmul.bf16.gmra.mxu0 %v627
      %v1125 = vpop.f32.mrf.mxu0
      %v1126 = vadd.f32 %v989, %v1125
      %v1127 = vpop.f32.mrf.mxu0
      %v1128 = vadd.f32 %v991, %v1127
      %1129 = vmatmul.bf16.gmra.mxu0 %v628
      %v1130 = vpop.f32.mrf.mxu0
      %v1131 = vadd.f32 %v994, %v1130
      %v1132 = vpop.f32.mrf.mxu0
      %v1133 = vadd.f32 %v996, %v1132
      %1134 = vmatmul.bf16.gmra.mxu0 %v629
      %v1135 = vpop.f32.mrf.mxu0
      %v1136 = vadd.f32 %v999, %v1135
      %v1137 = vpop.f32.mrf.mxu0
      %v1138 = vadd.f32 %v1001, %v1137
      %1139 = vmatmul.bf16.gmra.mxu0 %v630
      %v1140 = vpop.f32.mrf.mxu0
      %v1141 = vadd.f32 %v1004, %v1140
      %v1142 = vpop.f32.mrf.mxu0
      %v1143 = vadd.f32 %v1006, %v1142
      %1144 = vmatmul.bf16.gmra.mxu0 %v631
      %v1145 = vpop.f32.mrf.mxu0
      %v1146 = vadd.f32 %v1009, %v1145
      %v1147 = vpop.f32.mrf.mxu0
      %v1148 = vadd.f32 %v1011, %v1147
      %1149 = vmatmul.bf16.gmra.mxu0 %v632
      %v1150 = vpop.f32.mrf.mxu0
      %v1151 = vadd.f32 %v1014, %v1150
      %v1152 = vpop.f32.mrf.mxu0
      %v1153 = vadd.f32 %v1016, %v1152
      %1154 = vmatmul.bf16.gmra.mxu0 %v633
      %v1155 = vpop.f32.mrf.mxu0
      %v1156 = vadd.f32 %v1019, %v1155
      %v1157 = vpop.f32.mrf.mxu0
      %v1158 = vadd.f32 %v1021, %v1157
      %1159 = vmatmul.bf16.gmra.mxu0 %v634
      %v1160 = vpop.f32.mrf.mxu0
      %v1161 = vadd.f32 %v1024, %v1160
      %v1162 = vpop.f32.mrf.mxu0
      %v1163 = vadd.f32 %v1026, %v1162
      %1164 = vmatmul.bf16.gmra.mxu0 %v635
      %v1165 = vpop.f32.mrf.mxu0
      %v1166 = vadd.f32 %v1029, %v1165
      %v1167 = vpop.f32.mrf.mxu0
      %v1168 = vadd.f32 %v1031, %v1167
      %1169 = vdwg.mxu0
      %vm1202 = vcmask 1046528
      %v1203 = vrot.slane %v620, 1
      %v1204 = vrot.slane %v637, 1
      %v1205 = vsel %vm1202, %v1203, %v1204
      %v1206 = vrot.slane %v621, 1
      %v1207 = vrot.slane %v638, 1
      %v1208 = vsel %vm1202, %v1206, %v1207
      %v1209 = vrot.slane %v622, 1
      %v1210 = vrot.slane %v639, 1
      %v1211 = vsel %vm1202, %v1209, %v1210
      %v1212 = vrot.slane %v623, 1
      %v1213 = vrot.slane %v640, 1
      %v1214 = vsel %vm1202, %v1212, %v1213
      %v1215 = vrot.slane %v624, 1
      %v1216 = vrot.slane %v641, 1
      %v1217 = vsel %vm1202, %v1215, %v1216
      %v1218 = vrot.slane %v625, 1
      %v1219 = vrot.slane %v642, 1
      %v1220 = vsel %vm1202, %v1218, %v1219
      %v1221 = vrot.slane %v626, 1
      %v1222 = vrot.slane %v643, 1
      %v1223 = vsel %vm1202, %v1221, %v1222
      %v1224 = vrot.slane %v627, 1
      %v1225 = vrot.slane %v644, 1
      %v1226 = vsel %vm1202, %v1224, %v1225
      %v1227 = vrot.slane %v628, 1
      %v1228 = vrot.slane %v645, 1
      %v1229 = vsel %vm1202, %v1227, %v1228
      %v1230 = vrot.slane %v629, 1
      %v1231 = vrot.slane %v646, 1
      %v1232 = vsel %vm1202, %v1230, %v1231
      %v1233 = vrot.slane %v630, 1
      %v1234 = vrot.slane %v647, 1
      %v1235 = vsel %vm1202, %v1233, %v1234
      %v1236 = vrot.slane %v631, 1
      %v1237 = vrot.slane %v648, 1
      %v1238 = vsel %vm1202, %v1236, %v1237
      %v1239 = vrot.slane %v632, 1
      %v1240 = vrot.slane %v649, 1
      %v1241 = vsel %vm1202, %v1239, %v1240
      %v1242 = vrot.slane %v633, 1
      %v1243 = vrot.slane %v650, 1
      %v1244 = vsel %vm1202, %v1242, %v1243
      %v1245 = vrot.slane %v634, 1
      %v1246 = vrot.slane %v651, 1
      %v1247 = vsel %vm1202, %v1245, %v1246
      %v1248 = vrot.slane %v635, 1
      %v1249 = vrot.slane %v652, 1
      %v1250 = vsel %vm1202, %v1248, %v1249
      %s1267 = scalar_lea.vmem %s1, 128
      %v1268 = vld [vmem:[%s1267] sm:$0xf]
      %v1269 = vld [vmem:[%s1267 + $0x4] sm:$0xf]
      %v1270 = vld [vmem:[%s1267 + $0x8] sm:$0xf]
      %v1271 = vld [vmem:[%s1267 + $0xc] sm:$0xf]
      %v1272 = vld [vmem:[%s1267 + $0x10] sm:$0xf]
      %v1273 = vld [vmem:[%s1267 + $0x14] sm:$0xf]
      %v1274 = vld [vmem:[%s1267 + $0x18] sm:$0xf]
      %v1275 = vld [vmem:[%s1267 + $0x1c] sm:$0xf]
      %v1276 = vld [vmem:[%s1267 + $0x20] sm:$0xf]
      %v1277 = vld [vmem:[%s1267 + $0x24] sm:$0xf]
      %v1278 = vld [vmem:[%s1267 + $0x28] sm:$0xf]
      %v1279 = vld [vmem:[%s1267 + $0x2c] sm:$0xf]
      %v1280 = vld [vmem:[%s1267 + $0x30] sm:$0xf]
      %v1281 = vld [vmem:[%s1267 + $0x34] sm:$0xf]
      %v1282 = vld [vmem:[%s1267 + $0x38] sm:$0xf]
      %v1283 = vld [vmem:[%s1267 + $0x3c] sm:$0xf]
      %v1300 = vunpack.c.l.b16 %v1268
      %v1301 = vunpack.c.l.b16 %v1269
      %v1302 = vunpack.c.l.b16 %v1270
      %v1303 = vunpack.c.l.b16 %v1271
      %v1304 = vunpack.c.l.b16 %v1272
      %v1305 = vunpack.c.l.b16 %v1273
      %v1306 = vunpack.c.l.b16 %v1274
      %v1307 = vunpack.c.l.b16 %v1275
      %v1308 = vunpack.c.l.b16 %v1276
      %v1309 = vunpack.c.l.b16 %v1277
      %v1310 = vunpack.c.l.b16 %v1278
      %v1311 = vunpack.c.l.b16 %v1279
      %v1312 = vunpack.c.l.b16 %v1280
      %v1313 = vunpack.c.l.b16 %v1281
      %v1314 = vunpack.c.l.b16 %v1282
      %v1315 = vunpack.c.l.b16 %v1283
      %v1316 = vpack.c.b16 %v1301, %v1300
      %v1317 = vpack.c.b16 %v1303, %v1302
      %v1318 = vpack.c.b16 %v1305, %v1304
      %v1319 = vpack.c.b16 %v1307, %v1306
      %v1320 = vpack.c.b16 %v1309, %v1308
      %v1321 = vpack.c.b16 %v1311, %v1310
      %v1322 = vpack.c.b16 %v1313, %v1312
      %v1323 = vpack.c.b16 %v1315, %v1314
      %1332 = vmatpush.bf16.msra.mxu0 %v1323
      %1333 = vmatpush.bf16.msra.mxu0 %v1322
      %1334 = vmatpush.bf16.msra.mxu0 %v1321
      %1335 = vmatpush.bf16.msra.mxu0 %v1320
      %1336 = vmatpush.bf16.msra.mxu0 %v1319
      %1337 = vmatpush.bf16.msra.mxu0 %v1318
      %1338 = vmatpush.bf16.msra.mxu0 %v1317
      %1339 = vmatpush.bf16.msra.mxu0 %v1316
      %1340 = vmatmul.bf16.gmra.mxu0 %v1205
      %v1341 = vpop.f32.mrf.mxu0
      %v1342 = vadd.f32 0.0, %v1341
      %v1343 = vpop.f32.mrf.mxu0
      %v1344 = vadd.f32 0.0, %v1343
      %1345 = vmatmul.bf16.gmra.mxu0 %v1208
      %v1346 = vpop.f32.mrf.mxu0
      %v1347 = vadd.f32 0.0, %v1346
      %v1348 = vpop.f32.mrf.mxu0
      %v1349 = vadd.f32 0.0, %v1348
      %1350 = vmatmul.bf16.gmra.mxu0 %v1211
      %v1351 = vpop.f32.mrf.mxu0
      %v1352 = vadd.f32 0.0, %v1351
      %v1353 = vpop.f32.mrf.mxu0
      %v1354 = vadd.f32 0.0, %v1353
      %1355 = vmatmul.bf16.gmra.mxu0 %v1214
      %v1356 = vpop.f32.mrf.mxu0
      %v1357 = vadd.f32 0.0, %v1356
      %v1358 = vpop.f32.mrf.mxu0
      %v1359 = vadd.f32 0.0, %v1358
      %1360 = vmatmul.bf16.gmra.mxu0 %v1217
      %v1361 = vpop.f32.mrf.mxu0
      %v1362 = vadd.f32 0.0, %v1361
      %v1363 = vpop.f32.mrf.mxu0
      %v1364 = vadd.f32 0.0, %v1363
      %1365 = vmatmul.bf16.gmra.mxu0 %v1220
      %v1366 = vpop.f32.mrf.mxu0
      %v1367 = vadd.f32 0.0, %v1366
      %v1368 = vpop.f32.mrf.mxu0
      %v1369 = vadd.f32 0.0, %v1368
      %1370 = vmatmul.bf16.gmra.mxu0 %v1223
      %v1371 = vpop.f32.mrf.mxu0
      %v1372 = vadd.f32 0.0, %v1371
      %v1373 = vpop.f32.mrf.mxu0
      %v1374 = vadd.f32 0.0, %v1373
      %1375 = vmatmul.bf16.gmra.mxu0 %v1226
      %v1376 = vpop.f32.mrf.mxu0
      %v1377 = vadd.f32 0.0, %v1376
      %v1378 = vpop.f32.mrf.mxu0
      %v1379 = vadd.f32 0.0, %v1378
      %1380 = vmatmul.bf16.gmra.mxu0 %v1229
      %v1381 = vpop.f32.mrf.mxu0
      %v1382 = vadd.f32 0.0, %v1381
      %v1383 = vpop.f32.mrf.mxu0
      %v1384 = vadd.f32 0.0, %v1383
      %1385 = vmatmul.bf16.gmra.mxu0 %v1232
      %v1386 = vpop.f32.mrf.mxu0
      %v1387 = vadd.f32 0.0, %v1386
      %v1388 = vpop.f32.mrf.mxu0
      %v1389 = vadd.f32 0.0, %v1388
      %1390 = vmatmul.bf16.gmra.mxu0 %v1235
      %v1391 = vpop.f32.mrf.mxu0
      %v1392 = vadd.f32 0.0, %v1391
      %v1393 = vpop.f32.mrf.mxu0
      %v1394 = vadd.f32 0.0, %v1393
      %1395 = vmatmul.bf16.gmra.mxu0 %v1238
      %v1396 = vpop.f32.mrf.mxu0
      %v1397 = vadd.f32 0.0, %v1396
      %v1398 = vpop.f32.mrf.mxu0
      %v1399 = vadd.f32 0.0, %v1398
      %1400 = vmatmul.bf16.gmra.mxu0 %v1241
      %v1401 = vpop.f32.mrf.mxu0
      %v1402 = vadd.f32 0.0, %v1401
      %v1403 = vpop.f32.mrf.mxu0
      %v1404 = vadd.f32 0.0, %v1403
      %1405 = vmatmul.bf16.gmra.mxu0 %v1244
      %v1406 = vpop.f32.mrf.mxu0
      %v1407 = vadd.f32 0.0, %v1406
      %v1408 = vpop.f32.mrf.mxu0
      %v1409 = vadd.f32 0.0, %v1408
      %1410 = vmatmul.bf16.gmra.mxu0 %v1247
      %v1411 = vpop.f32.mrf.mxu0
      %v1412 = vadd.f32 0.0, %v1411
      %v1413 = vpop.f32.mrf.mxu0
      %v1414 = vadd.f32 0.0, %v1413
      %1415 = vmatmul.bf16.gmra.mxu0 %v1250
      %v1416 = vpop.f32.mrf.mxu0
      %v1417 = vadd.f32 0.0, %v1416
      %v1418 = vpop.f32.mrf.mxu0
      %v1419 = vadd.f32 0.0, %v1418
      %1420 = vdwg.mxu0
      %v1421 = vadd.f32 %v1091, %v1342
      %v1422 = vadd.f32 %v1093, %v1344
      %v1423 = vadd.f32 %v1096, %v1347
      %v1424 = vadd.f32 %v1098, %v1349
      %v1425 = vadd.f32 %v1101, %v1352
      %v1426 = vadd.f32 %v1103, %v1354
      %v1427 = vadd.f32 %v1106, %v1357
      %v1428 = vadd.f32 %v1108, %v1359
      %v1429 = vadd.f32 %v1111, %v1362
      %v1430 = vadd.f32 %v1113, %v1364
      %v1431 = vadd.f32 %v1116, %v1367
      %v1432 = vadd.f32 %v1118, %v1369
      %v1433 = vadd.f32 %v1121, %v1372
      %v1434 = vadd.f32 %v1123, %v1374
      %v1435 = vadd.f32 %v1126, %v1377
      %v1436 = vadd.f32 %v1128, %v1379
      %v1437 = vadd.f32 %v1131, %v1382
      %v1438 = vadd.f32 %v1133, %v1384
      %v1439 = vadd.f32 %v1136, %v1387
      %v1440 = vadd.f32 %v1138, %v1389
      %v1441 = vadd.f32 %v1141, %v1392
      %v1442 = vadd.f32 %v1143, %v1394
      %v1443 = vadd.f32 %v1146, %v1397
      %v1444 = vadd.f32 %v1148, %v1399
      %v1445 = vadd.f32 %v1151, %v1402
      %v1446 = vadd.f32 %v1153, %v1404
      %v1447 = vadd.f32 %v1156, %v1407
      %v1448 = vadd.f32 %v1158, %v1409
      %v1449 = vadd.f32 %v1161, %v1412
      %v1450 = vadd.f32 %v1163, %v1414
      %v1451 = vadd.f32 %v1166, %v1417
      %v1452 = vadd.f32 %v1168, %v1419
      %s1453 = scalar_lea.vmem %s1, 192
      %v1454 = vld [vmem:[%s1453] sm:$0xf]
      %v1455 = vld [vmem:[%s1453 + $0x4] sm:$0xf]
      %v1456 = vld [vmem:[%s1453 + $0x8] sm:$0xf]
      %v1457 = vld [vmem:[%s1453 + $0xc] sm:$0xf]
      %v1458 = vld [vmem:[%s1453 + $0x10] sm:$0xf]
      %v1459 = vld [vmem:[%s1453 + $0x14] sm:$0xf]
      %v1460 = vld [vmem:[%s1453 + $0x18] sm:$0xf]
      %v1461 = vld [vmem:[%s1453 + $0x1c] sm:$0xf]
      %v1462 = vld [vmem:[%s1453 + $0x20] sm:$0xf]
      %v1463 = vld [vmem:[%s1453 + $0x24] sm:$0xf]
      %v1464 = vld [vmem:[%s1453 + $0x28] sm:$0xf]
      %v1465 = vld [vmem:[%s1453 + $0x2c] sm:$0xf]
      %v1466 = vld [vmem:[%s1453 + $0x30] sm:$0xf]
      %v1467 = vld [vmem:[%s1453 + $0x34] sm:$0xf]
      %v1468 = vld [vmem:[%s1453 + $0x38] sm:$0xf]
      %v1469 = vld [vmem:[%s1453 + $0x3c] sm:$0xf]
      %v1486 = vunpack.c.l.b16 %v1454
      %v1487 = vunpack.c.l.b16 %v1455
      %v1488 = vunpack.c.l.b16 %v1456
      %v1489 = vunpack.c.l.b16 %v1457
      %v1490 = vunpack.c.l.b16 %v1458
      %v1491 = vunpack.c.l.b16 %v1459
      %v1492 = vunpack.c.l.b16 %v1460
      %v1493 = vunpack.c.l.b16 %v1461
      %v1494 = vunpack.c.l.b16 %v1462
      %v1495 = vunpack.c.l.b16 %v1463
      %v1496 = vunpack.c.l.b16 %v1464
      %v1497 = vunpack.c.l.b16 %v1465
      %v1498 = vunpack.c.l.b16 %v1466
      %v1499 = vunpack.c.l.b16 %v1467
      %v1500 = vunpack.c.l.b16 %v1468
      %v1501 = vunpack.c.l.b16 %v1469
      %v1502 = vpack.c.b16 %v1487, %v1486
      %v1503 = vpack.c.b16 %v1489, %v1488
      %v1504 = vpack.c.b16 %v1491, %v1490
      %v1505 = vpack.c.b16 %v1493, %v1492
      %v1506 = vpack.c.b16 %v1495, %v1494
      %v1507 = vpack.c.b16 %v1497, %v1496
      %v1508 = vpack.c.b16 %v1499, %v1498
      %v1509 = vpack.c.b16 %v1501, %v1500
      %1518 = vmatpush.bf16.msra.mxu0 %v1509
      %1519 = vmatpush.bf16.msra.mxu0 %v1508
      %1520 = vmatpush.bf16.msra.mxu0 %v1507
      %1521 = vmatpush.bf16.msra.mxu0 %v1506
      %1522 = vmatpush.bf16.msra.mxu0 %v1505
      %1523 = vmatpush.bf16.msra.mxu0 %v1504
      %1524 = vmatpush.bf16.msra.mxu0 %v1503
      %1525 = vmatpush.bf16.msra.mxu0 %v1502
      %1526 = vmatmul.bf16.gmra.mxu0 %v621
      %v1527 = vpop.f32.mrf.mxu0
      %v1528 = vadd.f32 0.0, %v1527
      %v1529 = vpop.f32.mrf.mxu0
      %v1530 = vadd.f32 0.0, %v1529
      %1531 = vmatmul.bf16.gmra.mxu0 %v622
      %v1532 = vpop.f32.mrf.mxu0
      %v1533 = vadd.f32 0.0, %v1532
      %v1534 = vpop.f32.mrf.mxu0
      %v1535 = vadd.f32 0.0, %v1534
      %1536 = vmatmul.bf16.gmra.mxu0 %v623
      %v1537 = vpop.f32.mrf.mxu0
      %v1538 = vadd.f32 0.0, %v1537
      %v1539 = vpop.f32.mrf.mxu0
      %v1540 = vadd.f32 0.0, %v1539
      %1541 = vmatmul.bf16.gmra.mxu0 %v624
      %v1542 = vpop.f32.mrf.mxu0
      %v1543 = vadd.f32 0.0, %v1542
      %v1544 = vpop.f32.mrf.mxu0
      %v1545 = vadd.f32 0.0, %v1544
      %1546 = vmatmul.bf16.gmra.mxu0 %v625
      %v1547 = vpop.f32.mrf.mxu0
      %v1548 = vadd.f32 0.0, %v1547
      %v1549 = vpop.f32.mrf.mxu0
      %v1550 = vadd.f32 0.0, %v1549
      %1551 = vmatmul.bf16.gmra.mxu0 %v626
      %v1552 = vpop.f32.mrf.mxu0
      %v1553 = vadd.f32 0.0, %v1552
      %v1554 = vpop.f32.mrf.mxu0
      %v1555 = vadd.f32 0.0, %v1554
      %1556 = vmatmul.bf16.gmra.mxu0 %v627
      %v1557 = vpop.f32.mrf.mxu0
      %v1558 = vadd.f32 0.0, %v1557
      %v1559 = vpop.f32.mrf.mxu0
      %v1560 = vadd.f32 0.0, %v1559
      %1561 = vmatmul.bf16.gmra.mxu0 %v628
      %v1562 = vpop.f32.mrf.mxu0
      %v1563 = vadd.f32 0.0, %v1562
      %v1564 = vpop.f32.mrf.mxu0
      %v1565 = vadd.f32 0.0, %v1564
      %1566 = vmatmul.bf16.gmra.mxu0 %v629
      %v1567 = vpop.f32.mrf.mxu0
      %v1568 = vadd.f32 0.0, %v1567
      %v1569 = vpop.f32.mrf.mxu0
      %v1570 = vadd.f32 0.0, %v1569
      %1571 = vmatmul.bf16.gmra.mxu0 %v630
      %v1572 = vpop.f32.mrf.mxu0
      %v1573 = vadd.f32 0.0, %v1572
      %v1574 = vpop.f32.mrf.mxu0
      %v1575 = vadd.f32 0.0, %v1574
      %1576 = vmatmul.bf16.gmra.mxu0 %v631
      %v1577 = vpop.f32.mrf.mxu0
      %v1578 = vadd.f32 0.0, %v1577
      %v1579 = vpop.f32.mrf.mxu0
      %v1580 = vadd.f32 0.0, %v1579
      %1581 = vmatmul.bf16.gmra.mxu0 %v632
      %v1582 = vpop.f32.mrf.mxu0
      %v1583 = vadd.f32 0.0, %v1582
      %v1584 = vpop.f32.mrf.mxu0
      %v1585 = vadd.f32 0.0, %v1584
      %1586 = vmatmul.bf16.gmra.mxu0 %v633
      %v1587 = vpop.f32.mrf.mxu0
      %v1588 = vadd.f32 0.0, %v1587
      %v1589 = vpop.f32.mrf.mxu0
      %v1590 = vadd.f32 0.0, %v1589
      %1591 = vmatmul.bf16.gmra.mxu0 %v634
      %v1592 = vpop.f32.mrf.mxu0
      %v1593 = vadd.f32 0.0, %v1592
      %v1594 = vpop.f32.mrf.mxu0
      %v1595 = vadd.f32 0.0, %v1594
      %1596 = vmatmul.bf16.gmra.mxu0 %v635
      %v1597 = vpop.f32.mrf.mxu0
      %v1598 = vadd.f32 0.0, %v1597
      %v1599 = vpop.f32.mrf.mxu0
      %v1600 = vadd.f32 0.0, %v1599
      %1601 = vmatmul.bf16.gmra.mxu0 %v636
      %v1602 = vpop.f32.mrf.mxu0
      %v1603 = vadd.f32 0.0, %v1602
      %v1604 = vpop.f32.mrf.mxu0
      %v1605 = vadd.f32 0.0, %v1604
      %1606 = vdwg.mxu0
      %v1607 = vadd.f32 %v1421, %v1528
      %v1608 = vadd.f32 %v1422, %v1530
      %v1609 = vadd.f32 %v1423, %v1533
      %v1610 = vadd.f32 %v1424, %v1535
      %v1611 = vadd.f32 %v1425, %v1538
      %v1612 = vadd.f32 %v1426, %v1540
      %v1613 = vadd.f32 %v1427, %v1543
      %v1614 = vadd.f32 %v1428, %v1545
      %v1615 = vadd.f32 %v1429, %v1548
      %v1616 = vadd.f32 %v1430, %v1550
      %v1617 = vadd.f32 %v1431, %v1553
      %v1618 = vadd.f32 %v1432, %v1555
      %v1619 = vadd.f32 %v1433, %v1558
      %v1620 = vadd.f32 %v1434, %v1560
      %v1621 = vadd.f32 %v1435, %v1563
      %v1622 = vadd.f32 %v1436, %v1565
      %v1623 = vadd.f32 %v1437, %v1568
      %v1624 = vadd.f32 %v1438, %v1570
      %v1625 = vadd.f32 %v1439, %v1573
      %v1626 = vadd.f32 %v1440, %v1575
      %v1627 = vadd.f32 %v1441, %v1578
      %v1628 = vadd.f32 %v1442, %v1580
      %v1629 = vadd.f32 %v1443, %v1583
      %v1630 = vadd.f32 %v1444, %v1585
      %v1631 = vadd.f32 %v1445, %v1588
      %v1632 = vadd.f32 %v1446, %v1590
      %v1633 = vadd.f32 %v1447, %v1593
      %v1634 = vadd.f32 %v1448, %v1595
      %v1635 = vadd.f32 %v1449, %v1598
      %v1636 = vadd.f32 %v1450, %v1600
      %v1637 = vadd.f32 %v1451, %v1603
      %v1638 = vadd.f32 %v1452, %v1605
      %v1640 = vshrl.u32 %v636, 16
      %v1642 = vshll.u32 %v636, 16
      %v1644 = vrot.slane %v1642, 1
      %v1645 = vor.u32 %v1640, %v1644
      %v1647 = vshll.u32 %v653, 16
      %v1649 = vrot.slane %v1647, 1
      %v1650 = vsel %vm670, %v1645, %v1649
      %s1652 = scalar_lea.vmem %s1, 256
      %v1653 = vld [vmem:[%s1652] sm:$0xf]
      %v1654 = vld [vmem:[%s1652 + $0x4] sm:$0xf]
      %v1655 = vld [vmem:[%s1652 + $0x8] sm:$0xf]
      %v1656 = vld [vmem:[%s1652 + $0xc] sm:$0xf]
      %v1657 = vld [vmem:[%s1652 + $0x10] sm:$0xf]
      %v1658 = vld [vmem:[%s1652 + $0x14] sm:$0xf]
      %v1659 = vld [vmem:[%s1652 + $0x18] sm:$0xf]
      %v1660 = vld [vmem:[%s1652 + $0x1c] sm:$0xf]
      %v1661 = vld [vmem:[%s1652 + $0x20] sm:$0xf]
      %v1662 = vld [vmem:[%s1652 + $0x24] sm:$0xf]
      %v1663 = vld [vmem:[%s1652 + $0x28] sm:$0xf]
      %v1664 = vld [vmem:[%s1652 + $0x2c] sm:$0xf]
      %v1665 = vld [vmem:[%s1652 + $0x30] sm:$0xf]
      %v1666 = vld [vmem:[%s1652 + $0x34] sm:$0xf]
      %v1667 = vld [vmem:[%s1652 + $0x38] sm:$0xf]
      %v1668 = vld [vmem:[%s1652 + $0x3c] sm:$0xf]
      %v1685 = vunpack.c.l.b16 %v1653
      %v1686 = vunpack.c.l.b16 %v1654
      %v1687 = vunpack.c.l.b16 %v1655
      %v1688 = vunpack.c.l.b16 %v1656
      %v1689 = vunpack.c.l.b16 %v1657
      %v1690 = vunpack.c.l.b16 %v1658
      %v1691 = vunpack.c.l.b16 %v1659
      %v1692 = vunpack.c.l.b16 %v1660
      %v1693 = vunpack.c.l.b16 %v1661
      %v1694 = vunpack.c.l.b16 %v1662
      %v1695 = vunpack.c.l.b16 %v1663
      %v1696 = vunpack.c.l.b16 %v1664
      %v1697 = vunpack.c.l.b16 %v1665
      %v1698 = vunpack.c.l.b16 %v1666
      %v1699 = vunpack.c.l.b16 %v1667
      %v1700 = vunpack.c.l.b16 %v1668
      %v1701 = vpack.c.b16 %v1686, %v1685
      %v1702 = vpack.c.b16 %v1688, %v1687
      %v1703 = vpack.c.b16 %v1690, %v1689
      %v1704 = vpack.c.b16 %v1692, %v1691
      %v1705 = vpack.c.b16 %v1694, %v1693
      %v1706 = vpack.c.b16 %v1696, %v1695
      %v1707 = vpack.c.b16 %v1698, %v1697
      %v1708 = vpack.c.b16 %v1700, %v1699
      %1717 = vmatpush.bf16.msra.mxu0 %v1708
      %1718 = vmatpush.bf16.msra.mxu0 %v1707
      %1719 = vmatpush.bf16.msra.mxu0 %v1706
      %1720 = vmatpush.bf16.msra.mxu0 %v1705
      %1721 = vmatpush.bf16.msra.mxu0 %v1704
      %1722 = vmatpush.bf16.msra.mxu0 %v1703
      %1723 = vmatpush.bf16.msra.mxu0 %v1702
      %1724 = vmatpush.bf16.msra.mxu0 %v1701
      %1725 = vmatmul.bf16.gmra.mxu0 %v694
      %v1726 = vpop.f32.mrf.mxu0
      %v1727 = vadd.f32 0.0, %v1726
      %v1728 = vpop.f32.mrf.mxu0
      %v1729 = vadd.f32 0.0, %v1728
      %1730 = vmatmul.bf16.gmra.mxu0 %v706
      %v1731 = vpop.f32.mrf.mxu0
      %v1732 = vadd.f32 0.0, %v1731
      %v1733 = vpop.f32.mrf.mxu0
      %v1734 = vadd.f32 0.0, %v1733
      %1735 = vmatmul.bf16.gmra.mxu0 %v718
      %v1736 = vpop.f32.mrf.mxu0
      %v1737 = vadd.f32 0.0, %v1736
      %v1738 = vpop.f32.mrf.mxu0
      %v1739 = vadd.f32 0.0, %v1738
      %1740 = vmatmul.bf16.gmra.mxu0 %v730
      %v1741 = vpop.f32.mrf.mxu0
      %v1742 = vadd.f32 0.0, %v1741
      %v1743 = vpop.f32.mrf.mxu0
      %v1744 = vadd.f32 0.0, %v1743
      %1745 = vmatmul.bf16.gmra.mxu0 %v742
      %v1746 = vpop.f32.mrf.mxu0
      %v1747 = vadd.f32 0.0, %v1746
      %v1748 = vpop.f32.mrf.mxu0
      %v1749 = vadd.f32 0.0, %v1748
      %1750 = vmatmul.bf16.gmra.mxu0 %v754
      %v1751 = vpop.f32.mrf.mxu0
      %v1752 = vadd.f32 0.0, %v1751
      %v1753 = vpop.f32.mrf.mxu0
      %v1754 = vadd.f32 0.0, %v1753
      %1755 = vmatmul.bf16.gmra.mxu0 %v766
      %v1756 = vpop.f32.mrf.mxu0
      %v1757 = vadd.f32 0.0, %v1756
      %v1758 = vpop.f32.mrf.mxu0
      %v1759 = vadd.f32 0.0, %v1758
      %1760 = vmatmul.bf16.gmra.mxu0 %v778
      %v1761 = vpop.f32.mrf.mxu0
      %v1762 = vadd.f32 0.0, %v1761
      %v1763 = vpop.f32.mrf.mxu0
      %v1764 = vadd.f32 0.0, %v1763
      %1765 = vmatmul.bf16.gmra.mxu0 %v790
      %v1766 = vpop.f32.mrf.mxu0
      %v1767 = vadd.f32 0.0, %v1766
      %v1768 = vpop.f32.mrf.mxu0
      %v1769 = vadd.f32 0.0, %v1768
      %1770 = vmatmul.bf16.gmra.mxu0 %v802
      %v1771 = vpop.f32.mrf.mxu0
      %v1772 = vadd.f32 0.0, %v1771
      %v1773 = vpop.f32.mrf.mxu0
      %v1774 = vadd.f32 0.0, %v1773
      %1775 = vmatmul.bf16.gmra.mxu0 %v814
      %v1776 = vpop.f32.mrf.mxu0
      %v1777 = vadd.f32 0.0, %v1776
      %v1778 = vpop.f32.mrf.mxu0
      %v1779 = vadd.f32 0.0, %v1778
      %1780 = vmatmul.bf16.gmra.mxu0 %v826
      %v1781 = vpop.f32.mrf.mxu0
      %v1782 = vadd.f32 0.0, %v1781
      %v1783 = vpop.f32.mrf.mxu0
      %v1784 = vadd.f32 0.0, %v1783
      %1785 = vmatmul.bf16.gmra.mxu0 %v838
      %v1786 = vpop.f32.mrf.mxu0
      %v1787 = vadd.f32 0.0, %v1786
      %v1788 = vpop.f32.mrf.mxu0
      %v1789 = vadd.f32 0.0, %v1788
      %1790 = vmatmul.bf16.gmra.mxu0 %v850
      %v1791 = vpop.f32.mrf.mxu0
      %v1792 = vadd.f32 0.0, %v1791
      %v1793 = vpop.f32.mrf.mxu0
      %v1794 = vadd.f32 0.0, %v1793
      %1795 = vmatmul.bf16.gmra.mxu0 %v862
      %v1796 = vpop.f32.mrf.mxu0
      %v1797 = vadd.f32 0.0, %v1796
      %v1798 = vpop.f32.mrf.mxu0
      %v1799 = vadd.f32 0.0, %v1798
      %1800 = vmatmul.bf16.gmra.mxu0 %v1650
      %v1801 = vpop.f32.mrf.mxu0
      %v1802 = vadd.f32 0.0, %v1801
      %v1803 = vpop.f32.mrf.mxu0
      %v1804 = vadd.f32 0.0, %v1803
      %1805 = vdwg.mxu0
      %v1806 = vadd.f32 %v1607, %v1727
      %v1807 = vadd.f32 %v1608, %v1729
      %v1808 = vadd.f32 %v1609, %v1732
      %v1809 = vadd.f32 %v1610, %v1734
      %v1810 = vadd.f32 %v1611, %v1737
      %v1811 = vadd.f32 %v1612, %v1739
      %v1812 = vadd.f32 %v1613, %v1742
      %v1813 = vadd.f32 %v1614, %v1744
      %v1814 = vadd.f32 %v1615, %v1747
      %v1815 = vadd.f32 %v1616, %v1749
      %v1816 = vadd.f32 %v1617, %v1752
      %v1817 = vadd.f32 %v1618, %v1754
      %v1818 = vadd.f32 %v1619, %v1757
      %v1819 = vadd.f32 %v1620, %v1759
      %v1820 = vadd.f32 %v1621, %v1762
      %v1821 = vadd.f32 %v1622, %v1764
      %v1822 = vadd.f32 %v1623, %v1767
      %v1823 = vadd.f32 %v1624, %v1769
      %v1824 = vadd.f32 %v1625, %v1772
      %v1825 = vadd.f32 %v1626, %v1774
      %v1826 = vadd.f32 %v1627, %v1777
      %v1827 = vadd.f32 %v1628, %v1779
      %v1828 = vadd.f32 %v1629, %v1782
      %v1829 = vadd.f32 %v1630, %v1784
      %v1830 = vadd.f32 %v1631, %v1787
      %v1831 = vadd.f32 %v1632, %v1789
      %v1832 = vadd.f32 %v1633, %v1792
      %v1833 = vadd.f32 %v1634, %v1794
      %v1834 = vadd.f32 %v1635, %v1797
      %v1835 = vadd.f32 %v1636, %v1799
      %v1836 = vadd.f32 %v1637, %v1802
      %v1837 = vadd.f32 %v1638, %v1804
      %v1840 = vrot.slane %v636, 1
      %v1841 = vrot.slane %v653, 1
      %v1842 = vsel %vm1202, %v1840, %v1841
      %s1844 = scalar_lea.vmem %s1, 320
      %v1845 = vld [vmem:[%s1844] sm:$0xf]
      %v1846 = vld [vmem:[%s1844 + $0x4] sm:$0xf]
      %v1847 = vld [vmem:[%s1844 + $0x8] sm:$0xf]
      %v1848 = vld [vmem:[%s1844 + $0xc] sm:$0xf]
      %v1849 = vld [vmem:[%s1844 + $0x10] sm:$0xf]
      %v1850 = vld [vmem:[%s1844 + $0x14] sm:$0xf]
      %v1851 = vld [vmem:[%s1844 + $0x18] sm:$0xf]
      %v1852 = vld [vmem:[%s1844 + $0x1c] sm:$0xf]
      %v1853 = vld [vmem:[%s1844 + $0x20] sm:$0xf]
      %v1854 = vld [vmem:[%s1844 + $0x24] sm:$0xf]
      %v1855 = vld [vmem:[%s1844 + $0x28] sm:$0xf]
      %v1856 = vld [vmem:[%s1844 + $0x2c] sm:$0xf]
      %v1857 = vld [vmem:[%s1844 + $0x30] sm:$0xf]
      %v1858 = vld [vmem:[%s1844 + $0x34] sm:$0xf]
      %v1859 = vld [vmem:[%s1844 + $0x38] sm:$0xf]
      %v1860 = vld [vmem:[%s1844 + $0x3c] sm:$0xf]
      %v1877 = vunpack.c.l.b16 %v1845
      %v1878 = vunpack.c.l.b16 %v1846
      %v1879 = vunpack.c.l.b16 %v1847
      %v1880 = vunpack.c.l.b16 %v1848
      %v1881 = vunpack.c.l.b16 %v1849
      %v1882 = vunpack.c.l.b16 %v1850
      %v1883 = vunpack.c.l.b16 %v1851
      %v1884 = vunpack.c.l.b16 %v1852
      %v1885 = vunpack.c.l.b16 %v1853
      %v1886 = vunpack.c.l.b16 %v1854
      %v1887 = vunpack.c.l.b16 %v1855
      %v1888 = vunpack.c.l.b16 %v1856
      %v1889 = vunpack.c.l.b16 %v1857
      %v1890 = vunpack.c.l.b16 %v1858
      %v1891 = vunpack.c.l.b16 %v1859
      %v1892 = vunpack.c.l.b16 %v1860
      %v1893 = vpack.c.b16 %v1878, %v1877
      %v1894 = vpack.c.b16 %v1880, %v1879
      %v1895 = vpack.c.b16 %v1882, %v1881
      %v1896 = vpack.c.b16 %v1884, %v1883
      %v1897 = vpack.c.b16 %v1886, %v1885
      %v1898 = vpack.c.b16 %v1888, %v1887
      %v1899 = vpack.c.b16 %v1890, %v1889
      %v1900 = vpack.c.b16 %v1892, %v1891
      %1909 = vmatpush.bf16.msra.mxu0 %v1900
      %1910 = vmatpush.bf16.msra.mxu0 %v1899
      %1911 = vmatpush.bf16.msra.mxu0 %v1898
      %1912 = vmatpush.bf16.msra.mxu0 %v1897
      %1913 = vmatpush.bf16.msra.mxu0 %v1896
      %1914 = vmatpush.bf16.msra.mxu0 %v1895
      %1915 = vmatpush.bf16.msra.mxu0 %v1894
      %1916 = vmatpush.bf16.msra.mxu0 %v1893
      %1917 = vmatmul.bf16.gmra.mxu0 %v1208
      %v1918 = vpop.f32.mrf.mxu0
      %v1919 = vadd.f32 0.0, %v1918
      %v1920 = vpop.f32.mrf.mxu0
      %v1921 = vadd.f32 0.0, %v1920
      %1922 = vmatmul.bf16.gmra.mxu0 %v1211
      %v1923 = vpop.f32.mrf.mxu0
      %v1924 = vadd.f32 0.0, %v1923
      %v1925 = vpop.f32.mrf.mxu0
      %v1926 = vadd.f32 0.0, %v1925
      %1927 = vmatmul.bf16.gmra.mxu0 %v1214
      %v1928 = vpop.f32.mrf.mxu0
      %v1929 = vadd.f32 0.0, %v1928
      %v1930 = vpop.f32.mrf.mxu0
      %v1931 = vadd.f32 0.0, %v1930
      %1932 = vmatmul.bf16.gmra.mxu0 %v1217
      %v1933 = vpop.f32.mrf.mxu0
      %v1934 = vadd.f32 0.0, %v1933
      %v1935 = vpop.f32.mrf.mxu0
      %v1936 = vadd.f32 0.0, %v1935
      %1937 = vmatmul.bf16.gmra.mxu0 %v1220
      %v1938 = vpop.f32.mrf.mxu0
      %v1939 = vadd.f32 0.0, %v1938
      %v1940 = vpop.f32.mrf.mxu0
      %v1941 = vadd.f32 0.0, %v1940
      %1942 = vmatmul.bf16.gmra.mxu0 %v1223
      %v1943 = vpop.f32.mrf.mxu0
      %v1944 = vadd.f32 0.0, %v1943
      %v1945 = vpop.f32.mrf.mxu0
      %v1946 = vadd.f32 0.0, %v1945
      %1947 = vmatmul.bf16.gmra.mxu0 %v1226
      %v1948 = vpop.f32.mrf.mxu0
      %v1949 = vadd.f32 0.0, %v1948
      %v1950 = vpop.f32.mrf.mxu0
      %v1951 = vadd.f32 0.0, %v1950
      %1952 = vmatmul.bf16.gmra.mxu0 %v1229
      %v1953 = vpop.f32.mrf.mxu0
      %v1954 = vadd.f32 0.0, %v1953
      %v1955 = vpop.f32.mrf.mxu0
      %v1956 = vadd.f32 0.0, %v1955
      %1957 = vmatmul.bf16.gmra.mxu0 %v1232
      %v1958 = vpop.f32.mrf.mxu0
      %v1959 = vadd.f32 0.0, %v1958
      %v1960 = vpop.f32.mrf.mxu0
      %v1961 = vadd.f32 0.0, %v1960
      %1962 = vmatmul.bf16.gmra.mxu0 %v1235
      %v1963 = vpop.f32.mrf.mxu0
      %v1964 = vadd.f32 0.0, %v1963
      %v1965 = vpop.f32.mrf.mxu0
      %v1966 = vadd.f32 0.0, %v1965
      %1967 = vmatmul.bf16.gmra.mxu0 %v1238
      %v1968 = vpop.f32.mrf.mxu0
      %v1969 = vadd.f32 0.0, %v1968
      %v1970 = vpop.f32.mrf.mxu0
      %v1971 = vadd.f32 0.0, %v1970
      %1972 = vmatmul.bf16.gmra.mxu0 %v1241
      %v1973 = vpop.f32.mrf.mxu0
      %v1974 = vadd.f32 0.0, %v1973
      %v1975 = vpop.f32.mrf.mxu0
      %v1976 = vadd.f32 0.0, %v1975
      %1977 = vmatmul.bf16.gmra.mxu0 %v1244
      %v1978 = vpop.f32.mrf.mxu0
      %v1979 = vadd.f32 0.0, %v1978
      %v1980 = vpop.f32.mrf.mxu0
      %v1981 = vadd.f32 0.0, %v1980
      %1982 = vmatmul.bf16.gmra.mxu0 %v1247
      %v1983 = vpop.f32.mrf.mxu0
      %v1984 = vadd.f32 0.0, %v1983
      %v1985 = vpop.f32.mrf.mxu0
      %v1986 = vadd.f32 0.0, %v1985
      %1987 = vmatmul.bf16.gmra.mxu0 %v1250
      %v1988 = vpop.f32.mrf.mxu0
      %v1989 = vadd.f32 0.0, %v1988
      %v1990 = vpop.f32.mrf.mxu0
      %v1991 = vadd.f32 0.0, %v1990
      %1992 = vmatmul.bf16.gmra.mxu0 %v1842
      %v1993 = vpop.f32.mrf.mxu0
      %v1994 = vadd.f32 0.0, %v1993
      %v1995 = vpop.f32.mrf.mxu0
      %v1996 = vadd.f32 0.0, %v1995
      %1997 = vdwg.mxu0
      %v1998 = vadd.f32 %v1806, %v1919
      %v1999 = vadd.f32 %v1807, %v1921
      %v2000 = vadd.f32 %v1808, %v1924
      %v2001 = vadd.f32 %v1809, %v1926
      %v2002 = vadd.f32 %v1810, %v1929
      %v2003 = vadd.f32 %v1811, %v1931
      %v2004 = vadd.f32 %v1812, %v1934
      %v2005 = vadd.f32 %v1813, %v1936
      %v2006 = vadd.f32 %v1814, %v1939
      %v2007 = vadd.f32 %v1815, %v1941
      %v2008 = vadd.f32 %v1816, %v1944
      %v2009 = vadd.f32 %v1817, %v1946
      %v2010 = vadd.f32 %v1818, %v1949
      %v2011 = vadd.f32 %v1819, %v1951
      %v2012 = vadd.f32 %v1820, %v1954
      %v2013 = vadd.f32 %v1821, %v1956
      %v2014 = vadd.f32 %v1822, %v1959
      %v2015 = vadd.f32 %v1823, %v1961
      %v2016 = vadd.f32 %v1824, %v1964
      %v2017 = vadd.f32 %v1825, %v1966
      %v2018 = vadd.f32 %v1826, %v1969
      %v2019 = vadd.f32 %v1827, %v1971
      %v2020 = vadd.f32 %v1828, %v1974
      %v2021 = vadd.f32 %v1829, %v1976
      %v2022 = vadd.f32 %v1830, %v1979
      %v2023 = vadd.f32 %v1831, %v1981
      %v2024 = vadd.f32 %v1832, %v1984
      %v2025 = vadd.f32 %v1833, %v1986
      %v2026 = vadd.f32 %v1834, %v1989
      %v2027 = vadd.f32 %v1835, %v1991
      %v2028 = vadd.f32 %v1836, %v1994
      %v2029 = vadd.f32 %v1837, %v1996
      %s2030 = scalar_lea.vmem %s1, 384
      %v2031 = vld [vmem:[%s2030] sm:$0xf]
      %v2032 = vld [vmem:[%s2030 + $0x4] sm:$0xf]
      %v2033 = vld [vmem:[%s2030 + $0x8] sm:$0xf]
      %v2034 = vld [vmem:[%s2030 + $0xc] sm:$0xf]
      %v2035 = vld [vmem:[%s2030 + $0x10] sm:$0xf]
      %v2036 = vld [vmem:[%s2030 + $0x14] sm:$0xf]
      %v2037 = vld [vmem:[%s2030 + $0x18] sm:$0xf]
      %v2038 = vld [vmem:[%s2030 + $0x1c] sm:$0xf]
      %v2039 = vld [vmem:[%s2030 + $0x20] sm:$0xf]
      %v2040 = vld [vmem:[%s2030 + $0x24] sm:$0xf]
      %v2041 = vld [vmem:[%s2030 + $0x28] sm:$0xf]
      %v2042 = vld [vmem:[%s2030 + $0x2c] sm:$0xf]
      %v2043 = vld [vmem:[%s2030 + $0x30] sm:$0xf]
      %v2044 = vld [vmem:[%s2030 + $0x34] sm:$0xf]
      %v2045 = vld [vmem:[%s2030 + $0x38] sm:$0xf]
      %v2046 = vld [vmem:[%s2030 + $0x3c] sm:$0xf]
      %v2063 = vunpack.c.l.b16 %v2031
      %v2064 = vunpack.c.l.b16 %v2032
      %v2065 = vunpack.c.l.b16 %v2033
      %v2066 = vunpack.c.l.b16 %v2034
      %v2067 = vunpack.c.l.b16 %v2035
      %v2068 = vunpack.c.l.b16 %v2036
      %v2069 = vunpack.c.l.b16 %v2037
      %v2070 = vunpack.c.l.b16 %v2038
      %v2071 = vunpack.c.l.b16 %v2039
      %v2072 = vunpack.c.l.b16 %v2040
      %v2073 = vunpack.c.l.b16 %v2041
      %v2074 = vunpack.c.l.b16 %v2042
      %v2075 = vunpack.c.l.b16 %v2043
      %v2076 = vunpack.c.l.b16 %v2044
      %v2077 = vunpack.c.l.b16 %v2045
      %v2078 = vunpack.c.l.b16 %v2046
      %v2079 = vpack.c.b16 %v2064, %v2063
      %v2080 = vpack.c.b16 %v2066, %v2065
      %v2081 = vpack.c.b16 %v2068, %v2067
      %v2082 = vpack.c.b16 %v2070, %v2069
      %v2083 = vpack.c.b16 %v2072, %v2071
      %v2084 = vpack.c.b16 %v2074, %v2073
      %v2085 = vpack.c.b16 %v2076, %v2075
      %v2086 = vpack.c.b16 %v2078, %v2077
      %2095 = vmatpush.bf16.msra.mxu0 %v2086
      %2096 = vmatpush.bf16.msra.mxu0 %v2085
      %2097 = vmatpush.bf16.msra.mxu0 %v2084
      %2098 = vmatpush.bf16.msra.mxu0 %v2083
      %2099 = vmatpush.bf16.msra.mxu0 %v2082
      %2100 = vmatpush.bf16.msra.mxu0 %v2081
      %2101 = vmatpush.bf16.msra.mxu0 %v2080
      %2102 = vmatpush.bf16.msra.mxu0 %v2079
      %2103 = vmatmul.bf16.gmra.mxu0 %v622
      %v2104 = vpop.f32.mrf.mxu0
      %v2105 = vadd.f32 0.0, %v2104
      %v2106 = vpop.f32.mrf.mxu0
      %v2107 = vadd.f32 0.0, %v2106
      %2108 = vmatmul.bf16.gmra.mxu0 %v623
      %v2109 = vpop.f32.mrf.mxu0
      %v2110 = vadd.f32 0.0, %v2109
      %v2111 = vpop.f32.mrf.mxu0
      %v2112 = vadd.f32 0.0, %v2111
      %2113 = vmatmul.bf16.gmra.mxu0 %v624
      %v2114 = vpop.f32.mrf.mxu0
      %v2115 = vadd.f32 0.0, %v2114
      %v2116 = vpop.f32.mrf.mxu0
      %v2117 = vadd.f32 0.0, %v2116
      %2118 = vmatmul.bf16.gmra.mxu0 %v625
      %v2119 = vpop.f32.mrf.mxu0
      %v2120 = vadd.f32 0.0, %v2119
      %v2121 = vpop.f32.mrf.mxu0
      %v2122 = vadd.f32 0.0, %v2121
      %2123 = vmatmul.bf16.gmra.mxu0 %v626
      %v2124 = vpop.f32.mrf.mxu0
      %v2125 = vadd.f32 0.0, %v2124
      %v2126 = vpop.f32.mrf.mxu0
      %v2127 = vadd.f32 0.0, %v2126
      %2128 = vmatmul.bf16.gmra.mxu0 %v627
      %v2129 = vpop.f32.mrf.mxu0
      %v2130 = vadd.f32 0.0, %v2129
      %v2131 = vpop.f32.mrf.mxu0
      %v2132 = vadd.f32 0.0, %v2131
      %2133 = vmatmul.bf16.gmra.mxu0 %v628
      %v2134 = vpop.f32.mrf.mxu0
      %v2135 = vadd.f32 0.0, %v2134
      %v2136 = vpop.f32.mrf.mxu0
      %v2137 = vadd.f32 0.0, %v2136
      %2138 = vmatmul.bf16.gmra.mxu0 %v629
      %v2139 = vpop.f32.mrf.mxu0
      %v2140 = vadd.f32 0.0, %v2139
      %v2141 = vpop.f32.mrf.mxu0
      %v2142 = vadd.f32 0.0, %v2141
      %2143 = vmatmul.bf16.gmra.mxu0 %v630
      %v2144 = vpop.f32.mrf.mxu0
      %v2145 = vadd.f32 0.0, %v2144
      %v2146 = vpop.f32.mrf.mxu0
      %v2147 = vadd.f32 0.0, %v2146
      %2148 = vmatmul.bf16.gmra.mxu0 %v631
      %v2149 = vpop.f32.mrf.mxu0
      %v2150 = vadd.f32 0.0, %v2149
      %v2151 = vpop.f32.mrf.mxu0
      %v2152 = vadd.f32 0.0, %v2151
      %2153 = vmatmul.bf16.gmra.mxu0 %v632
      %v2154 = vpop.f32.mrf.mxu0
      %v2155 = vadd.f32 0.0, %v2154
      %v2156 = vpop.f32.mrf.mxu0
      %v2157 = vadd.f32 0.0, %v2156
      %2158 = vmatmul.bf16.gmra.mxu0 %v633
      %v2159 = vpop.f32.mrf.mxu0
      %v2160 = vadd.f32 0.0, %v2159
      %v2161 = vpop.f32.mrf.mxu0
      %v2162 = vadd.f32 0.0, %v2161
      %2163 = vmatmul.bf16.gmra.mxu0 %v634
      %v2164 = vpop.f32.mrf.mxu0
      %v2165 = vadd.f32 0.0, %v2164
      %v2166 = vpop.f32.mrf.mxu0
      %v2167 = vadd.f32 0.0, %v2166
      %2168 = vmatmul.bf16.gmra.mxu0 %v635
      %v2169 = vpop.f32.mrf.mxu0
      %v2170 = vadd.f32 0.0, %v2169
      %v2171 = vpop.f32.mrf.mxu0
      %v2172 = vadd.f32 0.0, %v2171
      %2173 = vmatmul.bf16.gmra.mxu0 %v636
      %v2174 = vpop.f32.mrf.mxu0
      %v2175 = vadd.f32 0.0, %v2174
      %v2176 = vpop.f32.mrf.mxu0
      %v2177 = vadd.f32 0.0, %v2176
      %2178 = vmatmul.bf16.gmra.mxu0 %v620
      %v2179 = vpop.f32.mrf.mxu0
      %v2180 = vadd.f32 0.0, %v2179
      %v2181 = vpop.f32.mrf.mxu0
      %v2182 = vadd.f32 0.0, %v2181
      %2183 = vdwg.mxu0
      %v2184 = vadd.f32 %v1998, %v2105
      %v2185 = vadd.f32 %v1999, %v2107
      %v2186 = vadd.f32 %v2000, %v2110
      %v2187 = vadd.f32 %v2001, %v2112
      %v2188 = vadd.f32 %v2002, %v2115
      %v2189 = vadd.f32 %v2003, %v2117
      %v2190 = vadd.f32 %v2004, %v2120
      %v2191 = vadd.f32 %v2005, %v2122
      %v2192 = vadd.f32 %v2006, %v2125
      %v2193 = vadd.f32 %v2007, %v2127
      %v2194 = vadd.f32 %v2008, %v2130
      %v2195 = vadd.f32 %v2009, %v2132
      %v2196 = vadd.f32 %v2010, %v2135
      %v2197 = vadd.f32 %v2011, %v2137
      %v2198 = vadd.f32 %v2012, %v2140
      %v2199 = vadd.f32 %v2013, %v2142
      %v2200 = vadd.f32 %v2014, %v2145
      %v2201 = vadd.f32 %v2015, %v2147
      %v2202 = vadd.f32 %v2016, %v2150
      %v2203 = vadd.f32 %v2017, %v2152
      %v2204 = vadd.f32 %v2018, %v2155
      %v2205 = vadd.f32 %v2019, %v2157
      %v2206 = vadd.f32 %v2020, %v2160
      %v2207 = vadd.f32 %v2021, %v2162
      %v2208 = vadd.f32 %v2022, %v2165
      %v2209 = vadd.f32 %v2023, %v2167
      %v2210 = vadd.f32 %v2024, %v2170
      %v2211 = vadd.f32 %v2025, %v2172
      %v2212 = vadd.f32 %v2026, %v2175
      %v2213 = vadd.f32 %v2027, %v2177
      %v2214 = vadd.f32 %v2028, %v2180
      %v2215 = vadd.f32 %v2029, %v2182
      %s2216 = scalar_lea.vmem %s1, 448
      %v2217 = vld [vmem:[%s2216] sm:$0xf]
      %v2218 = vld [vmem:[%s2216 + $0x4] sm:$0xf]
      %v2219 = vld [vmem:[%s2216 + $0x8] sm:$0xf]
      %v2220 = vld [vmem:[%s2216 + $0xc] sm:$0xf]
      %v2221 = vld [vmem:[%s2216 + $0x10] sm:$0xf]
      %v2222 = vld [vmem:[%s2216 + $0x14] sm:$0xf]
      %v2223 = vld [vmem:[%s2216 + $0x18] sm:$0xf]
      %v2224 = vld [vmem:[%s2216 + $0x1c] sm:$0xf]
      %v2225 = vld [vmem:[%s2216 + $0x20] sm:$0xf]
      %v2226 = vld [vmem:[%s2216 + $0x24] sm:$0xf]
      %v2227 = vld [vmem:[%s2216 + $0x28] sm:$0xf]
      %v2228 = vld [vmem:[%s2216 + $0x2c] sm:$0xf]
      %v2229 = vld [vmem:[%s2216 + $0x30] sm:$0xf]
      %v2230 = vld [vmem:[%s2216 + $0x34] sm:$0xf]
      %v2231 = vld [vmem:[%s2216 + $0x38] sm:$0xf]
      %v2232 = vld [vmem:[%s2216 + $0x3c] sm:$0xf]
      %v2249 = vunpack.c.l.b16 %v2217
      %v2250 = vunpack.c.l.b16 %v2218
      %v2251 = vunpack.c.l.b16 %v2219
      %v2252 = vunpack.c.l.b16 %v2220
      %v2253 = vunpack.c.l.b16 %v2221
      %v2254 = vunpack.c.l.b16 %v2222
      %v2255 = vunpack.c.l.b16 %v2223
      %v2256 = vunpack.c.l.b16 %v2224
      %v2257 = vunpack.c.l.b16 %v2225
      %v2258 = vunpack.c.l.b16 %v2226
      %v2259 = vunpack.c.l.b16 %v2227
      %v2260 = vunpack.c.l.b16 %v2228
      %v2261 = vunpack.c.l.b16 %v2229
      %v2262 = vunpack.c.l.b16 %v2230
      %v2263 = vunpack.c.l.b16 %v2231
      %v2264 = vunpack.c.l.b16 %v2232
      %v2265 = vpack.c.b16 %v2250, %v2249
      %v2266 = vpack.c.b16 %v2252, %v2251
      %v2267 = vpack.c.b16 %v2254, %v2253
      %v2268 = vpack.c.b16 %v2256, %v2255
      %v2269 = vpack.c.b16 %v2258, %v2257
      %v2270 = vpack.c.b16 %v2260, %v2259
      %v2271 = vpack.c.b16 %v2262, %v2261
      %v2272 = vpack.c.b16 %v2264, %v2263
      %2281 = vmatpush.bf16.msra.mxu0 %v2272
      %2282 = vmatpush.bf16.msra.mxu0 %v2271
      %2283 = vmatpush.bf16.msra.mxu0 %v2270
      %2284 = vmatpush.bf16.msra.mxu0 %v2269
      %2285 = vmatpush.bf16.msra.mxu0 %v2268
      %2286 = vmatpush.bf16.msra.mxu0 %v2267
      %2287 = vmatpush.bf16.msra.mxu0 %v2266
      %2288 = vmatpush.bf16.msra.mxu0 %v2265
      %2289 = vmatmul.bf16.gmra.mxu0 %v706
      %v2290 = vpop.f32.mrf.mxu0
      %v2291 = vadd.f32 0.0, %v2290
      %v2292 = vpop.f32.mrf.mxu0
      %v2293 = vadd.f32 0.0, %v2292
      %2294 = vmatmul.bf16.gmra.mxu0 %v718
      %v2295 = vpop.f32.mrf.mxu0
      %v2296 = vadd.f32 0.0, %v2295
      %v2297 = vpop.f32.mrf.mxu0
      %v2298 = vadd.f32 0.0, %v2297
      %2299 = vmatmul.bf16.gmra.mxu0 %v730
      %v2300 = vpop.f32.mrf.mxu0
      %v2301 = vadd.f32 0.0, %v2300
      %v2302 = vpop.f32.mrf.mxu0
      %v2303 = vadd.f32 0.0, %v2302
      %2304 = vmatmul.bf16.gmra.mxu0 %v742
      %v2305 = vpop.f32.mrf.mxu0
      %v2306 = vadd.f32 0.0, %v2305
      %v2307 = vpop.f32.mrf.mxu0
      %v2308 = vadd.f32 0.0, %v2307
      %2309 = vmatmul.bf16.gmra.mxu0 %v754
      %v2310 = vpop.f32.mrf.mxu0
      %v2311 = vadd.f32 0.0, %v2310
      %v2312 = vpop.f32.mrf.mxu0
      %v2313 = vadd.f32 0.0, %v2312
      %2314 = vmatmul.bf16.gmra.mxu0 %v766
      %v2315 = vpop.f32.mrf.mxu0
      %v2316 = vadd.f32 0.0, %v2315
      %v2317 = vpop.f32.mrf.mxu0
      %v2318 = vadd.f32 0.0, %v2317
      %2319 = vmatmul.bf16.gmra.mxu0 %v778
      %v2320 = vpop.f32.mrf.mxu0
      %v2321 = vadd.f32 0.0, %v2320
      %v2322 = vpop.f32.mrf.mxu0
      %v2323 = vadd.f32 0.0, %v2322
      %2324 = vmatmul.bf16.gmra.mxu0 %v790
      %v2325 = vpop.f32.mrf.mxu0
      %v2326 = vadd.f32 0.0, %v2325
      %v2327 = vpop.f32.mrf.mxu0
      %v2328 = vadd.f32 0.0, %v2327
      %2329 = vmatmul.bf16.gmra.mxu0 %v802
      %v2330 = vpop.f32.mrf.mxu0
      %v2331 = vadd.f32 0.0, %v2330
      %v2332 = vpop.f32.mrf.mxu0
      %v2333 = vadd.f32 0.0, %v2332
      %2334 = vmatmul.bf16.gmra.mxu0 %v814
      %v2335 = vpop.f32.mrf.mxu0
      %v2336 = vadd.f32 0.0, %v2335
      %v2337 = vpop.f32.mrf.mxu0
      %v2338 = vadd.f32 0.0, %v2337
      %2339 = vmatmul.bf16.gmra.mxu0 %v826
      %v2340 = vpop.f32.mrf.mxu0
      %v2341 = vadd.f32 0.0, %v2340
      %v2342 = vpop.f32.mrf.mxu0
      %v2343 = vadd.f32 0.0, %v2342
      %2344 = vmatmul.bf16.gmra.mxu0 %v838
      %v2345 = vpop.f32.mrf.mxu0
      %v2346 = vadd.f32 0.0, %v2345
      %v2347 = vpop.f32.mrf.mxu0
      %v2348 = vadd.f32 0.0, %v2347
      %2349 = vmatmul.bf16.gmra.mxu0 %v850
      %v2350 = vpop.f32.mrf.mxu0
      %v2351 = vadd.f32 0.0, %v2350
      %v2352 = vpop.f32.mrf.mxu0
      %v2353 = vadd.f32 0.0, %v2352
      %2354 = vmatmul.bf16.gmra.mxu0 %v862
      %v2355 = vpop.f32.mrf.mxu0
      %v2356 = vadd.f32 0.0, %v2355
      %v2357 = vpop.f32.mrf.mxu0
      %v2358 = vadd.f32 0.0, %v2357
      %2359 = vmatmul.bf16.gmra.mxu0 %v1650
      %v2360 = vpop.f32.mrf.mxu0
      %v2361 = vadd.f32 0.0, %v2360
      %v2362 = vpop.f32.mrf.mxu0
      %v2363 = vadd.f32 0.0, %v2362
      %2364 = vmatmul.bf16.gmra.mxu0 %v682
      %v2365 = vpop.f32.mrf.mxu0
      %v2366 = vadd.f32 0.0, %v2365
      %v2367 = vpop.f32.mrf.mxu0
      %v2368 = vadd.f32 0.0, %v2367
      %2369 = vdwg.mxu0
      %v2370 = vadd.f32 %v2184, %v2291
      %v2371 = vadd.f32 %v2185, %v2293
      %v2372 = vadd.f32 %v2186, %v2296
      %v2373 = vadd.f32 %v2187, %v2298
      %v2374 = vadd.f32 %v2188, %v2301
      %v2375 = vadd.f32 %v2189, %v2303
      %v2376 = vadd.f32 %v2190, %v2306
      %v2377 = vadd.f32 %v2191, %v2308
      %v2378 = vadd.f32 %v2192, %v2311
      %v2379 = vadd.f32 %v2193, %v2313
      %v2380 = vadd.f32 %v2194, %v2316
      %v2381 = vadd.f32 %v2195, %v2318
      %v2382 = vadd.f32 %v2196, %v2321
      %v2383 = vadd.f32 %v2197, %v2323
      %v2384 = vadd.f32 %v2198, %v2326
      %v2385 = vadd.f32 %v2199, %v2328
      %v2386 = vadd.f32 %v2200, %v2331
      %v2387 = vadd.f32 %v2201, %v2333
      %v2388 = vadd.f32 %v2202, %v2336
      %v2389 = vadd.f32 %v2203, %v2338
      %v2390 = vadd.f32 %v2204, %v2341
      %v2391 = vadd.f32 %v2205, %v2343
      %v2392 = vadd.f32 %v2206, %v2346
      %v2393 = vadd.f32 %v2207, %v2348
      %v2394 = vadd.f32 %v2208, %v2351
      %v2395 = vadd.f32 %v2209, %v2353
      %v2396 = vadd.f32 %v2210, %v2356
      %v2397 = vadd.f32 %v2211, %v2358
      %v2398 = vadd.f32 %v2212, %v2361
      %v2399 = vadd.f32 %v2213, %v2363
      %v2400 = vadd.f32 %v2214, %v2366
      %v2401 = vadd.f32 %v2215, %v2368
      %s2402 = scalar_lea.vmem %s1, 512
      %v2403 = vld [vmem:[%s2402] sm:$0xf]
      %v2404 = vld [vmem:[%s2402 + $0x4] sm:$0xf]
      %v2405 = vld [vmem:[%s2402 + $0x8] sm:$0xf]
      %v2406 = vld [vmem:[%s2402 + $0xc] sm:$0xf]
      %v2407 = vld [vmem:[%s2402 + $0x10] sm:$0xf]
      %v2408 = vld [vmem:[%s2402 + $0x14] sm:$0xf]
      %v2409 = vld [vmem:[%s2402 + $0x18] sm:$0xf]
      %v2410 = vld [vmem:[%s2402 + $0x1c] sm:$0xf]
      %v2411 = vld [vmem:[%s2402 + $0x20] sm:$0xf]
      %v2412 = vld [vmem:[%s2402 + $0x24] sm:$0xf]
      %v2413 = vld [vmem:[%s2402 + $0x28] sm:$0xf]
      %v2414 = vld [vmem:[%s2402 + $0x2c] sm:$0xf]
      %v2415 = vld [vmem:[%s2402 + $0x30] sm:$0xf]
      %v2416 = vld [vmem:[%s2402 + $0x34] sm:$0xf]
      %v2417 = vld [vmem:[%s2402 + $0x38] sm:$0xf]
      %v2418 = vld [vmem:[%s2402 + $0x3c] sm:$0xf]
      %v2435 = vunpack.c.l.b16 %v2403
      %v2436 = vunpack.c.l.b16 %v2404
      %v2437 = vunpack.c.l.b16 %v2405
      %v2438 = vunpack.c.l.b16 %v2406
      %v2439 = vunpack.c.l.b16 %v2407
      %v2440 = vunpack.c.l.b16 %v2408
      %v2441 = vunpack.c.l.b16 %v2409
      %v2442 = vunpack.c.l.b16 %v2410
      %v2443 = vunpack.c.l.b16 %v2411
      %v2444 = vunpack.c.l.b16 %v2412
      %v2445 = vunpack.c.l.b16 %v2413
      %v2446 = vunpack.c.l.b16 %v2414
      %v2447 = vunpack.c.l.b16 %v2415
      %v2448 = vunpack.c.l.b16 %v2416
      %v2449 = vunpack.c.l.b16 %v2417
      %v2450 = vunpack.c.l.b16 %v2418
      %v2451 = vpack.c.b16 %v2436, %v2435
      %v2452 = vpack.c.b16 %v2438, %v2437
      %v2453 = vpack.c.b16 %v2440, %v2439
      %v2454 = vpack.c.b16 %v2442, %v2441
      %v2455 = vpack.c.b16 %v2444, %v2443
      %v2456 = vpack.c.b16 %v2446, %v2445
      %v2457 = vpack.c.b16 %v2448, %v2447
      %v2458 = vpack.c.b16 %v2450, %v2449
      %2467 = vmatpush.bf16.msra.mxu0 %v2458
      %2468 = vmatpush.bf16.msra.mxu0 %v2457
      %2469 = vmatpush.bf16.msra.mxu0 %v2456
      %2470 = vmatpush.bf16.msra.mxu0 %v2455
      %2471 = vmatpush.bf16.msra.mxu0 %v2454
      %2472 = vmatpush.bf16.msra.mxu0 %v2453
      %2473 = vmatpush.bf16.msra.mxu0 %v2452
      %2474 = vmatpush.bf16.msra.mxu0 %v2451
      %2475 = vmatmul.bf16.gmra.mxu0 %v1211
      %v2476 = vpop.f32.mrf.mxu0
      %v2477 = vadd.f32 0.0, %v2476
      %v2478 = vpop.f32.mrf.mxu0
      %v2479 = vadd.f32 0.0, %v2478
      %2480 = vmatmul.bf16.gmra.mxu0 %v1214
      %v2481 = vpop.f32.mrf.mxu0
      %v2482 = vadd.f32 0.0, %v2481
      %v2483 = vpop.f32.mrf.mxu0
      %v2484 = vadd.f32 0.0, %v2483
      %2485 = vmatmul.bf16.gmra.mxu0 %v1217
      %v2486 = vpop.f32.mrf.mxu0
      %v2487 = vadd.f32 0.0, %v2486
      %v2488 = vpop.f32.mrf.mxu0
      %v2489 = vadd.f32 0.0, %v2488
      %2490 = vmatmul.bf16.gmra.mxu0 %v1220
      %v2491 = vpop.f32.mrf.mxu0
      %v2492 = vadd.f32 0.0, %v2491
      %v2493 = vpop.f32.mrf.mxu0
      %v2494 = vadd.f32 0.0, %v2493
      %2495 = vmatmul.bf16.gmra.mxu0 %v1223
      %v2496 = vpop.f32.mrf.mxu0
      %v2497 = vadd.f32 0.0, %v2496
      %v2498 = vpop.f32.mrf.mxu0
      %v2499 = vadd.f32 0.0, %v2498
      %2500 = vmatmul.bf16.gmra.mxu0 %v1226
      %v2501 = vpop.f32.mrf.mxu0
      %v2502 = vadd.f32 0.0, %v2501
      %v2503 = vpop.f32.mrf.mxu0
      %v2504 = vadd.f32 0.0, %v2503
      %2505 = vmatmul.bf16.gmra.mxu0 %v1229
      %v2506 = vpop.f32.mrf.mxu0
      %v2507 = vadd.f32 0.0, %v2506
      %v2508 = vpop.f32.mrf.mxu0
      %v2509 = vadd.f32 0.0, %v2508
      %2510 = vmatmul.bf16.gmra.mxu0 %v1232
      %v2511 = vpop.f32.mrf.mxu0
      %v2512 = vadd.f32 0.0, %v2511
      %v2513 = vpop.f32.mrf.mxu0
      %v2514 = vadd.f32 0.0, %v2513
      %2515 = vmatmul.bf16.gmra.mxu0 %v1235
      %v2516 = vpop.f32.mrf.mxu0
      %v2517 = vadd.f32 0.0, %v2516
      %v2518 = vpop.f32.mrf.mxu0
      %v2519 = vadd.f32 0.0, %v2518
      %2520 = vmatmul.bf16.gmra.mxu0 %v1238
      %v2521 = vpop.f32.mrf.mxu0
      %v2522 = vadd.f32 0.0, %v2521
      %v2523 = vpop.f32.mrf.mxu0
      %v2524 = vadd.f32 0.0, %v2523
      %2525 = vmatmul.bf16.gmra.mxu0 %v1241
      %v2526 = vpop.f32.mrf.mxu0
      %v2527 = vadd.f32 0.0, %v2526
      %v2528 = vpop.f32.mrf.mxu0
      %v2529 = vadd.f32 0.0, %v2528
      %2530 = vmatmul.bf16.gmra.mxu0 %v1244
      %v2531 = vpop.f32.mrf.mxu0
      %v2532 = vadd.f32 0.0, %v2531
      %v2533 = vpop.f32.mrf.mxu0
      %v2534 = vadd.f32 0.0, %v2533
      %2535 = vmatmul.bf16.gmra.mxu0 %v1247
      %v2536 = vpop.f32.mrf.mxu0
      %v2537 = vadd.f32 0.0, %v2536
      %v2538 = vpop.f32.mrf.mxu0
      %v2539 = vadd.f32 0.0, %v2538
      %2540 = vmatmul.bf16.gmra.mxu0 %v1250
      %v2541 = vpop.f32.mrf.mxu0
      %v2542 = vadd.f32 0.0, %v2541
      %v2543 = vpop.f32.mrf.mxu0
      %v2544 = vadd.f32 0.0, %v2543
      %2545 = vmatmul.bf16.gmra.mxu0 %v1842
      %v2546 = vpop.f32.mrf.mxu0
      %v2547 = vadd.f32 0.0, %v2546
      %v2548 = vpop.f32.mrf.mxu0
      %v2549 = vadd.f32 0.0, %v2548
      %2550 = vmatmul.bf16.gmra.mxu0 %v1205
      %v2551 = vpop.f32.mrf.mxu0
      %v2552 = vadd.f32 0.0, %v2551
      %v2553 = vpop.f32.mrf.mxu0
      %v2554 = vadd.f32 0.0, %v2553
      %2555 = vdwg.mxu0
      %v2556 = vadd.f32 %v2370, %v2477
      %v2557 = vadd.f32 %v2371, %v2479
      %v2558 = vadd.f32 %v2372, %v2482
      %v2559 = vadd.f32 %v2373, %v2484
      %v2560 = vadd.f32 %v2374, %v2487
      %v2561 = vadd.f32 %v2375, %v2489
      %v2562 = vadd.f32 %v2376, %v2492
      %v2563 = vadd.f32 %v2377, %v2494
      %v2564 = vadd.f32 %v2378, %v2497
      %v2565 = vadd.f32 %v2379, %v2499
      %v2566 = vadd.f32 %v2380, %v2502
      %v2567 = vadd.f32 %v2381, %v2504
      %v2568 = vadd.f32 %v2382, %v2507
      %v2569 = vadd.f32 %v2383, %v2509
      %v2570 = vadd.f32 %v2384, %v2512
      %v2571 = vadd.f32 %v2385, %v2514
      %v2572 = vadd.f32 %v2386, %v2517
      %v2573 = vadd.f32 %v2387, %v2519
      %v2574 = vadd.f32 %v2388, %v2522
      %v2575 = vadd.f32 %v2389, %v2524
      %v2576 = vadd.f32 %v2390, %v2527
      %v2577 = vadd.f32 %v2391, %v2529
      %v2578 = vadd.f32 %v2392, %v2532
      %v2579 = vadd.f32 %v2393, %v2534
      %v2580 = vadd.f32 %v2394, %v2537
      %v2581 = vadd.f32 %v2395, %v2539
      %v2582 = vadd.f32 %v2396, %v2542
      %v2583 = vadd.f32 %v2397, %v2544
      %v2584 = vadd.f32 %v2398, %v2547
      %v2585 = vadd.f32 %v2399, %v2549
      %v2586 = vadd.f32 %v2400, %v2552
      %v2587 = vadd.f32 %v2401, %v2554
      %v2588 = vpack.c.bf16 %v2556, %v2556
      %v2589 = vpack.c.bf16 %v2557, %v2557
      %v2590 = vpack.c.bf16 %v2558, %v2558
      %v2591 = vpack.c.bf16 %v2559, %v2559
      %v2592 = vpack.c.bf16 %v2560, %v2560
      %v2593 = vpack.c.bf16 %v2561, %v2561
      %v2594 = vpack.c.bf16 %v2562, %v2562
      %v2595 = vpack.c.bf16 %v2563, %v2563
      %v2596 = vpack.c.bf16 %v2564, %v2564
      %v2597 = vpack.c.bf16 %v2565, %v2565
      %v2598 = vpack.c.bf16 %v2566, %v2566
      %v2599 = vpack.c.bf16 %v2567, %v2567
      %v2600 = vpack.c.bf16 %v2568, %v2568
      %v2601 = vpack.c.bf16 %v2569, %v2569
      %v2602 = vpack.c.bf16 %v2570, %v2570
      %v2603 = vpack.c.bf16 %v2571, %v2571
      %v2604 = vpack.c.bf16 %v2572, %v2572
      %v2605 = vpack.c.bf16 %v2573, %v2573
      %v2606 = vpack.c.bf16 %v2574, %v2574
      %v2607 = vpack.c.bf16 %v2575, %v2575
      %v2608 = vpack.c.bf16 %v2576, %v2576
      %v2609 = vpack.c.bf16 %v2577, %v2577
      %v2610 = vpack.c.bf16 %v2578, %v2578
      %v2611 = vpack.c.bf16 %v2579, %v2579
      %v2612 = vpack.c.bf16 %v2580, %v2580
      %v2613 = vpack.c.bf16 %v2581, %v2581
      %v2614 = vpack.c.bf16 %v2582, %v2582
      %v2615 = vpack.c.bf16 %v2583, %v2583
      %v2616 = vpack.c.bf16 %v2584, %v2584
      %v2617 = vpack.c.bf16 %v2585, %v2585
      %v2618 = vpack.c.bf16 %v2586, %v2586
      %v2619 = vpack.c.bf16 %v2587, %v2587
      %2620 = vst [vmem:[%s333] sm:$0xf] %v2588
      %2621 = vst [vmem:[%s333 + $0x4] sm:$0xf] %v2589
      %2622 = vst [vmem:[%s333 + $0x8] sm:$0xf] %v2590
      %2623 = vst [vmem:[%s333 + $0xc] sm:$0xf] %v2591
      %2624 = vst [vmem:[%s333 + $0x10] sm:$0xf] %v2592
      %2625 = vst [vmem:[%s333 + $0x14] sm:$0xf] %v2593
      %2626 = vst [vmem:[%s333 + $0x18] sm:$0xf] %v2594
      %2627 = vst [vmem:[%s333 + $0x1c] sm:$0xf] %v2595
      %2628 = vst [vmem:[%s333 + $0x20] sm:$0xf] %v2596
      %2629 = vst [vmem:[%s333 + $0x24] sm:$0xf] %v2597
      %2630 = vst [vmem:[%s333 + $0x28] sm:$0xf] %v2598
      %2631 = vst [vmem:[%s333 + $0x2c] sm:$0xf] %v2599
      %2632 = vst [vmem:[%s333 + $0x30] sm:$0xf] %v2600
      %2633 = vst [vmem:[%s333 + $0x34] sm:$0xf] %v2601
      %2634 = vst [vmem:[%s333 + $0x38] sm:$0xf] %v2602
      %2635 = vst [vmem:[%s333 + $0x3c] sm:$0xf] %v2603
      %2636 = vst [vmem:[%s333 + $0x40] sm:$0xf] %v2604
      %2637 = vst [vmem:[%s333 + $0x44] sm:$0xf] %v2605
      %2638 = vst [vmem:[%s333 + $0x48] sm:$0xf] %v2606
      %2639 = vst [vmem:[%s333 + $0x4c] sm:$0xf] %v2607
      %2640 = vst [vmem:[%s333 + $0x50] sm:$0xf] %v2608
      %2641 = vst [vmem:[%s333 + $0x54] sm:$0xf] %v2609
      %2642 = vst [vmem:[%s333 + $0x58] sm:$0xf] %v2610
      %2643 = vst [vmem:[%s333 + $0x5c] sm:$0xf] %v2611
      %2644 = vst [vmem:[%s333 + $0x60] sm:$0xf] %v2612
      %2645 = vst [vmem:[%s333 + $0x64] sm:$0xf] %v2613
      %2646 = vst [vmem:[%s333 + $0x68] sm:$0xf] %v2614
      %2647 = vst [vmem:[%s333 + $0x6c] sm:$0xf] %v2615
      %2648 = vst [vmem:[%s333 + $0x70] sm:$0xf] %v2616
      %2649 = vst [vmem:[%s333 + $0x74] sm:$0xf] %v2617
      %2650 = vst [vmem:[%s333 + $0x78] sm:$0xf] %v2618
      %2651 = vst [vmem:[%s333 + $0x7c] sm:$0xf] %v2619
      %v2652 = vadd.f32 %v2556, %v2557
      %v2653 = vadd.f32 %v2652, %v2558
      %v2654 = vadd.f32 %v2653, %v2559
      %v2655 = vadd.f32 %v2654, %v2560
      %v2656 = vadd.f32 %v2655, %v2561
      %v2657 = vadd.f32 %v2656, %v2562
      %v2658 = vadd.f32 %v2657, %v2563
      %v2659 = vadd.f32 %v2658, %v2564
      %v2660 = vadd.f32 %v2659, %v2565
      %v2661 = vadd.f32 %v2660, %v2566
      %v2662 = vadd.f32 %v2661, %v2567
      %v2663 = vadd.f32 %v2662, %v2568
      %v2664 = vadd.f32 %v2663, %v2569
      %v2665 = vadd.f32 %v2664, %v2570
      %v2666 = vadd.f32 %v2665, %v2571
      %v2667 = vadd.f32 %v2666, %v2572
      %v2668 = vadd.f32 %v2667, %v2573
      %v2669 = vadd.f32 %v2668, %v2574
      %v2670 = vadd.f32 %v2669, %v2575
      %v2671 = vadd.f32 %v2670, %v2576
      %v2672 = vadd.f32 %v2671, %v2577
      %v2673 = vadd.f32 %v2672, %v2578
      %v2674 = vadd.f32 %v2673, %v2579
      %v2675 = vadd.f32 %v2674, %v2580
      %v2676 = vadd.f32 %v2675, %v2581
      %v2677 = vadd.f32 %v2676, %v2582
      %v2678 = vadd.f32 %v2677, %v2583
      %v2679 = vadd.f32 %v2678, %v2584
      %v2680 = vadd.f32 %v2679, %v2585
      %v2681 = vadd.f32 %v2680, %v2586
      %v2682 = vadd.f32 %v2681, %v2587
      %v2683 = vrot.slane %v2682, 4
      %v2684 = vadd.f32 %v2682, %v2683
      %v2685 = vrot.slane %v2684, 2
      %v2686 = vadd.f32 %v2684, %v2685
      %v2687 = vrot.slane %v2686, 1
      %v2688 = vadd.f32 %v2686, %v2687
      %2689 = vst [vmem:[%s341] sm:$0x1] %v2688
      %v2690 = vmul.f32 %v2556, %v2556
      %v2691 = vmul.f32 %v2557, %v2557
      %v2692 = vmul.f32 %v2558, %v2558
      %v2693 = vmul.f32 %v2559, %v2559
      %v2694 = vmul.f32 %v2560, %v2560
      %v2695 = vmul.f32 %v2561, %v2561
      %v2696 = vmul.f32 %v2562, %v2562
      %v2697 = vmul.f32 %v2563, %v2563
      %v2698 = vmul.f32 %v2564, %v2564
      %v2699 = vmul.f32 %v2565, %v2565
      %v2700 = vmul.f32 %v2566, %v2566
      %v2701 = vmul.f32 %v2567, %v2567
      %v2702 = vmul.f32 %v2568, %v2568
      %v2703 = vmul.f32 %v2569, %v2569
      %v2704 = vmul.f32 %v2570, %v2570
      %v2705 = vmul.f32 %v2571, %v2571
      %v2706 = vmul.f32 %v2572, %v2572
      %v2707 = vmul.f32 %v2573, %v2573
      %v2708 = vmul.f32 %v2574, %v2574
      %v2709 = vmul.f32 %v2575, %v2575
      %v2710 = vmul.f32 %v2576, %v2576
      %v2711 = vmul.f32 %v2577, %v2577
      %v2712 = vmul.f32 %v2578, %v2578
      %v2713 = vmul.f32 %v2579, %v2579
      %v2714 = vmul.f32 %v2580, %v2580
      %v2715 = vmul.f32 %v2581, %v2581
      %v2716 = vmul.f32 %v2582, %v2582
      %v2717 = vmul.f32 %v2583, %v2583
      %v2718 = vmul.f32 %v2584, %v2584
      %v2719 = vmul.f32 %v2585, %v2585
      %v2720 = vmul.f32 %v2586, %v2586
      %v2721 = vmul.f32 %v2587, %v2587
      %v2722 = vadd.f32 %v2690, %v2691
      %v2723 = vadd.f32 %v2722, %v2692
      %v2724 = vadd.f32 %v2723, %v2693
      %v2725 = vadd.f32 %v2724, %v2694
      %v2726 = vadd.f32 %v2725, %v2695
      %v2727 = vadd.f32 %v2726, %v2696
      %v2728 = vadd.f32 %v2727, %v2697
      %v2729 = vadd.f32 %v2728, %v2698
      %v2730 = vadd.f32 %v2729, %v2699
      %v2731 = vadd.f32 %v2730, %v2700
      %v2732 = vadd.f32 %v2731, %v2701
      %v2733 = vadd.f32 %v2732, %v2702
      %v2734 = vadd.f32 %v2733, %v2703
      %v2735 = vadd.f32 %v2734, %v2704
      %v2736 = vadd.f32 %v2735, %v2705
      %v2737 = vadd.f32 %v2736, %v2706
      %v2738 = vadd.f32 %v2737, %v2707
      %v2739 = vadd.f32 %v2738, %v2708
      %v2740 = vadd.f32 %v2739, %v2709
      %v2741 = vadd.f32 %v2740, %v2710
      %v2742 = vadd.f32 %v2741, %v2711
      %v2743 = vadd.f32 %v2742, %v2712
      %v2744 = vadd.f32 %v2743, %v2713
      %v2745 = vadd.f32 %v2744, %v2714
      %v2746 = vadd.f32 %v2745, %v2715
      %v2747 = vadd.f32 %v2746, %v2716
      %v2748 = vadd.f32 %v2747, %v2717
      %v2749 = vadd.f32 %v2748, %v2718
      %v2750 = vadd.f32 %v2749, %v2719
      %v2751 = vadd.f32 %v2750, %v2720
      %v2752 = vadd.f32 %v2751, %v2721
      %v2753 = vrot.slane %v2752, 4
      %v2754 = vadd.f32 %v2752, %v2753
      %v2755 = vrot.slane %v2754, 2
      %v2756 = vadd.f32 %v2754, %v2755
      %v2757 = vrot.slane %v2756, 1
      %v2758 = vadd.f32 %v2756, %v2757
      %2759 = vst [vmem:[%s344] sm:$0x1] %v2758
      %v2760 = vld [vmem:[%s2] sm:$0xf]
      %v2761 = vld [vmem:[%s2 + $0x4] sm:$0xf]
      %v2762 = vld [vmem:[%s2 + $0x8] sm:$0xf]
      %v2763 = vld [vmem:[%s2 + $0xc] sm:$0xf]
      %v2764 = vld [vmem:[%s2 + $0x10] sm:$0xf]
      %v2765 = vld [vmem:[%s2 + $0x14] sm:$0xf]
      %v2766 = vld [vmem:[%s2 + $0x18] sm:$0xf]
      %v2767 = vld [vmem:[%s2 + $0x1c] sm:$0xf]
      %v2768 = vld [vmem:[%s2 + $0x20] sm:$0xf]
      %v2769 = vld [vmem:[%s2 + $0x24] sm:$0xf]
      %v2770 = vld [vmem:[%s2 + $0x28] sm:$0xf]
      %v2771 = vld [vmem:[%s2 + $0x2c] sm:$0xf]
      %v2772 = vld [vmem:[%s2 + $0x30] sm:$0xf]
      %v2773 = vld [vmem:[%s2 + $0x34] sm:$0xf]
      %v2774 = vld [vmem:[%s2 + $0x38] sm:$0xf]
      %v2775 = vld [vmem:[%s2 + $0x3c] sm:$0xf]
      %v2808 = vunpack.c.l.b16 %v2760
      %v2809 = vunpack.c.l.b16 %v2761
      %v2810 = vunpack.c.l.b16 %v2762
      %v2811 = vunpack.c.l.b16 %v2763
      %v2812 = vunpack.c.l.b16 %v2764
      %v2813 = vunpack.c.l.b16 %v2765
      %v2814 = vunpack.c.l.b16 %v2766
      %v2815 = vunpack.c.l.b16 %v2767
      %v2816 = vunpack.c.l.b16 %v2768
      %v2817 = vunpack.c.l.b16 %v2769
      %v2818 = vunpack.c.l.b16 %v2770
      %v2819 = vunpack.c.l.b16 %v2771
      %v2820 = vunpack.c.l.b16 %v2772
      %v2821 = vunpack.c.l.b16 %v2773
      %v2822 = vunpack.c.l.b16 %v2774
      %v2823 = vunpack.c.l.b16 %v2775
      %v2824 = vpack.c.b16 %v2809, %v2808
      %v2825 = vpack.c.b16 %v2811, %v2810
      %v2826 = vpack.c.b16 %v2813, %v2812
      %v2827 = vpack.c.b16 %v2815, %v2814
      %v2828 = vpack.c.b16 %v2817, %v2816
      %v2829 = vpack.c.b16 %v2819, %v2818
      %v2830 = vpack.c.b16 %v2821, %v2820
      %v2831 = vpack.c.b16 %v2823, %v2822
      %2840 = vmatpush.bf16.msra.mxu0 %v2831
      %2841 = vmatpush.bf16.msra.mxu0 %v2830
      %2842 = vmatpush.bf16.msra.mxu0 %v2829
      %2843 = vmatpush.bf16.msra.mxu0 %v2828
      %2844 = vmatpush.bf16.msra.mxu0 %v2827
      %2845 = vmatpush.bf16.msra.mxu0 %v2826
      %2846 = vmatpush.bf16.msra.mxu0 %v2825
      %2847 = vmatpush.bf16.msra.mxu0 %v2824
      %2848 = vmatmul.bf16.gmra.mxu0 %v448
      %v2849 = vpop.f32.mrf.mxu0
      %v2850 = vadd.f32 0.0, %v2849
      %v2851 = vpop.f32.mrf.mxu0
      %v2852 = vadd.f32 0.0, %v2851
      %2853 = vmatmul.bf16.gmra.mxu0 %v449
      %v2854 = vpop.f32.mrf.mxu0
      %v2855 = vadd.f32 0.0, %v2854
      %v2856 = vpop.f32.mrf.mxu0
      %v2857 = vadd.f32 0.0, %v2856
      %2858 = vmatmul.bf16.gmra.mxu0 %v450
      %v2859 = vpop.f32.mrf.mxu0
      %v2860 = vadd.f32 0.0, %v2859
      %v2861 = vpop.f32.mrf.mxu0
      %v2862 = vadd.f32 0.0, %v2861
      %2863 = vmatmul.bf16.gmra.mxu0 %v451
      %v2864 = vpop.f32.mrf.mxu0
      %v2865 = vadd.f32 0.0, %v2864
      %v2866 = vpop.f32.mrf.mxu0
      %v2867 = vadd.f32 0.0, %v2866
      %2868 = vmatmul.bf16.gmra.mxu0 %v452
      %v2869 = vpop.f32.mrf.mxu0
      %v2870 = vadd.f32 0.0, %v2869
      %v2871 = vpop.f32.mrf.mxu0
      %v2872 = vadd.f32 0.0, %v2871
      %2873 = vmatmul.bf16.gmra.mxu0 %v453
      %v2874 = vpop.f32.mrf.mxu0
      %v2875 = vadd.f32 0.0, %v2874
      %v2876 = vpop.f32.mrf.mxu0
      %v2877 = vadd.f32 0.0, %v2876
      %2878 = vmatmul.bf16.gmra.mxu0 %v454
      %v2879 = vpop.f32.mrf.mxu0
      %v2880 = vadd.f32 0.0, %v2879
      %v2881 = vpop.f32.mrf.mxu0
      %v2882 = vadd.f32 0.0, %v2881
      %2883 = vmatmul.bf16.gmra.mxu0 %v455
      %v2884 = vpop.f32.mrf.mxu0
      %v2885 = vadd.f32 0.0, %v2884
      %v2886 = vpop.f32.mrf.mxu0
      %v2887 = vadd.f32 0.0, %v2886
      %2888 = vmatmul.bf16.gmra.mxu0 %v456
      %v2889 = vpop.f32.mrf.mxu0
      %v2890 = vadd.f32 0.0, %v2889
      %v2891 = vpop.f32.mrf.mxu0
      %v2892 = vadd.f32 0.0, %v2891
      %2893 = vmatmul.bf16.gmra.mxu0 %v457
      %v2894 = vpop.f32.mrf.mxu0
      %v2895 = vadd.f32 0.0, %v2894
      %v2896 = vpop.f32.mrf.mxu0
      %v2897 = vadd.f32 0.0, %v2896
      %2898 = vmatmul.bf16.gmra.mxu0 %v458
      %v2899 = vpop.f32.mrf.mxu0
      %v2900 = vadd.f32 0.0, %v2899
      %v2901 = vpop.f32.mrf.mxu0
      %v2902 = vadd.f32 0.0, %v2901
      %2903 = vmatmul.bf16.gmra.mxu0 %v459
      %v2904 = vpop.f32.mrf.mxu0
      %v2905 = vadd.f32 0.0, %v2904
      %v2906 = vpop.f32.mrf.mxu0
      %v2907 = vadd.f32 0.0, %v2906
      %2908 = vmatmul.bf16.gmra.mxu0 %v460
      %v2909 = vpop.f32.mrf.mxu0
      %v2910 = vadd.f32 0.0, %v2909
      %v2911 = vpop.f32.mrf.mxu0
      %v2912 = vadd.f32 0.0, %v2911
      %2913 = vmatmul.bf16.gmra.mxu0 %v461
      %v2914 = vpop.f32.mrf.mxu0
      %v2915 = vadd.f32 0.0, %v2914
      %v2916 = vpop.f32.mrf.mxu0
      %v2917 = vadd.f32 0.0, %v2916
      %2918 = vmatmul.bf16.gmra.mxu0 %v462
      %v2919 = vpop.f32.mrf.mxu0
      %v2920 = vadd.f32 0.0, %v2919
      %v2921 = vpop.f32.mrf.mxu0
      %v2922 = vadd.f32 0.0, %v2921
      %2923 = vmatmul.bf16.gmra.mxu0 %v463
      %v2924 = vpop.f32.mrf.mxu0
      %v2925 = vadd.f32 0.0, %v2924
      %v2926 = vpop.f32.mrf.mxu0
      %v2927 = vadd.f32 0.0, %v2926
      %2928 = vdwg.mxu0
      %v2929 = vpack.c.bf16 %v2850, %v2850
      %v2930 = vpack.c.bf16 %v2852, %v2852
      %v2931 = vpack.c.bf16 %v2855, %v2855
      %v2932 = vpack.c.bf16 %v2857, %v2857
      %v2933 = vpack.c.bf16 %v2860, %v2860
      %v2934 = vpack.c.bf16 %v2862, %v2862
      %v2935 = vpack.c.bf16 %v2865, %v2865
      %v2936 = vpack.c.bf16 %v2867, %v2867
      %v2937 = vpack.c.bf16 %v2870, %v2870
      %v2938 = vpack.c.bf16 %v2872, %v2872
      %v2939 = vpack.c.bf16 %v2875, %v2875
      %v2940 = vpack.c.bf16 %v2877, %v2877
      %v2941 = vpack.c.bf16 %v2880, %v2880
      %v2942 = vpack.c.bf16 %v2882, %v2882
      %v2943 = vpack.c.bf16 %v2885, %v2885
      %v2944 = vpack.c.bf16 %v2887, %v2887
      %v2945 = vpack.c.bf16 %v2890, %v2890
      %v2946 = vpack.c.bf16 %v2892, %v2892
      %v2947 = vpack.c.bf16 %v2895, %v2895
      %v2948 = vpack.c.bf16 %v2897, %v2897
      %v2949 = vpack.c.bf16 %v2900, %v2900
      %v2950 = vpack.c.bf16 %v2902, %v2902
      %v2951 = vpack.c.bf16 %v2905, %v2905
      %v2952 = vpack.c.bf16 %v2907, %v2907
      %v2953 = vpack.c.bf16 %v2910, %v2910
      %v2954 = vpack.c.bf16 %v2912, %v2912
      %v2955 = vpack.c.bf16 %v2915, %v2915
      %v2956 = vpack.c.bf16 %v2917, %v2917
      %v2957 = vpack.c.bf16 %v2920, %v2920
      %v2958 = vpack.c.bf16 %v2922, %v2922
      %v2959 = vpack.c.bf16 %v2925, %v2925
      %v2960 = vpack.c.bf16 %v2927, %v2927
      %2961 = vst [vmem:[%s338] sm:$0xf] %v2929
      %2962 = vst [vmem:[%s338 + $0x4] sm:$0xf] %v2930
      %2963 = vst [vmem:[%s338 + $0x8] sm:$0xf] %v2931
      %2964 = vst [vmem:[%s338 + $0xc] sm:$0xf] %v2932
      %2965 = vst [vmem:[%s338 + $0x10] sm:$0xf] %v2933
      %2966 = vst [vmem:[%s338 + $0x14] sm:$0xf] %v2934
      %2967 = vst [vmem:[%s338 + $0x18] sm:$0xf] %v2935
      %2968 = vst [vmem:[%s338 + $0x1c] sm:$0xf] %v2936
      %2969 = vst [vmem:[%s338 + $0x20] sm:$0xf] %v2937
      %2970 = vst [vmem:[%s338 + $0x24] sm:$0xf] %v2938
      %2971 = vst [vmem:[%s338 + $0x28] sm:$0xf] %v2939
      %2972 = vst [vmem:[%s338 + $0x2c] sm:$0xf] %v2940
      %2973 = vst [vmem:[%s338 + $0x30] sm:$0xf] %v2941
      %2974 = vst [vmem:[%s338 + $0x34] sm:$0xf] %v2942
      %2975 = vst [vmem:[%s338 + $0x38] sm:$0xf] %v2943
      %2976 = vst [vmem:[%s338 + $0x3c] sm:$0xf] %v2944
      %2977 = vst [vmem:[%s338 + $0x40] sm:$0xf] %v2945
      %2978 = vst [vmem:[%s338 + $0x44] sm:$0xf] %v2946
      %2979 = vst [vmem:[%s338 + $0x48] sm:$0xf] %v2947
      %2980 = vst [vmem:[%s338 + $0x4c] sm:$0xf] %v2948
      %2981 = vst [vmem:[%s338 + $0x50] sm:$0xf] %v2949
      %2982 = vst [vmem:[%s338 + $0x54] sm:$0xf] %v2950
      %2983 = vst [vmem:[%s338 + $0x58] sm:$0xf] %v2951
      %2984 = vst [vmem:[%s338 + $0x5c] sm:$0xf] %v2952
      %2985 = vst [vmem:[%s338 + $0x60] sm:$0xf] %v2953
      %2986 = vst [vmem:[%s338 + $0x64] sm:$0xf] %v2954
      %2987 = vst [vmem:[%s338 + $0x68] sm:$0xf] %v2955
      %2988 = vst [vmem:[%s338 + $0x6c] sm:$0xf] %v2956
      %2989 = vst [vmem:[%s338 + $0x70] sm:$0xf] %v2957
      %2990 = vst [vmem:[%s338 + $0x74] sm:$0xf] %v2958
      %2991 = vst [vmem:[%s338 + $0x78] sm:$0xf] %v2959
      %2992 = vst [vmem:[%s338 + $0x7c] sm:$0xf] %v2960
      %v2993 = vadd.f32 %v2850, %v2852
      %v2994 = vadd.f32 %v2993, %v2855
      %v2995 = vadd.f32 %v2994, %v2857
      %v2996 = vadd.f32 %v2995, %v2860
      %v2997 = vadd.f32 %v2996, %v2862
      %v2998 = vadd.f32 %v2997, %v2865
      %v2999 = vadd.f32 %v2998, %v2867
      %v3000 = vadd.f32 %v2999, %v2870
      %v3001 = vadd.f32 %v3000, %v2872
      %v3002 = vadd.f32 %v3001, %v2875
      %v3003 = vadd.f32 %v3002, %v2877
      %v3004 = vadd.f32 %v3003, %v2880
      %v3005 = vadd.f32 %v3004, %v2882
      %v3006 = vadd.f32 %v3005, %v2885
      %v3007 = vadd.f32 %v3006, %v2887
      %v3008 = vadd.f32 %v3007, %v2890
      %v3009 = vadd.f32 %v3008, %v2892
      %v3010 = vadd.f32 %v3009, %v2895
      %v3011 = vadd.f32 %v3010, %v2897
      %v3012 = vadd.f32 %v3011, %v2900
      %v3013 = vadd.f32 %v3012, %v2902
      %v3014 = vadd.f32 %v3013, %v2905
      %v3015 = vadd.f32 %v3014, %v2907
      %v3016 = vadd.f32 %v3015, %v2910
      %v3017 = vadd.f32 %v3016, %v2912
      %v3018 = vadd.f32 %v3017, %v2915
      %v3019 = vadd.f32 %v3018, %v2917
      %v3020 = vadd.f32 %v3019, %v2920
      %v3021 = vadd.f32 %v3020, %v2922
      %v3022 = vadd.f32 %v3021, %v2925
      %v3023 = vadd.f32 %v3022, %v2927
      %v3024 = vrot.slane %v3023, 4
      %v3025 = vadd.f32 %v3023, %v3024
      %v3026 = vrot.slane %v3025, 2
      %v3027 = vadd.f32 %v3025, %v3026
      %v3028 = vrot.slane %v3027, 1
      %v3029 = vadd.f32 %v3027, %v3028
      %3030 = vst [vmem:[%s347] sm:$0x1] %v3029
      %v3031 = vmul.f32 %v2850, %v2850
      %v3032 = vmul.f32 %v2852, %v2852
      %v3033 = vmul.f32 %v2855, %v2855
      %v3034 = vmul.f32 %v2857, %v2857
      %v3035 = vmul.f32 %v2860, %v2860
      %v3036 = vmul.f32 %v2862, %v2862
      %v3037 = vmul.f32 %v2865, %v2865
      %v3038 = vmul.f32 %v2867, %v2867
      %v3039 = vmul.f32 %v2870, %v2870
      %v3040 = vmul.f32 %v2872, %v2872
      %v3041 = vmul.f32 %v2875, %v2875
      %v3042 = vmul.f32 %v2877, %v2877
      %v3043 = vmul.f32 %v2880, %v2880
      %v3044 = vmul.f32 %v2882, %v2882
      %v3045 = vmul.f32 %v2885, %v2885
      %v3046 = vmul.f32 %v2887, %v2887
      %v3047 = vmul.f32 %v2890, %v2890
      %v3048 = vmul.f32 %v2892, %v2892
      %v3049 = vmul.f32 %v2895, %v2895
      %v3050 = vmul.f32 %v2897, %v2897
      %v3051 = vmul.f32 %v2900, %v2900
      %v3052 = vmul.f32 %v2902, %v2902
      %v3053 = vmul.f32 %v2905, %v2905
      %v3054 = vmul.f32 %v2907, %v2907
      %v3055 = vmul.f32 %v2910, %v2910
      %v3056 = vmul.f32 %v2912, %v2912
      %v3057 = vmul.f32 %v2915, %v2915
      %v3058 = vmul.f32 %v2917, %v2917
      %v3059 = vmul.f32 %v2920, %v2920
      %v3060 = vmul.f32 %v2922, %v2922
      %v3061 = vmul.f32 %v2925, %v2925
      %v3062 = vmul.f32 %v2927, %v2927
      %v3063 = vadd.f32 %v3031, %v3032
      %v3064 = vadd.f32 %v3063, %v3033
      %v3065 = vadd.f32 %v3064, %v3034
      %v3066 = vadd.f32 %v3065, %v3035
      %v3067 = vadd.f32 %v3066, %v3036
      %v3068 = vadd.f32 %v3067, %v3037
      %v3069 = vadd.f32 %v3068, %v3038
      %v3070 = vadd.f32 %v3069, %v3039
      %v3071 = vadd.f32 %v3070, %v3040
      %v3072 = vadd.f32 %v3071, %v3041
      %v3073 = vadd.f32 %v3072, %v3042
      %v3074 = vadd.f32 %v3073, %v3043
      %v3075 = vadd.f32 %v3074, %v3044
      %v3076 = vadd.f32 %v3075, %v3045
      %v3077 = vadd.f32 %v3076, %v3046
      %v3078 = vadd.f32 %v3077, %v3047
      %v3079 = vadd.f32 %v3078, %v3048
      %v3080 = vadd.f32 %v3079, %v3049
      %v3081 = vadd.f32 %v3080, %v3050
      %v3082 = vadd.f32 %v3081, %v3051
      %v3083 = vadd.f32 %v3082, %v3052
      %v3084 = vadd.f32 %v3083, %v3053
      %v3085 = vadd.f32 %v3084, %v3054
      %v3086 = vadd.f32 %v3085, %v3055
      %v3087 = vadd.f32 %v3086, %v3056
      %v3088 = vadd.f32 %v3087, %v3057
      %v3089 = vadd.f32 %v3088, %v3058
      %v3090 = vadd.f32 %v3089, %v3059
      %v3091 = vadd.f32 %v3090, %v3060
      %v3092 = vadd.f32 %v3091, %v3061
      %v3093 = vadd.f32 %v3092, %v3062
      %v3094 = vrot.slane %v3093, 4
      %v3095 = vadd.f32 %v3093, %v3094
      %v3096 = vrot.slane %v3095, 2
      %v3097 = vadd.f32 %v3095, %v3096
      %v3098 = vrot.slane %v3097, 1
      %v3099 = vadd.f32 %v3097, %v3098
      %3100 = vst [vmem:[%s350] sm:$0x1] %v3099
      %p3101 = scmp.lt.s32.totalorder %s20, 1
      %s3102 = scalar_select %p3101, %s20, 1
      %s3103 = smul.addr %s3102, 32
      %s3104 = smul.addr %s3103, 4
      %s3105 = scalar_lea.vmem %s3, %s3104
      %p3106 = scmp.lt.s32.totalorder %s20, 1
      %s3107 = scalar_select %p3106, %s20, 1
      %s3108 = smul.addr %s3107, 32
      %s3109 = smul.addr %s3108, 4
      %s3110 = scalar_lea.vmem %s4, %s3109
      %p3111 = scmp.lt.s32.totalorder %s20, 1
      %s3112 = scalar_select %p3111, %s20, 1
      %s3113 = scalar_lea.vmem %s5, %s3112
      %p3114 = scmp.lt.s32.totalorder %s20, 1
      %s3115 = scalar_select %p3114, %s20, 1
      %s3116 = scalar_lea.vmem %s6, %s3115
      %p3117 = scmp.lt.s32.totalorder %s20, 1
      %s3118 = scalar_select %p3117, %s20, 1
      %s3119 = scalar_lea.vmem %s7, %s3118
      %p3120 = scmp.lt.s32.totalorder %s20, 1
      %s3121 = scalar_select %p3120, %s20, 1
      %s3122 = scalar_lea.vmem %s8, %s3121
      // Predicated region
      $region33: #{residual_block_forward.3} parent=31 // pred_check
        %p3123 = pneg %p106
      $region34: #{residual_block_forward.3} parent=31 // pred_check_branch
        %3125 = sbr.rel (%p3123) target = $region36
      $region35: #{residual_block_forward.3} parent=31 // pred_region
        _
      $region36: #{residual_block_forward.3} parent=31 // pred_fallthru
        _
      // Predicated region
      $region37: #{residual_block_forward.3} parent=31 // pred_check
        %p3126 = pneg %p132
      $region38: #{residual_block_forward.3} parent=31 // pred_check_branch
        %3128 = sbr.rel (%p3126) target = $region40
      $region39: #{residual_block_forward.3} parent=31 // pred_region
        _
      $region40: #{residual_block_forward.3} parent=31 // pred_fallthru
        _
      // Predicated region
      $region41: #{residual_block_forward.3} parent=31 // pred_check
        %p3129 = pneg %p158
      $region42: #{residual_block_forward.3} parent=31 // pred_check_branch
        %3131 = sbr.rel (%p3129) target = $region44
      $region43: #{residual_block_forward.3} parent=31 // pred_region
        _
      $region44: #{residual_block_forward.3} parent=31 // pred_fallthru
        _
      // Predicated region
      $region45: #{residual_block_forward.3} parent=31 // pred_check
        %p3132 = pneg %p184
      $region46: #{residual_block_forward.3} parent=31 // pred_check_branch
        %3134 = sbr.rel (%p3132) target = $region48
      $region47: #{residual_block_forward.3} parent=31 // pred_region
        _
      $region48: #{residual_block_forward.3} parent=31 // pred_fallthru
        _
      // Predicated region
      $region49: #{residual_block_forward.3} parent=31 // pred_check
        %p3135 = pneg %p210
      $region50: #{residual_block_forward.3} parent=31 // pred_check_branch
        %3137 = sbr.rel (%p3135) target = $region52
      $region51: #{residual_block_forward.3} parent=31 // pred_region
        _
      $region52: #{residual_block_forward.3} parent=31 // pred_fallthru
        _
      // Predicated region
      $region53: #{residual_block_forward.3} parent=31 // pred_check
        %p3138 = pneg %p236
      $region54: #{residual_block_forward.3} parent=31 // pred_check_branch
        %3140 = sbr.rel (%p3138) target = $region56
      $region55: #{residual_block_forward.3} parent=31 // pred_region
        _
      $region56: #{residual_block_forward.3} parent=31 // pred_fallthru
        _
    $region32: #{residual_block_forward.3} parent=5 // pred_fallthru
      _
    %p3141 = scmp.le.s32.totalorder 2, %s15
    // Predicated region
    $region57: #{residual_block_forward.3} parent=5 // pred_check
      %p3142 = pneg %p3141
    $region58: #{residual_block_forward.3} parent=5 // pred_check_branch
      %3144 = sbr.rel (%p3142) target = $region60
    $region59: #{residual_block_forward.3} parent=5 // pred_region
      %s3145 = ssub.s32 %s15, 2
      // Predicated region
      $region61: #{residual_block_forward.3} parent=59 // pred_check
        %p3146 = pneg %p112
      $region62: #{residual_block_forward.3} parent=59 // pred_check_branch
        %3148 = sbr.rel (%p3146) target = $region64
      $region63: #{residual_block_forward.3} parent=59 // pred_region
        %p3149 = scmp.lt.s32.totalorder %s21, 1
        %s3150 = scalar_select %p3149, %s21, 1
        %s3151 = smul.addr %s3150, 32
        %s3152 = smul.addr %s3151, 4
        %s3153 = scalar_lea.vmem %s3, %s3152
      $region64: #{residual_block_forward.3} parent=59 // pred_fallthru
        _
      // Predicated region
      $region65: #{residual_block_forward.3} parent=59 // pred_check
        %p3154 = pneg %p138
      $region66: #{residual_block_forward.3} parent=59 // pred_check_branch
        %3156 = sbr.rel (%p3154) target = $region68
      $region67: #{residual_block_forward.3} parent=59 // pred_region
        %p3157 = scmp.lt.s32.totalorder %s21, 1
        %s3158 = scalar_select %p3157, %s21, 1
        %s3159 = smul.addr %s3158, 32
        %s3160 = smul.addr %s3159, 4
        %s3161 = scalar_lea.vmem %s4, %s3160
      $region68: #{residual_block_forward.3} parent=59 // pred_fallthru
        _
      // Predicated region
      $region69: #{residual_block_forward.3} parent=59 // pred_check
        %p3162 = pneg %p164
      $region70: #{residual_block_forward.3} parent=59 // pred_check_branch
        %3164 = sbr.rel (%p3162) target = $region72
      $region71: #{residual_block_forward.3} parent=59 // pred_region
        %p3165 = scmp.lt.s32.totalorder %s21, 1
        %s3166 = scalar_select %p3165, %s21, 1
        %s3167 = scalar_lea.vmem %s5, %s3166
      $region72: #{residual_block_forward.3} parent=59 // pred_fallthru
        _
      // Predicated region
      $region73: #{residual_block_forward.3} parent=59 // pred_check
        %p3168 = pneg %p190
      $region74: #{residual_block_forward.3} parent=59 // pred_check_branch
        %3170 = sbr.rel (%p3168) target = $region76
      $region75: #{residual_block_forward.3} parent=59 // pred_region
        %p3171 = scmp.lt.s32.totalorder %s21, 1
        %s3172 = scalar_select %p3171, %s21, 1
        %s3173 = scalar_lea.vmem %s6, %s3172
      $region76: #{residual_block_forward.3} parent=59 // pred_fallthru
        _
      // Predicated region
      $region77: #{residual_block_forward.3} parent=59 // pred_check
        %p3174 = pneg %p216
      $region78: #{residual_block_forward.3} parent=59 // pred_check_branch
        %3176 = sbr.rel (%p3174) target = $region80
      $region79: #{residual_block_forward.3} parent=59 // pred_region
        %p3177 = scmp.lt.s32.totalorder %s21, 1
        %s3178 = scalar_select %p3177, %s21, 1
        %s3179 = scalar_lea.vmem %s7, %s3178
      $region80: #{residual_block_forward.3} parent=59 // pred_fallthru
        _
      // Predicated region
      $region81: #{residual_block_forward.3} parent=59 // pred_check
        %p3180 = pneg %p242
      $region82: #{residual_block_forward.3} parent=59 // pred_check_branch
        %3182 = sbr.rel (%p3180) target = $region84
      $region83: #{residual_block_forward.3} parent=59 // pred_region
        %p3183 = scmp.lt.s32.totalorder %s21, 1
        %s3184 = scalar_select %p3183, %s21, 1
        %s3185 = scalar_lea.vmem %s8, %s3184
      $region84: #{residual_block_forward.3} parent=59 // pred_fallthru
        _
    $region60: #{residual_block_forward.3} parent=5 // pred_fallthru
      _
  $region6: #{residual_block_forward.3} parent=0 // loop_footer
    %s19 = sadd.s32 1, %s15
  $region7: #{residual_block_forward.3} parent=0 // loop_footer_branch
    %14 = sbr.rel target = $region3
  $region8: #{residual_block_forward.3} parent=0 // loop_exit
    _

</llo_original>
